<compile_context>
chip_gen: v5e
topology: v5e:2x2
jax: 0.10.0
libtpu: 0.0.40
codegen_flags: <defaults>
</compile_context>

<pallas_src>
import functools

import jax
import jax.numpy as jnp
from jax.experimental import pallas as pl
from jax.experimental.pallas import tpu as pltpu


# ---------------------------------------------------------------------------
# small helpers
# ---------------------------------------------------------------------------
def _round_up(n, m):
    return ((n + m - 1) // m) * m


def _pad_axis(a, axis, target):
    pad = target - a.shape[axis]
    if pad <= 0:
        return a
    widths = [(0, 0)] * a.ndim
    widths[axis] = (0, pad)
    return jnp.pad(a, widths)


def _pick_tile(n, cap):
    """Return (tile, padded_n).

    Prefer the largest multiple-of-8 divisor of n that is <= cap; if none
    exists, pad n up to a multiple of a bounded tile instead of silently
    using the whole axis (which could blow the scoped VMEM limit).
    """
    t = min(n, cap)
    t -= t % 8
    while t >= 8:
        if n % t == 0:
            return t, n
        t -= 8
    t = min(cap, _round_up(max(n, 8), 8))
    return t, _round_up(n, t)


def _pick_group_tile(n_groups, group_rows, cap_rows):
    """How many pool-row groups (of `group_rows` rows) per projection tile.

    The tile covers whole groups so the fused 2x2 pool never straddles a tile
    boundary; tile and pooled-tile row counts must be 8-aligned (or full).
    """
    best = None
    for r in range(1, n_groups + 1):
        if n_groups % r:
            continue
        tn = r * group_rows
        if tn <= cap_rows and tn % 8 == 0 and (tn // 4) % 8 == 0:
            best = r
    # TODO(synk): the fallback covers the whole axis; for very large, oddly
    # shaped inputs this can exceed the scoped VMEM limit.
    return best if best is not None else n_groups


def _tpu_vmem_bytes():
    try:
        return int(pltpu.get_tpu_info().vmem_capacity_bytes)
    except Exception:
        return 64 * 1024 * 1024     # conservative default (v7x-sized)


_VMEM_BYTES = _tpu_vmem_bytes()
_BIG_VMEM = _VMEM_BYTES >= 96 * 1024 * 1024     # v5e / v6e: 128 MiB physical
_Q_CAP = 1024 if _BIG_VMEM else 512             # v7x (64 MiB): keep TQ at 512
_K_CAP = 512
_PROJ_ROW_CAP = 512
_VMEM_LIMIT = (64 if _BIG_VMEM else 32) * 1024 * 1024


# ---------------------------------------------------------------------------
# Kernel 1: phi / g 1x1x1 "convs" as ONE fused wide matmul (+ bias) with the
# 2x2 HW max-pool fused in; only the pooled bf16 phi/g tensors hit HBM.
# ---------------------------------------------------------------------------
def _proj_kernel(x_ref, w_ref, b_ref, phi_ref, g_ref, *, group_rows, icp):
    tn = x_ref.shape[1]            # rows in this tile (multiple of group_rows)
    r = tn // group_rows           # number of (t, h//2) row groups in the tile
    w2 = group_rows // 4           # pooled width per group

    x = x_ref[0].astype(jnp.bfloat16)                              # (TN, Cp)
    v = (jnp.dot(x, w_ref[...], preferred_element_type=jnp.float32)
         + b_ref[...])                                             # (TN, 2*icp)

    # Rows within a group are ordered (h%2, w%2, w//2): the 4 elements of each
    # 2x2 pooling window sit on axis 1 after this reshape -> cheap VPU max.
    v4 = v.reshape(r, 4, w2, 2 * icp)
    pooled = jnp.maximum(jnp.maximum(v4[:, 0], v4[:, 1]),
                         jnp.maximum(v4[:, 2], v4[:, 3]))          # (r, w2, 2ic)
    pooled = pooled.reshape(r * w2, 2 * icp).astype(jnp.bfloat16)

    phi_ref[0] = pooled[:, :icp]
    g_ref[0] = pooled[:, icp:]


def _projections(x_flat, w_pg, b_pg, *, n_groups, group_rows, icp):
    b, N, Cp = x_flat.shape
    Ns = N // 4

    r = _pick_group_tile(n_groups, group_rows, _PROJ_ROW_CAP)
    TN = r * group_rows
    TNp = TN // 4
    grid = (b, N // TN)

    kernel = functools.partial(_proj_kernel, group_rows=group_rows, icp=icp)
    out_shape = (jax.ShapeDtypeStruct((b, Ns, icp), jnp.bfloat16),
                 jax.ShapeDtypeStruct((b, Ns, icp), jnp.bfloat16))
    return pl.pallas_call(
        kernel,
        out_shape=out_shape,
        grid=grid,
        in_specs=[
            pl.BlockSpec((1, TN, Cp), lambda i, j: (i, j, 0)),
            pl.BlockSpec((Cp, 2 * icp), lambda i, j: (0, 0)),
            pl.BlockSpec((1, 2 * icp), lambda i, j: (0, 0)),
        ],
        out_specs=(
            pl.BlockSpec((1, TNp, icp), lambda i, j: (i, j, 0)),
            pl.BlockSpec((1, TNp, icp), lambda i, j: (i, j, 0)),
        ),
        compiler_params=pltpu.CompilerParams(
            dimension_semantics=("parallel", "parallel"),
            vmem_limit_bytes=_VMEM_LIMIT),
    )(x_flat, w_pg, b_pg)


# ---------------------------------------------------------------------------
# Kernel 2: flash-style attention with the theta projection fused into the
# first K step, and the W projection (1x1x1 conv) + residual fused into the
# last K step.  bf16 MXU operands, f32 online-softmax state.
# ---------------------------------------------------------------------------
def _attn_kernel(x_ref, wt_ref, bt_ref, phi_ref, g_ref, wW_ref, bW_ref, z_ref,
                 theta_sc, m_sc, l_sc, acc_sc, *, tk, ns_real, mask_keys):
    ki = pl.program_id(2)

    @pl.when(ki == 0)
    def _init():
        x_bf = x_ref[0].astype(jnp.bfloat16)                       # (TQ, Cp)
        th = (jnp.dot(x_bf, wt_ref[...], preferred_element_type=jnp.float32)
              + bt_ref[...])
        theta_sc[...] = th.astype(jnp.bfloat16)
        m_sc[...] = jnp.full(m_sc.shape, -jnp.inf, m_sc.dtype)
        l_sc[...] = jnp.zeros(l_sc.shape, l_sc.dtype)
        acc_sc[...] = jnp.zeros(acc_sc.shape, acc_sc.dtype)

    # s = theta @ phi^T -> (TQ, TK); contract over the inter-channel axis.
    s = jax.lax.dot_general(theta_sc[...], phi_ref[0],
                            (((1,), (1,)), ((), ())),
                            preferred_element_type=jnp.float32)
    if mask_keys:
        col = ki * tk + jax.lax.broadcasted_iota(jnp.int32, s.shape, 1)
        s = jnp.where(col < ns_real, s, -1e30)

    m_prev = m_sc[...]
    m_new = jnp.maximum(m_prev, jnp.max(s, axis=-1, keepdims=True))
    alpha = jnp.exp(m_prev - m_new)
    p = jnp.exp(s - m_new)                                         # (TQ, TK)
    l_sc[...] = alpha * l_sc[...] + jnp.sum(p, axis=-1, keepdims=True)
    acc_sc[...] = alpha * acc_sc[...] + jnp.dot(
        p.astype(jnp.bfloat16), g_ref[0], preferred_element_type=jnp.float32)
    m_sc[...] = m_new

    @pl.when(ki == pl.num_programs(2) - 1)
    def _finalize():
        y = acc_sc[...] * pl.reciprocal(l_sc[...], approx=False)   # (TQ, icp)
        wy = (jnp.dot(y.astype(jnp.bfloat16), wW_ref[...],
                      preferred_element_type=jnp.float32) + bW_ref[...])
        z_ref[0] = wy + x_ref[0]


def _attention(x_flat, w_theta, b_theta, phi_s, g_s, w_W, b_W):
    b, N, Cp = x_flat.shape
    Ns, icp = phi_s.shape[1], phi_s.shape[2]

    TQ, Np = _pick_tile(N, _Q_CAP)
    TK, Nsp = _pick_tile(Ns, _K_CAP)

    x_attn = _pad_axis(x_flat, 1, Np)       # padded query rows are sliced off
    phi_p = _pad_axis(phi_s, 1, Nsp)        # padded keys are masked in-kernel
    g_p = _pad_axis(g_s, 1, Nsp)

    kernel = functools.partial(_attn_kernel, tk=TK, ns_real=Ns,
                               mask_keys=(Nsp != Ns))
    grid = (b, Np // TQ, Nsp // TK)

    z = pl.pallas_call(
        kernel,
        out_shape=jax.ShapeDtypeStruct((b, Np, Cp), jnp.float32),
        grid=grid,
        in_specs=[
            pl.BlockSpec((1, TQ, Cp), lambda bi, qi, ki: (bi, qi, 0)),
            pl.BlockSpec((Cp, icp), lambda bi, qi, ki: (0, 0)),
            pl.BlockSpec((1, icp), lambda bi, qi, ki: (0, 0)),
            pl.BlockSpec((1, TK, icp), lambda bi, qi, ki: (bi, ki, 0)),
            pl.BlockSpec((1, TK, icp), lambda bi, qi, ki: (bi, ki, 0)),
            pl.BlockSpec((icp, Cp), lambda bi, qi, ki: (0, 0)),
            pl.BlockSpec((1, Cp), lambda bi, qi, ki: (0, 0)),
        ],
        out_specs=pl.BlockSpec((1, TQ, Cp), lambda bi, qi, ki: (bi, qi, 0)),
        scratch_shapes=[
            pltpu.VMEM((TQ, icp), jnp.bfloat16),   # theta tile (once per Q)
            pltpu.VMEM((TQ, 1), jnp.float32),      # running max
            pltpu.VMEM((TQ, 1), jnp.float32),      # running sum
            pltpu.VMEM((TQ, icp), jnp.float32),    # output accumulator
        ],
        compiler_params=pltpu.CompilerParams(
            dimension_semantics=("parallel", "parallel", "arbitrary"),
            vmem_limit_bytes=_VMEM_LIMIT),
    )(x_attn, w_theta, b_theta, phi_p, g_p, w_W, b_W)
    return z[:, :N, :]


# ---------------------------------------------------------------------------
# Wrapper: NCDHW in / NCDHW out.
# ---------------------------------------------------------------------------
def nonlocal_block_3d(x, params):
    """x: (b, c, t, h, w) float32 -> (b, c, t, h, w) float32."""
    b, c, t, h, w = x.shape
    # TODO(synk): PyTorch MaxPool3d((1,2,2)) floors odd H/W; only the common
    # even-H/W case is supported here.
    assert h % 2 == 0 and w % 2 == 0, "H and W must be even"
    h2, w2 = h // 2, w // 2
    N = t * h * w

    ic = params["w_theta"].shape[1]
    icp = _round_up(ic, 128)        # lane-dense / MXU-aligned inter-channels
    Cp = _round_up(c, 128)          # lane-dense residual / output channels

    def pad_w(wm):                  # (c, ic) -> (Cp, icp) bf16
        return _pad_axis(_pad_axis(wm, 0, Cp), 1, icp).astype(jnp.bfloat16)

    def pad_b(bm):                  # (1, ic) -> (1, icp) f32
        return _pad_axis(bm, 1, icp).astype(jnp.float32)

    w_theta = pad_w(params["w_theta"])
    b_theta = pad_b(params["b_theta"])
    w_pg = jnp.concatenate([pad_w(params["w_phi"]), pad_w(params["w_g"])], axis=1)
    b_pg = jnp.concatenate([pad_b(params["b_phi"]), pad_b(params["b_g"])], axis=1)
    w_W = _pad_axis(_pad_axis(params["w_W"], 0, icp), 1, Cp).astype(jnp.bfloat16)
    b_W = _pad_axis(params["b_W"], 1, Cp).astype(jnp.float32)

    # Channels-last flatten with pool-window-major row order:
    # row index = (t, h//2, h%2, w%2, w//2); every aligned group of 2*w rows
    # contains w//2 complete 2x2 pooling windows.  Attention is permutation-
    # invariant along N; the permutation is inverted when reshaping z back.
    x_flat = (x.reshape(b, c, t, h2, 2, w2, 2)
                .transpose(0, 2, 3, 4, 6, 5, 1)
                .reshape(b, N, c))
    x_flat = _pad_axis(x_flat, 2, Cp)

    phi_s, g_s = _projections(x_flat, w_pg, b_pg,
                              n_groups=t * h2, group_rows=4 * w2, icp=icp)

    z_flat = _attention(x_flat, w_theta, b_theta, phi_s, g_s, w_W, b_W)

    # Drop channel padding and invert the flatten permutation back to NCDHW.
    z = (z_flat[:, :, :c]
           .reshape(b, t, h2, 2, 2, w2, c)
           .transpose(0, 6, 1, 2, 3, 5, 4)
           .reshape(b, c, t, h, w))
    return z


# ---------------------------------------------------------------------------
# Deterministic parameter init (mirrors __init__ shapes; W conv is zero-init).
# Weights stored as (c_in, c_out) so the 1x1x1 conv is a right-matmul.
# ---------------------------------------------------------------------------
def init_params(key, in_channels):
    ic = in_channels // 2
    if ic == 0:
        ic = 1
    ks = jax.random.split(key, 6)

    def wi(k, shape):
        return 0.1 * jax.random.normal(k, shape, jnp.float32)

    return {
        "w_theta": wi(ks[0], (in_channels, ic)),
        "b_theta": wi(ks[1], (1, ic)),
        "w_phi": wi(ks[2], (in_channels, ic)),
        "b_phi": wi(ks[3], (1, ic)),
        "w_g": wi(ks[4], (in_channels, ic)),
        "b_g": wi(ks[5], (1, ic)),
        # torch.nn.init.constant_(self.W.weight, 0); constant_(self.W.bias, 0)
        "w_W": jnp.zeros((ic, in_channels), jnp.float32),
        "b_W": jnp.zeros((1, in_channels), jnp.float32),
    }


# ---------------------------------------------------------------------------
# Pure-JAX reference (mirrors the PyTorch forward exactly, NCDHW layout, f32).
# ---------------------------------------------------------------------------
def ref_forward(x, params):
    b, c, t, h, w = x.shape
    ic = params["w_theta"].shape[1]

    def conv1(xx, wci, bci):
        out = wci.shape[1]
        y = jnp.einsum("bcthw,co->bothw", xx, wci)
        return y + bci.reshape(1, out, 1, 1, 1)

    def pool(xx):
        bb, cc, tt, hh, ww = xx.shape
        return xx.reshape(bb, cc, tt, hh // 2, 2, ww // 2, 2).max(axis=(4, 6))

    g_x = pool(conv1(x, params["w_g"], params["b_g"]))
    g_x = g_x.reshape(b, ic, -1).transpose(0, 2, 1)
    theta_x = conv1(x, params["w_theta"], params["b_theta"])
    theta_x = theta_x.reshape(b, ic, -1).transpose(0, 2, 1)
    phi_x = pool(conv1(x, params["w_phi"], params["b_phi"])).reshape(b, ic, -1)

    f = jnp.einsum("bni,bim->bnm", theta_x, phi_x)
    f_div_C = jax.nn.softmax(f, axis=-1)
    y = jnp.einsum("bnm,bmi->bni", f_div_C, g_x)
    y = y.transpose(0, 2, 1).reshape(b, ic, t, h, w)
    W_y = conv1(y, params["w_W"], params["b_W"])
    return W_y + x


if __name__ == "__main__":
    key = jax.random.PRNGKey(0)
    k_x, k_p = jax.random.split(key)

    b, c, t, h, w = 2, 4, 4, 16, 16
    x = jax.random.normal(k_x, (b, c, t, h, w), jnp.float32)
    params = init_params(k_p, c)

    fwd = jax.jit(nonlocal_block_3d)

    # Faithful module params (W conv zero-initialized -> z == x numerically).
    z = jax.block_until_ready(fwd(x, params))
    z_ref = ref_forward(x, params)
    assert z.shape == x.shape
    err0 = float(jnp.max(jnp.abs(z - z_ref)))
    assert jnp.allclose(z, z_ref, atol=1e-4, rtol=1e-4), err0

    # Extra self-test: nonzero W to exercise the full attention + W path
    # (bf16 MXU operands -> looser tolerance vs the f32 reference).
    params_nz = dict(params)
    params_nz["w_W"] = 0.1 * jax.random.normal(
        jax.random.PRNGKey(1), params["w_W"].shape, jnp.float32)
    params_nz["b_W"] = 0.1 * jax.random.normal(
        jax.random.PRNGKey(2), params["b_W"].shape, jnp.float32)
    z2 = jax.block_until_ready(fwd(x, params_nz))
    z2_ref = ref_forward(x, params_nz)
    err1 = float(jnp.max(jnp.abs(z2 - z2_ref)))
    assert jnp.allclose(z2, z2_ref, atol=3e-2, rtol=3e-2), err1

    print("KERNEL_OK")
</pallas_src>

<mosaic_0001>
module attributes {stable_mosaic.version = 11 : i64} {
  func.func @_proj_kernel(%arg0: i32, %arg1: i32, %arg2: memref<1x512x128xf32, #tpu.memory_space<vmem>>, %arg3: memref<128x256xbf16, #tpu.memory_space<vmem>>, %arg4: memref<1x256xf32, #tpu.memory_space<vmem>>, %arg5: memref<1x128x128xbf16, #tpu.memory_space<vmem>>, %arg6: memref<1x128x128xbf16, #tpu.memory_space<vmem>>) attributes {dimension_semantics = [#tpu.dimension_semantics<parallel>, #tpu.dimension_semantics<parallel>], iteration_bounds = array<i64: 2, 2>, scalar_prefetch = 0 : i64, scratch_operands = 0 : i64, tpu.core_type = #tpu.core_type<tc>, window_params = [{transform_indices = @transform_0, window_bounds = array<i64: 1, 512, 128>}, {pipeline_mode = #tpu.pipeline_mode<synchronous>, transform_indices = @transform_1, window_bounds = array<i64: 128, 256>}, {pipeline_mode = #tpu.pipeline_mode<synchronous>, transform_indices = @transform_2, window_bounds = array<i64: 1, 256>}, {transform_indices = @transform_3, window_bounds = array<i64: 1, 128, 128>}, {transform_indices = @transform_4, window_bounds = array<i64: 1, 128, 128>}]} {
    %c0 = arith.constant 0 : index
    %c0_0 = arith.constant 0 : index
    %c0_1 = arith.constant 0 : index
    %0 = vector.load %arg2[%c0, %c0_0, %c0_1] : memref<1x512x128xf32, #tpu.memory_space<vmem>>, vector<1x512x128xf32>
    %1 = vector.shape_cast %0 : vector<1x512x128xf32> to vector<512x128xf32>
    %2 = arith.truncf %1 : vector<512x128xf32> to vector<512x128xbf16>
    %c0_2 = arith.constant 0 : index
    %c0_3 = arith.constant 0 : index
    %3 = vector.load %arg3[%c0_2, %c0_3] : memref<128x256xbf16, #tpu.memory_space<vmem>>, vector<128x256xbf16>
    %cst = arith.constant dense<0.000000e+00> : vector<512x256xf32>
    %4 = tpu.matmul %2, %3, %cst {dimension_numbers = #tpu.dot_dimension_numbers<[1], [0], [0], [1], [0, 0, 1, 1], [], []>} : vector<512x128xbf16>, vector<128x256xbf16>, vector<512x256xf32> -> vector<512x256xf32>
    %c0_4 = arith.constant 0 : index
    %c0_5 = arith.constant 0 : index
    %5 = vector.load %arg4[%c0_4, %c0_5] : memref<1x256xf32, #tpu.memory_space<vmem>>, vector<1x256xf32>
    %6 = vector.broadcast %5 : vector<1x256xf32> to vector<512x256xf32>
    %7 = arith.addf %4, %6 : vector<512x256xf32>
    %8 = vector.shape_cast %7 : vector<512x256xf32> to vector<16x4x8x256xf32>
    %9 = vector.extract_strided_slice %8 {offsets = [0, 0, 0, 0], sizes = [16, 1, 8, 256], strides = [1, 1, 1, 1]} : vector<16x4x8x256xf32> to vector<16x1x8x256xf32>
    %10 = vector.shape_cast %9 : vector<16x1x8x256xf32> to vector<16x8x256xf32>
    %11 = vector.extract_strided_slice %8 {offsets = [0, 1, 0, 0], sizes = [16, 1, 8, 256], strides = [1, 1, 1, 1]} : vector<16x4x8x256xf32> to vector<16x1x8x256xf32>
    %12 = vector.shape_cast %11 : vector<16x1x8x256xf32> to vector<16x8x256xf32>
    %13 = arith.maximumf %10, %12 : vector<16x8x256xf32>
    %14 = vector.extract_strided_slice %8 {offsets = [0, 2, 0, 0], sizes = [16, 1, 8, 256], strides = [1, 1, 1, 1]} : vector<16x4x8x256xf32> to vector<16x1x8x256xf32>
    %15 = vector.shape_cast %14 : vector<16x1x8x256xf32> to vector<16x8x256xf32>
    %16 = vector.extract_strided_slice %8 {offsets = [0, 3, 0, 0], sizes = [16, 1, 8, 256], strides = [1, 1, 1, 1]} : vector<16x4x8x256xf32> to vector<16x1x8x256xf32>
    %17 = vector.shape_cast %16 : vector<16x1x8x256xf32> to vector<16x8x256xf32>
    %18 = arith.maximumf %15, %17 : vector<16x8x256xf32>
    %19 = arith.maximumf %13, %18 : vector<16x8x256xf32>
    %20 = vector.shape_cast %19 : vector<16x8x256xf32> to vector<128x256xf32>
    %21 = arith.truncf %20 : vector<128x256xf32> to vector<128x256xbf16>
    %22 = vector.extract_strided_slice %21 {offsets = [0, 0], sizes = [128, 128], strides = [1, 1]} : vector<128x256xbf16> to vector<128x128xbf16>
    %c0_6 = arith.constant 0 : index
    %c0_7 = arith.constant 0 : index
    %c0_8 = arith.constant 0 : index
    %23 = vector.load %arg5[%c0_6, %c0_7, %c0_8] : memref<1x128x128xbf16, #tpu.memory_space<vmem>>, vector<1x128x128xbf16>
    %24 = vector.shape_cast %23 : vector<1x128x128xbf16> to vector<128x128xbf16>
    %25 = vector.shape_cast %22 : vector<128x128xbf16> to vector<1x128x128xbf16>
    tpu.vector_store %arg5[%c0_6, %c0_7, %c0_8], %25 {strides = array<i32>} : memref<1x128x128xbf16, #tpu.memory_space<vmem>>, vector<1x128x128xbf16>,
    %26 = vector.extract_strided_slice %21 {offsets = [0, 128], sizes = [128, 128], strides = [1, 1]} : vector<128x256xbf16> to vector<128x128xbf16>
    %c0_9 = arith.constant 0 : index
    %c0_10 = arith.constant 0 : index
    %c0_11 = arith.constant 0 : index
    %27 = vector.load %arg6[%c0_9, %c0_10, %c0_11] : memref<1x128x128xbf16, #tpu.memory_space<vmem>>, vector<1x128x128xbf16>
    %28 = vector.shape_cast %27 : vector<1x128x128xbf16> to vector<128x128xbf16>
    %29 = vector.shape_cast %26 : vector<128x128xbf16> to vector<1x128x128xbf16>
    tpu.vector_store %arg6[%c0_9, %c0_10, %c0_11], %29 {strides = array<i32>} : memref<1x128x128xbf16, #tpu.memory_space<vmem>>, vector<1x128x128xbf16>,
    return
  }
  func.func @transform_0(%arg0: i32, %arg1: i32) -> (i32, i32, i32) {
    %c0_i32 = arith.constant 0 : i32
    %c0_i32_0 = arith.constant 0 : i32
    return %arg0, %arg1, %c0_i32 : i32, i32, i32
  }
  func.func @transform_1(%arg0: i32, %arg1: i32) -> (i32, i32) {
    %c0_i32 = arith.constant 0 : i32
    %c0_i32_0 = arith.constant 0 : i32
    %c0_i32_1 = arith.constant 0 : i32
    return %c0_i32, %c0_i32_0 : i32, i32
  }
  func.func @transform_2(%arg0: i32, %arg1: i32) -> (i32, i32) {
    %c0_i32 = arith.constant 0 : i32
    %c0_i32_0 = arith.constant 0 : i32
    %c0_i32_1 = arith.constant 0 : i32
    return %c0_i32, %c0_i32_0 : i32, i32
  }
  func.func @transform_3(%arg0: i32, %arg1: i32) -> (i32, i32, i32) {
    %c0_i32 = arith.constant 0 : i32
    %c0_i32_0 = arith.constant 0 : i32
    return %arg0, %arg1, %c0_i32 : i32, i32, i32
  }
  func.func @transform_4(%arg0: i32, %arg1: i32) -> (i32, i32, i32) {
    %c0_i32 = arith.constant 0 : i32
    %c0_i32_0 = arith.constant 0 : i32
    return %arg0, %arg1, %c0_i32 : i32, i32, i32
  }
}

module attributes {stable_mosaic.version = 11 : i64} {
  func.func @_attn_kernel(%arg0: i32, %arg1: i32, %arg2: i32, %arg3: memref<1x512x128xf32, #tpu.memory_space<vmem>>, %arg4: memref<128x128xbf16, #tpu.memory_space<vmem>>, %arg5: memref<1x128xf32, #tpu.memory_space<vmem>>, %arg6: memref<1x256x128xbf16, #tpu.memory_space<vmem>>, %arg7: memref<1x256x128xbf16, #tpu.memory_space<vmem>>, %arg8: memref<128x128xbf16, #tpu.memory_space<vmem>>, %arg9: memref<1x128xf32, #tpu.memory_space<vmem>>, %arg10: memref<1x512x128xf32, #tpu.memory_space<vmem>>, %arg11: memref<512x128xbf16, #tpu.memory_space<vmem>>, %arg12: memref<512x1xf32, #tpu.memory_space<vmem>>, %arg13: memref<512x1xf32, #tpu.memory_space<vmem>>, %arg14: memref<512x128xf32, #tpu.memory_space<vmem>>) attributes {dimension_semantics = [#tpu.dimension_semantics<parallel>, #tpu.dimension_semantics<parallel>, #tpu.dimension_semantics<arbitrary>], iteration_bounds = array<i64: 2, 2, 1>, scalar_prefetch = 0 : i64, scratch_operands = 4 : i64, tpu.core_type = #tpu.core_type<tc>, window_params = [{transform_indices = @transform_0, window_bounds = array<i64: 1, 512, 128>}, {pipeline_mode = #tpu.pipeline_mode<synchronous>, transform_indices = @transform_1, window_bounds = array<i64: 128, 128>}, {pipeline_mode = #tpu.pipeline_mode<synchronous>, transform_indices = @transform_2, window_bounds = array<i64: 1, 128>}, {transform_indices = @transform_3, window_bounds = array<i64: 1, 256, 128>}, {transform_indices = @transform_4, window_bounds = array<i64: 1, 256, 128>}, {pipeline_mode = #tpu.pipeline_mode<synchronous>, transform_indices = @transform_5, window_bounds = array<i64: 128, 128>}, {pipeline_mode = #tpu.pipeline_mode<synchronous>, transform_indices = @transform_6, window_bounds = array<i64: 1, 128>}, {transform_indices = @transform_7, window_bounds = array<i64: 1, 512, 128>}]} {
    %c0_i32 = arith.constant 0 : i32
    %0 = arith.cmpi eq, %arg2, %c0_i32 : i32
    %1 = arith.extui %0 : i1 to i32
    %c0_i32_0 = arith.constant 0 : i32
    %2 = arith.cmpi ne, %1, %c0_i32_0 : i32
    scf.if %2 {
      %c0_25 = arith.constant 0 : index
      %c0_26 = arith.constant 0 : index
      %c0_27 = arith.constant 0 : index
      %35 = vector.load %arg3[%c0_25, %c0_26, %c0_27] : memref<1x512x128xf32, #tpu.memory_space<vmem>>, vector<1x512x128xf32>
      %36 = vector.shape_cast %35 : vector<1x512x128xf32> to vector<512x128xf32>
      %37 = arith.truncf %36 : vector<512x128xf32> to vector<512x128xbf16>
      %c0_28 = arith.constant 0 : index
      %c0_29 = arith.constant 0 : index
      %38 = vector.load %arg4[%c0_28, %c0_29] : memref<128x128xbf16, #tpu.memory_space<vmem>>, vector<128x128xbf16>
      %cst_30 = arith.constant dense<0.000000e+00> : vector<512x128xf32>
      %39 = tpu.matmul %37, %38, %cst_30 {dimension_numbers = #tpu.dot_dimension_numbers<[1], [0], [0], [1], [0, 0, 1, 1], [], []>} : vector<512x128xbf16>, vector<128x128xbf16>, vector<512x128xf32> -> vector<512x128xf32>
      %c0_31 = arith.constant 0 : index
      %c0_32 = arith.constant 0 : index
      %40 = vector.load %arg5[%c0_31, %c0_32] : memref<1x128xf32, #tpu.memory_space<vmem>>, vector<1x128xf32>
      %41 = vector.broadcast %40 : vector<1x128xf32> to vector<512x128xf32>
      %42 = arith.addf %39, %41 : vector<512x128xf32>
      %43 = arith.truncf %42 : vector<512x128xf32> to vector<512x128xbf16>
      %c0_33 = arith.constant 0 : index
      %c0_34 = arith.constant 0 : index
      %44 = vector.load %arg11[%c0_33, %c0_34] : memref<512x128xbf16, #tpu.memory_space<vmem>>, vector<512x128xbf16>
      tpu.vector_store %arg11[%c0_33, %c0_34], %43 {strides = array<i32>} : memref<512x128xbf16, #tpu.memory_space<vmem>>, vector<512x128xbf16>,
      %cst_35 = arith.constant 0xFF800000 : f32
      %45 = vector.broadcast %cst_35 : f32 to vector<512x1xf32>
      %c0_36 = arith.constant 0 : index
      %c0_37 = arith.constant 0 : index
      %46 = vector.load %arg12[%c0_36, %c0_37] : memref<512x1xf32, #tpu.memory_space<vmem>>, vector<512x1xf32>
      tpu.vector_store %arg12[%c0_36, %c0_37], %45 {strides = array<i32>} : memref<512x1xf32, #tpu.memory_space<vmem>>, vector<512x1xf32>,
      %cst_38 = arith.constant 0.000000e+00 : f32
      %47 = vector.broadcast %cst_38 : f32 to vector<512x1xf32>
      %c0_39 = arith.constant 0 : index
      %c0_40 = arith.constant 0 : index
      %48 = vector.load %arg13[%c0_39, %c0_40] : memref<512x1xf32, #tpu.memory_space<vmem>>, vector<512x1xf32>
      tpu.vector_store %arg13[%c0_39, %c0_40], %47 {strides = array<i32>} : memref<512x1xf32, #tpu.memory_space<vmem>>, vector<512x1xf32>,
      %cst_41 = arith.constant 0.000000e+00 : f32
      %49 = vector.broadcast %cst_41 : f32 to vector<512x128xf32>
      %c0_42 = arith.constant 0 : index
      %c0_43 = arith.constant 0 : index
      %50 = vector.load %arg14[%c0_42, %c0_43] : memref<512x128xf32, #tpu.memory_space<vmem>>, vector<512x128xf32>
      tpu.vector_store %arg14[%c0_42, %c0_43], %49 {strides = array<i32>} : memref<512x128xf32, #tpu.memory_space<vmem>>, vector<512x128xf32>,
    } else {
    }
    %c0 = arith.constant 0 : index
    %c0_1 = arith.constant 0 : index
    %3 = vector.load %arg11[%c0, %c0_1] : memref<512x128xbf16, #tpu.memory_space<vmem>>, vector<512x128xbf16>
    %c0_2 = arith.constant 0 : index
    %c0_3 = arith.constant 0 : index
    %c0_4 = arith.constant 0 : index
    %4 = vector.load %arg6[%c0_2, %c0_3, %c0_4] : memref<1x256x128xbf16, #tpu.memory_space<vmem>>, vector<1x256x128xbf16>
    %5 = vector.shape_cast %4 : vector<1x256x128xbf16> to vector<256x128xbf16>
    %cst = arith.constant dense<0.000000e+00> : vector<512x256xf32>
    %6 = tpu.matmul %3, %5, %cst {dimension_numbers = #tpu.dot_dimension_numbers<[1], [1], [0], [0], [0, 0, 1, 0], [], []>} : vector<512x128xbf16>, vector<256x128xbf16>, vector<512x256xf32> -> vector<512x256xf32>
    %c0_5 = arith.constant 0 : index
    %c0_6 = arith.constant 0 : index
    %7 = vector.load %arg12[%c0_5, %c0_6] : memref<512x1xf32, #tpu.memory_space<vmem>>, vector<512x1xf32>
    %cst_7 = arith.constant dense<0xFF800000> : vector<512xf32>
    %8 = vector.multi_reduction <maximumf>, %6, %cst_7 [1] : vector<512x256xf32> to vector<512xf32>
    %9 = vector.shape_cast %8 : vector<512xf32> to vector<512x1xf32>
    %10 = arith.maximumf %7, %9 : vector<512x1xf32>
    %11 = arith.subf %7, %10 : vector<512x1xf32>
    %12 = math.exp %11 : vector<512x1xf32>
    %13 = vector.broadcast %10 : vector<512x1xf32> to vector<512x256xf32>
    %14 = arith.subf %6, %13 : vector<512x256xf32>
    %15 = math.exp %14 : vector<512x256xf32>
    %c0_8 = arith.constant 0 : index
    %c0_9 = arith.constant 0 : index
    %16 = vector.load %arg13[%c0_8, %c0_9] : memref<512x1xf32, #tpu.memory_space<vmem>>, vector<512x1xf32>
    %17 = arith.mulf %12, %16 : vector<512x1xf32>
    %cst_10 = arith.constant dense<0.000000e+00> : vector<512xf32>
    %18 = vector.multi_reduction <add>, %15, %cst_10 [1] : vector<512x256xf32> to vector<512xf32>
    %19 = vector.shape_cast %18 : vector<512xf32> to vector<512x1xf32>
    %20 = arith.addf %17, %19 : vector<512x1xf32>
    %c0_11 = arith.constant 0 : index
    %c0_12 = arith.constant 0 : index
    %21 = vector.load %arg13[%c0_11, %c0_12] : memref<512x1xf32, #tpu.memory_space<vmem>>, vector<512x1xf32>
    tpu.vector_store %arg13[%c0_11, %c0_12], %20 {strides = array<i32>} : memref<512x1xf32, #tpu.memory_space<vmem>>, vector<512x1xf32>,
    %c0_13 = arith.constant 0 : index
    %c0_14 = arith.constant 0 : index
    %22 = vector.load %arg14[%c0_13, %c0_14] : memref<512x128xf32, #tpu.memory_space<vmem>>, vector<512x128xf32>
    %23 = vector.broadcast %12 : vector<512x1xf32> to vector<512x128xf32>
    %24 = arith.mulf %23, %22 : vector<512x128xf32>
    %25 = arith.truncf %15 : vector<512x256xf32> to vector<512x256xbf16>
    %c0_15 = arith.constant 0 : index
    %c0_16 = arith.constant 0 : index
    %c0_17 = arith.constant 0 : index
    %26 = vector.load %arg7[%c0_15, %c0_16, %c0_17] : memref<1x256x128xbf16, #tpu.memory_space<vmem>>, vector<1x256x128xbf16>
    %27 = vector.shape_cast %26 : vector<1x256x128xbf16> to vector<256x128xbf16>
    %cst_18 = arith.constant dense<0.000000e+00> : vector<512x128xf32>
    %28 = tpu.matmul %25, %27, %cst_18 {dimension_numbers = #tpu.dot_dimension_numbers<[1], [0], [0], [1], [0, 0, 1, 1], [], []>} : vector<512x256xbf16>, vector<256x128xbf16>, vector<512x128xf32> -> vector<512x128xf32>
    %29 = arith.addf %24, %28 : vector<512x128xf32>
    %c0_19 = arith.constant 0 : index
    %c0_20 = arith.constant 0 : index
    %30 = vector.load %arg14[%c0_19, %c0_20] : memref<512x128xf32, #tpu.memory_space<vmem>>, vector<512x128xf32>
    tpu.vector_store %arg14[%c0_19, %c0_20], %29 {strides = array<i32>} : memref<512x128xf32, #tpu.memory_space<vmem>>, vector<512x128xf32>,
    %c0_21 = arith.constant 0 : index
    %c0_22 = arith.constant 0 : index
    %31 = vector.load %arg12[%c0_21, %c0_22] : memref<512x1xf32, #tpu.memory_space<vmem>>, vector<512x1xf32>
    tpu.vector_store %arg12[%c0_21, %c0_22], %10 {strides = array<i32>} : memref<512x1xf32, #tpu.memory_space<vmem>>, vector<512x1xf32>,
    %c0_i32_23 = arith.constant 0 : i32
    %32 = arith.cmpi eq, %arg2, %c0_i32_23 : i32
    %33 = arith.extui %32 : i1 to i32
    %c0_i32_24 = arith.constant 0 : i32
    %34 = arith.cmpi ne, %33, %c0_i32_24 : i32
    scf.if %34 {
      %c0_25 = arith.constant 0 : index
      %c0_26 = arith.constant 0 : index
      %35 = vector.load %arg14[%c0_25, %c0_26] : memref<512x128xf32, #tpu.memory_space<vmem>>, vector<512x128xf32>
      %c0_27 = arith.constant 0 : index
      %c0_28 = arith.constant 0 : index
      %36 = vector.load %arg13[%c0_27, %c0_28] : memref<512x1xf32, #tpu.memory_space<vmem>>, vector<512x1xf32>
      %37 = tpu.reciprocal %36 : vector<512x1xf32> -> vector<512x1xf32>
      %38 = vector.broadcast %37 : vector<512x1xf32> to vector<512x128xf32>
      %39 = arith.mulf %35, %38 : vector<512x128xf32>
      %40 = arith.truncf %39 : vector<512x128xf32> to vector<512x128xbf16>
      %c0_29 = arith.constant 0 : index
      %c0_30 = arith.constant 0 : index
      %41 = vector.load %arg8[%c0_29, %c0_30] : memref<128x128xbf16, #tpu.memory_space<vmem>>, vector<128x128xbf16>
      %cst_31 = arith.constant dense<0.000000e+00> : vector<512x128xf32>
      %42 = tpu.matmul %40, %41, %cst_31 {dimension_numbers = #tpu.dot_dimension_numbers<[1], [0], [0], [1], [0, 0, 1, 1], [], []>} : vector<512x128xbf16>, vector<128x128xbf16>, vector<512x128xf32> -> vector<512x128xf32>
      %c0_32 = arith.constant 0 : index
      %c0_33 = arith.constant 0 : index
      %43 = vector.load %arg9[%c0_32, %c0_33] : memref<1x128xf32, #tpu.memory_space<vmem>>, vector<1x128xf32>
      %44 = vector.broadcast %43 : vector<1x128xf32> to vector<512x128xf32>
      %45 = arith.addf %42, %44 : vector<512x128xf32>
      %c0_34 = arith.constant 0 : index
      %c0_35 = arith.constant 0 : index
      %c0_36 = arith.constant 0 : index
      %46 = vector.load %arg3[%c0_34, %c0_35, %c0_36] : memref<1x512x128xf32, #tpu.memory_space<vmem>>, vector<1x512x128xf32>
      %47 = vector.shape_cast %46 : vector<1x512x128xf32> to vector<512x128xf32>
      %48 = arith.addf %45, %47 : vector<512x128xf32>
      %c0_37 = arith.constant 0 : index
      %c0_38 = arith.constant 0 : index
      %c0_39 = arith.constant 0 : index
      %49 = vector.load %arg10[%c0_37, %c0_38, %c0_39] : memref<1x512x128xf32, #tpu.memory_space<vmem>>, vector<1x512x128xf32>
      %50 = vector.shape_cast %49 : vector<1x512x128xf32> to vector<512x128xf32>
      %51 = vector.shape_cast %48 : vector<512x128xf32> to vector<1x512x128xf32>
      tpu.vector_store %arg10[%c0_37, %c0_38, %c0_39], %51 {strides = array<i32>} : memref<1x512x128xf32, #tpu.memory_space<vmem>>, vector<1x512x128xf32>,
    } else {
    }
    return
  }
  func.func @transform_0(%arg0: i32, %arg1: i32, %arg2: i32) -> (i32, i32, i32) {
    %c0_i32 = arith.constant 0 : i32
    %c0_i32_0 = arith.constant 0 : i32
    return %arg0, %arg1, %c0_i32 : i32, i32, i32
  }
  func.func @transform_1(%arg0: i32, %arg1: i32, %arg2: i32) -> (i32, i32) {
    %c0_i32 = arith.constant 0 : i32
    %c0_i32_0 = arith.constant 0 : i32
    %c0_i32_1 = arith.constant 0 : i32
    return %c0_i32, %c0_i32_0 : i32, i32
  }
  func.func @transform_2(%arg0: i32, %arg1: i32, %arg2: i32) -> (i32, i32) {
    %c0_i32 = arith.constant 0 : i32
    %c0_i32_0 = arith.constant 0 : i32
    %c0_i32_1 = arith.constant 0 : i32
    return %c0_i32, %c0_i32_0 : i32, i32
  }
  func.func @transform_3(%arg0: i32, %arg1: i32, %arg2: i32) -> (i32, i32, i32) {
    %c0_i32 = arith.constant 0 : i32
    %c0_i32_0 = arith.constant 0 : i32
    return %arg0, %arg2, %c0_i32 : i32, i32, i32
  }
  func.func @transform_4(%arg0: i32, %arg1: i32, %arg2: i32) -> (i32, i32, i32) {
    %c0_i32 = arith.constant 0 : i32
    %c0_i32_0 = arith.constant 0 : i32
    return %arg0, %arg2, %c0_i32 : i32, i32, i32
  }
  func.func @transform_5(%arg0: i32, %arg1: i32, %arg2: i32) -> (i32, i32) {
    %c0_i32 = arith.constant 0 : i32
    %c0_i32_0 = arith.constant 0 : i32
    %c0_i32_1 = arith.constant 0 : i32
    return %c0_i32, %c0_i32_0 : i32, i32
  }
  func.func @transform_6(%arg0: i32, %arg1: i32, %arg2: i32) -> (i32, i32) {
    %c0_i32 = arith.constant 0 : i32
    %c0_i32_0 = arith.constant 0 : i32
    %c0_i32_1 = arith.constant 0 : i32
    return %c0_i32, %c0_i32_0 : i32, i32
  }
  func.func @transform_7(%arg0: i32, %arg1: i32, %arg2: i32) -> (i32, i32, i32) {
    %c0_i32 = arith.constant 0 : i32
    %c0_i32_0 = arith.constant 0 : i32
    return %arg0, %arg1, %c0_i32 : i32, i32, i32
  }
}

</mosaic_0001>

<llo_original>
// kernel: nonlocal_block_3d.2
$region0: #{nonlocal_block_3d.2}
  #allocation0 [shape = 'u32[]', space=smem, size = 0x4, offset = 0x4, fixed_abs, tag = 'smem constant byte address 0x4 - core index']
  #allocation1 [shape = 'u32[72,128]{1,0:T(1,128)}', space=vmem, size = 0x9000, scoped, tag = 'internal scratch']
  %s0 = inlined_call_operand.vmem [shape: f32[2,1024,128], index: 0, kind: input, shape index: {}]
  %s1 = inlined_call_operand.vmem [shape: bf16[128,256], index: 1, kind: input, shape index: {}]
  %s2 = inlined_call_operand.vmem [shape: f32[1,256], index: 2, kind: input, shape index: {}]
  %s3 = inlined_call_operand.vmem [shape: bf16[2,256,128], index: 3, kind: output, shape index: {0}]
  %s4 = inlined_call_operand.vmem [shape: bf16[2,256,128], index: 4, kind: output, shape index: {1}]
  %5 = xla_tuple %s3, %s4
  %s6 = sld [smem:[#allocation0]]
  $region53: #{nonlocal_block_3d.2} parent=0
    _
  %s8 = ssub.s32 1, %s6
  %s9 = scalar_select 0, %s8, %s6
  loop: start=0, step=1, limit=6
  $region2: #{nonlocal_block_3d.2} parent=0 // loop_pre_header
    _
  $region3: #{nonlocal_block_3d.2} parent=0 // loop_header
    %s11 = sphi 0, %s15
    %p12 = scmp.ge.s32.totalorder %s11, 6
    %s18 = sphi 0, %s30
    %s19 = sphi 0, %s26
    %s20 = sphi 0, %s18
    %s21 = sphi 0, %s19
    %s22 = sphi 0, %s20
    %s23 = sphi 0, %s21
    %s35 = sphi 0, %s37
    %s38 = sphi 0, %s35
    %s39 = sphi 0, %s38
    %s55 = sphi 0, %s39
    %s59 = sphi 0, %s59
    %s61 = sphi 0, %s59
    %s62 = sphi 0, %s61
    %s76 = sphi 0, %s62
    %s80 = sphi 0, %s80
    %s82 = sphi 0, %s80
    %s83 = sphi 0, %s82
    %s97 = sphi 0, %s83
    %s105 = sphi 0, %s107
    %s108 = sphi 0, %s105
    %s109 = sphi 0, %s108
    %s125 = sphi 0, %s109
    %s133 = sphi 0, %s135
    %s136 = sphi 0, %s133
    %s137 = sphi 0, %s136
    %s153 = sphi 0, %s137
  $region4: #{nonlocal_block_3d.2} parent=0 // loop_header_branch
    %14 = sbr.rel (%p12) target = $region8
  $region5: #{nonlocal_block_3d.2} parent=0 // loop_body
    %s16 = ssub.s32 %s11, 1
    %s17 = ssub.s32 %s11, 2
    %s24 = sadd.s32 1, %s19
    %p25 = scmp.ge.s32.totalorder %s24, 2
    %s26 = scalar_select %p25, 0, %s24
    %s27 = sadd.s32 1, %s18
    %s28 = scalar_select %p25, %s27, %s18
    %p29 = scmp.ge.s32.totalorder %s28, 2
    %s30 = scalar_select %p29, 0, %s28
    %s31 = ssub.s32 %s18, %s30
    %s32 = ssub.s32 %s19, %s26
    %s33 = sor.u32 %s31, %s32
    %p34 = scmp.eq.s32.totalorder %s33, 0
    %s36 = sadd.s32 %s35, 1
    %s37 = scalar_select %p34, %s35, %s36
    %p40 = pneg %p34
    %p41 = scmp.eq.s32.totalorder %s11, 3
    %p42 = por %p40, %p41
    %p43 = scmp.ne.s32.totalorder %s35, %s38
    %p44 = scmp.eq.s32.totalorder %s11, 0
    %p45 = por %p43, %p44
    %p46 = scmp.ne.s32.totalorder %s35, %s38
    %p47 = scmp.eq.s32.totalorder %s16, 3
    %p48 = por %p46, %p47
    %p49 = scmp.ne.s32.totalorder %s38, %s39
    %p50 = scmp.eq.s32.totalorder %s16, 0
    %p51 = por %p49, %p50
    %p52 = scmp.ne.s32.totalorder %s38, %s39
    %p53 = scmp.eq.s32.totalorder %s17, 3
    %p54 = por %p52, %p53
    %p56 = scmp.ne.s32.totalorder %s39, %s55
    %p57 = scmp.eq.s32.totalorder %s17, 0
    %p58 = por %p56, %p57
    %s60 = sadd.s32 %s59, 1
    %p63 = scmp.eq.s32.totalorder %s11, 3
    %p64 = scmp.ne.s32.totalorder %s59, %s61
    %p65 = scmp.eq.s32.totalorder %s11, 0
    %p66 = por %p64, %p65
    %p67 = scmp.ne.s32.totalorder %s59, %s61
    %p68 = scmp.eq.s32.totalorder %s16, 3
    %p69 = por %p67, %p68
    %p70 = scmp.ne.s32.totalorder %s61, %s62
    %p71 = scmp.eq.s32.totalorder %s16, 0
    %p72 = por %p70, %p71
    %p73 = scmp.ne.s32.totalorder %s61, %s62
    %p74 = scmp.eq.s32.totalorder %s17, 3
    %p75 = por %p73, %p74
    %p77 = scmp.ne.s32.totalorder %s62, %s76
    %p78 = scmp.eq.s32.totalorder %s17, 0
    %p79 = por %p77, %p78
    %s81 = sadd.s32 %s80, 1
    %p84 = scmp.eq.s32.totalorder %s11, 3
    %p85 = scmp.ne.s32.totalorder %s80, %s82
    %p86 = scmp.eq.s32.totalorder %s11, 0
    %p87 = por %p85, %p86
    %p88 = scmp.ne.s32.totalorder %s80, %s82
    %p89 = scmp.eq.s32.totalorder %s16, 3
    %p90 = por %p88, %p89
    %p91 = scmp.ne.s32.totalorder %s82, %s83
    %p92 = scmp.eq.s32.totalorder %s16, 0
    %p93 = por %p91, %p92
    %p94 = scmp.ne.s32.totalorder %s82, %s83
    %p95 = scmp.eq.s32.totalorder %s17, 3
    %p96 = por %p94, %p95
    %p98 = scmp.ne.s32.totalorder %s83, %s97
    %p99 = scmp.eq.s32.totalorder %s17, 0
    %p100 = por %p98, %p99
    %s101 = ssub.s32 %s18, %s30
    %s102 = ssub.s32 %s19, %s26
    %s103 = sor.u32 %s101, %s102
    %p104 = scmp.eq.s32.totalorder %s103, 0
    %s106 = sadd.s32 %s105, 1
    %s107 = scalar_select %p104, %s105, %s106
    %p110 = pneg %p104
    %p111 = scmp.eq.s32.totalorder %s11, 3
    %p112 = por %p110, %p111
    %p113 = scmp.ne.s32.totalorder %s105, %s108
    %p114 = scmp.eq.s32.totalorder %s11, 0
    %p115 = por %p113, %p114
    %p116 = scmp.ne.s32.totalorder %s105, %s108
    %p117 = scmp.eq.s32.totalorder %s16, 3
    %p118 = por %p116, %p117
    %p119 = scmp.ne.s32.totalorder %s108, %s109
    %p120 = scmp.eq.s32.totalorder %s16, 0
    %p121 = por %p119, %p120
    %p122 = scmp.ne.s32.totalorder %s108, %s109
    %p123 = scmp.eq.s32.totalorder %s17, 3
    %p124 = por %p122, %p123
    %p126 = scmp.ne.s32.totalorder %s109, %s125
    %p127 = scmp.eq.s32.totalorder %s17, 0
    %p128 = por %p126, %p127
    %s129 = ssub.s32 %s18, %s30
    %s130 = ssub.s32 %s19, %s26
    %s131 = sor.u32 %s129, %s130
    %p132 = scmp.eq.s32.totalorder %s131, 0
    %s134 = sadd.s32 %s133, 1
    %s135 = scalar_select %p132, %s133, %s134
    %p138 = pneg %p132
    %p139 = scmp.eq.s32.totalorder %s11, 3
    %p140 = por %p138, %p139
    %p141 = scmp.ne.s32.totalorder %s133, %s136
    %p142 = scmp.eq.s32.totalorder %s11, 0
    %p143 = por %p141, %p142
    %p144 = scmp.ne.s32.totalorder %s133, %s136
    %p145 = scmp.eq.s32.totalorder %s16, 3
    %p146 = por %p144, %p145
    %p147 = scmp.ne.s32.totalorder %s136, %s137
    %p148 = scmp.eq.s32.totalorder %s16, 0
    %p149 = por %p147, %p148
    %p150 = scmp.ne.s32.totalorder %s136, %s137
    %p151 = scmp.eq.s32.totalorder %s17, 3
    %p152 = por %p150, %p151
    %p154 = scmp.ne.s32.totalorder %s137, %s153
    %p155 = scmp.eq.s32.totalorder %s17, 0
    %p156 = por %p154, %p155
    %p157 = scmp.le.s32.totalorder 1, %s11
    %p158 = scmp.lt.s32.totalorder %s11, 5
    %p159 = pnand %p157, %p158
    %p160 = pneg %p159
    // Predicated region
    $region9: #{nonlocal_block_3d.2} parent=5 // pred_check
      _
    $region10: #{nonlocal_block_3d.2} parent=5 // pred_check_branch
      %162 = sbr.rel (%p159) target = $region12
    $region11: #{nonlocal_block_3d.2} parent=5 // pred_region
      %s163 = ssub.s32 %s11, 1
      // Predicated region
      $region13: #{nonlocal_block_3d.2} parent=11 // pred_check
        %p164 = pneg %p72
      $region14: #{nonlocal_block_3d.2} parent=11 // pred_check_branch
        %166 = sbr.rel (%p164) target = $region16
      $region15: #{nonlocal_block_3d.2} parent=11 // pred_region
        _
      $region16: #{nonlocal_block_3d.2} parent=11 // pred_fallthru
        _
      // Predicated region
      $region17: #{nonlocal_block_3d.2} parent=11 // pred_check
        %p167 = pneg %p93
      $region18: #{nonlocal_block_3d.2} parent=11 // pred_check_branch
        %169 = sbr.rel (%p167) target = $region20
      $region19: #{nonlocal_block_3d.2} parent=11 // pred_region
        _
      $region20: #{nonlocal_block_3d.2} parent=11 // pred_fallthru
        _
    $region12: #{nonlocal_block_3d.2} parent=5 // pred_fallthru
      _
    %p170 = scmp.lt.s32.totalorder %s11, 4
    // Predicated region
    $region21: #{nonlocal_block_3d.2} parent=5 // pred_check
      %p171 = pneg %p170
    $region22: #{nonlocal_block_3d.2} parent=5 // pred_check_branch
      %173 = sbr.rel (%p171) target = $region24
    $region23: #{nonlocal_block_3d.2} parent=5 // pred_region
      // Predicated region
      $region25: #{nonlocal_block_3d.2} parent=23 // pred_check
        %p174 = pneg %p45
      $region26: #{nonlocal_block_3d.2} parent=23 // pred_check_branch
        %176 = sbr.rel (%p174) target = $region28
      $region27: #{nonlocal_block_3d.2} parent=23 // pred_region
        %s177 = smul.u32 64, %s19
        %p178 = scmp.lt.s32.totalorder %s18, 1
        %s179 = scalar_select %p178, %s18, 1
        %p180 = scmp.lt.s32.totalorder %s177, 127
        %s181 = scalar_select %p180, %s177, 127
        %s182 = smul.addr %s179, 128
        %s183 = sadd.s32 %s181, %s182
        %s184 = smul.addr %s183, 8
        %s185 = scalar_lea.vmem %s0, %s184
        %s186 = smul.u32 64, %s19
      $region28: #{nonlocal_block_3d.2} parent=23 // pred_fallthru
        _
    $region24: #{nonlocal_block_3d.2} parent=5 // pred_fallthru
      _
    %p187 = scmp.le.s32.totalorder 1, %s11
    %p188 = scmp.lt.s32.totalorder %s11, 5
    %p189 = pnand %p187, %p188
    %p190 = pneg %p189
    // Predicated region
    $region29: #{nonlocal_block_3d.2} parent=5 // pred_check
      _
    $region30: #{nonlocal_block_3d.2} parent=5 // pred_check_branch
      %192 = sbr.rel (%p189) target = $region32
    $region31: #{nonlocal_block_3d.2} parent=5 // pred_region
      %s193 = ssub.s32 %s11, 1
      %s194 = smul.u32 64, %s21
      %p195 = scmp.lt.s32.totalorder %s20, 1
      %s196 = scalar_select %p195, %s20, 1
      %p197 = scmp.lt.s32.totalorder %s194, 127
      %s198 = scalar_select %p197, %s194, 127
      %s199 = smul.addr %s196, 128
      %s200 = sadd.s32 %s198, %s199
      %s201 = smul.addr %s200, 8
      %s202 = scalar_lea.vmem %s0, %s201
      %p203 = pneg %p51
      %p204 = pneg %p48
      %p205 = pneg %p72
      %p206 = pneg %p69
      %p207 = pneg %p93
      %p208 = pneg %p90
      %p209 = pneg %p121
      %p210 = pneg %p118
      %s211 = smul.u32 16, %s21
      %p212 = scmp.lt.s32.totalorder %s20, 1
      %s213 = scalar_select %p212, %s20, 1
      %p214 = scmp.lt.s32.totalorder %s211, 31
      %s215 = scalar_select %p214, %s211, 31
      %s216 = smul.addr %s213, 32
      %s217 = sadd.s32 %s215, %s216
      %s218 = smul.addr %s217, 4
      %s219 = scalar_lea.vmem %s3, %s218
      %p220 = pneg %p149
      %p221 = pneg %p146
      %s222 = smul.u32 16, %s21
      %p223 = scmp.lt.s32.totalorder %s20, 1
      %s224 = scalar_select %p223, %s20, 1
      %p225 = scmp.lt.s32.totalorder %s222, 31
      %s226 = scalar_select %p225, %s222, 31
      %s227 = smul.addr %s224, 32
      %s228 = sadd.s32 %s226, %s227
      %s229 = smul.addr %s228, 4
      %s230 = scalar_lea.vmem %s4, %s229
      %s231 = smul.u32 64, %s21
      %p232 = scmp.lt.s32.totalorder %s20, 1
      %s233 = scalar_select %p232, %s20, 1
      %p234 = scmp.lt.s32.totalorder %s231, 127
      %s235 = scalar_select %p234, %s231, 127
      %s236 = smul.addr %s233, 128
      %s237 = sadd.s32 %s235, %s236
      %s238 = smul.addr %s237, 8
      %s239 = scalar_lea.vmem %s0, %s238
      %s240 = smul.u32 64, %s21
      %s241 = smul.u32 16, %s21
      %p242 = scmp.lt.s32.totalorder %s20, 1
      %s243 = scalar_select %p242, %s20, 1
      %p244 = scmp.lt.s32.totalorder %s241, 31
      %s245 = scalar_select %p244, %s241, 31
      %s246 = smul.addr %s243, 32
      %s247 = sadd.s32 %s245, %s246
      %s248 = smul.addr %s247, 4
      %s249 = scalar_lea.vmem %s3, %s248
      %s250 = smul.u32 16, %s21
      %s251 = smul.u32 16, %s21
      %p252 = scmp.lt.s32.totalorder %s20, 1
      %s253 = scalar_select %p252, %s20, 1
      %p254 = scmp.lt.s32.totalorder %s251, 31
      %s255 = scalar_select %p254, %s251, 31
      %s256 = smul.addr %s253, 32
      %s257 = sadd.s32 %s255, %s256
      %s258 = smul.addr %s257, 4
      %s259 = scalar_lea.vmem %s4, %s258
      %s260 = smul.u32 16, %s21
      %v261 = vld [vmem:[%s239] sm:$0xff]
      %v262 = vld [vmem:[%s239 + $0x8] sm:$0xff]
      %v263 = vld [vmem:[%s239 + $0x10] sm:$0xff]
      %v264 = vld [vmem:[%s239 + $0x18] sm:$0xff]
      %v265 = vld [vmem:[%s239 + $0x20] sm:$0xff]
      %v266 = vld [vmem:[%s239 + $0x28] sm:$0xff]
      %v267 = vld [vmem:[%s239 + $0x30] sm:$0xff]
      %v268 = vld [vmem:[%s239 + $0x38] sm:$0xff]
      %v269 = vld [vmem:[%s239 + $0x40] sm:$0xff]
      %v270 = vld [vmem:[%s239 + $0x48] sm:$0xff]
      %v271 = vld [vmem:[%s239 + $0x50] sm:$0xff]
      %v272 = vld [vmem:[%s239 + $0x58] sm:$0xff]
      %v273 = vld [vmem:[%s239 + $0x60] sm:$0xff]
      %v274 = vld [vmem:[%s239 + $0x68] sm:$0xff]
      %v275 = vld [vmem:[%s239 + $0x70] sm:$0xff]
      %v276 = vld [vmem:[%s239 + $0x78] sm:$0xff]
      %v277 = vld [vmem:[%s239 + $0x80] sm:$0xff]
      %v278 = vld [vmem:[%s239 + $0x88] sm:$0xff]
      %v279 = vld [vmem:[%s239 + $0x90] sm:$0xff]
      %v280 = vld [vmem:[%s239 + $0x98] sm:$0xff]
      %v281 = vld [vmem:[%s239 + $0xa0] sm:$0xff]
      %v282 = vld [vmem:[%s239 + $0xa8] sm:$0xff]
      %v283 = vld [vmem:[%s239 + $0xb0] sm:$0xff]
      %v284 = vld [vmem:[%s239 + $0xb8] sm:$0xff]
      %v285 = vld [vmem:[%s239 + $0xc0] sm:$0xff]
      %v286 = vld [vmem:[%s239 + $0xc8] sm:$0xff]
      %v287 = vld [vmem:[%s239 + $0xd0] sm:$0xff]
      %v288 = vld [vmem:[%s239 + $0xd8] sm:$0xff]
      %v289 = vld [vmem:[%s239 + $0xe0] sm:$0xff]
      %v290 = vld [vmem:[%s239 + $0xe8] sm:$0xff]
      %v291 = vld [vmem:[%s239 + $0xf0] sm:$0xff]
      %v292 = vld [vmem:[%s239 + $0xf8] sm:$0xff]
      %v293 = vld [vmem:[%s239 + $0x100] sm:$0xff]
      %v294 = vld [vmem:[%s239 + $0x108] sm:$0xff]
      %v295 = vld [vmem:[%s239 + $0x110] sm:$0xff]
      %v296 = vld [vmem:[%s239 + $0x118] sm:$0xff]
      %v297 = vld [vmem:[%s239 + $0x120] sm:$0xff]
      %v298 = vld [vmem:[%s239 + $0x128] sm:$0xff]
      %v299 = vld [vmem:[%s239 + $0x130] sm:$0xff]
      %v300 = vld [vmem:[%s239 + $0x138] sm:$0xff]
      %v301 = vld [vmem:[%s239 + $0x140] sm:$0xff]
      %v302 = vld [vmem:[%s239 + $0x148] sm:$0xff]
      %v303 = vld [vmem:[%s239 + $0x150] sm:$0xff]
      %v304 = vld [vmem:[%s239 + $0x158] sm:$0xff]
      %v305 = vld [vmem:[%s239 + $0x160] sm:$0xff]
      %v306 = vld [vmem:[%s239 + $0x168] sm:$0xff]
      %v307 = vld [vmem:[%s239 + $0x170] sm:$0xff]
      %v308 = vld [vmem:[%s239 + $0x178] sm:$0xff]
      %v309 = vld [vmem:[%s239 + $0x180] sm:$0xff]
      %v310 = vld [vmem:[%s239 + $0x188] sm:$0xff]
      %v311 = vld [vmem:[%s239 + $0x190] sm:$0xff]
      %v312 = vld [vmem:[%s239 + $0x198] sm:$0xff]
      %v313 = vld [vmem:[%s239 + $0x1a0] sm:$0xff]
      %v314 = vld [vmem:[%s239 + $0x1a8] sm:$0xff]
      %v315 = vld [vmem:[%s239 + $0x1b0] sm:$0xff]
      %v316 = vld [vmem:[%s239 + $0x1b8] sm:$0xff]
      %v317 = vld [vmem:[%s239 + $0x1c0] sm:$0xff]
      %v318 = vld [vmem:[%s239 + $0x1c8] sm:$0xff]
      %v319 = vld [vmem:[%s239 + $0x1d0] sm:$0xff]
      %v320 = vld [vmem:[%s239 + $0x1d8] sm:$0xff]
      %v321 = vld [vmem:[%s239 + $0x1e0] sm:$0xff]
      %v322 = vld [vmem:[%s239 + $0x1e8] sm:$0xff]
      %v323 = vld [vmem:[%s239 + $0x1f0] sm:$0xff]
      %v324 = vld [vmem:[%s239 + $0x1f8] sm:$0xff]
      %v325 = vpack.c.bf16 %v262, %v261
      %v326 = vpack.c.bf16 %v264, %v263
      %v327 = vpack.c.bf16 %v266, %v265
      %v328 = vpack.c.bf16 %v268, %v267
      %v329 = vpack.c.bf16 %v270, %v269
      %v330 = vpack.c.bf16 %v272, %v271
      %v331 = vpack.c.bf16 %v274, %v273
      %v332 = vpack.c.bf16 %v276, %v275
      %v333 = vpack.c.bf16 %v278, %v277
      %v334 = vpack.c.bf16 %v280, %v279
      %v335 = vpack.c.bf16 %v282, %v281
      %v336 = vpack.c.bf16 %v284, %v283
      %v337 = vpack.c.bf16 %v286, %v285
      %v338 = vpack.c.bf16 %v288, %v287
      %v339 = vpack.c.bf16 %v290, %v289
      %v340 = vpack.c.bf16 %v292, %v291
      %v341 = vpack.c.bf16 %v294, %v293
      %v342 = vpack.c.bf16 %v296, %v295
      %v343 = vpack.c.bf16 %v298, %v297
      %v344 = vpack.c.bf16 %v300, %v299
      %v345 = vpack.c.bf16 %v302, %v301
      %v346 = vpack.c.bf16 %v304, %v303
      %v347 = vpack.c.bf16 %v306, %v305
      %v348 = vpack.c.bf16 %v308, %v307
      %v349 = vpack.c.bf16 %v310, %v309
      %v350 = vpack.c.bf16 %v312, %v311
      %v351 = vpack.c.bf16 %v314, %v313
      %v352 = vpack.c.bf16 %v316, %v315
      %v353 = vpack.c.bf16 %v318, %v317
      %v354 = vpack.c.bf16 %v320, %v319
      %v355 = vpack.c.bf16 %v322, %v321
      %v356 = vpack.c.bf16 %v324, %v323
      %v357 = vld [vmem:[%s1] sm:$0xff]
      %v358 = vld [vmem:[%s1 + $0x8] sm:$0xff]
      %v359 = vld [vmem:[%s1 + $0x10] sm:$0xff]
      %v360 = vld [vmem:[%s1 + $0x18] sm:$0xff]
      %v361 = vld [vmem:[%s1 + $0x20] sm:$0xff]
      %v362 = vld [vmem:[%s1 + $0x28] sm:$0xff]
      %v363 = vld [vmem:[%s1 + $0x30] sm:$0xff]
      %v364 = vld [vmem:[%s1 + $0x38] sm:$0xff]
      %v365 = vld [vmem:[%s1 + $0x40] sm:$0xff]
      %v366 = vld [vmem:[%s1 + $0x48] sm:$0xff]
      %v367 = vld [vmem:[%s1 + $0x50] sm:$0xff]
      %v368 = vld [vmem:[%s1 + $0x58] sm:$0xff]
      %v369 = vld [vmem:[%s1 + $0x60] sm:$0xff]
      %v370 = vld [vmem:[%s1 + $0x68] sm:$0xff]
      %v371 = vld [vmem:[%s1 + $0x70] sm:$0xff]
      %v372 = vld [vmem:[%s1 + $0x78] sm:$0xff]
      %v373 = vld [vmem:[%s2] sm:$0x3]
      %v375 = vperm.slane %v373, 0
      %v376 = vperm.slane %v373, 1
      %v395 = vunpack.c.l.b16 %v357
      %v396 = vunpack.c.h.b16 %v357
      %v397 = vunpack.c.l.b16 %v358
      %v398 = vunpack.c.h.b16 %v358
      %v399 = vunpack.c.l.b16 %v359
      %v400 = vunpack.c.h.b16 %v359
      %v401 = vunpack.c.l.b16 %v360
      %v402 = vunpack.c.h.b16 %v360
      %v403 = vunpack.c.l.b16 %v361
      %v404 = vunpack.c.h.b16 %v361
      %v405 = vunpack.c.l.b16 %v362
      %v406 = vunpack.c.h.b16 %v362
      %v407 = vunpack.c.l.b16 %v363
      %v408 = vunpack.c.h.b16 %v363
      %v409 = vunpack.c.l.b16 %v364
      %v410 = vunpack.c.h.b16 %v364
      %v411 = vunpack.c.l.b16 %v365
      %v412 = vunpack.c.h.b16 %v365
      %v413 = vunpack.c.l.b16 %v366
      %v414 = vunpack.c.h.b16 %v366
      %v415 = vunpack.c.l.b16 %v367
      %v416 = vunpack.c.h.b16 %v367
      %v417 = vunpack.c.l.b16 %v368
      %v418 = vunpack.c.h.b16 %v368
      %v419 = vunpack.c.l.b16 %v369
      %v420 = vunpack.c.h.b16 %v369
      %v421 = vunpack.c.l.b16 %v370
      %v422 = vunpack.c.h.b16 %v370
      %v423 = vunpack.c.l.b16 %v371
      %v424 = vunpack.c.h.b16 %v371
      %v425 = vunpack.c.l.b16 %v372
      %v426 = vunpack.c.h.b16 %v372
      %v427 = vpack.c.b16 %v397, %v395
      %v428 = vpack.c.b16 %v398, %v396
      %v429 = vpack.c.b16 %v401, %v399
      %v430 = vpack.c.b16 %v402, %v400
      %v431 = vpack.c.b16 %v405, %v403
      %v432 = vpack.c.b16 %v406, %v404
      %v433 = vpack.c.b16 %v409, %v407
      %v434 = vpack.c.b16 %v410, %v408
      %v435 = vpack.c.b16 %v413, %v411
      %v436 = vpack.c.b16 %v414, %v412
      %v437 = vpack.c.b16 %v417, %v415
      %v438 = vpack.c.b16 %v418, %v416
      %v439 = vpack.c.b16 %v421, %v419
      %v440 = vpack.c.b16 %v422, %v420
      %v441 = vpack.c.b16 %v425, %v423
      %v442 = vpack.c.b16 %v426, %v424
      %459 = vmatpush.bf16.msra.mxu0 %v441
      %460 = vmatpush.bf16.msra.mxu0 %v439
      %461 = vmatpush.bf16.msra.mxu0 %v437
      %462 = vmatpush.bf16.msra.mxu0 %v435
      %463 = vmatpush.bf16.msra.mxu0 %v433
      %464 = vmatpush.bf16.msra.mxu0 %v431
      %465 = vmatpush.bf16.msra.mxu0 %v429
      %466 = vmatpush.bf16.msra.mxu0 %v427
      %467 = vmatmul.bf16.gmra.mxu0 %v325
      %v468 = vpop.f32.mrf.mxu0
      %v469 = vadd.f32 %v375, %v468
      %v470 = vpop.f32.mrf.mxu0
      %v471 = vadd.f32 %v375, %v470
      %472 = vmatmul.bf16.gmra.mxu0 %v326
      %v473 = vpop.f32.mrf.mxu0
      %v474 = vadd.f32 %v375, %v473
      %v475 = vpop.f32.mrf.mxu0
      %v476 = vadd.f32 %v375, %v475
      %477 = vmatmul.bf16.gmra.mxu0 %v327
      %v478 = vpop.f32.mrf.mxu0
      %v479 = vadd.f32 %v375, %v478
      %v480 = vpop.f32.mrf.mxu0
      %v481 = vadd.f32 %v375, %v480
      %482 = vmatmul.bf16.gmra.mxu0 %v328
      %v483 = vpop.f32.mrf.mxu0
      %v484 = vadd.f32 %v375, %v483
      %v485 = vpop.f32.mrf.mxu0
      %v486 = vadd.f32 %v375, %v485
      %487 = vmatmul.bf16.gmra.mxu0 %v329
      %v488 = vpop.f32.mrf.mxu0
      %v489 = vadd.f32 %v375, %v488
      %v490 = vpop.f32.mrf.mxu0
      %v491 = vadd.f32 %v375, %v490
      %492 = vmatmul.bf16.gmra.mxu0 %v330
      %v493 = vpop.f32.mrf.mxu0
      %v494 = vadd.f32 %v375, %v493
      %v495 = vpop.f32.mrf.mxu0
      %v496 = vadd.f32 %v375, %v495
      %497 = vmatmul.bf16.gmra.mxu0 %v331
      %v498 = vpop.f32.mrf.mxu0
      %v499 = vadd.f32 %v375, %v498
      %v500 = vpop.f32.mrf.mxu0
      %v501 = vadd.f32 %v375, %v500
      %502 = vmatmul.bf16.gmra.mxu0 %v332
      %v503 = vpop.f32.mrf.mxu0
      %v504 = vadd.f32 %v375, %v503
      %v505 = vpop.f32.mrf.mxu0
      %v506 = vadd.f32 %v375, %v505
      %507 = vmatmul.bf16.gmra.mxu0 %v333
      %v508 = vpop.f32.mrf.mxu0
      %v509 = vadd.f32 %v375, %v508
      %v510 = vpop.f32.mrf.mxu0
      %v511 = vadd.f32 %v375, %v510
      %512 = vmatmul.bf16.gmra.mxu0 %v334
      %v513 = vpop.f32.mrf.mxu0
      %v514 = vadd.f32 %v375, %v513
      %v515 = vpop.f32.mrf.mxu0
      %v516 = vadd.f32 %v375, %v515
      %517 = vmatmul.bf16.gmra.mxu0 %v335
      %v518 = vpop.f32.mrf.mxu0
      %v519 = vadd.f32 %v375, %v518
      %v520 = vpop.f32.mrf.mxu0
      %v521 = vadd.f32 %v375, %v520
      %522 = vmatmul.bf16.gmra.mxu0 %v336
      %v523 = vpop.f32.mrf.mxu0
      %v524 = vadd.f32 %v375, %v523
      %v525 = vpop.f32.mrf.mxu0
      %v526 = vadd.f32 %v375, %v525
      %527 = vmatmul.bf16.gmra.mxu0 %v337
      %v528 = vpop.f32.mrf.mxu0
      %v529 = vadd.f32 %v375, %v528
      %v530 = vpop.f32.mrf.mxu0
      %v531 = vadd.f32 %v375, %v530
      %532 = vmatmul.bf16.gmra.mxu0 %v338
      %v533 = vpop.f32.mrf.mxu0
      %v534 = vadd.f32 %v375, %v533
      %v535 = vpop.f32.mrf.mxu0
      %v536 = vadd.f32 %v375, %v535
      %537 = vmatmul.bf16.gmra.mxu0 %v339
      %v538 = vpop.f32.mrf.mxu0
      %v539 = vadd.f32 %v375, %v538
      %v540 = vpop.f32.mrf.mxu0
      %v541 = vadd.f32 %v375, %v540
      %542 = vmatmul.bf16.gmra.mxu0 %v340
      %v543 = vpop.f32.mrf.mxu0
      %v544 = vadd.f32 %v375, %v543
      %v545 = vpop.f32.mrf.mxu0
      %v546 = vadd.f32 %v375, %v545
      %547 = vmatmul.bf16.gmra.mxu0 %v341
      %v548 = vpop.f32.mrf.mxu0
      %v549 = vadd.f32 %v375, %v548
      %v550 = vpop.f32.mrf.mxu0
      %v551 = vadd.f32 %v375, %v550
      %552 = vmatmul.bf16.gmra.mxu0 %v342
      %v553 = vpop.f32.mrf.mxu0
      %v554 = vadd.f32 %v375, %v553
      %v555 = vpop.f32.mrf.mxu0
      %v556 = vadd.f32 %v375, %v555
      %557 = vmatmul.bf16.gmra.mxu0 %v343
      %v558 = vpop.f32.mrf.mxu0
      %v559 = vadd.f32 %v375, %v558
      %v560 = vpop.f32.mrf.mxu0
      %v561 = vadd.f32 %v375, %v560
      %562 = vmatmul.bf16.gmra.mxu0 %v344
      %v563 = vpop.f32.mrf.mxu0
      %v564 = vadd.f32 %v375, %v563
      %v565 = vpop.f32.mrf.mxu0
      %v566 = vadd.f32 %v375, %v565
      %567 = vmatmul.bf16.gmra.mxu0 %v345
      %v568 = vpop.f32.mrf.mxu0
      %v569 = vadd.f32 %v375, %v568
      %v570 = vpop.f32.mrf.mxu0
      %v571 = vadd.f32 %v375, %v570
      %572 = vmatmul.bf16.gmra.mxu0 %v346
      %v573 = vpop.f32.mrf.mxu0
      %v574 = vadd.f32 %v375, %v573
      %v575 = vpop.f32.mrf.mxu0
      %v576 = vadd.f32 %v375, %v575
      %577 = vmatmul.bf16.gmra.mxu0 %v347
      %v578 = vpop.f32.mrf.mxu0
      %v579 = vadd.f32 %v375, %v578
      %v580 = vpop.f32.mrf.mxu0
      %v581 = vadd.f32 %v375, %v580
      %582 = vmatmul.bf16.gmra.mxu0 %v348
      %v583 = vpop.f32.mrf.mxu0
      %v584 = vadd.f32 %v375, %v583
      %v585 = vpop.f32.mrf.mxu0
      %v586 = vadd.f32 %v375, %v585
      %587 = vmatmul.bf16.gmra.mxu0 %v349
      %v588 = vpop.f32.mrf.mxu0
      %v589 = vadd.f32 %v375, %v588
      %v590 = vpop.f32.mrf.mxu0
      %v591 = vadd.f32 %v375, %v590
      %592 = vmatmul.bf16.gmra.mxu0 %v350
      %v593 = vpop.f32.mrf.mxu0
      %v594 = vadd.f32 %v375, %v593
      %v595 = vpop.f32.mrf.mxu0
      %v596 = vadd.f32 %v375, %v595
      %597 = vmatmul.bf16.gmra.mxu0 %v351
      %v598 = vpop.f32.mrf.mxu0
      %v599 = vadd.f32 %v375, %v598
      %v600 = vpop.f32.mrf.mxu0
      %v601 = vadd.f32 %v375, %v600
      %602 = vmatmul.bf16.gmra.mxu0 %v352
      %v603 = vpop.f32.mrf.mxu0
      %v604 = vadd.f32 %v375, %v603
      %v605 = vpop.f32.mrf.mxu0
      %v606 = vadd.f32 %v375, %v605
      %607 = vmatmul.bf16.gmra.mxu0 %v353
      %v608 = vpop.f32.mrf.mxu0
      %v609 = vadd.f32 %v375, %v608
      %v610 = vpop.f32.mrf.mxu0
      %v611 = vadd.f32 %v375, %v610
      %612 = vmatmul.bf16.gmra.mxu0 %v354
      %v613 = vpop.f32.mrf.mxu0
      %v614 = vadd.f32 %v375, %v613
      %v615 = vpop.f32.mrf.mxu0
      %v616 = vadd.f32 %v375, %v615
      %617 = vmatmul.bf16.gmra.mxu0 %v355
      %v618 = vpop.f32.mrf.mxu0
      %v619 = vadd.f32 %v375, %v618
      %v620 = vpop.f32.mrf.mxu0
      %v621 = vadd.f32 %v375, %v620
      %622 = vmatmul.bf16.gmra.mxu0 %v356
      %v623 = vpop.f32.mrf.mxu0
      %v624 = vadd.f32 %v375, %v623
      %v625 = vpop.f32.mrf.mxu0
      %v626 = vadd.f32 %v375, %v625
      %627 = vdwg.mxu0
      %628 = vmatpush.bf16.msra.mxu0 %v442
      %629 = vmatpush.bf16.msra.mxu0 %v440
      %630 = vmatpush.bf16.msra.mxu0 %v438
      %631 = vmatpush.bf16.msra.mxu0 %v436
      %632 = vmatpush.bf16.msra.mxu0 %v434
      %633 = vmatpush.bf16.msra.mxu0 %v432
      %634 = vmatpush.bf16.msra.mxu0 %v430
      %635 = vmatpush.bf16.msra.mxu0 %v428
      %636 = vmatmul.bf16.gmra.mxu0 %v325
      %v637 = vpop.f32.mrf.mxu0
      %v638 = vadd.f32 %v376, %v637
      %v639 = vpop.f32.mrf.mxu0
      %v640 = vadd.f32 %v376, %v639
      %641 = vmatmul.bf16.gmra.mxu0 %v326
      %v642 = vpop.f32.mrf.mxu0
      %v643 = vadd.f32 %v376, %v642
      %v644 = vpop.f32.mrf.mxu0
      %v645 = vadd.f32 %v376, %v644
      %646 = vmatmul.bf16.gmra.mxu0 %v327
      %v647 = vpop.f32.mrf.mxu0
      %v648 = vadd.f32 %v376, %v647
      %v649 = vpop.f32.mrf.mxu0
      %v650 = vadd.f32 %v376, %v649
      %651 = vmatmul.bf16.gmra.mxu0 %v328
      %v652 = vpop.f32.mrf.mxu0
      %v653 = vadd.f32 %v376, %v652
      %v654 = vpop.f32.mrf.mxu0
      %v655 = vadd.f32 %v376, %v654
      %656 = vmatmul.bf16.gmra.mxu0 %v329
      %v657 = vpop.f32.mrf.mxu0
      %v658 = vadd.f32 %v376, %v657
      %v659 = vpop.f32.mrf.mxu0
      %v660 = vadd.f32 %v376, %v659
      %661 = vmatmul.bf16.gmra.mxu0 %v330
      %v662 = vpop.f32.mrf.mxu0
      %v663 = vadd.f32 %v376, %v662
      %v664 = vpop.f32.mrf.mxu0
      %v665 = vadd.f32 %v376, %v664
      %666 = vmatmul.bf16.gmra.mxu0 %v331
      %v667 = vpop.f32.mrf.mxu0
      %v668 = vadd.f32 %v376, %v667
      %v669 = vpop.f32.mrf.mxu0
      %v670 = vadd.f32 %v376, %v669
      %671 = vmatmul.bf16.gmra.mxu0 %v332
      %v672 = vpop.f32.mrf.mxu0
      %v673 = vadd.f32 %v376, %v672
      %v674 = vpop.f32.mrf.mxu0
      %v675 = vadd.f32 %v376, %v674
      %676 = vmatmul.bf16.gmra.mxu0 %v333
      %v677 = vpop.f32.mrf.mxu0
      %v678 = vadd.f32 %v376, %v677
      %v679 = vpop.f32.mrf.mxu0
      %v680 = vadd.f32 %v376, %v679
      %681 = vmatmul.bf16.gmra.mxu0 %v334
      %v682 = vpop.f32.mrf.mxu0
      %v683 = vadd.f32 %v376, %v682
      %v684 = vpop.f32.mrf.mxu0
      %v685 = vadd.f32 %v376, %v684
      %686 = vmatmul.bf16.gmra.mxu0 %v335
      %v687 = vpop.f32.mrf.mxu0
      %v688 = vadd.f32 %v376, %v687
      %v689 = vpop.f32.mrf.mxu0
      %v690 = vadd.f32 %v376, %v689
      %691 = vmatmul.bf16.gmra.mxu0 %v336
      %v692 = vpop.f32.mrf.mxu0
      %v693 = vadd.f32 %v376, %v692
      %v694 = vpop.f32.mrf.mxu0
      %v695 = vadd.f32 %v376, %v694
      %696 = vmatmul.bf16.gmra.mxu0 %v337
      %v697 = vpop.f32.mrf.mxu0
      %v698 = vadd.f32 %v376, %v697
      %v699 = vpop.f32.mrf.mxu0
      %v700 = vadd.f32 %v376, %v699
      %701 = vmatmul.bf16.gmra.mxu0 %v338
      %v702 = vpop.f32.mrf.mxu0
      %v703 = vadd.f32 %v376, %v702
      %v704 = vpop.f32.mrf.mxu0
      %v705 = vadd.f32 %v376, %v704
      %706 = vmatmul.bf16.gmra.mxu0 %v339
      %v707 = vpop.f32.mrf.mxu0
      %v708 = vadd.f32 %v376, %v707
      %v709 = vpop.f32.mrf.mxu0
      %v710 = vadd.f32 %v376, %v709
      %711 = vmatmul.bf16.gmra.mxu0 %v340
      %v712 = vpop.f32.mrf.mxu0
      %v713 = vadd.f32 %v376, %v712
      %v714 = vpop.f32.mrf.mxu0
      %v715 = vadd.f32 %v376, %v714
      %716 = vmatmul.bf16.gmra.mxu0 %v341
      %v717 = vpop.f32.mrf.mxu0
      %v718 = vadd.f32 %v376, %v717
      %v719 = vpop.f32.mrf.mxu0
      %v720 = vadd.f32 %v376, %v719
      %721 = vmatmul.bf16.gmra.mxu0 %v342
      %v722 = vpop.f32.mrf.mxu0
      %v723 = vadd.f32 %v376, %v722
      %v724 = vpop.f32.mrf.mxu0
      %v725 = vadd.f32 %v376, %v724
      %726 = vmatmul.bf16.gmra.mxu0 %v343
      %v727 = vpop.f32.mrf.mxu0
      %v728 = vadd.f32 %v376, %v727
      %v729 = vpop.f32.mrf.mxu0
      %v730 = vadd.f32 %v376, %v729
      %731 = vmatmul.bf16.gmra.mxu0 %v344
      %v732 = vpop.f32.mrf.mxu0
      %v733 = vadd.f32 %v376, %v732
      %v734 = vpop.f32.mrf.mxu0
      %v735 = vadd.f32 %v376, %v734
      %736 = vmatmul.bf16.gmra.mxu0 %v345
      %v737 = vpop.f32.mrf.mxu0
      %v738 = vadd.f32 %v376, %v737
      %v739 = vpop.f32.mrf.mxu0
      %v740 = vadd.f32 %v376, %v739
      %741 = vmatmul.bf16.gmra.mxu0 %v346
      %v742 = vpop.f32.mrf.mxu0
      %v743 = vadd.f32 %v376, %v742
      %v744 = vpop.f32.mrf.mxu0
      %v745 = vadd.f32 %v376, %v744
      %746 = vmatmul.bf16.gmra.mxu0 %v347
      %v747 = vpop.f32.mrf.mxu0
      %v748 = vadd.f32 %v376, %v747
      %v749 = vpop.f32.mrf.mxu0
      %v750 = vadd.f32 %v376, %v749
      %751 = vmatmul.bf16.gmra.mxu0 %v348
      %v752 = vpop.f32.mrf.mxu0
      %v753 = vadd.f32 %v376, %v752
      %v754 = vpop.f32.mrf.mxu0
      %v755 = vadd.f32 %v376, %v754
      %756 = vmatmul.bf16.gmra.mxu0 %v349
      %v757 = vpop.f32.mrf.mxu0
      %v758 = vadd.f32 %v376, %v757
      %v759 = vpop.f32.mrf.mxu0
      %v760 = vadd.f32 %v376, %v759
      %761 = vmatmul.bf16.gmra.mxu0 %v350
      %v762 = vpop.f32.mrf.mxu0
      %v763 = vadd.f32 %v376, %v762
      %v764 = vpop.f32.mrf.mxu0
      %v765 = vadd.f32 %v376, %v764
      %766 = vmatmul.bf16.gmra.mxu0 %v351
      %v767 = vpop.f32.mrf.mxu0
      %v768 = vadd.f32 %v376, %v767
      %v769 = vpop.f32.mrf.mxu0
      %v770 = vadd.f32 %v376, %v769
      %771 = vmatmul.bf16.gmra.mxu0 %v352
      %v772 = vpop.f32.mrf.mxu0
      %v773 = vadd.f32 %v376, %v772
      %v774 = vpop.f32.mrf.mxu0
      %v775 = vadd.f32 %v376, %v774
      %776 = vmatmul.bf16.gmra.mxu0 %v353
      %v777 = vpop.f32.mrf.mxu0
      %v778 = vadd.f32 %v376, %v777
      %v779 = vpop.f32.mrf.mxu0
      %v780 = vadd.f32 %v376, %v779
      %781 = vmatmul.bf16.gmra.mxu0 %v354
      %v782 = vpop.f32.mrf.mxu0
      %v783 = vadd.f32 %v376, %v782
      %v784 = vpop.f32.mrf.mxu0
      %v785 = vadd.f32 %v376, %v784
      %786 = vmatmul.bf16.gmra.mxu0 %v355
      %v787 = vpop.f32.mrf.mxu0
      %v788 = vadd.f32 %v376, %v787
      %v789 = vpop.f32.mrf.mxu0
      %v790 = vadd.f32 %v376, %v789
      %791 = vmatmul.bf16.gmra.mxu0 %v356
      %v792 = vpop.f32.mrf.mxu0
      %v793 = vadd.f32 %v376, %v792
      %v794 = vpop.f32.mrf.mxu0
      %v795 = vadd.f32 %v376, %v794
      %796 = vdwg.mxu0
      %v797 = vmax.f32 %v469, %v471
      %v798 = vmax.f32 %v638, %v640
      %v799 = vmax.f32 %v479, %v481
      %v800 = vmax.f32 %v648, %v650
      %v801 = vmax.f32 %v489, %v491
      %v802 = vmax.f32 %v658, %v660
      %v803 = vmax.f32 %v499, %v501
      %v804 = vmax.f32 %v668, %v670
      %v805 = vmax.f32 %v509, %v511
      %v806 = vmax.f32 %v678, %v680
      %v807 = vmax.f32 %v519, %v521
      %v808 = vmax.f32 %v688, %v690
      %v809 = vmax.f32 %v529, %v531
      %v810 = vmax.f32 %v698, %v700
      %v811 = vmax.f32 %v539, %v541
      %v812 = vmax.f32 %v708, %v710
      %v813 = vmax.f32 %v549, %v551
      %v814 = vmax.f32 %v718, %v720
      %v815 = vmax.f32 %v559, %v561
      %v816 = vmax.f32 %v728, %v730
      %v817 = vmax.f32 %v569, %v571
      %v818 = vmax.f32 %v738, %v740
      %v819 = vmax.f32 %v579, %v581
      %v820 = vmax.f32 %v748, %v750
      %v821 = vmax.f32 %v589, %v591
      %v822 = vmax.f32 %v758, %v760
      %v823 = vmax.f32 %v599, %v601
      %v824 = vmax.f32 %v768, %v770
      %v825 = vmax.f32 %v609, %v611
      %v826 = vmax.f32 %v778, %v780
      %v827 = vmax.f32 %v619, %v621
      %v828 = vmax.f32 %v788, %v790
      %v829 = vmax.f32 %v474, %v476
      %v830 = vmax.f32 %v643, %v645
      %v831 = vmax.f32 %v484, %v486
      %v832 = vmax.f32 %v653, %v655
      %v833 = vmax.f32 %v494, %v496
      %v834 = vmax.f32 %v663, %v665
      %v835 = vmax.f32 %v504, %v506
      %v836 = vmax.f32 %v673, %v675
      %v837 = vmax.f32 %v514, %v516
      %v838 = vmax.f32 %v683, %v685
      %v839 = vmax.f32 %v524, %v526
      %v840 = vmax.f32 %v693, %v695
      %v841 = vmax.f32 %v534, %v536
      %v842 = vmax.f32 %v703, %v705
      %v843 = vmax.f32 %v544, %v546
      %v844 = vmax.f32 %v713, %v715
      %v845 = vmax.f32 %v554, %v556
      %v846 = vmax.f32 %v723, %v725
      %v847 = vmax.f32 %v564, %v566
      %v848 = vmax.f32 %v733, %v735
      %v849 = vmax.f32 %v574, %v576
      %v850 = vmax.f32 %v743, %v745
      %v851 = vmax.f32 %v584, %v586
      %v852 = vmax.f32 %v753, %v755
      %v853 = vmax.f32 %v594, %v596
      %v854 = vmax.f32 %v763, %v765
      %v855 = vmax.f32 %v604, %v606
      %v856 = vmax.f32 %v773, %v775
      %v857 = vmax.f32 %v614, %v616
      %v858 = vmax.f32 %v783, %v785
      %v859 = vmax.f32 %v624, %v626
      %v860 = vmax.f32 %v793, %v795
      %v861 = vmax.f32 %v797, %v829
      %v862 = vmax.f32 %v798, %v830
      %v863 = vmax.f32 %v799, %v831
      %v864 = vmax.f32 %v800, %v832
      %v865 = vmax.f32 %v801, %v833
      %v866 = vmax.f32 %v802, %v834
      %v867 = vmax.f32 %v803, %v835
      %v868 = vmax.f32 %v804, %v836
      %v869 = vmax.f32 %v805, %v837
      %v870 = vmax.f32 %v806, %v838
      %v871 = vmax.f32 %v807, %v839
      %v872 = vmax.f32 %v808, %v840
      %v873 = vmax.f32 %v809, %v841
      %v874 = vmax.f32 %v810, %v842
      %v875 = vmax.f32 %v811, %v843
      %v876 = vmax.f32 %v812, %v844
      %v877 = vmax.f32 %v813, %v845
      %v878 = vmax.f32 %v814, %v846
      %v879 = vmax.f32 %v815, %v847
      %v880 = vmax.f32 %v816, %v848
      %v881 = vmax.f32 %v817, %v849
      %v882 = vmax.f32 %v818, %v850
      %v883 = vmax.f32 %v819, %v851
      %v884 = vmax.f32 %v820, %v852
      %v885 = vmax.f32 %v821, %v853
      %v886 = vmax.f32 %v822, %v854
      %v887 = vmax.f32 %v823, %v855
      %v888 = vmax.f32 %v824, %v856
      %v889 = vmax.f32 %v825, %v857
      %v890 = vmax.f32 %v826, %v858
      %v891 = vmax.f32 %v827, %v859
      %v892 = vmax.f32 %v828, %v860
      %v893 = vpack.c.bf16 %v862, %v861
      %v894 = vpack.c.bf16 %v864, %v863
      %v895 = vpack.c.bf16 %v866, %v865
      %v896 = vpack.c.bf16 %v868, %v867
      %v897 = vpack.c.bf16 %v870, %v869
      %v898 = vpack.c.bf16 %v872, %v871
      %v899 = vpack.c.bf16 %v874, %v873
      %v900 = vpack.c.bf16 %v876, %v875
      %v901 = vpack.c.bf16 %v878, %v877
      %v902 = vpack.c.bf16 %v880, %v879
      %v903 = vpack.c.bf16 %v882, %v881
      %v904 = vpack.c.bf16 %v884, %v883
      %v905 = vpack.c.bf16 %v886, %v885
      %v906 = vpack.c.bf16 %v888, %v887
      %v907 = vpack.c.bf16 %v890, %v889
      %v908 = vpack.c.bf16 %v892, %v891
      %909 = vst [vmem:[%s249] sm:$0xf] %v893
      %910 = vst [vmem:[%s249 + $0x4] sm:$0xf] %v894
      %911 = vst [vmem:[%s249 + $0x8] sm:$0xf] %v895
      %912 = vst [vmem:[%s249 + $0xc] sm:$0xf] %v896
      %913 = vst [vmem:[%s249 + $0x10] sm:$0xf] %v897
      %914 = vst [vmem:[%s249 + $0x14] sm:$0xf] %v898
      %915 = vst [vmem:[%s249 + $0x18] sm:$0xf] %v899
      %916 = vst [vmem:[%s249 + $0x1c] sm:$0xf] %v900
      %917 = vst [vmem:[%s249 + $0x20] sm:$0xf] %v901
      %918 = vst [vmem:[%s249 + $0x24] sm:$0xf] %v902
      %919 = vst [vmem:[%s249 + $0x28] sm:$0xf] %v903
      %920 = vst [vmem:[%s249 + $0x2c] sm:$0xf] %v904
      %921 = vst [vmem:[%s249 + $0x30] sm:$0xf] %v905
      %922 = vst [vmem:[%s249 + $0x34] sm:$0xf] %v906
      %923 = vst [vmem:[%s249 + $0x38] sm:$0xf] %v907
      %924 = vst [vmem:[%s249 + $0x3c] sm:$0xf] %v908
      %v941 = vrot.slane %v893, 4
      %v942 = vrot.slane %v894, 4
      %v943 = vrot.slane %v895, 4
      %v944 = vrot.slane %v896, 4
      %v945 = vrot.slane %v897, 4
      %v946 = vrot.slane %v898, 4
      %v947 = vrot.slane %v899, 4
      %v948 = vrot.slane %v900, 4
      %v949 = vrot.slane %v901, 4
      %v950 = vrot.slane %v902, 4
      %v951 = vrot.slane %v903, 4
      %v952 = vrot.slane %v904, 4
      %v953 = vrot.slane %v905, 4
      %v954 = vrot.slane %v906, 4
      %v955 = vrot.slane %v907, 4
      %v956 = vrot.slane %v908, 4
      %973 = vst [vmem:[%s259] sm:$0xf] %v941
      %974 = vst [vmem:[%s259 + $0x4] sm:$0xf] %v942
      %975 = vst [vmem:[%s259 + $0x8] sm:$0xf] %v943
      %976 = vst [vmem:[%s259 + $0xc] sm:$0xf] %v944
      %977 = vst [vmem:[%s259 + $0x10] sm:$0xf] %v945
      %978 = vst [vmem:[%s259 + $0x14] sm:$0xf] %v946
      %979 = vst [vmem:[%s259 + $0x18] sm:$0xf] %v947
      %980 = vst [vmem:[%s259 + $0x1c] sm:$0xf] %v948
      %981 = vst [vmem:[%s259 + $0x20] sm:$0xf] %v949
      %982 = vst [vmem:[%s259 + $0x24] sm:$0xf] %v950
      %983 = vst [vmem:[%s259 + $0x28] sm:$0xf] %v951
      %984 = vst [vmem:[%s259 + $0x2c] sm:$0xf] %v952
      %985 = vst [vmem:[%s259 + $0x30] sm:$0xf] %v953
      %986 = vst [vmem:[%s259 + $0x34] sm:$0xf] %v954
      %987 = vst [vmem:[%s259 + $0x38] sm:$0xf] %v955
      %988 = vst [vmem:[%s259 + $0x3c] sm:$0xf] %v956
      %s989 = smul.u32 16, %s21
      %p990 = scmp.lt.s32.totalorder %s20, 1
      %s991 = scalar_select %p990, %s20, 1
      %p992 = scmp.lt.s32.totalorder %s989, 31
      %s993 = scalar_select %p992, %s989, 31
      %s994 = smul.addr %s991, 32
      %s995 = sadd.s32 %s993, %s994
      %s996 = smul.addr %s995, 4
      %s997 = scalar_lea.vmem %s3, %s996
      %s998 = smul.u32 16, %s21
      %p999 = scmp.lt.s32.totalorder %s20, 1
      %s1000 = scalar_select %p999, %s20, 1
      %p1001 = scmp.lt.s32.totalorder %s998, 31
      %s1002 = scalar_select %p1001, %s998, 31
      %s1003 = smul.addr %s1000, 32
      %s1004 = sadd.s32 %s1002, %s1003
      %s1005 = smul.addr %s1004, 4
      %s1006 = scalar_lea.vmem %s4, %s1005
      // Predicated region
      $region33: #{nonlocal_block_3d.2} parent=31 // pred_check
        %p1007 = pneg %p118
      $region34: #{nonlocal_block_3d.2} parent=31 // pred_check_branch
        %1009 = sbr.rel (%p1007) target = $region36
      $region35: #{nonlocal_block_3d.2} parent=31 // pred_region
        %s1010 = smul.u32 16, %s21
      $region36: #{nonlocal_block_3d.2} parent=31 // pred_fallthru
        _
      // Predicated region
      $region37: #{nonlocal_block_3d.2} parent=31 // pred_check
        %p1011 = pneg %p146
      $region38: #{nonlocal_block_3d.2} parent=31 // pred_check_branch
        %1013 = sbr.rel (%p1011) target = $region40
      $region39: #{nonlocal_block_3d.2} parent=31 // pred_region
        %s1014 = smul.u32 16, %s21
      $region40: #{nonlocal_block_3d.2} parent=31 // pred_fallthru
        _
    $region32: #{nonlocal_block_3d.2} parent=5 // pred_fallthru
      _
    %p1015 = scmp.le.s32.totalorder 2, %s11
    // Predicated region
    $region41: #{nonlocal_block_3d.2} parent=5 // pred_check
      %p1016 = pneg %p1015
    $region42: #{nonlocal_block_3d.2} parent=5 // pred_check_branch
      %1018 = sbr.rel (%p1016) target = $region44
    $region43: #{nonlocal_block_3d.2} parent=5 // pred_region
      %s1019 = ssub.s32 %s11, 2
      // Predicated region
      $region45: #{nonlocal_block_3d.2} parent=43 // pred_check
        %p1020 = pneg %p124
      $region46: #{nonlocal_block_3d.2} parent=43 // pred_check_branch
        %1022 = sbr.rel (%p1020) target = $region48
      $region47: #{nonlocal_block_3d.2} parent=43 // pred_region
        %s1023 = smul.u32 16, %s23
        %p1024 = scmp.lt.s32.totalorder %s22, 1
        %s1025 = scalar_select %p1024, %s22, 1
        %p1026 = scmp.lt.s32.totalorder %s1023, 31
        %s1027 = scalar_select %p1026, %s1023, 31
        %s1028 = smul.addr %s1025, 32
        %s1029 = sadd.s32 %s1027, %s1028
        %s1030 = smul.addr %s1029, 4
        %s1031 = scalar_lea.vmem %s3, %s1030
      $region48: #{nonlocal_block_3d.2} parent=43 // pred_fallthru
        _
      // Predicated region
      $region49: #{nonlocal_block_3d.2} parent=43 // pred_check
        %p1032 = pneg %p152
      $region50: #{nonlocal_block_3d.2} parent=43 // pred_check_branch
        %1034 = sbr.rel (%p1032) target = $region52
      $region51: #{nonlocal_block_3d.2} parent=43 // pred_region
        %s1035 = smul.u32 16, %s23
        %p1036 = scmp.lt.s32.totalorder %s22, 1
        %s1037 = scalar_select %p1036, %s22, 1
        %p1038 = scmp.lt.s32.totalorder %s1035, 31
        %s1039 = scalar_select %p1038, %s1035, 31
        %s1040 = smul.addr %s1037, 32
        %s1041 = sadd.s32 %s1039, %s1040
        %s1042 = smul.addr %s1041, 4
        %s1043 = scalar_lea.vmem %s4, %s1042
      $region52: #{nonlocal_block_3d.2} parent=43 // pred_fallthru
        _
    $region44: #{nonlocal_block_3d.2} parent=5 // pred_fallthru
      _
  $region6: #{nonlocal_block_3d.2} parent=0 // loop_footer
    %s15 = sadd.s32 1, %s11
  $region7: #{nonlocal_block_3d.2} parent=0 // loop_footer_branch
    %10 = sbr.rel target = $region3
  $region8: #{nonlocal_block_3d.2} parent=0 // loop_exit
    _

// kernel: nonlocal_block_3d.3
$region0: #{nonlocal_block_3d.3}
  #allocation0 [shape = 'u32[]', space=smem, size = 0x4, offset = 0x4, fixed_abs, tag = 'smem constant byte address 0x4 - core index']
  #allocation1 [shape = 'u32[72,128]{1,0:T(1,128)}', space=vmem, size = 0x9000, scoped, tag = 'internal scratch']
  #allocation2 [shape = 'bf16[512,128]{1,0:T(8,128)(2,1)}', space=vmem, size = 0x20000, scoped, tag = 'scratch operand']
  #allocation3 [shape = 'f32[512,1]{1,0:T(8,128)}', space=vmem, size = 0x40000, scoped, tag = 'scratch operand']
  #allocation4 [shape = 'f32[512,1]{1,0:T(8,128)}', space=vmem, size = 0x40000, scoped, tag = 'scratch operand']
  #allocation5 [shape = 'f32[512,128]{1,0:T(8,128)}', space=vmem, size = 0x40000, scoped, tag = 'scratch operand']
  %s0 = inlined_call_operand.vmem [shape: f32[2,1024,128], index: 0, kind: input, shape index: {}]
  %s1 = inlined_call_operand.vmem [shape: bf16[128,128], index: 1, kind: input, shape index: {}]
  %s2 = inlined_call_operand.vmem [shape: f32[1,128], index: 2, kind: input, shape index: {}]
  %s3 = inlined_call_operand.vmem [shape: bf16[2,256,128], index: 3, kind: input, shape index: {}]
  %s4 = inlined_call_operand.vmem [shape: bf16[2,256,128], index: 4, kind: input, shape index: {}]
  %s5 = inlined_call_operand.vmem [shape: bf16[128,128], index: 5, kind: input, shape index: {}]
  %s6 = inlined_call_operand.vmem [shape: f32[1,128], index: 6, kind: input, shape index: {}]
  %s7 = inlined_call_operand.vmem [shape: f32[2,1024,128], index: 7, kind: output, shape index: {}]
  %s8 = sld [smem:[#allocation0]]
  $region69: #{nonlocal_block_3d.3} parent=0
    _
  %s10 = ssub.s32 1, %s8
  %s11 = scalar_select 0, %s10, %s8
  loop: start=0, step=1, limit=6
  $region2: #{nonlocal_block_3d.3} parent=0 // loop_pre_header
    _
  $region3: #{nonlocal_block_3d.3} parent=0 // loop_header
    %s13 = sphi 0, %s17
    %p14 = scmp.ge.s32.totalorder %s13, 6
    %s20 = sphi 0, %s39
    %s21 = sphi 0, %s35
    %s22 = sphi 0, %s31
    %s23 = sphi 0, %s20
    %s24 = sphi 0, %s21
    %s25 = sphi 0, %s22
    %s26 = sphi 0, %s23
    %s27 = sphi 0, %s24
    %s28 = sphi 0, %s25
    %s44 = sphi 0, %s46
    %s47 = sphi 0, %s44
    %s48 = sphi 0, %s47
    %s64 = sphi 0, %s48
    %s68 = sphi 0, %s68
    %s70 = sphi 0, %s68
    %s71 = sphi 0, %s70
    %s85 = sphi 0, %s71
    %s89 = sphi 0, %s89
    %s91 = sphi 0, %s89
    %s92 = sphi 0, %s91
    %s106 = sphi 0, %s92
    %s114 = sphi 0, %s116
    %s117 = sphi 0, %s114
    %s118 = sphi 0, %s117
    %s134 = sphi 0, %s118
    %s142 = sphi 0, %s144
    %s145 = sphi 0, %s142
    %s146 = sphi 0, %s145
    %s162 = sphi 0, %s146
    %s166 = sphi 0, %s166
    %s168 = sphi 0, %s166
    %s169 = sphi 0, %s168
    %s183 = sphi 0, %s169
    %s187 = sphi 0, %s187
    %s189 = sphi 0, %s187
    %s190 = sphi 0, %s189
    %s204 = sphi 0, %s190
    %s212 = sphi 0, %s214
    %s215 = sphi 0, %s212
    %s216 = sphi 0, %s215
    %s232 = sphi 0, %s216
  $region4: #{nonlocal_block_3d.3} parent=0 // loop_header_branch
    %16 = sbr.rel (%p14) target = $region8
  $region5: #{nonlocal_block_3d.3} parent=0 // loop_body
    %s18 = ssub.s32 %s13, 1
    %s19 = ssub.s32 %s13, 2
    %s29 = sadd.s32 1, %s22
    %p30 = scmp.ge.s32.totalorder %s29, 1
    %s31 = scalar_select %p30, 0, %s29
    %s32 = sadd.s32 1, %s21
    %s33 = scalar_select %p30, %s32, %s21
    %p34 = scmp.ge.s32.totalorder %s33, 2
    %s35 = scalar_select %p34, 0, %s33
    %s36 = sadd.s32 1, %s20
    %s37 = scalar_select %p34, %s36, %s20
    %p38 = scmp.ge.s32.totalorder %s37, 2
    %s39 = scalar_select %p38, 0, %s37
    %s40 = ssub.s32 %s20, %s39
    %s41 = ssub.s32 %s21, %s35
    %s42 = sor.u32 %s40, %s41
    %p43 = scmp.eq.s32.totalorder %s42, 0
    %s45 = sadd.s32 %s44, 1
    %s46 = scalar_select %p43, %s44, %s45
    %p49 = pneg %p43
    %p50 = scmp.eq.s32.totalorder %s13, 3
    %p51 = por %p49, %p50
    %p52 = scmp.ne.s32.totalorder %s44, %s47
    %p53 = scmp.eq.s32.totalorder %s13, 0
    %p54 = por %p52, %p53
    %p55 = scmp.ne.s32.totalorder %s44, %s47
    %p56 = scmp.eq.s32.totalorder %s18, 3
    %p57 = por %p55, %p56
    %p58 = scmp.ne.s32.totalorder %s47, %s48
    %p59 = scmp.eq.s32.totalorder %s18, 0
    %p60 = por %p58, %p59
    %p61 = scmp.ne.s32.totalorder %s47, %s48
    %p62 = scmp.eq.s32.totalorder %s19, 3
    %p63 = por %p61, %p62
    %p65 = scmp.ne.s32.totalorder %s48, %s64
    %p66 = scmp.eq.s32.totalorder %s19, 0
    %p67 = por %p65, %p66
    %s69 = sadd.s32 %s68, 1
    %p72 = scmp.eq.s32.totalorder %s13, 3
    %p73 = scmp.ne.s32.totalorder %s68, %s70
    %p74 = scmp.eq.s32.totalorder %s13, 0
    %p75 = por %p73, %p74
    %p76 = scmp.ne.s32.totalorder %s68, %s70
    %p77 = scmp.eq.s32.totalorder %s18, 3
    %p78 = por %p76, %p77
    %p79 = scmp.ne.s32.totalorder %s70, %s71
    %p80 = scmp.eq.s32.totalorder %s18, 0
    %p81 = por %p79, %p80
    %p82 = scmp.ne.s32.totalorder %s70, %s71
    %p83 = scmp.eq.s32.totalorder %s19, 3
    %p84 = por %p82, %p83
    %p86 = scmp.ne.s32.totalorder %s71, %s85
    %p87 = scmp.eq.s32.totalorder %s19, 0
    %p88 = por %p86, %p87
    %s90 = sadd.s32 %s89, 1
    %p93 = scmp.eq.s32.totalorder %s13, 3
    %p94 = scmp.ne.s32.totalorder %s89, %s91
    %p95 = scmp.eq.s32.totalorder %s13, 0
    %p96 = por %p94, %p95
    %p97 = scmp.ne.s32.totalorder %s89, %s91
    %p98 = scmp.eq.s32.totalorder %s18, 3
    %p99 = por %p97, %p98
    %p100 = scmp.ne.s32.totalorder %s91, %s92
    %p101 = scmp.eq.s32.totalorder %s18, 0
    %p102 = por %p100, %p101
    %p103 = scmp.ne.s32.totalorder %s91, %s92
    %p104 = scmp.eq.s32.totalorder %s19, 3
    %p105 = por %p103, %p104
    %p107 = scmp.ne.s32.totalorder %s92, %s106
    %p108 = scmp.eq.s32.totalorder %s19, 0
    %p109 = por %p107, %p108
    %s110 = ssub.s32 %s20, %s39
    %s111 = ssub.s32 %s22, %s31
    %s112 = sor.u32 %s110, %s111
    %p113 = scmp.eq.s32.totalorder %s112, 0
    %s115 = sadd.s32 %s114, 1
    %s116 = scalar_select %p113, %s114, %s115
    %p119 = pneg %p113
    %p120 = scmp.eq.s32.totalorder %s13, 3
    %p121 = por %p119, %p120
    %p122 = scmp.ne.s32.totalorder %s114, %s117
    %p123 = scmp.eq.s32.totalorder %s13, 0
    %p124 = por %p122, %p123
    %p125 = scmp.ne.s32.totalorder %s114, %s117
    %p126 = scmp.eq.s32.totalorder %s18, 3
    %p127 = por %p125, %p126
    %p128 = scmp.ne.s32.totalorder %s117, %s118
    %p129 = scmp.eq.s32.totalorder %s18, 0
    %p130 = por %p128, %p129
    %p131 = scmp.ne.s32.totalorder %s117, %s118
    %p132 = scmp.eq.s32.totalorder %s19, 3
    %p133 = por %p131, %p132
    %p135 = scmp.ne.s32.totalorder %s118, %s134
    %p136 = scmp.eq.s32.totalorder %s19, 0
    %p137 = por %p135, %p136
    %s138 = ssub.s32 %s20, %s39
    %s139 = ssub.s32 %s22, %s31
    %s140 = sor.u32 %s138, %s139
    %p141 = scmp.eq.s32.totalorder %s140, 0
    %s143 = sadd.s32 %s142, 1
    %s144 = scalar_select %p141, %s142, %s143
    %p147 = pneg %p141
    %p148 = scmp.eq.s32.totalorder %s13, 3
    %p149 = por %p147, %p148
    %p150 = scmp.ne.s32.totalorder %s142, %s145
    %p151 = scmp.eq.s32.totalorder %s13, 0
    %p152 = por %p150, %p151
    %p153 = scmp.ne.s32.totalorder %s142, %s145
    %p154 = scmp.eq.s32.totalorder %s18, 3
    %p155 = por %p153, %p154
    %p156 = scmp.ne.s32.totalorder %s145, %s146
    %p157 = scmp.eq.s32.totalorder %s18, 0
    %p158 = por %p156, %p157
    %p159 = scmp.ne.s32.totalorder %s145, %s146
    %p160 = scmp.eq.s32.totalorder %s19, 3
    %p161 = por %p159, %p160
    %p163 = scmp.ne.s32.totalorder %s146, %s162
    %p164 = scmp.eq.s32.totalorder %s19, 0
    %p165 = por %p163, %p164
    %s167 = sadd.s32 %s166, 1
    %p170 = scmp.eq.s32.totalorder %s13, 3
    %p171 = scmp.ne.s32.totalorder %s166, %s168
    %p172 = scmp.eq.s32.totalorder %s13, 0
    %p173 = por %p171, %p172
    %p174 = scmp.ne.s32.totalorder %s166, %s168
    %p175 = scmp.eq.s32.totalorder %s18, 3
    %p176 = por %p174, %p175
    %p177 = scmp.ne.s32.totalorder %s168, %s169
    %p178 = scmp.eq.s32.totalorder %s18, 0
    %p179 = por %p177, %p178
    %p180 = scmp.ne.s32.totalorder %s168, %s169
    %p181 = scmp.eq.s32.totalorder %s19, 3
    %p182 = por %p180, %p181
    %p184 = scmp.ne.s32.totalorder %s169, %s183
    %p185 = scmp.eq.s32.totalorder %s19, 0
    %p186 = por %p184, %p185
    %s188 = sadd.s32 %s187, 1
    %p191 = scmp.eq.s32.totalorder %s13, 3
    %p192 = scmp.ne.s32.totalorder %s187, %s189
    %p193 = scmp.eq.s32.totalorder %s13, 0
    %p194 = por %p192, %p193
    %p195 = scmp.ne.s32.totalorder %s187, %s189
    %p196 = scmp.eq.s32.totalorder %s18, 3
    %p197 = por %p195, %p196
    %p198 = scmp.ne.s32.totalorder %s189, %s190
    %p199 = scmp.eq.s32.totalorder %s18, 0
    %p200 = por %p198, %p199
    %p201 = scmp.ne.s32.totalorder %s189, %s190
    %p202 = scmp.eq.s32.totalorder %s19, 3
    %p203 = por %p201, %p202
    %p205 = scmp.ne.s32.totalorder %s190, %s204
    %p206 = scmp.eq.s32.totalorder %s19, 0
    %p207 = por %p205, %p206
    %s208 = ssub.s32 %s20, %s39
    %s209 = ssub.s32 %s21, %s35
    %s210 = sor.u32 %s208, %s209
    %p211 = scmp.eq.s32.totalorder %s210, 0
    %s213 = sadd.s32 %s212, 1
    %s214 = scalar_select %p211, %s212, %s213
    %p217 = pneg %p211
    %p218 = scmp.eq.s32.totalorder %s13, 3
    %p219 = por %p217, %p218
    %p220 = scmp.ne.s32.totalorder %s212, %s215
    %p221 = scmp.eq.s32.totalorder %s13, 0
    %p222 = por %p220, %p221
    %p223 = scmp.ne.s32.totalorder %s212, %s215
    %p224 = scmp.eq.s32.totalorder %s18, 3
    %p225 = por %p223, %p224
    %p226 = scmp.ne.s32.totalorder %s215, %s216
    %p227 = scmp.eq.s32.totalorder %s18, 0
    %p228 = por %p226, %p227
    %p229 = scmp.ne.s32.totalorder %s215, %s216
    %p230 = scmp.eq.s32.totalorder %s19, 3
    %p231 = por %p229, %p230
    %p233 = scmp.ne.s32.totalorder %s216, %s232
    %p234 = scmp.eq.s32.totalorder %s19, 0
    %p235 = por %p233, %p234
    %p236 = scmp.le.s32.totalorder 1, %s13
    %p237 = scmp.lt.s32.totalorder %s13, 5
    %p238 = pnand %p236, %p237
    %p239 = pneg %p238
    // Predicated region
    $region9: #{nonlocal_block_3d.3} parent=5 // pred_check
      _
    $region10: #{nonlocal_block_3d.3} parent=5 // pred_check_branch
      %241 = sbr.rel (%p238) target = $region12
    $region11: #{nonlocal_block_3d.3} parent=5 // pred_region
      %s242 = ssub.s32 %s13, 1
      // Predicated region
      $region13: #{nonlocal_block_3d.3} parent=11 // pred_check
        %p243 = pneg %p81
      $region14: #{nonlocal_block_3d.3} parent=11 // pred_check_branch
        %245 = sbr.rel (%p243) target = $region16
      $region15: #{nonlocal_block_3d.3} parent=11 // pred_region
        _
      $region16: #{nonlocal_block_3d.3} parent=11 // pred_fallthru
        _
      // Predicated region
      $region17: #{nonlocal_block_3d.3} parent=11 // pred_check
        %p246 = pneg %p102
      $region18: #{nonlocal_block_3d.3} parent=11 // pred_check_branch
        %248 = sbr.rel (%p246) target = $region20
      $region19: #{nonlocal_block_3d.3} parent=11 // pred_region
        _
      $region20: #{nonlocal_block_3d.3} parent=11 // pred_fallthru
        _
      // Predicated region
      $region21: #{nonlocal_block_3d.3} parent=11 // pred_check
        %p249 = pneg %p179
      $region22: #{nonlocal_block_3d.3} parent=11 // pred_check_branch
        %251 = sbr.rel (%p249) target = $region24
      $region23: #{nonlocal_block_3d.3} parent=11 // pred_region
        _
      $region24: #{nonlocal_block_3d.3} parent=11 // pred_fallthru
        _
      // Predicated region
      $region25: #{nonlocal_block_3d.3} parent=11 // pred_check
        %p252 = pneg %p200
      $region26: #{nonlocal_block_3d.3} parent=11 // pred_check_branch
        %254 = sbr.rel (%p252) target = $region28
      $region27: #{nonlocal_block_3d.3} parent=11 // pred_region
        _
      $region28: #{nonlocal_block_3d.3} parent=11 // pred_fallthru
        _
    $region12: #{nonlocal_block_3d.3} parent=5 // pred_fallthru
      _
    %p255 = scmp.lt.s32.totalorder %s13, 4
    // Predicated region
    $region29: #{nonlocal_block_3d.3} parent=5 // pred_check
      %p256 = pneg %p255
    $region30: #{nonlocal_block_3d.3} parent=5 // pred_check_branch
      %258 = sbr.rel (%p256) target = $region32
    $region31: #{nonlocal_block_3d.3} parent=5 // pred_region
      // Predicated region
      $region33: #{nonlocal_block_3d.3} parent=31 // pred_check
        %p259 = pneg %p54
      $region34: #{nonlocal_block_3d.3} parent=31 // pred_check_branch
        %261 = sbr.rel (%p259) target = $region36
      $region35: #{nonlocal_block_3d.3} parent=31 // pred_region
        %s262 = smul.u32 64, %s21
        %p263 = scmp.lt.s32.totalorder %s20, 1
        %s264 = scalar_select %p263, %s20, 1
        %p265 = scmp.lt.s32.totalorder %s262, 127
        %s266 = scalar_select %p265, %s262, 127
        %s267 = smul.addr %s264, 128
        %s268 = sadd.s32 %s266, %s267
        %s269 = smul.addr %s268, 8
        %s270 = scalar_lea.vmem %s0, %s269
        %s271 = smul.u32 64, %s21
      $region36: #{nonlocal_block_3d.3} parent=31 // pred_fallthru
        _
      // Predicated region
      $region37: #{nonlocal_block_3d.3} parent=31 // pred_check
        %p272 = pneg %p124
      $region38: #{nonlocal_block_3d.3} parent=31 // pred_check_branch
        %274 = sbr.rel (%p272) target = $region40
      $region39: #{nonlocal_block_3d.3} parent=31 // pred_region
        %s275 = smul.u32 32, %s22
        %p276 = scmp.lt.s32.totalorder %s20, 1
        %s277 = scalar_select %p276, %s20, 1
        %p278 = scmp.lt.s32.totalorder %s275, 31
        %s279 = scalar_select %p278, %s275, 31
        %s280 = smul.addr %s277, 32
        %s281 = sadd.s32 %s279, %s280
        %s282 = smul.addr %s281, 4
        %s283 = scalar_lea.vmem %s3, %s282
        %s284 = smul.u32 32, %s22
      $region40: #{nonlocal_block_3d.3} parent=31 // pred_fallthru
        _
      // Predicated region
      $region41: #{nonlocal_block_3d.3} parent=31 // pred_check
        %p285 = pneg %p152
      $region42: #{nonlocal_block_3d.3} parent=31 // pred_check_branch
        %287 = sbr.rel (%p285) target = $region44
      $region43: #{nonlocal_block_3d.3} parent=31 // pred_region
        %s288 = smul.u32 32, %s22
        %p289 = scmp.lt.s32.totalorder %s20, 1
        %s290 = scalar_select %p289, %s20, 1
        %p291 = scmp.lt.s32.totalorder %s288, 31
        %s292 = scalar_select %p291, %s288, 31
        %s293 = smul.addr %s290, 32
        %s294 = sadd.s32 %s292, %s293
        %s295 = smul.addr %s294, 4
        %s296 = scalar_lea.vmem %s4, %s295
        %s297 = smul.u32 32, %s22
      $region44: #{nonlocal_block_3d.3} parent=31 // pred_fallthru
        _
    $region32: #{nonlocal_block_3d.3} parent=5 // pred_fallthru
      _
    %p298 = scmp.le.s32.totalorder 1, %s13
    %p299 = scmp.lt.s32.totalorder %s13, 5
    %p300 = pnand %p298, %p299
    %p301 = pneg %p300
    // Predicated region
    $region45: #{nonlocal_block_3d.3} parent=5 // pred_check
      _
    $region46: #{nonlocal_block_3d.3} parent=5 // pred_check_branch
      %303 = sbr.rel (%p300) target = $region48
    $region47: #{nonlocal_block_3d.3} parent=5 // pred_region
      %s304 = ssub.s32 %s13, 1
      %s305 = smul.u32 64, %s24
      %p306 = scmp.lt.s32.totalorder %s23, 1
      %s307 = scalar_select %p306, %s23, 1
      %p308 = scmp.lt.s32.totalorder %s305, 127
      %s309 = scalar_select %p308, %s305, 127
      %s310 = smul.addr %s307, 128
      %s311 = sadd.s32 %s309, %s310
      %s312 = smul.addr %s311, 8
      %s313 = scalar_lea.vmem %s0, %s312
      %p314 = pneg %p60
      %p315 = pneg %p57
      %p316 = pneg %p81
      %p317 = pneg %p78
      %p318 = pneg %p102
      %p319 = pneg %p99
      %s320 = smul.u32 32, %s25
      %p321 = scmp.lt.s32.totalorder %s23, 1
      %s322 = scalar_select %p321, %s23, 1
      %p323 = scmp.lt.s32.totalorder %s320, 31
      %s324 = scalar_select %p323, %s320, 31
      %s325 = smul.addr %s322, 32
      %s326 = sadd.s32 %s324, %s325
      %s327 = smul.addr %s326, 4
      %s328 = scalar_lea.vmem %s3, %s327
      %p329 = pneg %p130
      %p330 = pneg %p127
      %s331 = smul.u32 32, %s25
      %p332 = scmp.lt.s32.totalorder %s23, 1
      %s333 = scalar_select %p332, %s23, 1
      %p334 = scmp.lt.s32.totalorder %s331, 31
      %s335 = scalar_select %p334, %s331, 31
      %s336 = smul.addr %s333, 32
      %s337 = sadd.s32 %s335, %s336
      %s338 = smul.addr %s337, 4
      %s339 = scalar_lea.vmem %s4, %s338
      %p340 = pneg %p158
      %p341 = pneg %p155
      %p342 = pneg %p179
      %p343 = pneg %p176
      %p344 = pneg %p200
      %p345 = pneg %p197
      %p346 = pneg %p228
      %p347 = pneg %p225
      %s348 = smul.u32 64, %s24
      %p349 = scmp.lt.s32.totalorder %s23, 1
      %s350 = scalar_select %p349, %s23, 1
      %p351 = scmp.lt.s32.totalorder %s348, 127
      %s352 = scalar_select %p351, %s348, 127
      %s353 = smul.addr %s350, 128
      %s354 = sadd.s32 %s352, %s353
      %s355 = smul.addr %s354, 8
      %s356 = scalar_lea.vmem %s7, %s355
      %s357 = smul.u32 64, %s24
      %p358 = scmp.lt.s32.totalorder %s23, 1
      %s359 = scalar_select %p358, %s23, 1
      %p360 = scmp.lt.s32.totalorder %s357, 127
      %s361 = scalar_select %p360, %s357, 127
      %s362 = smul.addr %s359, 128
      %s363 = sadd.s32 %s361, %s362
      %s364 = smul.addr %s363, 8
      %s365 = scalar_lea.vmem %s0, %s364
      %s366 = smul.u32 64, %s24
      %s367 = smul.u32 32, %s25
      %p368 = scmp.lt.s32.totalorder %s23, 1
      %s369 = scalar_select %p368, %s23, 1
      %p370 = scmp.lt.s32.totalorder %s367, 31
      %s371 = scalar_select %p370, %s367, 31
      %s372 = smul.addr %s369, 32
      %s373 = sadd.s32 %s371, %s372
      %s374 = smul.addr %s373, 4
      %s375 = scalar_lea.vmem %s3, %s374
      %s376 = smul.u32 32, %s25
      %s377 = smul.u32 32, %s25
      %p378 = scmp.lt.s32.totalorder %s23, 1
      %s379 = scalar_select %p378, %s23, 1
      %p380 = scmp.lt.s32.totalorder %s377, 31
      %s381 = scalar_select %p380, %s377, 31
      %s382 = smul.addr %s379, 32
      %s383 = sadd.s32 %s381, %s382
      %s384 = smul.addr %s383, 4
      %s385 = scalar_lea.vmem %s4, %s384
      %s386 = smul.u32 32, %s25
      %s387 = smul.u32 64, %s24
      %p388 = scmp.lt.s32.totalorder %s23, 1
      %s389 = scalar_select %p388, %s23, 1
      %p390 = scmp.lt.s32.totalorder %s387, 127
      %s391 = scalar_select %p390, %s387, 127
      %s392 = smul.addr %s389, 128
      %s393 = sadd.s32 %s391, %s392
      %s394 = smul.addr %s393, 8
      %s395 = scalar_lea.vmem %s7, %s394
      %s396 = smul.u32 64, %s24
      %p397 = scmp.eq.s32.totalorder %s25, 0
      // Predicated region
      $region49: #{nonlocal_block_3d.3} parent=47 // pred_check
        %p398 = pneg %p397
      $region50: #{nonlocal_block_3d.3} parent=47 // pred_check_branch
        %400 = sbr.rel (%p398) target = $region52
      $region51: #{nonlocal_block_3d.3} parent=47 // pred_region
        %v401 = vld [vmem:[%s365] sm:$0xff]
        %v402 = vld [vmem:[%s365 + $0x8] sm:$0xff]
        %v403 = vld [vmem:[%s365 + $0x10] sm:$0xff]
        %v404 = vld [vmem:[%s365 + $0x18] sm:$0xff]
        %v405 = vld [vmem:[%s365 + $0x20] sm:$0xff]
        %v406 = vld [vmem:[%s365 + $0x28] sm:$0xff]
        %v407 = vld [vmem:[%s365 + $0x30] sm:$0xff]
        %v408 = vld [vmem:[%s365 + $0x38] sm:$0xff]
        %v409 = vld [vmem:[%s365 + $0x40] sm:$0xff]
        %v410 = vld [vmem:[%s365 + $0x48] sm:$0xff]
        %v411 = vld [vmem:[%s365 + $0x50] sm:$0xff]
        %v412 = vld [vmem:[%s365 + $0x58] sm:$0xff]
        %v413 = vld [vmem:[%s365 + $0x60] sm:$0xff]
        %v414 = vld [vmem:[%s365 + $0x68] sm:$0xff]
        %v415 = vld [vmem:[%s365 + $0x70] sm:$0xff]
        %v416 = vld [vmem:[%s365 + $0x78] sm:$0xff]
        %v417 = vld [vmem:[%s365 + $0x80] sm:$0xff]
        %v418 = vld [vmem:[%s365 + $0x88] sm:$0xff]
        %v419 = vld [vmem:[%s365 + $0x90] sm:$0xff]
        %v420 = vld [vmem:[%s365 + $0x98] sm:$0xff]
        %v421 = vld [vmem:[%s365 + $0xa0] sm:$0xff]
        %v422 = vld [vmem:[%s365 + $0xa8] sm:$0xff]
        %v423 = vld [vmem:[%s365 + $0xb0] sm:$0xff]
        %v424 = vld [vmem:[%s365 + $0xb8] sm:$0xff]
        %v425 = vld [vmem:[%s365 + $0xc0] sm:$0xff]
        %v426 = vld [vmem:[%s365 + $0xc8] sm:$0xff]
        %v427 = vld [vmem:[%s365 + $0xd0] sm:$0xff]
        %v428 = vld [vmem:[%s365 + $0xd8] sm:$0xff]
        %v429 = vld [vmem:[%s365 + $0xe0] sm:$0xff]
        %v430 = vld [vmem:[%s365 + $0xe8] sm:$0xff]
        %v431 = vld [vmem:[%s365 + $0xf0] sm:$0xff]
        %v432 = vld [vmem:[%s365 + $0xf8] sm:$0xff]
        %v433 = vld [vmem:[%s365 + $0x100] sm:$0xff]
        %v434 = vld [vmem:[%s365 + $0x108] sm:$0xff]
        %v435 = vld [vmem:[%s365 + $0x110] sm:$0xff]
        %v436 = vld [vmem:[%s365 + $0x118] sm:$0xff]
        %v437 = vld [vmem:[%s365 + $0x120] sm:$0xff]
        %v438 = vld [vmem:[%s365 + $0x128] sm:$0xff]
        %v439 = vld [vmem:[%s365 + $0x130] sm:$0xff]
        %v440 = vld [vmem:[%s365 + $0x138] sm:$0xff]
        %v441 = vld [vmem:[%s365 + $0x140] sm:$0xff]
        %v442 = vld [vmem:[%s365 + $0x148] sm:$0xff]
        %v443 = vld [vmem:[%s365 + $0x150] sm:$0xff]
        %v444 = vld [vmem:[%s365 + $0x158] sm:$0xff]
        %v445 = vld [vmem:[%s365 + $0x160] sm:$0xff]
        %v446 = vld [vmem:[%s365 + $0x168] sm:$0xff]
        %v447 = vld [vmem:[%s365 + $0x170] sm:$0xff]
        %v448 = vld [vmem:[%s365 + $0x178] sm:$0xff]
        %v449 = vld [vmem:[%s365 + $0x180] sm:$0xff]
        %v450 = vld [vmem:[%s365 + $0x188] sm:$0xff]
        %v451 = vld [vmem:[%s365 + $0x190] sm:$0xff]
        %v452 = vld [vmem:[%s365 + $0x198] sm:$0xff]
        %v453 = vld [vmem:[%s365 + $0x1a0] sm:$0xff]
        %v454 = vld [vmem:[%s365 + $0x1a8] sm:$0xff]
        %v455 = vld [vmem:[%s365 + $0x1b0] sm:$0xff]
        %v456 = vld [vmem:[%s365 + $0x1b8] sm:$0xff]
        %v457 = vld [vmem:[%s365 + $0x1c0] sm:$0xff]
        %v458 = vld [vmem:[%s365 + $0x1c8] sm:$0xff]
        %v459 = vld [vmem:[%s365 + $0x1d0] sm:$0xff]
        %v460 = vld [vmem:[%s365 + $0x1d8] sm:$0xff]
        %v461 = vld [vmem:[%s365 + $0x1e0] sm:$0xff]
        %v462 = vld [vmem:[%s365 + $0x1e8] sm:$0xff]
        %v463 = vld [vmem:[%s365 + $0x1f0] sm:$0xff]
        %v464 = vld [vmem:[%s365 + $0x1f8] sm:$0xff]
        %v465 = vpack.c.bf16 %v402, %v401
        %v466 = vpack.c.bf16 %v404, %v403
        %v467 = vpack.c.bf16 %v406, %v405
        %v468 = vpack.c.bf16 %v408, %v407
        %v469 = vpack.c.bf16 %v410, %v409
        %v470 = vpack.c.bf16 %v412, %v411
        %v471 = vpack.c.bf16 %v414, %v413
        %v472 = vpack.c.bf16 %v416, %v415
        %v473 = vpack.c.bf16 %v418, %v417
        %v474 = vpack.c.bf16 %v420, %v419
        %v475 = vpack.c.bf16 %v422, %v421
        %v476 = vpack.c.bf16 %v424, %v423
        %v477 = vpack.c.bf16 %v426, %v425
        %v478 = vpack.c.bf16 %v428, %v427
        %v479 = vpack.c.bf16 %v430, %v429
        %v480 = vpack.c.bf16 %v432, %v431
        %v481 = vpack.c.bf16 %v434, %v433
        %v482 = vpack.c.bf16 %v436, %v435
        %v483 = vpack.c.bf16 %v438, %v437
        %v484 = vpack.c.bf16 %v440, %v439
        %v485 = vpack.c.bf16 %v442, %v441
        %v486 = vpack.c.bf16 %v444, %v443
        %v487 = vpack.c.bf16 %v446, %v445
        %v488 = vpack.c.bf16 %v448, %v447
        %v489 = vpack.c.bf16 %v450, %v449
        %v490 = vpack.c.bf16 %v452, %v451
        %v491 = vpack.c.bf16 %v454, %v453
        %v492 = vpack.c.bf16 %v456, %v455
        %v493 = vpack.c.bf16 %v458, %v457
        %v494 = vpack.c.bf16 %v460, %v459
        %v495 = vpack.c.bf16 %v462, %v461
        %v496 = vpack.c.bf16 %v464, %v463
        %v497 = vld [vmem:[%s1] sm:$0xf]
        %v498 = vld [vmem:[%s1 + $0x4] sm:$0xf]
        %v499 = vld [vmem:[%s1 + $0x8] sm:$0xf]
        %v500 = vld [vmem:[%s1 + $0xc] sm:$0xf]
        %v501 = vld [vmem:[%s1 + $0x10] sm:$0xf]
        %v502 = vld [vmem:[%s1 + $0x14] sm:$0xf]
        %v503 = vld [vmem:[%s1 + $0x18] sm:$0xf]
        %v504 = vld [vmem:[%s1 + $0x1c] sm:$0xf]
        %v505 = vld [vmem:[%s1 + $0x20] sm:$0xf]
        %v506 = vld [vmem:[%s1 + $0x24] sm:$0xf]
        %v507 = vld [vmem:[%s1 + $0x28] sm:$0xf]
        %v508 = vld [vmem:[%s1 + $0x2c] sm:$0xf]
        %v509 = vld [vmem:[%s1 + $0x30] sm:$0xf]
        %v510 = vld [vmem:[%s1 + $0x34] sm:$0xf]
        %v511 = vld [vmem:[%s1 + $0x38] sm:$0xf]
        %v512 = vld [vmem:[%s1 + $0x3c] sm:$0xf]
        %v513 = vld [vmem:[%s2] sm:$0x1]
        %v515 = vperm.slane %v513, 0
        %v533 = vunpack.c.l.b16 %v497
        %v534 = vunpack.c.l.b16 %v498
        %v535 = vunpack.c.l.b16 %v499
        %v536 = vunpack.c.l.b16 %v500
        %v537 = vunpack.c.l.b16 %v501
        %v538 = vunpack.c.l.b16 %v502
        %v539 = vunpack.c.l.b16 %v503
        %v540 = vunpack.c.l.b16 %v504
        %v541 = vunpack.c.l.b16 %v505
        %v542 = vunpack.c.l.b16 %v506
        %v543 = vunpack.c.l.b16 %v507
        %v544 = vunpack.c.l.b16 %v508
        %v545 = vunpack.c.l.b16 %v509
        %v546 = vunpack.c.l.b16 %v510
        %v547 = vunpack.c.l.b16 %v511
        %v548 = vunpack.c.l.b16 %v512
        %v549 = vpack.c.b16 %v534, %v533
        %v550 = vpack.c.b16 %v536, %v535
        %v551 = vpack.c.b16 %v538, %v537
        %v552 = vpack.c.b16 %v540, %v539
        %v553 = vpack.c.b16 %v542, %v541
        %v554 = vpack.c.b16 %v544, %v543
        %v555 = vpack.c.b16 %v546, %v545
        %v556 = vpack.c.b16 %v548, %v547
        %565 = vmatpush.bf16.msra.mxu0 %v556
        %566 = vmatpush.bf16.msra.mxu0 %v555
        %567 = vmatpush.bf16.msra.mxu0 %v554
        %568 = vmatpush.bf16.msra.mxu0 %v553
        %569 = vmatpush.bf16.msra.mxu0 %v552
        %570 = vmatpush.bf16.msra.mxu0 %v551
        %571 = vmatpush.bf16.msra.mxu0 %v550
        %572 = vmatpush.bf16.msra.mxu0 %v549
        %573 = vmatmul.bf16.gmra.mxu0 %v465
        %v574 = vpop.f32.mrf.mxu0
        %v575 = vadd.f32 %v515, %v574
        %v576 = vpop.f32.mrf.mxu0
        %v577 = vadd.f32 %v515, %v576
        %578 = vmatmul.bf16.gmra.mxu0 %v466
        %v579 = vpop.f32.mrf.mxu0
        %v580 = vadd.f32 %v515, %v579
        %v581 = vpop.f32.mrf.mxu0
        %v582 = vadd.f32 %v515, %v581
        %583 = vmatmul.bf16.gmra.mxu0 %v467
        %v584 = vpop.f32.mrf.mxu0
        %v585 = vadd.f32 %v515, %v584
        %v586 = vpop.f32.mrf.mxu0
        %v587 = vadd.f32 %v515, %v586
        %588 = vmatmul.bf16.gmra.mxu0 %v468
        %v589 = vpop.f32.mrf.mxu0
        %v590 = vadd.f32 %v515, %v589
        %v591 = vpop.f32.mrf.mxu0
        %v592 = vadd.f32 %v515, %v591
        %593 = vmatmul.bf16.gmra.mxu0 %v469
        %v594 = vpop.f32.mrf.mxu0
        %v595 = vadd.f32 %v515, %v594
        %v596 = vpop.f32.mrf.mxu0
        %v597 = vadd.f32 %v515, %v596
        %598 = vmatmul.bf16.gmra.mxu0 %v470
        %v599 = vpop.f32.mrf.mxu0
        %v600 = vadd.f32 %v515, %v599
        %v601 = vpop.f32.mrf.mxu0
        %v602 = vadd.f32 %v515, %v601
        %603 = vmatmul.bf16.gmra.mxu0 %v471
        %v604 = vpop.f32.mrf.mxu0
        %v605 = vadd.f32 %v515, %v604
        %v606 = vpop.f32.mrf.mxu0
        %v607 = vadd.f32 %v515, %v606
        %608 = vmatmul.bf16.gmra.mxu0 %v472
        %v609 = vpop.f32.mrf.mxu0
        %v610 = vadd.f32 %v515, %v609
        %v611 = vpop.f32.mrf.mxu0
        %v612 = vadd.f32 %v515, %v611
        %613 = vmatmul.bf16.gmra.mxu0 %v473
        %v614 = vpop.f32.mrf.mxu0
        %v615 = vadd.f32 %v515, %v614
        %v616 = vpop.f32.mrf.mxu0
        %v617 = vadd.f32 %v515, %v616
        %618 = vmatmul.bf16.gmra.mxu0 %v474
        %v619 = vpop.f32.mrf.mxu0
        %v620 = vadd.f32 %v515, %v619
        %v621 = vpop.f32.mrf.mxu0
        %v622 = vadd.f32 %v515, %v621
        %623 = vmatmul.bf16.gmra.mxu0 %v475
        %v624 = vpop.f32.mrf.mxu0
        %v625 = vadd.f32 %v515, %v624
        %v626 = vpop.f32.mrf.mxu0
        %v627 = vadd.f32 %v515, %v626
        %628 = vmatmul.bf16.gmra.mxu0 %v476
        %v629 = vpop.f32.mrf.mxu0
        %v630 = vadd.f32 %v515, %v629
        %v631 = vpop.f32.mrf.mxu0
        %v632 = vadd.f32 %v515, %v631
        %633 = vmatmul.bf16.gmra.mxu0 %v477
        %v634 = vpop.f32.mrf.mxu0
        %v635 = vadd.f32 %v515, %v634
        %v636 = vpop.f32.mrf.mxu0
        %v637 = vadd.f32 %v515, %v636
        %638 = vmatmul.bf16.gmra.mxu0 %v478
        %v639 = vpop.f32.mrf.mxu0
        %v640 = vadd.f32 %v515, %v639
        %v641 = vpop.f32.mrf.mxu0
        %v642 = vadd.f32 %v515, %v641
        %643 = vmatmul.bf16.gmra.mxu0 %v479
        %v644 = vpop.f32.mrf.mxu0
        %v645 = vadd.f32 %v515, %v644
        %v646 = vpop.f32.mrf.mxu0
        %v647 = vadd.f32 %v515, %v646
        %648 = vmatmul.bf16.gmra.mxu0 %v480
        %v649 = vpop.f32.mrf.mxu0
        %v650 = vadd.f32 %v515, %v649
        %v651 = vpop.f32.mrf.mxu0
        %v652 = vadd.f32 %v515, %v651
        %653 = vmatmul.bf16.gmra.mxu0 %v481
        %v654 = vpop.f32.mrf.mxu0
        %v655 = vadd.f32 %v515, %v654
        %v656 = vpop.f32.mrf.mxu0
        %v657 = vadd.f32 %v515, %v656
        %658 = vmatmul.bf16.gmra.mxu0 %v482
        %v659 = vpop.f32.mrf.mxu0
        %v660 = vadd.f32 %v515, %v659
        %v661 = vpop.f32.mrf.mxu0
        %v662 = vadd.f32 %v515, %v661
        %663 = vmatmul.bf16.gmra.mxu0 %v483
        %v664 = vpop.f32.mrf.mxu0
        %v665 = vadd.f32 %v515, %v664
        %v666 = vpop.f32.mrf.mxu0
        %v667 = vadd.f32 %v515, %v666
        %668 = vmatmul.bf16.gmra.mxu0 %v484
        %v669 = vpop.f32.mrf.mxu0
        %v670 = vadd.f32 %v515, %v669
        %v671 = vpop.f32.mrf.mxu0
        %v672 = vadd.f32 %v515, %v671
        %673 = vmatmul.bf16.gmra.mxu0 %v485
        %v674 = vpop.f32.mrf.mxu0
        %v675 = vadd.f32 %v515, %v674
        %v676 = vpop.f32.mrf.mxu0
        %v677 = vadd.f32 %v515, %v676
        %678 = vmatmul.bf16.gmra.mxu0 %v486
        %v679 = vpop.f32.mrf.mxu0
        %v680 = vadd.f32 %v515, %v679
        %v681 = vpop.f32.mrf.mxu0
        %v682 = vadd.f32 %v515, %v681
        %683 = vmatmul.bf16.gmra.mxu0 %v487
        %v684 = vpop.f32.mrf.mxu0
        %v685 = vadd.f32 %v515, %v684
        %v686 = vpop.f32.mrf.mxu0
        %v687 = vadd.f32 %v515, %v686
        %688 = vmatmul.bf16.gmra.mxu0 %v488
        %v689 = vpop.f32.mrf.mxu0
        %v690 = vadd.f32 %v515, %v689
        %v691 = vpop.f32.mrf.mxu0
        %v692 = vadd.f32 %v515, %v691
        %693 = vmatmul.bf16.gmra.mxu0 %v489
        %v694 = vpop.f32.mrf.mxu0
        %v695 = vadd.f32 %v515, %v694
        %v696 = vpop.f32.mrf.mxu0
        %v697 = vadd.f32 %v515, %v696
        %698 = vmatmul.bf16.gmra.mxu0 %v490
        %v699 = vpop.f32.mrf.mxu0
        %v700 = vadd.f32 %v515, %v699
        %v701 = vpop.f32.mrf.mxu0
        %v702 = vadd.f32 %v515, %v701
        %703 = vmatmul.bf16.gmra.mxu0 %v491
        %v704 = vpop.f32.mrf.mxu0
        %v705 = vadd.f32 %v515, %v704
        %v706 = vpop.f32.mrf.mxu0
        %v707 = vadd.f32 %v515, %v706
        %708 = vmatmul.bf16.gmra.mxu0 %v492
        %v709 = vpop.f32.mrf.mxu0
        %v710 = vadd.f32 %v515, %v709
        %v711 = vpop.f32.mrf.mxu0
        %v712 = vadd.f32 %v515, %v711
        %713 = vmatmul.bf16.gmra.mxu0 %v493
        %v714 = vpop.f32.mrf.mxu0
        %v715 = vadd.f32 %v515, %v714
        %v716 = vpop.f32.mrf.mxu0
        %v717 = vadd.f32 %v515, %v716
        %718 = vmatmul.bf16.gmra.mxu0 %v494
        %v719 = vpop.f32.mrf.mxu0
        %v720 = vadd.f32 %v515, %v719
        %v721 = vpop.f32.mrf.mxu0
        %v722 = vadd.f32 %v515, %v721
        %723 = vmatmul.bf16.gmra.mxu0 %v495
        %v724 = vpop.f32.mrf.mxu0
        %v725 = vadd.f32 %v515, %v724
        %v726 = vpop.f32.mrf.mxu0
        %v727 = vadd.f32 %v515, %v726
        %728 = vmatmul.bf16.gmra.mxu0 %v496
        %v729 = vpop.f32.mrf.mxu0
        %v730 = vadd.f32 %v515, %v729
        %v731 = vpop.f32.mrf.mxu0
        %v732 = vadd.f32 %v515, %v731
        %733 = vdwg.mxu0
        %v734 = vpack.c.bf16 %v575, %v575
        %v735 = vpack.c.bf16 %v577, %v577
        %v736 = vpack.c.bf16 %v580, %v580
        %v737 = vpack.c.bf16 %v582, %v582
        %v738 = vpack.c.bf16 %v585, %v585
        %v739 = vpack.c.bf16 %v587, %v587
        %v740 = vpack.c.bf16 %v590, %v590
        %v741 = vpack.c.bf16 %v592, %v592
        %v742 = vpack.c.bf16 %v595, %v595
        %v743 = vpack.c.bf16 %v597, %v597
        %v744 = vpack.c.bf16 %v600, %v600
        %v745 = vpack.c.bf16 %v602, %v602
        %v746 = vpack.c.bf16 %v605, %v605
        %v747 = vpack.c.bf16 %v607, %v607
        %v748 = vpack.c.bf16 %v610, %v610
        %v749 = vpack.c.bf16 %v612, %v612
        %v750 = vpack.c.bf16 %v615, %v615
        %v751 = vpack.c.bf16 %v617, %v617
        %v752 = vpack.c.bf16 %v620, %v620
        %v753 = vpack.c.bf16 %v622, %v622
        %v754 = vpack.c.bf16 %v625, %v625
        %v755 = vpack.c.bf16 %v627, %v627
        %v756 = vpack.c.bf16 %v630, %v630
        %v757 = vpack.c.bf16 %v632, %v632
        %v758 = vpack.c.bf16 %v635, %v635
        %v759 = vpack.c.bf16 %v637, %v637
        %v760 = vpack.c.bf16 %v640, %v640
        %v761 = vpack.c.bf16 %v642, %v642
        %v762 = vpack.c.bf16 %v645, %v645
        %v763 = vpack.c.bf16 %v647, %v647
        %v764 = vpack.c.bf16 %v650, %v650
        %v765 = vpack.c.bf16 %v652, %v652
        %v766 = vpack.c.bf16 %v655, %v655
        %v767 = vpack.c.bf16 %v657, %v657
        %v768 = vpack.c.bf16 %v660, %v660
        %v769 = vpack.c.bf16 %v662, %v662
        %v770 = vpack.c.bf16 %v665, %v665
        %v771 = vpack.c.bf16 %v667, %v667
        %v772 = vpack.c.bf16 %v670, %v670
        %v773 = vpack.c.bf16 %v672, %v672
        %v774 = vpack.c.bf16 %v675, %v675
        %v775 = vpack.c.bf16 %v677, %v677
        %v776 = vpack.c.bf16 %v680, %v680
        %v777 = vpack.c.bf16 %v682, %v682
        %v778 = vpack.c.bf16 %v685, %v685
        %v779 = vpack.c.bf16 %v687, %v687
        %v780 = vpack.c.bf16 %v690, %v690
        %v781 = vpack.c.bf16 %v692, %v692
        %v782 = vpack.c.bf16 %v695, %v695
        %v783 = vpack.c.bf16 %v697, %v697
        %v784 = vpack.c.bf16 %v700, %v700
        %v785 = vpack.c.bf16 %v702, %v702
        %v786 = vpack.c.bf16 %v705, %v705
        %v787 = vpack.c.bf16 %v707, %v707
        %v788 = vpack.c.bf16 %v710, %v710
        %v789 = vpack.c.bf16 %v712, %v712
        %v790 = vpack.c.bf16 %v715, %v715
        %v791 = vpack.c.bf16 %v717, %v717
        %v792 = vpack.c.bf16 %v720, %v720
        %v793 = vpack.c.bf16 %v722, %v722
        %v794 = vpack.c.bf16 %v725, %v725
        %v795 = vpack.c.bf16 %v727, %v727
        %v796 = vpack.c.bf16 %v730, %v730
        %v797 = vpack.c.bf16 %v732, %v732
        %798 = vst [vmem:[#allocation2] sm:$0xf] %v734
        %799 = vst [vmem:[#allocation2 + $0x4] sm:$0xf] %v735
        %800 = vst [vmem:[#allocation2 + $0x8] sm:$0xf] %v736
        %801 = vst [vmem:[#allocation2 + $0xc] sm:$0xf] %v737
        %802 = vst [vmem:[#allocation2 + $0x10] sm:$0xf] %v738
        %803 = vst [vmem:[#allocation2 + $0x14] sm:$0xf] %v739
        %804 = vst [vmem:[#allocation2 + $0x18] sm:$0xf] %v740
        %805 = vst [vmem:[#allocation2 + $0x1c] sm:$0xf] %v741
        %806 = vst [vmem:[#allocation2 + $0x20] sm:$0xf] %v742
        %807 = vst [vmem:[#allocation2 + $0x24] sm:$0xf] %v743
        %808 = vst [vmem:[#allocation2 + $0x28] sm:$0xf] %v744
        %809 = vst [vmem:[#allocation2 + $0x2c] sm:$0xf] %v745
        %810 = vst [vmem:[#allocation2 + $0x30] sm:$0xf] %v746
        %811 = vst [vmem:[#allocation2 + $0x34] sm:$0xf] %v747
        %812 = vst [vmem:[#allocation2 + $0x38] sm:$0xf] %v748
        %813 = vst [vmem:[#allocation2 + $0x3c] sm:$0xf] %v749
        %814 = vst [vmem:[#allocation2 + $0x40] sm:$0xf] %v750
        %815 = vst [vmem:[#allocation2 + $0x44] sm:$0xf] %v751
        %816 = vst [vmem:[#allocation2 + $0x48] sm:$0xf] %v752
        %817 = vst [vmem:[#allocation2 + $0x4c] sm:$0xf] %v753
        %818 = vst [vmem:[#allocation2 + $0x50] sm:$0xf] %v754
        %819 = vst [vmem:[#allocation2 + $0x54] sm:$0xf] %v755
        %820 = vst [vmem:[#allocation2 + $0x58] sm:$0xf] %v756
        %821 = vst [vmem:[#allocation2 + $0x5c] sm:$0xf] %v757
        %822 = vst [vmem:[#allocation2 + $0x60] sm:$0xf] %v758
        %823 = vst [vmem:[#allocation2 + $0x64] sm:$0xf] %v759
        %824 = vst [vmem:[#allocation2 + $0x68] sm:$0xf] %v760
        %825 = vst [vmem:[#allocation2 + $0x6c] sm:$0xf] %v761
        %826 = vst [vmem:[#allocation2 + $0x70] sm:$0xf] %v762
        %827 = vst [vmem:[#allocation2 + $0x74] sm:$0xf] %v763
        %828 = vst [vmem:[#allocation2 + $0x78] sm:$0xf] %v764
        %829 = vst [vmem:[#allocation2 + $0x7c] sm:$0xf] %v765
        %830 = vst [vmem:[#allocation2 + $0x80] sm:$0xf] %v766
        %831 = vst [vmem:[#allocation2 + $0x84] sm:$0xf] %v767
        %832 = vst [vmem:[#allocation2 + $0x88] sm:$0xf] %v768
        %833 = vst [vmem:[#allocation2 + $0x8c] sm:$0xf] %v769
        %834 = vst [vmem:[#allocation2 + $0x90] sm:$0xf] %v770
        %835 = vst [vmem:[#allocation2 + $0x94] sm:$0xf] %v771
        %836 = vst [vmem:[#allocation2 + $0x98] sm:$0xf] %v772
        %837 = vst [vmem:[#allocation2 + $0x9c] sm:$0xf] %v773
        %838 = vst [vmem:[#allocation2 + $0xa0] sm:$0xf] %v774
        %839 = vst [vmem:[#allocation2 + $0xa4] sm:$0xf] %v775
        %840 = vst [vmem:[#allocation2 + $0xa8] sm:$0xf] %v776
        %841 = vst [vmem:[#allocation2 + $0xac] sm:$0xf] %v777
        %842 = vst [vmem:[#allocation2 + $0xb0] sm:$0xf] %v778
        %843 = vst [vmem:[#allocation2 + $0xb4] sm:$0xf] %v779
        %844 = vst [vmem:[#allocation2 + $0xb8] sm:$0xf] %v780
        %845 = vst [vmem:[#allocation2 + $0xbc] sm:$0xf] %v781
        %846 = vst [vmem:[#allocation2 + $0xc0] sm:$0xf] %v782
        %847 = vst [vmem:[#allocation2 + $0xc4] sm:$0xf] %v783
        %848 = vst [vmem:[#allocation2 + $0xc8] sm:$0xf] %v784
        %849 = vst [vmem:[#allocation2 + $0xcc] sm:$0xf] %v785
        %850 = vst [vmem:[#allocation2 + $0xd0] sm:$0xf] %v786
        %851 = vst [vmem:[#allocation2 + $0xd4] sm:$0xf] %v787
        %852 = vst [vmem:[#allocation2 + $0xd8] sm:$0xf] %v788
        %853 = vst [vmem:[#allocation2 + $0xdc] sm:$0xf] %v789
        %854 = vst [vmem:[#allocation2 + $0xe0] sm:$0xf] %v790
        %855 = vst [vmem:[#allocation2 + $0xe4] sm:$0xf] %v791
        %856 = vst [vmem:[#allocation2 + $0xe8] sm:$0xf] %v792
        %857 = vst [vmem:[#allocation2 + $0xec] sm:$0xf] %v793
        %858 = vst [vmem:[#allocation2 + $0xf0] sm:$0xf] %v794
        %859 = vst [vmem:[#allocation2 + $0xf4] sm:$0xf] %v795
        %860 = vst [vmem:[#allocation2 + $0xf8] sm:$0xf] %v796
        %861 = vst [vmem:[#allocation2 + $0xfc] sm:$0xf] %v797
        %vm862 = vcmask 7168
        %863 = vst.msk [vmem:[#allocation3] sm:$0xff] %vm862, -inf
        %864 = vst.msk [vmem:[#allocation3 + $0x8] sm:$0xff] %vm862, -inf
        %865 = vst.msk [vmem:[#allocation3 + $0x10] sm:$0xff] %vm862, -inf
        %866 = vst.msk [vmem:[#allocation3 + $0x18] sm:$0xff] %vm862, -inf
        %867 = vst.msk [vmem:[#allocation3 + $0x20] sm:$0xff] %vm862, -inf
        %868 = vst.msk [vmem:[#allocation3 + $0x28] sm:$0xff] %vm862, -inf
        %869 = vst.msk [vmem:[#allocation3 + $0x30] sm:$0xff] %vm862, -inf
        %870 = vst.msk [vmem:[#allocation3 + $0x38] sm:$0xff] %vm862, -inf
        %871 = vst.msk [vmem:[#allocation3 + $0x40] sm:$0xff] %vm862, -inf
        %872 = vst.msk [vmem:[#allocation3 + $0x48] sm:$0xff] %vm862, -inf
        %873 = vst.msk [vmem:[#allocation3 + $0x50] sm:$0xff] %vm862, -inf
        %874 = vst.msk [vmem:[#allocation3 + $0x58] sm:$0xff] %vm862, -inf
        %875 = vst.msk [vmem:[#allocation3 + $0x60] sm:$0xff] %vm862, -inf
        %876 = vst.msk [vmem:[#allocation3 + $0x68] sm:$0xff] %vm862, -inf
        %877 = vst.msk [vmem:[#allocation3 + $0x70] sm:$0xff] %vm862, -inf
        %878 = vst.msk [vmem:[#allocation3 + $0x78] sm:$0xff] %vm862, -inf
        %879 = vst.msk [vmem:[#allocation3 + $0x80] sm:$0xff] %vm862, -inf
        %880 = vst.msk [vmem:[#allocation3 + $0x88] sm:$0xff] %vm862, -inf
        %881 = vst.msk [vmem:[#allocation3 + $0x90] sm:$0xff] %vm862, -inf
        %882 = vst.msk [vmem:[#allocation3 + $0x98] sm:$0xff] %vm862, -inf
        %883 = vst.msk [vmem:[#allocation3 + $0xa0] sm:$0xff] %vm862, -inf
        %884 = vst.msk [vmem:[#allocation3 + $0xa8] sm:$0xff] %vm862, -inf
        %885 = vst.msk [vmem:[#allocation3 + $0xb0] sm:$0xff] %vm862, -inf
        %886 = vst.msk [vmem:[#allocation3 + $0xb8] sm:$0xff] %vm862, -inf
        %887 = vst.msk [vmem:[#allocation3 + $0xc0] sm:$0xff] %vm862, -inf
        %888 = vst.msk [vmem:[#allocation3 + $0xc8] sm:$0xff] %vm862, -inf
        %889 = vst.msk [vmem:[#allocation3 + $0xd0] sm:$0xff] %vm862, -inf
        %890 = vst.msk [vmem:[#allocation3 + $0xd8] sm:$0xff] %vm862, -inf
        %891 = vst.msk [vmem:[#allocation3 + $0xe0] sm:$0xff] %vm862, -inf
        %892 = vst.msk [vmem:[#allocation3 + $0xe8] sm:$0xff] %vm862, -inf
        %893 = vst.msk [vmem:[#allocation3 + $0xf0] sm:$0xff] %vm862, -inf
        %894 = vst.msk [vmem:[#allocation3 + $0xf8] sm:$0xff] %vm862, -inf
        %895 = vst.msk [vmem:[#allocation3 + $0x100] sm:$0xff] %vm862, -inf
        %896 = vst.msk [vmem:[#allocation3 + $0x108] sm:$0xff] %vm862, -inf
        %897 = vst.msk [vmem:[#allocation3 + $0x110] sm:$0xff] %vm862, -inf
        %898 = vst.msk [vmem:[#allocation3 + $0x118] sm:$0xff] %vm862, -inf
        %899 = vst.msk [vmem:[#allocation3 + $0x120] sm:$0xff] %vm862, -inf
        %900 = vst.msk [vmem:[#allocation3 + $0x128] sm:$0xff] %vm862, -inf
        %901 = vst.msk [vmem:[#allocation3 + $0x130] sm:$0xff] %vm862, -inf
        %902 = vst.msk [vmem:[#allocation3 + $0x138] sm:$0xff] %vm862, -inf
        %903 = vst.msk [vmem:[#allocation3 + $0x140] sm:$0xff] %vm862, -inf
        %904 = vst.msk [vmem:[#allocation3 + $0x148] sm:$0xff] %vm862, -inf
        %905 = vst.msk [vmem:[#allocation3 + $0x150] sm:$0xff] %vm862, -inf
        %906 = vst.msk [vmem:[#allocation3 + $0x158] sm:$0xff] %vm862, -inf
        %907 = vst.msk [vmem:[#allocation3 + $0x160] sm:$0xff] %vm862, -inf
        %908 = vst.msk [vmem:[#allocation3 + $0x168] sm:$0xff] %vm862, -inf
        %909 = vst.msk [vmem:[#allocation3 + $0x170] sm:$0xff] %vm862, -inf
        %910 = vst.msk [vmem:[#allocation3 + $0x178] sm:$0xff] %vm862, -inf
        %911 = vst.msk [vmem:[#allocation3 + $0x180] sm:$0xff] %vm862, -inf
        %912 = vst.msk [vmem:[#allocation3 + $0x188] sm:$0xff] %vm862, -inf
        %913 = vst.msk [vmem:[#allocation3 + $0x190] sm:$0xff] %vm862, -inf
        %914 = vst.msk [vmem:[#allocation3 + $0x198] sm:$0xff] %vm862, -inf
        %915 = vst.msk [vmem:[#allocation3 + $0x1a0] sm:$0xff] %vm862, -inf
        %916 = vst.msk [vmem:[#allocation3 + $0x1a8] sm:$0xff] %vm862, -inf
        %917 = vst.msk [vmem:[#allocation3 + $0x1b0] sm:$0xff] %vm862, -inf
        %918 = vst.msk [vmem:[#allocation3 + $0x1b8] sm:$0xff] %vm862, -inf
        %919 = vst.msk [vmem:[#allocation3 + $0x1c0] sm:$0xff] %vm862, -inf
        %920 = vst.msk [vmem:[#allocation3 + $0x1c8] sm:$0xff] %vm862, -inf
        %921 = vst.msk [vmem:[#allocation3 + $0x1d0] sm:$0xff] %vm862, -inf
        %922 = vst.msk [vmem:[#allocation3 + $0x1d8] sm:$0xff] %vm862, -inf
        %923 = vst.msk [vmem:[#allocation3 + $0x1e0] sm:$0xff] %vm862, -inf
        %924 = vst.msk [vmem:[#allocation3 + $0x1e8] sm:$0xff] %vm862, -inf
        %925 = vst.msk [vmem:[#allocation3 + $0x1f0] sm:$0xff] %vm862, -inf
        %926 = vst.msk [vmem:[#allocation3 + $0x1f8] sm:$0xff] %vm862, -inf
        %927 = vst.msk [vmem:[#allocation4] sm:$0xff] %vm862, 0.0
        %928 = vst.msk [vmem:[#allocation4 + $0x8] sm:$0xff] %vm862, 0.0
        %929 = vst.msk [vmem:[#allocation4 + $0x10] sm:$0xff] %vm862, 0.0
        %930 = vst.msk [vmem:[#allocation4 + $0x18] sm:$0xff] %vm862, 0.0
        %931 = vst.msk [vmem:[#allocation4 + $0x20] sm:$0xff] %vm862, 0.0
        %932 = vst.msk [vmem:[#allocation4 + $0x28] sm:$0xff] %vm862, 0.0
        %933 = vst.msk [vmem:[#allocation4 + $0x30] sm:$0xff] %vm862, 0.0
        %934 = vst.msk [vmem:[#allocation4 + $0x38] sm:$0xff] %vm862, 0.0
        %935 = vst.msk [vmem:[#allocation4 + $0x40] sm:$0xff] %vm862, 0.0
        %936 = vst.msk [vmem:[#allocation4 + $0x48] sm:$0xff] %vm862, 0.0
        %937 = vst.msk [vmem:[#allocation4 + $0x50] sm:$0xff] %vm862, 0.0
        %938 = vst.msk [vmem:[#allocation4 + $0x58] sm:$0xff] %vm862, 0.0
        %939 = vst.msk [vmem:[#allocation4 + $0x60] sm:$0xff] %vm862, 0.0
        %940 = vst.msk [vmem:[#allocation4 + $0x68] sm:$0xff] %vm862, 0.0
        %941 = vst.msk [vmem:[#allocation4 + $0x70] sm:$0xff] %vm862, 0.0
        %942 = vst.msk [vmem:[#allocation4 + $0x78] sm:$0xff] %vm862, 0.0
        %943 = vst.msk [vmem:[#allocation4 + $0x80] sm:$0xff] %vm862, 0.0
        %944 = vst.msk [vmem:[#allocation4 + $0x88] sm:$0xff] %vm862, 0.0
        %945 = vst.msk [vmem:[#allocation4 + $0x90] sm:$0xff] %vm862, 0.0
        %946 = vst.msk [vmem:[#allocation4 + $0x98] sm:$0xff] %vm862, 0.0
        %947 = vst.msk [vmem:[#allocation4 + $0xa0] sm:$0xff] %vm862, 0.0
        %948 = vst.msk [vmem:[#allocation4 + $0xa8] sm:$0xff] %vm862, 0.0
        %949 = vst.msk [vmem:[#allocation4 + $0xb0] sm:$0xff] %vm862, 0.0
        %950 = vst.msk [vmem:[#allocation4 + $0xb8] sm:$0xff] %vm862, 0.0
        %951 = vst.msk [vmem:[#allocation4 + $0xc0] sm:$0xff] %vm862, 0.0
        %952 = vst.msk [vmem:[#allocation4 + $0xc8] sm:$0xff] %vm862, 0.0
        %953 = vst.msk [vmem:[#allocation4 + $0xd0] sm:$0xff] %vm862, 0.0
        %954 = vst.msk [vmem:[#allocation4 + $0xd8] sm:$0xff] %vm862, 0.0
        %955 = vst.msk [vmem:[#allocation4 + $0xe0] sm:$0xff] %vm862, 0.0
        %956 = vst.msk [vmem:[#allocation4 + $0xe8] sm:$0xff] %vm862, 0.0
        %957 = vst.msk [vmem:[#allocation4 + $0xf0] sm:$0xff] %vm862, 0.0
        %958 = vst.msk [vmem:[#allocation4 + $0xf8] sm:$0xff] %vm862, 0.0
        %959 = vst.msk [vmem:[#allocation4 + $0x100] sm:$0xff] %vm862, 0.0
        %960 = vst.msk [vmem:[#allocation4 + $0x108] sm:$0xff] %vm862, 0.0
        %961 = vst.msk [vmem:[#allocation4 + $0x110] sm:$0xff] %vm862, 0.0
        %962 = vst.msk [vmem:[#allocation4 + $0x118] sm:$0xff] %vm862, 0.0
        %963 = vst.msk [vmem:[#allocation4 + $0x120] sm:$0xff] %vm862, 0.0
        %964 = vst.msk [vmem:[#allocation4 + $0x128] sm:$0xff] %vm862, 0.0
        %965 = vst.msk [vmem:[#allocation4 + $0x130] sm:$0xff] %vm862, 0.0
        %966 = vst.msk [vmem:[#allocation4 + $0x138] sm:$0xff] %vm862, 0.0
        %967 = vst.msk [vmem:[#allocation4 + $0x140] sm:$0xff] %vm862, 0.0
        %968 = vst.msk [vmem:[#allocation4 + $0x148] sm:$0xff] %vm862, 0.0
        %969 = vst.msk [vmem:[#allocation4 + $0x150] sm:$0xff] %vm862, 0.0
        %970 = vst.msk [vmem:[#allocation4 + $0x158] sm:$0xff] %vm862, 0.0
        %971 = vst.msk [vmem:[#allocation4 + $0x160] sm:$0xff] %vm862, 0.0
        %972 = vst.msk [vmem:[#allocation4 + $0x168] sm:$0xff] %vm862, 0.0
        %973 = vst.msk [vmem:[#allocation4 + $0x170] sm:$0xff] %vm862, 0.0
        %974 = vst.msk [vmem:[#allocation4 + $0x178] sm:$0xff] %vm862, 0.0
        %975 = vst.msk [vmem:[#allocation4 + $0x180] sm:$0xff] %vm862, 0.0
        %976 = vst.msk [vmem:[#allocation4 + $0x188] sm:$0xff] %vm862, 0.0
        %977 = vst.msk [vmem:[#allocation4 + $0x190] sm:$0xff] %vm862, 0.0
        %978 = vst.msk [vmem:[#allocation4 + $0x198] sm:$0xff] %vm862, 0.0
        %979 = vst.msk [vmem:[#allocation4 + $0x1a0] sm:$0xff] %vm862, 0.0
        %980 = vst.msk [vmem:[#allocation4 + $0x1a8] sm:$0xff] %vm862, 0.0
        %981 = vst.msk [vmem:[#allocation4 + $0x1b0] sm:$0xff] %vm862, 0.0
        %982 = vst.msk [vmem:[#allocation4 + $0x1b8] sm:$0xff] %vm862, 0.0
        %983 = vst.msk [vmem:[#allocation4 + $0x1c0] sm:$0xff] %vm862, 0.0
        %984 = vst.msk [vmem:[#allocation4 + $0x1c8] sm:$0xff] %vm862, 0.0
        %985 = vst.msk [vmem:[#allocation4 + $0x1d0] sm:$0xff] %vm862, 0.0
        %986 = vst.msk [vmem:[#allocation4 + $0x1d8] sm:$0xff] %vm862, 0.0
        %987 = vst.msk [vmem:[#allocation4 + $0x1e0] sm:$0xff] %vm862, 0.0
        %988 = vst.msk [vmem:[#allocation4 + $0x1e8] sm:$0xff] %vm862, 0.0
        %989 = vst.msk [vmem:[#allocation4 + $0x1f0] sm:$0xff] %vm862, 0.0
        %990 = vst.msk [vmem:[#allocation4 + $0x1f8] sm:$0xff] %vm862, 0.0
        %991 = vst [vmem:[#allocation5] sm:$0xff] 0.0
        %992 = vst [vmem:[#allocation5 + $0x8] sm:$0xff] 0.0
        %993 = vst [vmem:[#allocation5 + $0x10] sm:$0xff] 0.0
        %994 = vst [vmem:[#allocation5 + $0x18] sm:$0xff] 0.0
        %995 = vst [vmem:[#allocation5 + $0x20] sm:$0xff] 0.0
        %996 = vst [vmem:[#allocation5 + $0x28] sm:$0xff] 0.0
        %997 = vst [vmem:[#allocation5 + $0x30] sm:$0xff] 0.0
        %998 = vst [vmem:[#allocation5 + $0x38] sm:$0xff] 0.0
        %999 = vst [vmem:[#allocation5 + $0x40] sm:$0xff] 0.0
        %1000 = vst [vmem:[#allocation5 + $0x48] sm:$0xff] 0.0
        %1001 = vst [vmem:[#allocation5 + $0x50] sm:$0xff] 0.0
        %1002 = vst [vmem:[#allocation5 + $0x58] sm:$0xff] 0.0
        %1003 = vst [vmem:[#allocation5 + $0x60] sm:$0xff] 0.0
        %1004 = vst [vmem:[#allocation5 + $0x68] sm:$0xff] 0.0
        %1005 = vst [vmem:[#allocation5 + $0x70] sm:$0xff] 0.0
        %1006 = vst [vmem:[#allocation5 + $0x78] sm:$0xff] 0.0
        %1007 = vst [vmem:[#allocation5 + $0x80] sm:$0xff] 0.0
        %1008 = vst [vmem:[#allocation5 + $0x88] sm:$0xff] 0.0
        %1009 = vst [vmem:[#allocation5 + $0x90] sm:$0xff] 0.0
        %1010 = vst [vmem:[#allocation5 + $0x98] sm:$0xff] 0.0
        %1011 = vst [vmem:[#allocation5 + $0xa0] sm:$0xff] 0.0
        %1012 = vst [vmem:[#allocation5 + $0xa8] sm:$0xff] 0.0
        %1013 = vst [vmem:[#allocation5 + $0xb0] sm:$0xff] 0.0
        %1014 = vst [vmem:[#allocation5 + $0xb8] sm:$0xff] 0.0
        %1015 = vst [vmem:[#allocation5 + $0xc0] sm:$0xff] 0.0
        %1016 = vst [vmem:[#allocation5 + $0xc8] sm:$0xff] 0.0
        %1017 = vst [vmem:[#allocation5 + $0xd0] sm:$0xff] 0.0
        %1018 = vst [vmem:[#allocation5 + $0xd8] sm:$0xff] 0.0
        %1019 = vst [vmem:[#allocation5 + $0xe0] sm:$0xff] 0.0
        %1020 = vst [vmem:[#allocation5 + $0xe8] sm:$0xff] 0.0
        %1021 = vst [vmem:[#allocation5 + $0xf0] sm:$0xff] 0.0
        %1022 = vst [vmem:[#allocation5 + $0xf8] sm:$0xff] 0.0
        %1023 = vst [vmem:[#allocation5 + $0x100] sm:$0xff] 0.0
        %1024 = vst [vmem:[#allocation5 + $0x108] sm:$0xff] 0.0
        %1025 = vst [vmem:[#allocation5 + $0x110] sm:$0xff] 0.0
        %1026 = vst [vmem:[#allocation5 + $0x118] sm:$0xff] 0.0
        %1027 = vst [vmem:[#allocation5 + $0x120] sm:$0xff] 0.0
        %1028 = vst [vmem:[#allocation5 + $0x128] sm:$0xff] 0.0
        %1029 = vst [vmem:[#allocation5 + $0x130] sm:$0xff] 0.0
        %1030 = vst [vmem:[#allocation5 + $0x138] sm:$0xff] 0.0
        %1031 = vst [vmem:[#allocation5 + $0x140] sm:$0xff] 0.0
        %1032 = vst [vmem:[#allocation5 + $0x148] sm:$0xff] 0.0
        %1033 = vst [vmem:[#allocation5 + $0x150] sm:$0xff] 0.0
        %1034 = vst [vmem:[#allocation5 + $0x158] sm:$0xff] 0.0
        %1035 = vst [vmem:[#allocation5 + $0x160] sm:$0xff] 0.0
        %1036 = vst [vmem:[#allocation5 + $0x168] sm:$0xff] 0.0
        %1037 = vst [vmem:[#allocation5 + $0x170] sm:$0xff] 0.0
        %1038 = vst [vmem:[#allocation5 + $0x178] sm:$0xff] 0.0
        %1039 = vst [vmem:[#allocation5 + $0x180] sm:$0xff] 0.0
        %1040 = vst [vmem:[#allocation5 + $0x188] sm:$0xff] 0.0
        %1041 = vst [vmem:[#allocation5 + $0x190] sm:$0xff] 0.0
        %1042 = vst [vmem:[#allocation5 + $0x198] sm:$0xff] 0.0
        %1043 = vst [vmem:[#allocation5 + $0x1a0] sm:$0xff] 0.0
        %1044 = vst [vmem:[#allocation5 + $0x1a8] sm:$0xff] 0.0
        %1045 = vst [vmem:[#allocation5 + $0x1b0] sm:$0xff] 0.0
        %1046 = vst [vmem:[#allocation5 + $0x1b8] sm:$0xff] 0.0
        %1047 = vst [vmem:[#allocation5 + $0x1c0] sm:$0xff] 0.0
        %1048 = vst [vmem:[#allocation5 + $0x1c8] sm:$0xff] 0.0
        %1049 = vst [vmem:[#allocation5 + $0x1d0] sm:$0xff] 0.0
        %1050 = vst [vmem:[#allocation5 + $0x1d8] sm:$0xff] 0.0
        %1051 = vst [vmem:[#allocation5 + $0x1e0] sm:$0xff] 0.0
        %1052 = vst [vmem:[#allocation5 + $0x1e8] sm:$0xff] 0.0
        %1053 = vst [vmem:[#allocation5 + $0x1f0] sm:$0xff] 0.0
        %1054 = vst [vmem:[#allocation5 + $0x1f8] sm:$0xff] 0.0
      $region52: #{nonlocal_block_3d.3} parent=47 // pred_fallthru
        _
      %v1055 = vld [vmem:[#allocation2] sm:$0xf]
      %v1056 = vld [vmem:[#allocation2 + $0x4] sm:$0xf]
      %v1057 = vld [vmem:[#allocation2 + $0x8] sm:$0xf]
      %v1058 = vld [vmem:[#allocation2 + $0xc] sm:$0xf]
      %v1059 = vld [vmem:[#allocation2 + $0x10] sm:$0xf]
      %v1060 = vld [vmem:[#allocation2 + $0x14] sm:$0xf]
      %v1061 = vld [vmem:[#allocation2 + $0x18] sm:$0xf]
      %v1062 = vld [vmem:[#allocation2 + $0x1c] sm:$0xf]
      %v1063 = vld [vmem:[#allocation2 + $0x20] sm:$0xf]
      %v1064 = vld [vmem:[#allocation2 + $0x24] sm:$0xf]
      %v1065 = vld [vmem:[#allocation2 + $0x28] sm:$0xf]
      %v1066 = vld [vmem:[#allocation2 + $0x2c] sm:$0xf]
      %v1067 = vld [vmem:[#allocation2 + $0x30] sm:$0xf]
      %v1068 = vld [vmem:[#allocation2 + $0x34] sm:$0xf]
      %v1069 = vld [vmem:[#allocation2 + $0x38] sm:$0xf]
      %v1070 = vld [vmem:[#allocation2 + $0x3c] sm:$0xf]
      %v1071 = vld [vmem:[#allocation2 + $0x40] sm:$0xf]
      %v1072 = vld [vmem:[#allocation2 + $0x44] sm:$0xf]
      %v1073 = vld [vmem:[#allocation2 + $0x48] sm:$0xf]
      %v1074 = vld [vmem:[#allocation2 + $0x4c] sm:$0xf]
      %v1075 = vld [vmem:[#allocation2 + $0x50] sm:$0xf]
      %v1076 = vld [vmem:[#allocation2 + $0x54] sm:$0xf]
      %v1077 = vld [vmem:[#allocation2 + $0x58] sm:$0xf]
      %v1078 = vld [vmem:[#allocation2 + $0x5c] sm:$0xf]
      %v1079 = vld [vmem:[#allocation2 + $0x60] sm:$0xf]
      %v1080 = vld [vmem:[#allocation2 + $0x64] sm:$0xf]
      %v1081 = vld [vmem:[#allocation2 + $0x68] sm:$0xf]
      %v1082 = vld [vmem:[#allocation2 + $0x6c] sm:$0xf]
      %v1083 = vld [vmem:[#allocation2 + $0x70] sm:$0xf]
      %v1084 = vld [vmem:[#allocation2 + $0x74] sm:$0xf]
      %v1085 = vld [vmem:[#allocation2 + $0x78] sm:$0xf]
      %v1086 = vld [vmem:[#allocation2 + $0x7c] sm:$0xf]
      %v1087 = vld [vmem:[#allocation2 + $0x80] sm:$0xf]
      %v1088 = vld [vmem:[#allocation2 + $0x84] sm:$0xf]
      %v1089 = vld [vmem:[#allocation2 + $0x88] sm:$0xf]
      %v1090 = vld [vmem:[#allocation2 + $0x8c] sm:$0xf]
      %v1091 = vld [vmem:[#allocation2 + $0x90] sm:$0xf]
      %v1092 = vld [vmem:[#allocation2 + $0x94] sm:$0xf]
      %v1093 = vld [vmem:[#allocation2 + $0x98] sm:$0xf]
      %v1094 = vld [vmem:[#allocation2 + $0x9c] sm:$0xf]
      %v1095 = vld [vmem:[#allocation2 + $0xa0] sm:$0xf]
      %v1096 = vld [vmem:[#allocation2 + $0xa4] sm:$0xf]
      %v1097 = vld [vmem:[#allocation2 + $0xa8] sm:$0xf]
      %v1098 = vld [vmem:[#allocation2 + $0xac] sm:$0xf]
      %v1099 = vld [vmem:[#allocation2 + $0xb0] sm:$0xf]
      %v1100 = vld [vmem:[#allocation2 + $0xb4] sm:$0xf]
      %v1101 = vld [vmem:[#allocation2 + $0xb8] sm:$0xf]
      %v1102 = vld [vmem:[#allocation2 + $0xbc] sm:$0xf]
      %v1103 = vld [vmem:[#allocation2 + $0xc0] sm:$0xf]
      %v1104 = vld [vmem:[#allocation2 + $0xc4] sm:$0xf]
      %v1105 = vld [vmem:[#allocation2 + $0xc8] sm:$0xf]
      %v1106 = vld [vmem:[#allocation2 + $0xcc] sm:$0xf]
      %v1107 = vld [vmem:[#allocation2 + $0xd0] sm:$0xf]
      %v1108 = vld [vmem:[#allocation2 + $0xd4] sm:$0xf]
      %v1109 = vld [vmem:[#allocation2 + $0xd8] sm:$0xf]
      %v1110 = vld [vmem:[#allocation2 + $0xdc] sm:$0xf]
      %v1111 = vld [vmem:[#allocation2 + $0xe0] sm:$0xf]
      %v1112 = vld [vmem:[#allocation2 + $0xe4] sm:$0xf]
      %v1113 = vld [vmem:[#allocation2 + $0xe8] sm:$0xf]
      %v1114 = vld [vmem:[#allocation2 + $0xec] sm:$0xf]
      %v1115 = vld [vmem:[#allocation2 + $0xf0] sm:$0xf]
      %v1116 = vld [vmem:[#allocation2 + $0xf4] sm:$0xf]
      %v1117 = vld [vmem:[#allocation2 + $0xf8] sm:$0xf]
      %v1118 = vld [vmem:[#allocation2 + $0xfc] sm:$0xf]
      %v1119 = vld [vmem:[%s375] sm:$0xf]
      %v1120 = vld [vmem:[%s375 + $0x4] sm:$0xf]
      %v1121 = vld [vmem:[%s375 + $0x8] sm:$0xf]
      %v1122 = vld [vmem:[%s375 + $0xc] sm:$0xf]
      %v1123 = vld [vmem:[%s375 + $0x10] sm:$0xf]
      %v1124 = vld [vmem:[%s375 + $0x14] sm:$0xf]
      %v1125 = vld [vmem:[%s375 + $0x18] sm:$0xf]
      %v1126 = vld [vmem:[%s375 + $0x1c] sm:$0xf]
      %v1127 = vld [vmem:[%s375 + $0x20] sm:$0xf]
      %v1128 = vld [vmem:[%s375 + $0x24] sm:$0xf]
      %v1129 = vld [vmem:[%s375 + $0x28] sm:$0xf]
      %v1130 = vld [vmem:[%s375 + $0x2c] sm:$0xf]
      %v1131 = vld [vmem:[%s375 + $0x30] sm:$0xf]
      %v1132 = vld [vmem:[%s375 + $0x34] sm:$0xf]
      %v1133 = vld [vmem:[%s375 + $0x38] sm:$0xf]
      %v1134 = vld [vmem:[%s375 + $0x3c] sm:$0xf]
      %v1135 = vld [vmem:[%s375 + $0x40] sm:$0xf]
      %v1136 = vld [vmem:[%s375 + $0x44] sm:$0xf]
      %v1137 = vld [vmem:[%s375 + $0x48] sm:$0xf]
      %v1138 = vld [vmem:[%s375 + $0x4c] sm:$0xf]
      %v1139 = vld [vmem:[%s375 + $0x50] sm:$0xf]
      %v1140 = vld [vmem:[%s375 + $0x54] sm:$0xf]
      %v1141 = vld [vmem:[%s375 + $0x58] sm:$0xf]
      %v1142 = vld [vmem:[%s375 + $0x5c] sm:$0xf]
      %v1143 = vld [vmem:[%s375 + $0x60] sm:$0xf]
      %v1144 = vld [vmem:[%s375 + $0x64] sm:$0xf]
      %v1145 = vld [vmem:[%s375 + $0x68] sm:$0xf]
      %v1146 = vld [vmem:[%s375 + $0x6c] sm:$0xf]
      %v1147 = vld [vmem:[%s375 + $0x70] sm:$0xf]
      %v1148 = vld [vmem:[%s375 + $0x74] sm:$0xf]
      %v1149 = vld [vmem:[%s375 + $0x78] sm:$0xf]
      %v1150 = vld [vmem:[%s375 + $0x7c] sm:$0xf]
      %v1215 = vunpack.c.l.b16 %v1055
      %v1216 = vunpack.c.l.b16 %v1056
      %v1217 = vunpack.c.l.b16 %v1057
      %v1218 = vunpack.c.l.b16 %v1058
      %v1219 = vunpack.c.l.b16 %v1059
      %v1220 = vunpack.c.l.b16 %v1060
      %v1221 = vunpack.c.l.b16 %v1061
      %v1222 = vunpack.c.l.b16 %v1062
      %v1223 = vunpack.c.l.b16 %v1063
      %v1224 = vunpack.c.l.b16 %v1064
      %v1225 = vunpack.c.l.b16 %v1065
      %v1226 = vunpack.c.l.b16 %v1066
      %v1227 = vunpack.c.l.b16 %v1067
      %v1228 = vunpack.c.l.b16 %v1068
      %v1229 = vunpack.c.l.b16 %v1069
      %v1230 = vunpack.c.l.b16 %v1070
      %v1231 = vunpack.c.l.b16 %v1071
      %v1232 = vunpack.c.l.b16 %v1072
      %v1233 = vunpack.c.l.b16 %v1073
      %v1234 = vunpack.c.l.b16 %v1074
      %v1235 = vunpack.c.l.b16 %v1075
      %v1236 = vunpack.c.l.b16 %v1076
      %v1237 = vunpack.c.l.b16 %v1077
      %v1238 = vunpack.c.l.b16 %v1078
      %v1239 = vunpack.c.l.b16 %v1079
      %v1240 = vunpack.c.l.b16 %v1080
      %v1241 = vunpack.c.l.b16 %v1081
      %v1242 = vunpack.c.l.b16 %v1082
      %v1243 = vunpack.c.l.b16 %v1083
      %v1244 = vunpack.c.l.b16 %v1084
      %v1245 = vunpack.c.l.b16 %v1085
      %v1246 = vunpack.c.l.b16 %v1086
      %v1247 = vunpack.c.l.b16 %v1087
      %v1248 = vunpack.c.l.b16 %v1088
      %v1249 = vunpack.c.l.b16 %v1089
      %v1250 = vunpack.c.l.b16 %v1090
      %v1251 = vunpack.c.l.b16 %v1091
      %v1252 = vunpack.c.l.b16 %v1092
      %v1253 = vunpack.c.l.b16 %v1093
      %v1254 = vunpack.c.l.b16 %v1094
      %v1255 = vunpack.c.l.b16 %v1095
      %v1256 = vunpack.c.l.b16 %v1096
      %v1257 = vunpack.c.l.b16 %v1097
      %v1258 = vunpack.c.l.b16 %v1098
      %v1259 = vunpack.c.l.b16 %v1099
      %v1260 = vunpack.c.l.b16 %v1100
      %v1261 = vunpack.c.l.b16 %v1101
      %v1262 = vunpack.c.l.b16 %v1102
      %v1263 = vunpack.c.l.b16 %v1103
      %v1264 = vunpack.c.l.b16 %v1104
      %v1265 = vunpack.c.l.b16 %v1105
      %v1266 = vunpack.c.l.b16 %v1106
      %v1267 = vunpack.c.l.b16 %v1107
      %v1268 = vunpack.c.l.b16 %v1108
      %v1269 = vunpack.c.l.b16 %v1109
      %v1270 = vunpack.c.l.b16 %v1110
      %v1271 = vunpack.c.l.b16 %v1111
      %v1272 = vunpack.c.l.b16 %v1112
      %v1273 = vunpack.c.l.b16 %v1113
      %v1274 = vunpack.c.l.b16 %v1114
      %v1275 = vunpack.c.l.b16 %v1115
      %v1276 = vunpack.c.l.b16 %v1116
      %v1277 = vunpack.c.l.b16 %v1117
      %v1278 = vunpack.c.l.b16 %v1118
      %v1279 = vpack.c.b16 %v1216, %v1215
      %v1280 = vpack.c.b16 %v1218, %v1217
      %v1281 = vpack.c.b16 %v1220, %v1219
      %v1282 = vpack.c.b16 %v1222, %v1221
      %v1283 = vpack.c.b16 %v1224, %v1223
      %v1284 = vpack.c.b16 %v1226, %v1225
      %v1285 = vpack.c.b16 %v1228, %v1227
      %v1286 = vpack.c.b16 %v1230, %v1229
      %v1287 = vpack.c.b16 %v1232, %v1231
      %v1288 = vpack.c.b16 %v1234, %v1233
      %v1289 = vpack.c.b16 %v1236, %v1235
      %v1290 = vpack.c.b16 %v1238, %v1237
      %v1291 = vpack.c.b16 %v1240, %v1239
      %v1292 = vpack.c.b16 %v1242, %v1241
      %v1293 = vpack.c.b16 %v1244, %v1243
      %v1294 = vpack.c.b16 %v1246, %v1245
      %v1295 = vpack.c.b16 %v1248, %v1247
      %v1296 = vpack.c.b16 %v1250, %v1249
      %v1297 = vpack.c.b16 %v1252, %v1251
      %v1298 = vpack.c.b16 %v1254, %v1253
      %v1299 = vpack.c.b16 %v1256, %v1255
      %v1300 = vpack.c.b16 %v1258, %v1257
      %v1301 = vpack.c.b16 %v1260, %v1259
      %v1302 = vpack.c.b16 %v1262, %v1261
      %v1303 = vpack.c.b16 %v1264, %v1263
      %v1304 = vpack.c.b16 %v1266, %v1265
      %v1305 = vpack.c.b16 %v1268, %v1267
      %v1306 = vpack.c.b16 %v1270, %v1269
      %v1307 = vpack.c.b16 %v1272, %v1271
      %v1308 = vpack.c.b16 %v1274, %v1273
      %v1309 = vpack.c.b16 %v1276, %v1275
      %v1310 = vpack.c.b16 %v1278, %v1277
      %v1375 = vunpack.c.l.b16 %v1119
      %v1376 = vunpack.c.l.b16 %v1120
      %v1377 = vunpack.c.l.b16 %v1121
      %v1378 = vunpack.c.l.b16 %v1122
      %v1379 = vunpack.c.l.b16 %v1123
      %v1380 = vunpack.c.l.b16 %v1124
      %v1381 = vunpack.c.l.b16 %v1125
      %v1382 = vunpack.c.l.b16 %v1126
      %v1383 = vunpack.c.l.b16 %v1127
      %v1384 = vunpack.c.l.b16 %v1128
      %v1385 = vunpack.c.l.b16 %v1129
      %v1386 = vunpack.c.l.b16 %v1130
      %v1387 = vunpack.c.l.b16 %v1131
      %v1388 = vunpack.c.l.b16 %v1132
      %v1389 = vunpack.c.l.b16 %v1133
      %v1390 = vunpack.c.l.b16 %v1134
      %v1391 = vunpack.c.l.b16 %v1135
      %v1392 = vunpack.c.l.b16 %v1136
      %v1393 = vunpack.c.l.b16 %v1137
      %v1394 = vunpack.c.l.b16 %v1138
      %v1395 = vunpack.c.l.b16 %v1139
      %v1396 = vunpack.c.l.b16 %v1140
      %v1397 = vunpack.c.l.b16 %v1141
      %v1398 = vunpack.c.l.b16 %v1142
      %v1399 = vunpack.c.l.b16 %v1143
      %v1400 = vunpack.c.l.b16 %v1144
      %v1401 = vunpack.c.l.b16 %v1145
      %v1402 = vunpack.c.l.b16 %v1146
      %v1403 = vunpack.c.l.b16 %v1147
      %v1404 = vunpack.c.l.b16 %v1148
      %v1405 = vunpack.c.l.b16 %v1149
      %v1406 = vunpack.c.l.b16 %v1150
      %v1407 = vpack.c.b16 %v1376, %v1375
      %v1408 = vpack.c.b16 %v1378, %v1377
      %v1409 = vpack.c.b16 %v1380, %v1379
      %v1410 = vpack.c.b16 %v1382, %v1381
      %v1411 = vpack.c.b16 %v1384, %v1383
      %v1412 = vpack.c.b16 %v1386, %v1385
      %v1413 = vpack.c.b16 %v1388, %v1387
      %v1414 = vpack.c.b16 %v1390, %v1389
      %v1415 = vpack.c.b16 %v1392, %v1391
      %v1416 = vpack.c.b16 %v1394, %v1393
      %v1417 = vpack.c.b16 %v1396, %v1395
      %v1418 = vpack.c.b16 %v1398, %v1397
      %v1419 = vpack.c.b16 %v1400, %v1399
      %v1420 = vpack.c.b16 %v1402, %v1401
      %v1421 = vpack.c.b16 %v1404, %v1403
      %v1422 = vpack.c.b16 %v1406, %v1405
      %1439 = vmatpush.bf16.xpose.msra.mxu0 %v1414
      %1440 = vmatpush.bf16.xpose.msra.mxu0 %v1413
      %1441 = vmatpush.bf16.xpose.msra.mxu0 %v1412
      %1442 = vmatpush.bf16.xpose.msra.mxu0 %v1411
      %1443 = vmatpush.bf16.xpose.msra.mxu0 %v1410
      %1444 = vmatpush.bf16.xpose.msra.mxu0 %v1409
      %1445 = vmatpush.bf16.xpose.msra.mxu0 %v1408
      %1446 = vmatpush.bf16.xpose.msra.mxu0 %v1407
      %1447 = vmatmul.bf16.gmra.mxu0 %v1279
      %v1448 = vpop.f32.mrf.mxu0
      %v1449 = vadd.f32 0.0, %v1448
      %v1450 = vpop.f32.mrf.mxu0
      %v1451 = vadd.f32 0.0, %v1450
      %1452 = vmatmul.bf16.gmra.mxu0 %v1280
      %v1453 = vpop.f32.mrf.mxu0
      %v1454 = vadd.f32 0.0, %v1453
      %v1455 = vpop.f32.mrf.mxu0
      %v1456 = vadd.f32 0.0, %v1455
      %1457 = vmatmul.bf16.gmra.mxu0 %v1281
      %v1458 = vpop.f32.mrf.mxu0
      %v1459 = vadd.f32 0.0, %v1458
      %v1460 = vpop.f32.mrf.mxu0
      %v1461 = vadd.f32 0.0, %v1460
      %1462 = vmatmul.bf16.gmra.mxu0 %v1282
      %v1463 = vpop.f32.mrf.mxu0
      %v1464 = vadd.f32 0.0, %v1463
      %v1465 = vpop.f32.mrf.mxu0
      %v1466 = vadd.f32 0.0, %v1465
      %1467 = vmatmul.bf16.gmra.mxu0 %v1283
      %v1468 = vpop.f32.mrf.mxu0
      %v1469 = vadd.f32 0.0, %v1468
      %v1470 = vpop.f32.mrf.mxu0
      %v1471 = vadd.f32 0.0, %v1470
      %1472 = vmatmul.bf16.gmra.mxu0 %v1284
      %v1473 = vpop.f32.mrf.mxu0
      %v1474 = vadd.f32 0.0, %v1473
      %v1475 = vpop.f32.mrf.mxu0
      %v1476 = vadd.f32 0.0, %v1475
      %1477 = vmatmul.bf16.gmra.mxu0 %v1285
      %v1478 = vpop.f32.mrf.mxu0
      %v1479 = vadd.f32 0.0, %v1478
      %v1480 = vpop.f32.mrf.mxu0
      %v1481 = vadd.f32 0.0, %v1480
      %1482 = vmatmul.bf16.gmra.mxu0 %v1286
      %v1483 = vpop.f32.mrf.mxu0
      %v1484 = vadd.f32 0.0, %v1483
      %v1485 = vpop.f32.mrf.mxu0
      %v1486 = vadd.f32 0.0, %v1485
      %1487 = vmatmul.bf16.gmra.mxu0 %v1287
      %v1488 = vpop.f32.mrf.mxu0
      %v1489 = vadd.f32 0.0, %v1488
      %v1490 = vpop.f32.mrf.mxu0
      %v1491 = vadd.f32 0.0, %v1490
      %1492 = vmatmul.bf16.gmra.mxu0 %v1288
      %v1493 = vpop.f32.mrf.mxu0
      %v1494 = vadd.f32 0.0, %v1493
      %v1495 = vpop.f32.mrf.mxu0
      %v1496 = vadd.f32 0.0, %v1495
      %1497 = vmatmul.bf16.gmra.mxu0 %v1289
      %v1498 = vpop.f32.mrf.mxu0
      %v1499 = vadd.f32 0.0, %v1498
      %v1500 = vpop.f32.mrf.mxu0
      %v1501 = vadd.f32 0.0, %v1500
      %1502 = vmatmul.bf16.gmra.mxu0 %v1290
      %v1503 = vpop.f32.mrf.mxu0
      %v1504 = vadd.f32 0.0, %v1503
      %v1505 = vpop.f32.mrf.mxu0
      %v1506 = vadd.f32 0.0, %v1505
      %1507 = vmatmul.bf16.gmra.mxu0 %v1291
      %v1508 = vpop.f32.mrf.mxu0
      %v1509 = vadd.f32 0.0, %v1508
      %v1510 = vpop.f32.mrf.mxu0
      %v1511 = vadd.f32 0.0, %v1510
      %1512 = vmatmul.bf16.gmra.mxu0 %v1292
      %v1513 = vpop.f32.mrf.mxu0
      %v1514 = vadd.f32 0.0, %v1513
      %v1515 = vpop.f32.mrf.mxu0
      %v1516 = vadd.f32 0.0, %v1515
      %1517 = vmatmul.bf16.gmra.mxu0 %v1293
      %v1518 = vpop.f32.mrf.mxu0
      %v1519 = vadd.f32 0.0, %v1518
      %v1520 = vpop.f32.mrf.mxu0
      %v1521 = vadd.f32 0.0, %v1520
      %1522 = vmatmul.bf16.gmra.mxu0 %v1294
      %v1523 = vpop.f32.mrf.mxu0
      %v1524 = vadd.f32 0.0, %v1523
      %v1525 = vpop.f32.mrf.mxu0
      %v1526 = vadd.f32 0.0, %v1525
      %1527 = vmatmul.bf16.gmra.mxu0 %v1295
      %v1528 = vpop.f32.mrf.mxu0
      %v1529 = vadd.f32 0.0, %v1528
      %v1530 = vpop.f32.mrf.mxu0
      %v1531 = vadd.f32 0.0, %v1530
      %1532 = vmatmul.bf16.gmra.mxu0 %v1296
      %v1533 = vpop.f32.mrf.mxu0
      %v1534 = vadd.f32 0.0, %v1533
      %v1535 = vpop.f32.mrf.mxu0
      %v1536 = vadd.f32 0.0, %v1535
      %1537 = vmatmul.bf16.gmra.mxu0 %v1297
      %v1538 = vpop.f32.mrf.mxu0
      %v1539 = vadd.f32 0.0, %v1538
      %v1540 = vpop.f32.mrf.mxu0
      %v1541 = vadd.f32 0.0, %v1540
      %1542 = vmatmul.bf16.gmra.mxu0 %v1298
      %v1543 = vpop.f32.mrf.mxu0
      %v1544 = vadd.f32 0.0, %v1543
      %v1545 = vpop.f32.mrf.mxu0
      %v1546 = vadd.f32 0.0, %v1545
      %1547 = vmatmul.bf16.gmra.mxu0 %v1299
      %v1548 = vpop.f32.mrf.mxu0
      %v1549 = vadd.f32 0.0, %v1548
      %v1550 = vpop.f32.mrf.mxu0
      %v1551 = vadd.f32 0.0, %v1550
      %1552 = vmatmul.bf16.gmra.mxu0 %v1300
      %v1553 = vpop.f32.mrf.mxu0
      %v1554 = vadd.f32 0.0, %v1553
      %v1555 = vpop.f32.mrf.mxu0
      %v1556 = vadd.f32 0.0, %v1555
      %1557 = vmatmul.bf16.gmra.mxu0 %v1301
      %v1558 = vpop.f32.mrf.mxu0
      %v1559 = vadd.f32 0.0, %v1558
      %v1560 = vpop.f32.mrf.mxu0
      %v1561 = vadd.f32 0.0, %v1560
      %1562 = vmatmul.bf16.gmra.mxu0 %v1302
      %v1563 = vpop.f32.mrf.mxu0
      %v1564 = vadd.f32 0.0, %v1563
      %v1565 = vpop.f32.mrf.mxu0
      %v1566 = vadd.f32 0.0, %v1565
      %1567 = vmatmul.bf16.gmra.mxu0 %v1303
      %v1568 = vpop.f32.mrf.mxu0
      %v1569 = vadd.f32 0.0, %v1568
      %v1570 = vpop.f32.mrf.mxu0
      %v1571 = vadd.f32 0.0, %v1570
      %1572 = vmatmul.bf16.gmra.mxu0 %v1304
      %v1573 = vpop.f32.mrf.mxu0
      %v1574 = vadd.f32 0.0, %v1573
      %v1575 = vpop.f32.mrf.mxu0
      %v1576 = vadd.f32 0.0, %v1575
      %1577 = vmatmul.bf16.gmra.mxu0 %v1305
      %v1578 = vpop.f32.mrf.mxu0
      %v1579 = vadd.f32 0.0, %v1578
      %v1580 = vpop.f32.mrf.mxu0
      %v1581 = vadd.f32 0.0, %v1580
      %1582 = vmatmul.bf16.gmra.mxu0 %v1306
      %v1583 = vpop.f32.mrf.mxu0
      %v1584 = vadd.f32 0.0, %v1583
      %v1585 = vpop.f32.mrf.mxu0
      %v1586 = vadd.f32 0.0, %v1585
      %1587 = vmatmul.bf16.gmra.mxu0 %v1307
      %v1588 = vpop.f32.mrf.mxu0
      %v1589 = vadd.f32 0.0, %v1588
      %v1590 = vpop.f32.mrf.mxu0
      %v1591 = vadd.f32 0.0, %v1590
      %1592 = vmatmul.bf16.gmra.mxu0 %v1308
      %v1593 = vpop.f32.mrf.mxu0
      %v1594 = vadd.f32 0.0, %v1593
      %v1595 = vpop.f32.mrf.mxu0
      %v1596 = vadd.f32 0.0, %v1595
      %1597 = vmatmul.bf16.gmra.mxu0 %v1309
      %v1598 = vpop.f32.mrf.mxu0
      %v1599 = vadd.f32 0.0, %v1598
      %v1600 = vpop.f32.mrf.mxu0
      %v1601 = vadd.f32 0.0, %v1600
      %1602 = vmatmul.bf16.gmra.mxu0 %v1310
      %v1603 = vpop.f32.mrf.mxu0
      %v1604 = vadd.f32 0.0, %v1603
      %v1605 = vpop.f32.mrf.mxu0
      %v1606 = vadd.f32 0.0, %v1605
      %1607 = vdwg.mxu0
      %1608 = vmatpush.bf16.xpose.msra.mxu0 %v1422
      %1609 = vmatpush.bf16.xpose.msra.mxu0 %v1421
      %1610 = vmatpush.bf16.xpose.msra.mxu0 %v1420
      %1611 = vmatpush.bf16.xpose.msra.mxu0 %v1419
      %1612 = vmatpush.bf16.xpose.msra.mxu0 %v1418
      %1613 = vmatpush.bf16.xpose.msra.mxu0 %v1417
      %1614 = vmatpush.bf16.xpose.msra.mxu0 %v1416
      %1615 = vmatpush.bf16.xpose.msra.mxu0 %v1415
      %1616 = vmatmul.bf16.gmra.mxu0 %v1279
      %v1617 = vpop.f32.mrf.mxu0
      %v1618 = vadd.f32 0.0, %v1617
      %v1619 = vpop.f32.mrf.mxu0
      %v1620 = vadd.f32 0.0, %v1619
      %1621 = vmatmul.bf16.gmra.mxu0 %v1280
      %v1622 = vpop.f32.mrf.mxu0
      %v1623 = vadd.f32 0.0, %v1622
      %v1624 = vpop.f32.mrf.mxu0
      %v1625 = vadd.f32 0.0, %v1624
      %1626 = vmatmul.bf16.gmra.mxu0 %v1281
      %v1627 = vpop.f32.mrf.mxu0
      %v1628 = vadd.f32 0.0, %v1627
      %v1629 = vpop.f32.mrf.mxu0
      %v1630 = vadd.f32 0.0, %v1629
      %1631 = vmatmul.bf16.gmra.mxu0 %v1282
      %v1632 = vpop.f32.mrf.mxu0
      %v1633 = vadd.f32 0.0, %v1632
      %v1634 = vpop.f32.mrf.mxu0
      %v1635 = vadd.f32 0.0, %v1634
      %1636 = vmatmul.bf16.gmra.mxu0 %v1283
      %v1637 = vpop.f32.mrf.mxu0
      %v1638 = vadd.f32 0.0, %v1637
      %v1639 = vpop.f32.mrf.mxu0
      %v1640 = vadd.f32 0.0, %v1639
      %1641 = vmatmul.bf16.gmra.mxu0 %v1284
      %v1642 = vpop.f32.mrf.mxu0
      %v1643 = vadd.f32 0.0, %v1642
      %v1644 = vpop.f32.mrf.mxu0
      %v1645 = vadd.f32 0.0, %v1644
      %1646 = vmatmul.bf16.gmra.mxu0 %v1285
      %v1647 = vpop.f32.mrf.mxu0
      %v1648 = vadd.f32 0.0, %v1647
      %v1649 = vpop.f32.mrf.mxu0
      %v1650 = vadd.f32 0.0, %v1649
      %1651 = vmatmul.bf16.gmra.mxu0 %v1286
      %v1652 = vpop.f32.mrf.mxu0
      %v1653 = vadd.f32 0.0, %v1652
      %v1654 = vpop.f32.mrf.mxu0
      %v1655 = vadd.f32 0.0, %v1654
      %1656 = vmatmul.bf16.gmra.mxu0 %v1287
      %v1657 = vpop.f32.mrf.mxu0
      %v1658 = vadd.f32 0.0, %v1657
      %v1659 = vpop.f32.mrf.mxu0
      %v1660 = vadd.f32 0.0, %v1659
      %1661 = vmatmul.bf16.gmra.mxu0 %v1288
      %v1662 = vpop.f32.mrf.mxu0
      %v1663 = vadd.f32 0.0, %v1662
      %v1664 = vpop.f32.mrf.mxu0
      %v1665 = vadd.f32 0.0, %v1664
      %1666 = vmatmul.bf16.gmra.mxu0 %v1289
      %v1667 = vpop.f32.mrf.mxu0
      %v1668 = vadd.f32 0.0, %v1667
      %v1669 = vpop.f32.mrf.mxu0
      %v1670 = vadd.f32 0.0, %v1669
      %1671 = vmatmul.bf16.gmra.mxu0 %v1290
      %v1672 = vpop.f32.mrf.mxu0
      %v1673 = vadd.f32 0.0, %v1672
      %v1674 = vpop.f32.mrf.mxu0
      %v1675 = vadd.f32 0.0, %v1674
      %1676 = vmatmul.bf16.gmra.mxu0 %v1291
      %v1677 = vpop.f32.mrf.mxu0
      %v1678 = vadd.f32 0.0, %v1677
      %v1679 = vpop.f32.mrf.mxu0
      %v1680 = vadd.f32 0.0, %v1679
      %1681 = vmatmul.bf16.gmra.mxu0 %v1292
      %v1682 = vpop.f32.mrf.mxu0
      %v1683 = vadd.f32 0.0, %v1682
      %v1684 = vpop.f32.mrf.mxu0
      %v1685 = vadd.f32 0.0, %v1684
      %1686 = vmatmul.bf16.gmra.mxu0 %v1293
      %v1687 = vpop.f32.mrf.mxu0
      %v1688 = vadd.f32 0.0, %v1687
      %v1689 = vpop.f32.mrf.mxu0
      %v1690 = vadd.f32 0.0, %v1689
      %1691 = vmatmul.bf16.gmra.mxu0 %v1294
      %v1692 = vpop.f32.mrf.mxu0
      %v1693 = vadd.f32 0.0, %v1692
      %v1694 = vpop.f32.mrf.mxu0
      %v1695 = vadd.f32 0.0, %v1694
      %1696 = vmatmul.bf16.gmra.mxu0 %v1295
      %v1697 = vpop.f32.mrf.mxu0
      %v1698 = vadd.f32 0.0, %v1697
      %v1699 = vpop.f32.mrf.mxu0
      %v1700 = vadd.f32 0.0, %v1699
      %1701 = vmatmul.bf16.gmra.mxu0 %v1296
      %v1702 = vpop.f32.mrf.mxu0
      %v1703 = vadd.f32 0.0, %v1702
      %v1704 = vpop.f32.mrf.mxu0
      %v1705 = vadd.f32 0.0, %v1704
      %1706 = vmatmul.bf16.gmra.mxu0 %v1297
      %v1707 = vpop.f32.mrf.mxu0
      %v1708 = vadd.f32 0.0, %v1707
      %v1709 = vpop.f32.mrf.mxu0
      %v1710 = vadd.f32 0.0, %v1709
      %1711 = vmatmul.bf16.gmra.mxu0 %v1298
      %v1712 = vpop.f32.mrf.mxu0
      %v1713 = vadd.f32 0.0, %v1712
      %v1714 = vpop.f32.mrf.mxu0
      %v1715 = vadd.f32 0.0, %v1714
      %1716 = vmatmul.bf16.gmra.mxu0 %v1299
      %v1717 = vpop.f32.mrf.mxu0
      %v1718 = vadd.f32 0.0, %v1717
      %v1719 = vpop.f32.mrf.mxu0
      %v1720 = vadd.f32 0.0, %v1719
      %1721 = vmatmul.bf16.gmra.mxu0 %v1300
      %v1722 = vpop.f32.mrf.mxu0
      %v1723 = vadd.f32 0.0, %v1722
      %v1724 = vpop.f32.mrf.mxu0
      %v1725 = vadd.f32 0.0, %v1724
      %1726 = vmatmul.bf16.gmra.mxu0 %v1301
      %v1727 = vpop.f32.mrf.mxu0
      %v1728 = vadd.f32 0.0, %v1727
      %v1729 = vpop.f32.mrf.mxu0
      %v1730 = vadd.f32 0.0, %v1729
      %1731 = vmatmul.bf16.gmra.mxu0 %v1302
      %v1732 = vpop.f32.mrf.mxu0
      %v1733 = vadd.f32 0.0, %v1732
      %v1734 = vpop.f32.mrf.mxu0
      %v1735 = vadd.f32 0.0, %v1734
      %1736 = vmatmul.bf16.gmra.mxu0 %v1303
      %v1737 = vpop.f32.mrf.mxu0
      %v1738 = vadd.f32 0.0, %v1737
      %v1739 = vpop.f32.mrf.mxu0
      %v1740 = vadd.f32 0.0, %v1739
      %1741 = vmatmul.bf16.gmra.mxu0 %v1304
      %v1742 = vpop.f32.mrf.mxu0
      %v1743 = vadd.f32 0.0, %v1742
      %v1744 = vpop.f32.mrf.mxu0
      %v1745 = vadd.f32 0.0, %v1744
      %1746 = vmatmul.bf16.gmra.mxu0 %v1305
      %v1747 = vpop.f32.mrf.mxu0
      %v1748 = vadd.f32 0.0, %v1747
      %v1749 = vpop.f32.mrf.mxu0
      %v1750 = vadd.f32 0.0, %v1749
      %1751 = vmatmul.bf16.gmra.mxu0 %v1306
      %v1752 = vpop.f32.mrf.mxu0
      %v1753 = vadd.f32 0.0, %v1752
      %v1754 = vpop.f32.mrf.mxu0
      %v1755 = vadd.f32 0.0, %v1754
      %1756 = vmatmul.bf16.gmra.mxu0 %v1307
      %v1757 = vpop.f32.mrf.mxu0
      %v1758 = vadd.f32 0.0, %v1757
      %v1759 = vpop.f32.mrf.mxu0
      %v1760 = vadd.f32 0.0, %v1759
      %1761 = vmatmul.bf16.gmra.mxu0 %v1308
      %v1762 = vpop.f32.mrf.mxu0
      %v1763 = vadd.f32 0.0, %v1762
      %v1764 = vpop.f32.mrf.mxu0
      %v1765 = vadd.f32 0.0, %v1764
      %1766 = vmatmul.bf16.gmra.mxu0 %v1309
      %v1767 = vpop.f32.mrf.mxu0
      %v1768 = vadd.f32 0.0, %v1767
      %v1769 = vpop.f32.mrf.mxu0
      %v1770 = vadd.f32 0.0, %v1769
      %1771 = vmatmul.bf16.gmra.mxu0 %v1310
      %v1772 = vpop.f32.mrf.mxu0
      %v1773 = vadd.f32 0.0, %v1772
      %v1774 = vpop.f32.mrf.mxu0
      %v1775 = vadd.f32 0.0, %v1774
      %1776 = vdwg.mxu0
      %v1777 = vld [vmem:[#allocation3] sm:$0xff]
      %v1778 = vld [vmem:[#allocation3 + $0x8] sm:$0xff]
      %v1779 = vld [vmem:[#allocation3 + $0x10] sm:$0xff]
      %v1780 = vld [vmem:[#allocation3 + $0x18] sm:$0xff]
      %v1781 = vld [vmem:[#allocation3 + $0x20] sm:$0xff]
      %v1782 = vld [vmem:[#allocation3 + $0x28] sm:$0xff]
      %v1783 = vld [vmem:[#allocation3 + $0x30] sm:$0xff]
      %v1784 = vld [vmem:[#allocation3 + $0x38] sm:$0xff]
      %v1785 = vld [vmem:[#allocation3 + $0x40] sm:$0xff]
      %v1786 = vld [vmem:[#allocation3 + $0x48] sm:$0xff]
      %v1787 = vld [vmem:[#allocation3 + $0x50] sm:$0xff]
      %v1788 = vld [vmem:[#allocation3 + $0x58] sm:$0xff]
      %v1789 = vld [vmem:[#allocation3 + $0x60] sm:$0xff]
      %v1790 = vld [vmem:[#allocation3 + $0x68] sm:$0xff]
      %v1791 = vld [vmem:[#allocation3 + $0x70] sm:$0xff]
      %v1792 = vld [vmem:[#allocation3 + $0x78] sm:$0xff]
      %v1793 = vld [vmem:[#allocation3 + $0x80] sm:$0xff]
      %v1794 = vld [vmem:[#allocation3 + $0x88] sm:$0xff]
      %v1795 = vld [vmem:[#allocation3 + $0x90] sm:$0xff]
      %v1796 = vld [vmem:[#allocation3 + $0x98] sm:$0xff]
      %v1797 = vld [vmem:[#allocation3 + $0xa0] sm:$0xff]
      %v1798 = vld [vmem:[#allocation3 + $0xa8] sm:$0xff]
      %v1799 = vld [vmem:[#allocation3 + $0xb0] sm:$0xff]
      %v1800 = vld [vmem:[#allocation3 + $0xb8] sm:$0xff]
      %v1801 = vld [vmem:[#allocation3 + $0xc0] sm:$0xff]
      %v1802 = vld [vmem:[#allocation3 + $0xc8] sm:$0xff]
      %v1803 = vld [vmem:[#allocation3 + $0xd0] sm:$0xff]
      %v1804 = vld [vmem:[#allocation3 + $0xd8] sm:$0xff]
      %v1805 = vld [vmem:[#allocation3 + $0xe0] sm:$0xff]
      %v1806 = vld [vmem:[#allocation3 + $0xe8] sm:$0xff]
      %v1807 = vld [vmem:[#allocation3 + $0xf0] sm:$0xff]
      %v1808 = vld [vmem:[#allocation3 + $0xf8] sm:$0xff]
      %v1809 = vld [vmem:[#allocation3 + $0x100] sm:$0xff]
      %v1810 = vld [vmem:[#allocation3 + $0x108] sm:$0xff]
      %v1811 = vld [vmem:[#allocation3 + $0x110] sm:$0xff]
      %v1812 = vld [vmem:[#allocation3 + $0x118] sm:$0xff]
      %v1813 = vld [vmem:[#allocation3 + $0x120] sm:$0xff]
      %v1814 = vld [vmem:[#allocation3 + $0x128] sm:$0xff]
      %v1815 = vld [vmem:[#allocation3 + $0x130] sm:$0xff]
      %v1816 = vld [vmem:[#allocation3 + $0x138] sm:$0xff]
      %v1817 = vld [vmem:[#allocation3 + $0x140] sm:$0xff]
      %v1818 = vld [vmem:[#allocation3 + $0x148] sm:$0xff]
      %v1819 = vld [vmem:[#allocation3 + $0x150] sm:$0xff]
      %v1820 = vld [vmem:[#allocation3 + $0x158] sm:$0xff]
      %v1821 = vld [vmem:[#allocation3 + $0x160] sm:$0xff]
      %v1822 = vld [vmem:[#allocation3 + $0x168] sm:$0xff]
      %v1823 = vld [vmem:[#allocation3 + $0x170] sm:$0xff]
      %v1824 = vld [vmem:[#allocation3 + $0x178] sm:$0xff]
      %v1825 = vld [vmem:[#allocation3 + $0x180] sm:$0xff]
      %v1826 = vld [vmem:[#allocation3 + $0x188] sm:$0xff]
      %v1827 = vld [vmem:[#allocation3 + $0x190] sm:$0xff]
      %v1828 = vld [vmem:[#allocation3 + $0x198] sm:$0xff]
      %v1829 = vld [vmem:[#allocation3 + $0x1a0] sm:$0xff]
      %v1830 = vld [vmem:[#allocation3 + $0x1a8] sm:$0xff]
      %v1831 = vld [vmem:[#allocation3 + $0x1b0] sm:$0xff]
      %v1832 = vld [vmem:[#allocation3 + $0x1b8] sm:$0xff]
      %v1833 = vld [vmem:[#allocation3 + $0x1c0] sm:$0xff]
      %v1834 = vld [vmem:[#allocation3 + $0x1c8] sm:$0xff]
      %v1835 = vld [vmem:[#allocation3 + $0x1d0] sm:$0xff]
      %v1836 = vld [vmem:[#allocation3 + $0x1d8] sm:$0xff]
      %v1837 = vld [vmem:[#allocation3 + $0x1e0] sm:$0xff]
      %v1838 = vld [vmem:[#allocation3 + $0x1e8] sm:$0xff]
      %v1839 = vld [vmem:[#allocation3 + $0x1f0] sm:$0xff]
      %v1840 = vld [vmem:[#allocation3 + $0x1f8] sm:$0xff]
      %v1841 = vmax.f32 %v1449, %v1618
      %1842 = vmax.xlane.f32.xlu0 %v1841
      %v1843 = vpop.xlane.xlu0 %1842
      %v1844 = vmax.f32 %v1451, %v1620
      %1845 = vmax.xlane.f32.xlu0 %v1844
      %v1846 = vpop.xlane.xlu0 %1845
      %v1847 = vmax.f32 %v1454, %v1623
      %1848 = vmax.xlane.f32.xlu0 %v1847
      %v1849 = vpop.xlane.xlu0 %1848
      %v1850 = vmax.f32 %v1456, %v1625
      %1851 = vmax.xlane.f32.xlu0 %v1850
      %v1852 = vpop.xlane.xlu0 %1851
      %v1853 = vmax.f32 %v1459, %v1628
      %1854 = vmax.xlane.f32.xlu0 %v1853
      %v1855 = vpop.xlane.xlu0 %1854
      %v1856 = vmax.f32 %v1461, %v1630
      %1857 = vmax.xlane.f32.xlu0 %v1856
      %v1858 = vpop.xlane.xlu0 %1857
      %v1859 = vmax.f32 %v1464, %v1633
      %1860 = vmax.xlane.f32.xlu0 %v1859
      %v1861 = vpop.xlane.xlu0 %1860
      %v1862 = vmax.f32 %v1466, %v1635
      %1863 = vmax.xlane.f32.xlu0 %v1862
      %v1864 = vpop.xlane.xlu0 %1863
      %v1865 = vmax.f32 %v1469, %v1638
      %1866 = vmax.xlane.f32.xlu0 %v1865
      %v1867 = vpop.xlane.xlu0 %1866
      %v1868 = vmax.f32 %v1471, %v1640
      %1869 = vmax.xlane.f32.xlu0 %v1868
      %v1870 = vpop.xlane.xlu0 %1869
      %v1871 = vmax.f32 %v1474, %v1643
      %1872 = vmax.xlane.f32.xlu0 %v1871
      %v1873 = vpop.xlane.xlu0 %1872
      %v1874 = vmax.f32 %v1476, %v1645
      %1875 = vmax.xlane.f32.xlu0 %v1874
      %v1876 = vpop.xlane.xlu0 %1875
      %v1877 = vmax.f32 %v1479, %v1648
      %1878 = vmax.xlane.f32.xlu0 %v1877
      %v1879 = vpop.xlane.xlu0 %1878
      %v1880 = vmax.f32 %v1481, %v1650
      %1881 = vmax.xlane.f32.xlu0 %v1880
      %v1882 = vpop.xlane.xlu0 %1881
      %v1883 = vmax.f32 %v1484, %v1653
      %1884 = vmax.xlane.f32.xlu0 %v1883
      %v1885 = vpop.xlane.xlu0 %1884
      %v1886 = vmax.f32 %v1486, %v1655
      %1887 = vmax.xlane.f32.xlu0 %v1886
      %v1888 = vpop.xlane.xlu0 %1887
      %v1889 = vmax.f32 %v1489, %v1658
      %1890 = vmax.xlane.f32.xlu0 %v1889
      %v1891 = vpop.xlane.xlu0 %1890
      %v1892 = vmax.f32 %v1491, %v1660
      %1893 = vmax.xlane.f32.xlu0 %v1892
      %v1894 = vpop.xlane.xlu0 %1893
      %v1895 = vmax.f32 %v1494, %v1663
      %1896 = vmax.xlane.f32.xlu0 %v1895
      %v1897 = vpop.xlane.xlu0 %1896
      %v1898 = vmax.f32 %v1496, %v1665
      %1899 = vmax.xlane.f32.xlu0 %v1898
      %v1900 = vpop.xlane.xlu0 %1899
      %v1901 = vmax.f32 %v1499, %v1668
      %1902 = vmax.xlane.f32.xlu0 %v1901
      %v1903 = vpop.xlane.xlu0 %1902
      %v1904 = vmax.f32 %v1501, %v1670
      %1905 = vmax.xlane.f32.xlu0 %v1904
      %v1906 = vpop.xlane.xlu0 %1905
      %v1907 = vmax.f32 %v1504, %v1673
      %1908 = vmax.xlane.f32.xlu0 %v1907
      %v1909 = vpop.xlane.xlu0 %1908
      %v1910 = vmax.f32 %v1506, %v1675
      %1911 = vmax.xlane.f32.xlu0 %v1910
      %v1912 = vpop.xlane.xlu0 %1911
      %v1913 = vmax.f32 %v1509, %v1678
      %1914 = vmax.xlane.f32.xlu0 %v1913
      %v1915 = vpop.xlane.xlu0 %1914
      %v1916 = vmax.f32 %v1511, %v1680
      %1917 = vmax.xlane.f32.xlu0 %v1916
      %v1918 = vpop.xlane.xlu0 %1917
      %v1919 = vmax.f32 %v1514, %v1683
      %1920 = vmax.xlane.f32.xlu0 %v1919
      %v1921 = vpop.xlane.xlu0 %1920
      %v1922 = vmax.f32 %v1516, %v1685
      %1923 = vmax.xlane.f32.xlu0 %v1922
      %v1924 = vpop.xlane.xlu0 %1923
      %v1925 = vmax.f32 %v1519, %v1688
      %1926 = vmax.xlane.f32.xlu0 %v1925
      %v1927 = vpop.xlane.xlu0 %1926
      %v1928 = vmax.f32 %v1521, %v1690
      %1929 = vmax.xlane.f32.xlu0 %v1928
      %v1930 = vpop.xlane.xlu0 %1929
      %v1931 = vmax.f32 %v1524, %v1693
      %1932 = vmax.xlane.f32.xlu0 %v1931
      %v1933 = vpop.xlane.xlu0 %1932
      %v1934 = vmax.f32 %v1526, %v1695
      %1935 = vmax.xlane.f32.xlu0 %v1934
      %v1936 = vpop.xlane.xlu0 %1935
      %v1937 = vmax.f32 %v1529, %v1698
      %1938 = vmax.xlane.f32.xlu0 %v1937
      %v1939 = vpop.xlane.xlu0 %1938
      %v1940 = vmax.f32 %v1531, %v1700
      %1941 = vmax.xlane.f32.xlu0 %v1940
      %v1942 = vpop.xlane.xlu0 %1941
      %v1943 = vmax.f32 %v1534, %v1703
      %1944 = vmax.xlane.f32.xlu0 %v1943
      %v1945 = vpop.xlane.xlu0 %1944
      %v1946 = vmax.f32 %v1536, %v1705
      %1947 = vmax.xlane.f32.xlu0 %v1946
      %v1948 = vpop.xlane.xlu0 %1947
      %v1949 = vmax.f32 %v1539, %v1708
      %1950 = vmax.xlane.f32.xlu0 %v1949
      %v1951 = vpop.xlane.xlu0 %1950
      %v1952 = vmax.f32 %v1541, %v1710
      %1953 = vmax.xlane.f32.xlu0 %v1952
      %v1954 = vpop.xlane.xlu0 %1953
      %v1955 = vmax.f32 %v1544, %v1713
      %1956 = vmax.xlane.f32.xlu0 %v1955
      %v1957 = vpop.xlane.xlu0 %1956
      %v1958 = vmax.f32 %v1546, %v1715
      %1959 = vmax.xlane.f32.xlu0 %v1958
      %v1960 = vpop.xlane.xlu0 %1959
      %v1961 = vmax.f32 %v1549, %v1718
      %1962 = vmax.xlane.f32.xlu0 %v1961
      %v1963 = vpop.xlane.xlu0 %1962
      %v1964 = vmax.f32 %v1551, %v1720
      %1965 = vmax.xlane.f32.xlu0 %v1964
      %v1966 = vpop.xlane.xlu0 %1965
      %v1967 = vmax.f32 %v1554, %v1723
      %1968 = vmax.xlane.f32.xlu0 %v1967
      %v1969 = vpop.xlane.xlu0 %1968
      %v1970 = vmax.f32 %v1556, %v1725
      %1971 = vmax.xlane.f32.xlu0 %v1970
      %v1972 = vpop.xlane.xlu0 %1971
      %v1973 = vmax.f32 %v1559, %v1728
      %1974 = vmax.xlane.f32.xlu0 %v1973
      %v1975 = vpop.xlane.xlu0 %1974
      %v1976 = vmax.f32 %v1561, %v1730
      %1977 = vmax.xlane.f32.xlu0 %v1976
      %v1978 = vpop.xlane.xlu0 %1977
      %v1979 = vmax.f32 %v1564, %v1733
      %1980 = vmax.xlane.f32.xlu0 %v1979
      %v1981 = vpop.xlane.xlu0 %1980
      %v1982 = vmax.f32 %v1566, %v1735
      %1983 = vmax.xlane.f32.xlu0 %v1982
      %v1984 = vpop.xlane.xlu0 %1983
      %v1985 = vmax.f32 %v1569, %v1738
      %1986 = vmax.xlane.f32.xlu0 %v1985
      %v1987 = vpop.xlane.xlu0 %1986
      %v1988 = vmax.f32 %v1571, %v1740
      %1989 = vmax.xlane.f32.xlu0 %v1988
      %v1990 = vpop.xlane.xlu0 %1989
      %v1991 = vmax.f32 %v1574, %v1743
      %1992 = vmax.xlane.f32.xlu0 %v1991
      %v1993 = vpop.xlane.xlu0 %1992
      %v1994 = vmax.f32 %v1576, %v1745
      %1995 = vmax.xlane.f32.xlu0 %v1994
      %v1996 = vpop.xlane.xlu0 %1995
      %v1997 = vmax.f32 %v1579, %v1748
      %1998 = vmax.xlane.f32.xlu0 %v1997
      %v1999 = vpop.xlane.xlu0 %1998
      %v2000 = vmax.f32 %v1581, %v1750
      %2001 = vmax.xlane.f32.xlu0 %v2000
      %v2002 = vpop.xlane.xlu0 %2001
      %v2003 = vmax.f32 %v1584, %v1753
      %2004 = vmax.xlane.f32.xlu0 %v2003
      %v2005 = vpop.xlane.xlu0 %2004
      %v2006 = vmax.f32 %v1586, %v1755
      %2007 = vmax.xlane.f32.xlu0 %v2006
      %v2008 = vpop.xlane.xlu0 %2007
      %v2009 = vmax.f32 %v1589, %v1758
      %2010 = vmax.xlane.f32.xlu0 %v2009
      %v2011 = vpop.xlane.xlu0 %2010
      %v2012 = vmax.f32 %v1591, %v1760
      %2013 = vmax.xlane.f32.xlu0 %v2012
      %v2014 = vpop.xlane.xlu0 %2013
      %v2015 = vmax.f32 %v1594, %v1763
      %2016 = vmax.xlane.f32.xlu0 %v2015
      %v2017 = vpop.xlane.xlu0 %2016
      %v2018 = vmax.f32 %v1596, %v1765
      %2019 = vmax.xlane.f32.xlu0 %v2018
      %v2020 = vpop.xlane.xlu0 %2019
      %v2021 = vmax.f32 %v1599, %v1768
      %2022 = vmax.xlane.f32.xlu0 %v2021
      %v2023 = vpop.xlane.xlu0 %2022
      %v2024 = vmax.f32 %v1601, %v1770
      %2025 = vmax.xlane.f32.xlu0 %v2024
      %v2026 = vpop.xlane.xlu0 %2025
      %v2027 = vmax.f32 %v1604, %v1773
      %2028 = vmax.xlane.f32.xlu0 %v2027
      %v2029 = vpop.xlane.xlu0 %2028
      %v2030 = vmax.f32 %v1606, %v1775
      %2031 = vmax.xlane.f32.xlu0 %v2030
      %v2032 = vpop.xlane.xlu0 %2031
      %v2033 = vmax.f32 %v1777, %v1843
      %v2034 = vmax.f32 %v1778, %v1846
      %v2035 = vmax.f32 %v1779, %v1849
      %v2036 = vmax.f32 %v1780, %v1852
      %v2037 = vmax.f32 %v1781, %v1855
      %v2038 = vmax.f32 %v1782, %v1858
      %v2039 = vmax.f32 %v1783, %v1861
      %v2040 = vmax.f32 %v1784, %v1864
      %v2041 = vmax.f32 %v1785, %v1867
      %v2042 = vmax.f32 %v1786, %v1870
      %v2043 = vmax.f32 %v1787, %v1873
      %v2044 = vmax.f32 %v1788, %v1876
      %v2045 = vmax.f32 %v1789, %v1879
      %v2046 = vmax.f32 %v1790, %v1882
      %v2047 = vmax.f32 %v1791, %v1885
      %v2048 = vmax.f32 %v1792, %v1888
      %v2049 = vmax.f32 %v1793, %v1891
      %v2050 = vmax.f32 %v1794, %v1894
      %v2051 = vmax.f32 %v1795, %v1897
      %v2052 = vmax.f32 %v1796, %v1900
      %v2053 = vmax.f32 %v1797, %v1903
      %v2054 = vmax.f32 %v1798, %v1906
      %v2055 = vmax.f32 %v1799, %v1909
      %v2056 = vmax.f32 %v1800, %v1912
      %v2057 = vmax.f32 %v1801, %v1915
      %v2058 = vmax.f32 %v1802, %v1918
      %v2059 = vmax.f32 %v1803, %v1921
      %v2060 = vmax.f32 %v1804, %v1924
      %v2061 = vmax.f32 %v1805, %v1927
      %v2062 = vmax.f32 %v1806, %v1930
      %v2063 = vmax.f32 %v1807, %v1933
      %v2064 = vmax.f32 %v1808, %v1936
      %v2065 = vmax.f32 %v1809, %v1939
      %v2066 = vmax.f32 %v1810, %v1942
      %v2067 = vmax.f32 %v1811, %v1945
      %v2068 = vmax.f32 %v1812, %v1948
      %v2069 = vmax.f32 %v1813, %v1951
      %v2070 = vmax.f32 %v1814, %v1954
      %v2071 = vmax.f32 %v1815, %v1957
      %v2072 = vmax.f32 %v1816, %v1960
      %v2073 = vmax.f32 %v1817, %v1963
      %v2074 = vmax.f32 %v1818, %v1966
      %v2075 = vmax.f32 %v1819, %v1969
      %v2076 = vmax.f32 %v1820, %v1972
      %v2077 = vmax.f32 %v1821, %v1975
      %v2078 = vmax.f32 %v1822, %v1978
      %v2079 = vmax.f32 %v1823, %v1981
      %v2080 = vmax.f32 %v1824, %v1984
      %v2081 = vmax.f32 %v1825, %v1987
      %v2082 = vmax.f32 %v1826, %v1990
      %v2083 = vmax.f32 %v1827, %v1993
      %v2084 = vmax.f32 %v1828, %v1996
      %v2085 = vmax.f32 %v1829, %v1999
      %v2086 = vmax.f32 %v1830, %v2002
      %v2087 = vmax.f32 %v1831, %v2005
      %v2088 = vmax.f32 %v1832, %v2008
      %v2089 = vmax.f32 %v1833, %v2011
      %v2090 = vmax.f32 %v1834, %v2014
      %v2091 = vmax.f32 %v1835, %v2017
      %v2092 = vmax.f32 %v1836, %v2020
      %v2093 = vmax.f32 %v1837, %v2023
      %v2094 = vmax.f32 %v1838, %v2026
      %v2095 = vmax.f32 %v1839, %v2029
      %v2096 = vmax.f32 %v1840, %v2032
      %v2097 = vsub.f32 %v1777, %v2033
      %v2098 = vsub.f32 %v1778, %v2034
      %v2099 = vsub.f32 %v1779, %v2035
      %v2100 = vsub.f32 %v1780, %v2036
      %v2101 = vsub.f32 %v1781, %v2037
      %v2102 = vsub.f32 %v1782, %v2038
      %v2103 = vsub.f32 %v1783, %v2039
      %v2104 = vsub.f32 %v1784, %v2040
      %v2105 = vsub.f32 %v1785, %v2041
      %v2106 = vsub.f32 %v1786, %v2042
      %v2107 = vsub.f32 %v1787, %v2043
      %v2108 = vsub.f32 %v1788, %v2044
      %v2109 = vsub.f32 %v1789, %v2045
      %v2110 = vsub.f32 %v1790, %v2046
      %v2111 = vsub.f32 %v1791, %v2047
      %v2112 = vsub.f32 %v1792, %v2048
      %v2113 = vsub.f32 %v1793, %v2049
      %v2114 = vsub.f32 %v1794, %v2050
      %v2115 = vsub.f32 %v1795, %v2051
      %v2116 = vsub.f32 %v1796, %v2052
      %v2117 = vsub.f32 %v1797, %v2053
      %v2118 = vsub.f32 %v1798, %v2054
      %v2119 = vsub.f32 %v1799, %v2055
      %v2120 = vsub.f32 %v1800, %v2056
      %v2121 = vsub.f32 %v1801, %v2057
      %v2122 = vsub.f32 %v1802, %v2058
      %v2123 = vsub.f32 %v1803, %v2059
      %v2124 = vsub.f32 %v1804, %v2060
      %v2125 = vsub.f32 %v1805, %v2061
      %v2126 = vsub.f32 %v1806, %v2062
      %v2127 = vsub.f32 %v1807, %v2063
      %v2128 = vsub.f32 %v1808, %v2064
      %v2129 = vsub.f32 %v1809, %v2065
      %v2130 = vsub.f32 %v1810, %v2066
      %v2131 = vsub.f32 %v1811, %v2067
      %v2132 = vsub.f32 %v1812, %v2068
      %v2133 = vsub.f32 %v1813, %v2069
      %v2134 = vsub.f32 %v1814, %v2070
      %v2135 = vsub.f32 %v1815, %v2071
      %v2136 = vsub.f32 %v1816, %v2072
      %v2137 = vsub.f32 %v1817, %v2073
      %v2138 = vsub.f32 %v1818, %v2074
      %v2139 = vsub.f32 %v1819, %v2075
      %v2140 = vsub.f32 %v1820, %v2076
      %v2141 = vsub.f32 %v1821, %v2077
      %v2142 = vsub.f32 %v1822, %v2078
      %v2143 = vsub.f32 %v1823, %v2079
      %v2144 = vsub.f32 %v1824, %v2080
      %v2145 = vsub.f32 %v1825, %v2081
      %v2146 = vsub.f32 %v1826, %v2082
      %v2147 = vsub.f32 %v1827, %v2083
      %v2148 = vsub.f32 %v1828, %v2084
      %v2149 = vsub.f32 %v1829, %v2085
      %v2150 = vsub.f32 %v1830, %v2086
      %v2151 = vsub.f32 %v1831, %v2087
      %v2152 = vsub.f32 %v1832, %v2088
      %v2153 = vsub.f32 %v1833, %v2089
      %v2154 = vsub.f32 %v1834, %v2090
      %v2155 = vsub.f32 %v1835, %v2091
      %v2156 = vsub.f32 %v1836, %v2092
      %v2157 = vsub.f32 %v1837, %v2093
      %v2158 = vsub.f32 %v1838, %v2094
      %v2159 = vsub.f32 %v1839, %v2095
      %v2160 = vsub.f32 %v1840, %v2096
      %v2161 = vmul.f32 %v2097, 1.442695
      %v2162 = vpow.pop %v2161
      %v2163 = vmul.f32 %v2098, 1.442695
      %v2164 = vpow.pop %v2163
      %v2165 = vmul.f32 %v2099, 1.442695
      %v2166 = vpow.pop %v2165
      %v2167 = vmul.f32 %v2100, 1.442695
      %v2168 = vpow.pop %v2167
      %v2169 = vmul.f32 %v2101, 1.442695
      %v2170 = vpow.pop %v2169
      %v2171 = vmul.f32 %v2102, 1.442695
      %v2172 = vpow.pop %v2171
      %v2173 = vmul.f32 %v2103, 1.442695
      %v2174 = vpow.pop %v2173
      %v2175 = vmul.f32 %v2104, 1.442695
      %v2176 = vpow.pop %v2175
      %v2177 = vmul.f32 %v2105, 1.442695
      %v2178 = vpow.pop %v2177
      %v2179 = vmul.f32 %v2106, 1.442695
      %v2180 = vpow.pop %v2179
      %v2181 = vmul.f32 %v2107, 1.442695
      %v2182 = vpow.pop %v2181
      %v2183 = vmul.f32 %v2108, 1.442695
      %v2184 = vpow.pop %v2183
      %v2185 = vmul.f32 %v2109, 1.442695
      %v2186 = vpow.pop %v2185
      %v2187 = vmul.f32 %v2110, 1.442695
      %v2188 = vpow.pop %v2187
      %v2189 = vmul.f32 %v2111, 1.442695
      %v2190 = vpow.pop %v2189
      %v2191 = vmul.f32 %v2112, 1.442695
      %v2192 = vpow.pop %v2191
      %v2193 = vmul.f32 %v2113, 1.442695
      %v2194 = vpow.pop %v2193
      %v2195 = vmul.f32 %v2114, 1.442695
      %v2196 = vpow.pop %v2195
      %v2197 = vmul.f32 %v2115, 1.442695
      %v2198 = vpow.pop %v2197
      %v2199 = vmul.f32 %v2116, 1.442695
      %v2200 = vpow.pop %v2199
      %v2201 = vmul.f32 %v2117, 1.442695
      %v2202 = vpow.pop %v2201
      %v2203 = vmul.f32 %v2118, 1.442695
      %v2204 = vpow.pop %v2203
      %v2205 = vmul.f32 %v2119, 1.442695
      %v2206 = vpow.pop %v2205
      %v2207 = vmul.f32 %v2120, 1.442695
      %v2208 = vpow.pop %v2207
      %v2209 = vmul.f32 %v2121, 1.442695
      %v2210 = vpow.pop %v2209
      %v2211 = vmul.f32 %v2122, 1.442695
      %v2212 = vpow.pop %v2211
      %v2213 = vmul.f32 %v2123, 1.442695
      %v2214 = vpow.pop %v2213
      %v2215 = vmul.f32 %v2124, 1.442695
      %v2216 = vpow.pop %v2215
      %v2217 = vmul.f32 %v2125, 1.442695
      %v2218 = vpow.pop %v2217
      %v2219 = vmul.f32 %v2126, 1.442695
      %v2220 = vpow.pop %v2219
      %v2221 = vmul.f32 %v2127, 1.442695
      %v2222 = vpow.pop %v2221
      %v2223 = vmul.f32 %v2128, 1.442695
      %v2224 = vpow.pop %v2223
      %v2225 = vmul.f32 %v2129, 1.442695
      %v2226 = vpow.pop %v2225
      %v2227 = vmul.f32 %v2130, 1.442695
      %v2228 = vpow.pop %v2227
      %v2229 = vmul.f32 %v2131, 1.442695
      %v2230 = vpow.pop %v2229
      %v2231 = vmul.f32 %v2132, 1.442695
      %v2232 = vpow.pop %v2231
      %v2233 = vmul.f32 %v2133, 1.442695
      %v2234 = vpow.pop %v2233
      %v2235 = vmul.f32 %v2134, 1.442695
      %v2236 = vpow.pop %v2235
      %v2237 = vmul.f32 %v2135, 1.442695
      %v2238 = vpow.pop %v2237
      %v2239 = vmul.f32 %v2136, 1.442695
      %v2240 = vpow.pop %v2239
      %v2241 = vmul.f32 %v2137, 1.442695
      %v2242 = vpow.pop %v2241
      %v2243 = vmul.f32 %v2138, 1.442695
      %v2244 = vpow.pop %v2243
      %v2245 = vmul.f32 %v2139, 1.442695
      %v2246 = vpow.pop %v2245
      %v2247 = vmul.f32 %v2140, 1.442695
      %v2248 = vpow.pop %v2247
      %v2249 = vmul.f32 %v2141, 1.442695
      %v2250 = vpow.pop %v2249
      %v2251 = vmul.f32 %v2142, 1.442695
      %v2252 = vpow.pop %v2251
      %v2253 = vmul.f32 %v2143, 1.442695
      %v2254 = vpow.pop %v2253
      %v2255 = vmul.f32 %v2144, 1.442695
      %v2256 = vpow.pop %v2255
      %v2257 = vmul.f32 %v2145, 1.442695
      %v2258 = vpow.pop %v2257
      %v2259 = vmul.f32 %v2146, 1.442695
      %v2260 = vpow.pop %v2259
      %v2261 = vmul.f32 %v2147, 1.442695
      %v2262 = vpow.pop %v2261
      %v2263 = vmul.f32 %v2148, 1.442695
      %v2264 = vpow.pop %v2263
      %v2265 = vmul.f32 %v2149, 1.442695
      %v2266 = vpow.pop %v2265
      %v2267 = vmul.f32 %v2150, 1.442695
      %v2268 = vpow.pop %v2267
      %v2269 = vmul.f32 %v2151, 1.442695
      %v2270 = vpow.pop %v2269
      %v2271 = vmul.f32 %v2152, 1.442695
      %v2272 = vpow.pop %v2271
      %v2273 = vmul.f32 %v2153, 1.442695
      %v2274 = vpow.pop %v2273
      %v2275 = vmul.f32 %v2154, 1.442695
      %v2276 = vpow.pop %v2275
      %v2277 = vmul.f32 %v2155, 1.442695
      %v2278 = vpow.pop %v2277
      %v2279 = vmul.f32 %v2156, 1.442695
      %v2280 = vpow.pop %v2279
      %v2281 = vmul.f32 %v2157, 1.442695
      %v2282 = vpow.pop %v2281
      %v2283 = vmul.f32 %v2158, 1.442695
      %v2284 = vpow.pop %v2283
      %v2285 = vmul.f32 %v2159, 1.442695
      %v2286 = vpow.pop %v2285
      %v2287 = vmul.f32 %v2160, 1.442695
      %v2288 = vpow.pop %v2287
      %2290 = vset.pattern.permute.xlu0 0
      %2291 = vperm.xlu0 %2290, %v2033
      %v2292 = vpop.permute.xlu0 %2291
      %2295 = vset.pattern.permute.xlu0 0
      %2296 = vperm.xlu0 %2295, %v2034
      %v2297 = vpop.permute.xlu0 %2296
      %2300 = vset.pattern.permute.xlu0 0
      %2301 = vperm.xlu0 %2300, %v2035
      %v2302 = vpop.permute.xlu0 %2301
      %2305 = vset.pattern.permute.xlu0 0
      %2306 = vperm.xlu0 %2305, %v2036
      %v2307 = vpop.permute.xlu0 %2306
      %2310 = vset.pattern.permute.xlu0 0
      %2311 = vperm.xlu0 %2310, %v2037
      %v2312 = vpop.permute.xlu0 %2311
      %2315 = vset.pattern.permute.xlu0 0
      %2316 = vperm.xlu0 %2315, %v2038
      %v2317 = vpop.permute.xlu0 %2316
      %2320 = vset.pattern.permute.xlu0 0
      %2321 = vperm.xlu0 %2320, %v2039
      %v2322 = vpop.permute.xlu0 %2321
      %2325 = vset.pattern.permute.xlu0 0
      %2326 = vperm.xlu0 %2325, %v2040
      %v2327 = vpop.permute.xlu0 %2326
      %2330 = vset.pattern.permute.xlu0 0
      %2331 = vperm.xlu0 %2330, %v2041
      %v2332 = vpop.permute.xlu0 %2331
      %2335 = vset.pattern.permute.xlu0 0
      %2336 = vperm.xlu0 %2335, %v2042
      %v2337 = vpop.permute.xlu0 %2336
      %2340 = vset.pattern.permute.xlu0 0
      %2341 = vperm.xlu0 %2340, %v2043
      %v2342 = vpop.permute.xlu0 %2341
      %2345 = vset.pattern.permute.xlu0 0
      %2346 = vperm.xlu0 %2345, %v2044
      %v2347 = vpop.permute.xlu0 %2346
      %2350 = vset.pattern.permute.xlu0 0
      %2351 = vperm.xlu0 %2350, %v2045
      %v2352 = vpop.permute.xlu0 %2351
      %2355 = vset.pattern.permute.xlu0 0
      %2356 = vperm.xlu0 %2355, %v2046
      %v2357 = vpop.permute.xlu0 %2356
      %2360 = vset.pattern.permute.xlu0 0
      %2361 = vperm.xlu0 %2360, %v2047
      %v2362 = vpop.permute.xlu0 %2361
      %2365 = vset.pattern.permute.xlu0 0
      %2366 = vperm.xlu0 %2365, %v2048
      %v2367 = vpop.permute.xlu0 %2366
      %2370 = vset.pattern.permute.xlu0 0
      %2371 = vperm.xlu0 %2370, %v2049
      %v2372 = vpop.permute.xlu0 %2371
      %2375 = vset.pattern.permute.xlu0 0
      %2376 = vperm.xlu0 %2375, %v2050
      %v2377 = vpop.permute.xlu0 %2376
      %2380 = vset.pattern.permute.xlu0 0
      %2381 = vperm.xlu0 %2380, %v2051
      %v2382 = vpop.permute.xlu0 %2381
      %2385 = vset.pattern.permute.xlu0 0
      %2386 = vperm.xlu0 %2385, %v2052
      %v2387 = vpop.permute.xlu0 %2386
      %2390 = vset.pattern.permute.xlu0 0
      %2391 = vperm.xlu0 %2390, %v2053
      %v2392 = vpop.permute.xlu0 %2391
      %2395 = vset.pattern.permute.xlu0 0
      %2396 = vperm.xlu0 %2395, %v2054
      %v2397 = vpop.permute.xlu0 %2396
      %2400 = vset.pattern.permute.xlu0 0
      %2401 = vperm.xlu0 %2400, %v2055
      %v2402 = vpop.permute.xlu0 %2401
      %2405 = vset.pattern.permute.xlu0 0
      %2406 = vperm.xlu0 %2405, %v2056
      %v2407 = vpop.permute.xlu0 %2406
      %2410 = vset.pattern.permute.xlu0 0
      %2411 = vperm.xlu0 %2410, %v2057
      %v2412 = vpop.permute.xlu0 %2411
      %2415 = vset.pattern.permute.xlu0 0
      %2416 = vperm.xlu0 %2415, %v2058
      %v2417 = vpop.permute.xlu0 %2416
      %2420 = vset.pattern.permute.xlu0 0
      %2421 = vperm.xlu0 %2420, %v2059
      %v2422 = vpop.permute.xlu0 %2421
      %2425 = vset.pattern.permute.xlu0 0
      %2426 = vperm.xlu0 %2425, %v2060
      %v2427 = vpop.permute.xlu0 %2426
      %2430 = vset.pattern.permute.xlu0 0
      %2431 = vperm.xlu0 %2430, %v2061
      %v2432 = vpop.permute.xlu0 %2431
      %2435 = vset.pattern.permute.xlu0 0
      %2436 = vperm.xlu0 %2435, %v2062
      %v2437 = vpop.permute.xlu0 %2436
      %2440 = vset.pattern.permute.xlu0 0
      %2441 = vperm.xlu0 %2440, %v2063
      %v2442 = vpop.permute.xlu0 %2441
      %2445 = vset.pattern.permute.xlu0 0
      %2446 = vperm.xlu0 %2445, %v2064
      %v2447 = vpop.permute.xlu0 %2446
      %2450 = vset.pattern.permute.xlu0 0
      %2451 = vperm.xlu0 %2450, %v2065
      %v2452 = vpop.permute.xlu0 %2451
      %2455 = vset.pattern.permute.xlu0 0
      %2456 = vperm.xlu0 %2455, %v2066
      %v2457 = vpop.permute.xlu0 %2456
      %2460 = vset.pattern.permute.xlu0 0
      %2461 = vperm.xlu0 %2460, %v2067
      %v2462 = vpop.permute.xlu0 %2461
      %2465 = vset.pattern.permute.xlu0 0
      %2466 = vperm.xlu0 %2465, %v2068
      %v2467 = vpop.permute.xlu0 %2466
      %2470 = vset.pattern.permute.xlu0 0
      %2471 = vperm.xlu0 %2470, %v2069
      %v2472 = vpop.permute.xlu0 %2471
      %2475 = vset.pattern.permute.xlu0 0
      %2476 = vperm.xlu0 %2475, %v2070
      %v2477 = vpop.permute.xlu0 %2476
      %2480 = vset.pattern.permute.xlu0 0
      %2481 = vperm.xlu0 %2480, %v2071
      %v2482 = vpop.permute.xlu0 %2481
      %2485 = vset.pattern.permute.xlu0 0
      %2486 = vperm.xlu0 %2485, %v2072
      %v2487 = vpop.permute.xlu0 %2486
      %2490 = vset.pattern.permute.xlu0 0
      %2491 = vperm.xlu0 %2490, %v2073
      %v2492 = vpop.permute.xlu0 %2491
      %2495 = vset.pattern.permute.xlu0 0
      %2496 = vperm.xlu0 %2495, %v2074
      %v2497 = vpop.permute.xlu0 %2496
      %2500 = vset.pattern.permute.xlu0 0
      %2501 = vperm.xlu0 %2500, %v2075
      %v2502 = vpop.permute.xlu0 %2501
      %2505 = vset.pattern.permute.xlu0 0
      %2506 = vperm.xlu0 %2505, %v2076
      %v2507 = vpop.permute.xlu0 %2506
      %2510 = vset.pattern.permute.xlu0 0
      %2511 = vperm.xlu0 %2510, %v2077
      %v2512 = vpop.permute.xlu0 %2511
      %2515 = vset.pattern.permute.xlu0 0
      %2516 = vperm.xlu0 %2515, %v2078
      %v2517 = vpop.permute.xlu0 %2516
      %2520 = vset.pattern.permute.xlu0 0
      %2521 = vperm.xlu0 %2520, %v2079
      %v2522 = vpop.permute.xlu0 %2521
      %2525 = vset.pattern.permute.xlu0 0
      %2526 = vperm.xlu0 %2525, %v2080
      %v2527 = vpop.permute.xlu0 %2526
      %2530 = vset.pattern.permute.xlu0 0
      %2531 = vperm.xlu0 %2530, %v2081
      %v2532 = vpop.permute.xlu0 %2531
      %2535 = vset.pattern.permute.xlu0 0
      %2536 = vperm.xlu0 %2535, %v2082
      %v2537 = vpop.permute.xlu0 %2536
      %2540 = vset.pattern.permute.xlu0 0
      %2541 = vperm.xlu0 %2540, %v2083
      %v2542 = vpop.permute.xlu0 %2541
      %2545 = vset.pattern.permute.xlu0 0
      %2546 = vperm.xlu0 %2545, %v2084
      %v2547 = vpop.permute.xlu0 %2546
      %2550 = vset.pattern.permute.xlu0 0
      %2551 = vperm.xlu0 %2550, %v2085
      %v2552 = vpop.permute.xlu0 %2551
      %2555 = vset.pattern.permute.xlu0 0
      %2556 = vperm.xlu0 %2555, %v2086
      %v2557 = vpop.permute.xlu0 %2556
      %2560 = vset.pattern.permute.xlu0 0
      %2561 = vperm.xlu0 %2560, %v2087
      %v2562 = vpop.permute.xlu0 %2561
      %2565 = vset.pattern.permute.xlu0 0
      %2566 = vperm.xlu0 %2565, %v2088
      %v2567 = vpop.permute.xlu0 %2566
      %2570 = vset.pattern.permute.xlu0 0
      %2571 = vperm.xlu0 %2570, %v2089
      %v2572 = vpop.permute.xlu0 %2571
      %2575 = vset.pattern.permute.xlu0 0
      %2576 = vperm.xlu0 %2575, %v2090
      %v2577 = vpop.permute.xlu0 %2576
      %2580 = vset.pattern.permute.xlu0 0
      %2581 = vperm.xlu0 %2580, %v2091
      %v2582 = vpop.permute.xlu0 %2581
      %2585 = vset.pattern.permute.xlu0 0
      %2586 = vperm.xlu0 %2585, %v2092
      %v2587 = vpop.permute.xlu0 %2586
      %2590 = vset.pattern.permute.xlu0 0
      %2591 = vperm.xlu0 %2590, %v2093
      %v2592 = vpop.permute.xlu0 %2591
      %2595 = vset.pattern.permute.xlu0 0
      %2596 = vperm.xlu0 %2595, %v2094
      %v2597 = vpop.permute.xlu0 %2596
      %2600 = vset.pattern.permute.xlu0 0
      %2601 = vperm.xlu0 %2600, %v2095
      %v2602 = vpop.permute.xlu0 %2601
      %2605 = vset.pattern.permute.xlu0 0
      %2606 = vperm.xlu0 %2605, %v2096
      %v2607 = vpop.permute.xlu0 %2606
      %v2609 = vsub.f32 %v1449, %v2292
      %v2610 = vsub.f32 %v1618, %v2292
      %v2611 = vsub.f32 %v1451, %v2297
      %v2612 = vsub.f32 %v1620, %v2297
      %v2613 = vsub.f32 %v1454, %v2302
      %v2614 = vsub.f32 %v1623, %v2302
      %v2615 = vsub.f32 %v1456, %v2307
      %v2616 = vsub.f32 %v1625, %v2307
      %v2617 = vsub.f32 %v1459, %v2312
      %v2618 = vsub.f32 %v1628, %v2312
      %v2619 = vsub.f32 %v1461, %v2317
      %v2620 = vsub.f32 %v1630, %v2317
      %v2621 = vsub.f32 %v1464, %v2322
      %v2622 = vsub.f32 %v1633, %v2322
      %v2623 = vsub.f32 %v1466, %v2327
      %v2624 = vsub.f32 %v1635, %v2327
      %v2625 = vsub.f32 %v1469, %v2332
      %v2626 = vsub.f32 %v1638, %v2332
      %v2627 = vsub.f32 %v1471, %v2337
      %v2628 = vsub.f32 %v1640, %v2337
      %v2629 = vsub.f32 %v1474, %v2342
      %v2630 = vsub.f32 %v1643, %v2342
      %v2631 = vsub.f32 %v1476, %v2347
      %v2632 = vsub.f32 %v1645, %v2347
      %v2633 = vsub.f32 %v1479, %v2352
      %v2634 = vsub.f32 %v1648, %v2352
      %v2635 = vsub.f32 %v1481, %v2357
      %v2636 = vsub.f32 %v1650, %v2357
      %v2637 = vsub.f32 %v1484, %v2362
      %v2638 = vsub.f32 %v1653, %v2362
      %v2639 = vsub.f32 %v1486, %v2367
      %v2640 = vsub.f32 %v1655, %v2367
      %v2641 = vsub.f32 %v1489, %v2372
      %v2642 = vsub.f32 %v1658, %v2372
      %v2643 = vsub.f32 %v1491, %v2377
      %v2644 = vsub.f32 %v1660, %v2377
      %v2645 = vsub.f32 %v1494, %v2382
      %v2646 = vsub.f32 %v1663, %v2382
      %v2647 = vsub.f32 %v1496, %v2387
      %v2648 = vsub.f32 %v1665, %v2387
      %v2649 = vsub.f32 %v1499, %v2392
      %v2650 = vsub.f32 %v1668, %v2392
      %v2651 = vsub.f32 %v1501, %v2397
      %v2652 = vsub.f32 %v1670, %v2397
      %v2653 = vsub.f32 %v1504, %v2402
      %v2654 = vsub.f32 %v1673, %v2402
      %v2655 = vsub.f32 %v1506, %v2407
      %v2656 = vsub.f32 %v1675, %v2407
      %v2657 = vsub.f32 %v1509, %v2412
      %v2658 = vsub.f32 %v1678, %v2412
      %v2659 = vsub.f32 %v1511, %v2417
      %v2660 = vsub.f32 %v1680, %v2417
      %v2661 = vsub.f32 %v1514, %v2422
      %v2662 = vsub.f32 %v1683, %v2422
      %v2663 = vsub.f32 %v1516, %v2427
      %v2664 = vsub.f32 %v1685, %v2427
      %v2665 = vsub.f32 %v1519, %v2432
      %v2666 = vsub.f32 %v1688, %v2432
      %v2667 = vsub.f32 %v1521, %v2437
      %v2668 = vsub.f32 %v1690, %v2437
      %v2669 = vsub.f32 %v1524, %v2442
      %v2670 = vsub.f32 %v1693, %v2442
      %v2671 = vsub.f32 %v1526, %v2447
      %v2672 = vsub.f32 %v1695, %v2447
      %v2673 = vsub.f32 %v1529, %v2452
      %v2674 = vsub.f32 %v1698, %v2452
      %v2675 = vsub.f32 %v1531, %v2457
      %v2676 = vsub.f32 %v1700, %v2457
      %v2677 = vsub.f32 %v1534, %v2462
      %v2678 = vsub.f32 %v1703, %v2462
      %v2679 = vsub.f32 %v1536, %v2467
      %v2680 = vsub.f32 %v1705, %v2467
      %v2681 = vsub.f32 %v1539, %v2472
      %v2682 = vsub.f32 %v1708, %v2472
      %v2683 = vsub.f32 %v1541, %v2477
      %v2684 = vsub.f32 %v1710, %v2477
      %v2685 = vsub.f32 %v1544, %v2482
      %v2686 = vsub.f32 %v1713, %v2482
      %v2687 = vsub.f32 %v1546, %v2487
      %v2688 = vsub.f32 %v1715, %v2487
      %v2689 = vsub.f32 %v1549, %v2492
      %v2690 = vsub.f32 %v1718, %v2492
      %v2691 = vsub.f32 %v1551, %v2497
      %v2692 = vsub.f32 %v1720, %v2497
      %v2693 = vsub.f32 %v1554, %v2502
      %v2694 = vsub.f32 %v1723, %v2502
      %v2695 = vsub.f32 %v1556, %v2507
      %v2696 = vsub.f32 %v1725, %v2507
      %v2697 = vsub.f32 %v1559, %v2512
      %v2698 = vsub.f32 %v1728, %v2512
      %v2699 = vsub.f32 %v1561, %v2517
      %v2700 = vsub.f32 %v1730, %v2517
      %v2701 = vsub.f32 %v1564, %v2522
      %v2702 = vsub.f32 %v1733, %v2522
      %v2703 = vsub.f32 %v1566, %v2527
      %v2704 = vsub.f32 %v1735, %v2527
      %v2705 = vsub.f32 %v1569, %v2532
      %v2706 = vsub.f32 %v1738, %v2532
      %v2707 = vsub.f32 %v1571, %v2537
      %v2708 = vsub.f32 %v1740, %v2537
      %v2709 = vsub.f32 %v1574, %v2542
      %v2710 = vsub.f32 %v1743, %v2542
      %v2711 = vsub.f32 %v1576, %v2547
      %v2712 = vsub.f32 %v1745, %v2547
      %v2713 = vsub.f32 %v1579, %v2552
      %v2714 = vsub.f32 %v1748, %v2552
      %v2715 = vsub.f32 %v1581, %v2557
      %v2716 = vsub.f32 %v1750, %v2557
      %v2717 = vsub.f32 %v1584, %v2562
      %v2718 = vsub.f32 %v1753, %v2562
      %v2719 = vsub.f32 %v1586, %v2567
      %v2720 = vsub.f32 %v1755, %v2567
      %v2721 = vsub.f32 %v1589, %v2572
      %v2722 = vsub.f32 %v1758, %v2572
      %v2723 = vsub.f32 %v1591, %v2577
      %v2724 = vsub.f32 %v1760, %v2577
      %v2725 = vsub.f32 %v1594, %v2582
      %v2726 = vsub.f32 %v1763, %v2582
      %v2727 = vsub.f32 %v1596, %v2587
      %v2728 = vsub.f32 %v1765, %v2587
      %v2729 = vsub.f32 %v1599, %v2592
      %v2730 = vsub.f32 %v1768, %v2592
      %v2731 = vsub.f32 %v1601, %v2597
      %v2732 = vsub.f32 %v1770, %v2597
      %v2733 = vsub.f32 %v1604, %v2602
      %v2734 = vsub.f32 %v1773, %v2602
      %v2735 = vsub.f32 %v1606, %v2607
      %v2736 = vsub.f32 %v1775, %v2607
      %v2737 = vmul.f32 %v2609, 1.442695
      %v2738 = vpow.pop %v2737
      %v2739 = vmul.f32 %v2610, 1.442695
      %v2740 = vpow.pop %v2739
      %v2741 = vmul.f32 %v2611, 1.442695
      %v2742 = vpow.pop %v2741
      %v2743 = vmul.f32 %v2612, 1.442695
      %v2744 = vpow.pop %v2743
      %v2745 = vmul.f32 %v2613, 1.442695
      %v2746 = vpow.pop %v2745
      %v2747 = vmul.f32 %v2614, 1.442695
      %v2748 = vpow.pop %v2747
      %v2749 = vmul.f32 %v2615, 1.442695
      %v2750 = vpow.pop %v2749
      %v2751 = vmul.f32 %v2616, 1.442695
      %v2752 = vpow.pop %v2751
      %v2753 = vmul.f32 %v2617, 1.442695
      %v2754 = vpow.pop %v2753
      %v2755 = vmul.f32 %v2618, 1.442695
      %v2756 = vpow.pop %v2755
      %v2757 = vmul.f32 %v2619, 1.442695
      %v2758 = vpow.pop %v2757
      %v2759 = vmul.f32 %v2620, 1.442695
      %v2760 = vpow.pop %v2759
      %v2761 = vmul.f32 %v2621, 1.442695
      %v2762 = vpow.pop %v2761
      %v2763 = vmul.f32 %v2622, 1.442695
      %v2764 = vpow.pop %v2763
      %v2765 = vmul.f32 %v2623, 1.442695
      %v2766 = vpow.pop %v2765
      %v2767 = vmul.f32 %v2624, 1.442695
      %v2768 = vpow.pop %v2767
      %v2769 = vmul.f32 %v2625, 1.442695
      %v2770 = vpow.pop %v2769
      %v2771 = vmul.f32 %v2626, 1.442695
      %v2772 = vpow.pop %v2771
      %v2773 = vmul.f32 %v2627, 1.442695
      %v2774 = vpow.pop %v2773
      %v2775 = vmul.f32 %v2628, 1.442695
      %v2776 = vpow.pop %v2775
      %v2777 = vmul.f32 %v2629, 1.442695
      %v2778 = vpow.pop %v2777
      %v2779 = vmul.f32 %v2630, 1.442695
      %v2780 = vpow.pop %v2779
      %v2781 = vmul.f32 %v2631, 1.442695
      %v2782 = vpow.pop %v2781
      %v2783 = vmul.f32 %v2632, 1.442695
      %v2784 = vpow.pop %v2783
      %v2785 = vmul.f32 %v2633, 1.442695
      %v2786 = vpow.pop %v2785
      %v2787 = vmul.f32 %v2634, 1.442695
      %v2788 = vpow.pop %v2787
      %v2789 = vmul.f32 %v2635, 1.442695
      %v2790 = vpow.pop %v2789
      %v2791 = vmul.f32 %v2636, 1.442695
      %v2792 = vpow.pop %v2791
      %v2793 = vmul.f32 %v2637, 1.442695
      %v2794 = vpow.pop %v2793
      %v2795 = vmul.f32 %v2638, 1.442695
      %v2796 = vpow.pop %v2795
      %v2797 = vmul.f32 %v2639, 1.442695
      %v2798 = vpow.pop %v2797
      %v2799 = vmul.f32 %v2640, 1.442695
      %v2800 = vpow.pop %v2799
      %v2801 = vmul.f32 %v2641, 1.442695
      %v2802 = vpow.pop %v2801
      %v2803 = vmul.f32 %v2642, 1.442695
      %v2804 = vpow.pop %v2803
      %v2805 = vmul.f32 %v2643, 1.442695
      %v2806 = vpow.pop %v2805
      %v2807 = vmul.f32 %v2644, 1.442695
      %v2808 = vpow.pop %v2807
      %v2809 = vmul.f32 %v2645, 1.442695
      %v2810 = vpow.pop %v2809
      %v2811 = vmul.f32 %v2646, 1.442695
      %v2812 = vpow.pop %v2811
      %v2813 = vmul.f32 %v2647, 1.442695
      %v2814 = vpow.pop %v2813
      %v2815 = vmul.f32 %v2648, 1.442695
      %v2816 = vpow.pop %v2815
      %v2817 = vmul.f32 %v2649, 1.442695
      %v2818 = vpow.pop %v2817
      %v2819 = vmul.f32 %v2650, 1.442695
      %v2820 = vpow.pop %v2819
      %v2821 = vmul.f32 %v2651, 1.442695
      %v2822 = vpow.pop %v2821
      %v2823 = vmul.f32 %v2652, 1.442695
      %v2824 = vpow.pop %v2823
      %v2825 = vmul.f32 %v2653, 1.442695
      %v2826 = vpow.pop %v2825
      %v2827 = vmul.f32 %v2654, 1.442695
      %v2828 = vpow.pop %v2827
      %v2829 = vmul.f32 %v2655, 1.442695
      %v2830 = vpow.pop %v2829
      %v2831 = vmul.f32 %v2656, 1.442695
      %v2832 = vpow.pop %v2831
      %v2833 = vmul.f32 %v2657, 1.442695
      %v2834 = vpow.pop %v2833
      %v2835 = vmul.f32 %v2658, 1.442695
      %v2836 = vpow.pop %v2835
      %v2837 = vmul.f32 %v2659, 1.442695
      %v2838 = vpow.pop %v2837
      %v2839 = vmul.f32 %v2660, 1.442695
      %v2840 = vpow.pop %v2839
      %v2841 = vmul.f32 %v2661, 1.442695
      %v2842 = vpow.pop %v2841
      %v2843 = vmul.f32 %v2662, 1.442695
      %v2844 = vpow.pop %v2843
      %v2845 = vmul.f32 %v2663, 1.442695
      %v2846 = vpow.pop %v2845
      %v2847 = vmul.f32 %v2664, 1.442695
      %v2848 = vpow.pop %v2847
      %v2849 = vmul.f32 %v2665, 1.442695
      %v2850 = vpow.pop %v2849
      %v2851 = vmul.f32 %v2666, 1.442695
      %v2852 = vpow.pop %v2851
      %v2853 = vmul.f32 %v2667, 1.442695
      %v2854 = vpow.pop %v2853
      %v2855 = vmul.f32 %v2668, 1.442695
      %v2856 = vpow.pop %v2855
      %v2857 = vmul.f32 %v2669, 1.442695
      %v2858 = vpow.pop %v2857
      %v2859 = vmul.f32 %v2670, 1.442695
      %v2860 = vpow.pop %v2859
      %v2861 = vmul.f32 %v2671, 1.442695
      %v2862 = vpow.pop %v2861
      %v2863 = vmul.f32 %v2672, 1.442695
      %v2864 = vpow.pop %v2863
      %v2865 = vmul.f32 %v2673, 1.442695
      %v2866 = vpow.pop %v2865
      %v2867 = vmul.f32 %v2674, 1.442695
      %v2868 = vpow.pop %v2867
      %v2869 = vmul.f32 %v2675, 1.442695
      %v2870 = vpow.pop %v2869
      %v2871 = vmul.f32 %v2676, 1.442695
      %v2872 = vpow.pop %v2871
      %v2873 = vmul.f32 %v2677, 1.442695
      %v2874 = vpow.pop %v2873
      %v2875 = vmul.f32 %v2678, 1.442695
      %v2876 = vpow.pop %v2875
      %v2877 = vmul.f32 %v2679, 1.442695
      %v2878 = vpow.pop %v2877
      %v2879 = vmul.f32 %v2680, 1.442695
      %v2880 = vpow.pop %v2879
      %v2881 = vmul.f32 %v2681, 1.442695
      %v2882 = vpow.pop %v2881
      %v2883 = vmul.f32 %v2682, 1.442695
      %v2884 = vpow.pop %v2883
      %v2885 = vmul.f32 %v2683, 1.442695
      %v2886 = vpow.pop %v2885
      %v2887 = vmul.f32 %v2684, 1.442695
      %v2888 = vpow.pop %v2887
      %v2889 = vmul.f32 %v2685, 1.442695
      %v2890 = vpow.pop %v2889
      %v2891 = vmul.f32 %v2686, 1.442695
      %v2892 = vpow.pop %v2891
      %v2893 = vmul.f32 %v2687, 1.442695
      %v2894 = vpow.pop %v2893
      %v2895 = vmul.f32 %v2688, 1.442695
      %v2896 = vpow.pop %v2895
      %v2897 = vmul.f32 %v2689, 1.442695
      %v2898 = vpow.pop %v2897
      %v2899 = vmul.f32 %v2690, 1.442695
      %v2900 = vpow.pop %v2899
      %v2901 = vmul.f32 %v2691, 1.442695
      %v2902 = vpow.pop %v2901
      %v2903 = vmul.f32 %v2692, 1.442695
      %v2904 = vpow.pop %v2903
      %v2905 = vmul.f32 %v2693, 1.442695
      %v2906 = vpow.pop %v2905
      %v2907 = vmul.f32 %v2694, 1.442695
      %v2908 = vpow.pop %v2907
      %v2909 = vmul.f32 %v2695, 1.442695
      %v2910 = vpow.pop %v2909
      %v2911 = vmul.f32 %v2696, 1.442695
      %v2912 = vpow.pop %v2911
      %v2913 = vmul.f32 %v2697, 1.442695
      %v2914 = vpow.pop %v2913
      %v2915 = vmul.f32 %v2698, 1.442695
      %v2916 = vpow.pop %v2915
      %v2917 = vmul.f32 %v2699, 1.442695
      %v2918 = vpow.pop %v2917
      %v2919 = vmul.f32 %v2700, 1.442695
      %v2920 = vpow.pop %v2919
      %v2921 = vmul.f32 %v2701, 1.442695
      %v2922 = vpow.pop %v2921
      %v2923 = vmul.f32 %v2702, 1.442695
      %v2924 = vpow.pop %v2923
      %v2925 = vmul.f32 %v2703, 1.442695
      %v2926 = vpow.pop %v2925
      %v2927 = vmul.f32 %v2704, 1.442695
      %v2928 = vpow.pop %v2927
      %v2929 = vmul.f32 %v2705, 1.442695
      %v2930 = vpow.pop %v2929
      %v2931 = vmul.f32 %v2706, 1.442695
      %v2932 = vpow.pop %v2931
      %v2933 = vmul.f32 %v2707, 1.442695
      %v2934 = vpow.pop %v2933
      %v2935 = vmul.f32 %v2708, 1.442695
      %v2936 = vpow.pop %v2935
      %v2937 = vmul.f32 %v2709, 1.442695
      %v2938 = vpow.pop %v2937
      %v2939 = vmul.f32 %v2710, 1.442695
      %v2940 = vpow.pop %v2939
      %v2941 = vmul.f32 %v2711, 1.442695
      %v2942 = vpow.pop %v2941
      %v2943 = vmul.f32 %v2712, 1.442695
      %v2944 = vpow.pop %v2943
      %v2945 = vmul.f32 %v2713, 1.442695
      %v2946 = vpow.pop %v2945
      %v2947 = vmul.f32 %v2714, 1.442695
      %v2948 = vpow.pop %v2947
      %v2949 = vmul.f32 %v2715, 1.442695
      %v2950 = vpow.pop %v2949
      %v2951 = vmul.f32 %v2716, 1.442695
      %v2952 = vpow.pop %v2951
      %v2953 = vmul.f32 %v2717, 1.442695
      %v2954 = vpow.pop %v2953
      %v2955 = vmul.f32 %v2718, 1.442695
      %v2956 = vpow.pop %v2955
      %v2957 = vmul.f32 %v2719, 1.442695
      %v2958 = vpow.pop %v2957
      %v2959 = vmul.f32 %v2720, 1.442695
      %v2960 = vpow.pop %v2959
      %v2961 = vmul.f32 %v2721, 1.442695
      %v2962 = vpow.pop %v2961
      %v2963 = vmul.f32 %v2722, 1.442695
      %v2964 = vpow.pop %v2963
      %v2965 = vmul.f32 %v2723, 1.442695
      %v2966 = vpow.pop %v2965
      %v2967 = vmul.f32 %v2724, 1.442695
      %v2968 = vpow.pop %v2967
      %v2969 = vmul.f32 %v2725, 1.442695
      %v2970 = vpow.pop %v2969
      %v2971 = vmul.f32 %v2726, 1.442695
      %v2972 = vpow.pop %v2971
      %v2973 = vmul.f32 %v2727, 1.442695
      %v2974 = vpow.pop %v2973
      %v2975 = vmul.f32 %v2728, 1.442695
      %v2976 = vpow.pop %v2975
      %v2977 = vmul.f32 %v2729, 1.442695
      %v2978 = vpow.pop %v2977
      %v2979 = vmul.f32 %v2730, 1.442695
      %v2980 = vpow.pop %v2979
      %v2981 = vmul.f32 %v2731, 1.442695
      %v2982 = vpow.pop %v2981
      %v2983 = vmul.f32 %v2732, 1.442695
      %v2984 = vpow.pop %v2983
      %v2985 = vmul.f32 %v2733, 1.442695
      %v2986 = vpow.pop %v2985
      %v2987 = vmul.f32 %v2734, 1.442695
      %v2988 = vpow.pop %v2987
      %v2989 = vmul.f32 %v2735, 1.442695
      %v2990 = vpow.pop %v2989
      %v2991 = vmul.f32 %v2736, 1.442695
      %v2992 = vpow.pop %v2991
      %v2993 = vld [vmem:[#allocation4] sm:$0xff]
      %v2994 = vld [vmem:[#allocation4 + $0x8] sm:$0xff]
      %v2995 = vld [vmem:[#allocation4 + $0x10] sm:$0xff]
      %v2996 = vld [vmem:[#allocation4 + $0x18] sm:$0xff]
      %v2997 = vld [vmem:[#allocation4 + $0x20] sm:$0xff]
      %v2998 = vld [vmem:[#allocation4 + $0x28] sm:$0xff]
      %v2999 = vld [vmem:[#allocation4 + $0x30] sm:$0xff]
      %v3000 = vld [vmem:[#allocation4 + $0x38] sm:$0xff]
      %v3001 = vld [vmem:[#allocation4 + $0x40] sm:$0xff]
      %v3002 = vld [vmem:[#allocation4 + $0x48] sm:$0xff]
      %v3003 = vld [vmem:[#allocation4 + $0x50] sm:$0xff]
      %v3004 = vld [vmem:[#allocation4 + $0x58] sm:$0xff]
      %v3005 = vld [vmem:[#allocation4 + $0x60] sm:$0xff]
      %v3006 = vld [vmem:[#allocation4 + $0x68] sm:$0xff]
      %v3007 = vld [vmem:[#allocation4 + $0x70] sm:$0xff]
      %v3008 = vld [vmem:[#allocation4 + $0x78] sm:$0xff]
      %v3009 = vld [vmem:[#allocation4 + $0x80] sm:$0xff]
      %v3010 = vld [vmem:[#allocation4 + $0x88] sm:$0xff]
      %v3011 = vld [vmem:[#allocation4 + $0x90] sm:$0xff]
      %v3012 = vld [vmem:[#allocation4 + $0x98] sm:$0xff]
      %v3013 = vld [vmem:[#allocation4 + $0xa0] sm:$0xff]
      %v3014 = vld [vmem:[#allocation4 + $0xa8] sm:$0xff]
      %v3015 = vld [vmem:[#allocation4 + $0xb0] sm:$0xff]
      %v3016 = vld [vmem:[#allocation4 + $0xb8] sm:$0xff]
      %v3017 = vld [vmem:[#allocation4 + $0xc0] sm:$0xff]
      %v3018 = vld [vmem:[#allocation4 + $0xc8] sm:$0xff]
      %v3019 = vld [vmem:[#allocation4 + $0xd0] sm:$0xff]
      %v3020 = vld [vmem:[#allocation4 + $0xd8] sm:$0xff]
      %v3021 = vld [vmem:[#allocation4 + $0xe0] sm:$0xff]
      %v3022 = vld [vmem:[#allocation4 + $0xe8] sm:$0xff]
      %v3023 = vld [vmem:[#allocation4 + $0xf0] sm:$0xff]
      %v3024 = vld [vmem:[#allocation4 + $0xf8] sm:$0xff]
      %v3025 = vld [vmem:[#allocation4 + $0x100] sm:$0xff]
      %v3026 = vld [vmem:[#allocation4 + $0x108] sm:$0xff]
      %v3027 = vld [vmem:[#allocation4 + $0x110] sm:$0xff]
      %v3028 = vld [vmem:[#allocation4 + $0x118] sm:$0xff]
      %v3029 = vld [vmem:[#allocation4 + $0x120] sm:$0xff]
      %v3030 = vld [vmem:[#allocation4 + $0x128] sm:$0xff]
      %v3031 = vld [vmem:[#allocation4 + $0x130] sm:$0xff]
      %v3032 = vld [vmem:[#allocation4 + $0x138] sm:$0xff]
      %v3033 = vld [vmem:[#allocation4 + $0x140] sm:$0xff]
      %v3034 = vld [vmem:[#allocation4 + $0x148] sm:$0xff]
      %v3035 = vld [vmem:[#allocation4 + $0x150] sm:$0xff]
      %v3036 = vld [vmem:[#allocation4 + $0x158] sm:$0xff]
      %v3037 = vld [vmem:[#allocation4 + $0x160] sm:$0xff]
      %v3038 = vld [vmem:[#allocation4 + $0x168] sm:$0xff]
      %v3039 = vld [vmem:[#allocation4 + $0x170] sm:$0xff]
      %v3040 = vld [vmem:[#allocation4 + $0x178] sm:$0xff]
      %v3041 = vld [vmem:[#allocation4 + $0x180] sm:$0xff]
      %v3042 = vld [vmem:[#allocation4 + $0x188] sm:$0xff]
      %v3043 = vld [vmem:[#allocation4 + $0x190] sm:$0xff]
      %v3044 = vld [vmem:[#allocation4 + $0x198] sm:$0xff]
      %v3045 = vld [vmem:[#allocation4 + $0x1a0] sm:$0xff]
      %v3046 = vld [vmem:[#allocation4 + $0x1a8] sm:$0xff]
      %v3047 = vld [vmem:[#allocation4 + $0x1b0] sm:$0xff]
      %v3048 = vld [vmem:[#allocation4 + $0x1b8] sm:$0xff]
      %v3049 = vld [vmem:[#allocation4 + $0x1c0] sm:$0xff]
      %v3050 = vld [vmem:[#allocation4 + $0x1c8] sm:$0xff]
      %v3051 = vld [vmem:[#allocation4 + $0x1d0] sm:$0xff]
      %v3052 = vld [vmem:[#allocation4 + $0x1d8] sm:$0xff]
      %v3053 = vld [vmem:[#allocation4 + $0x1e0] sm:$0xff]
      %v3054 = vld [vmem:[#allocation4 + $0x1e8] sm:$0xff]
      %v3055 = vld [vmem:[#allocation4 + $0x1f0] sm:$0xff]
      %v3056 = vld [vmem:[#allocation4 + $0x1f8] sm:$0xff]
      %v3057 = vmul.f32 %v2162, %v2993
      %v3058 = vmul.f32 %v2164, %v2994
      %v3059 = vmul.f32 %v2166, %v2995
      %v3060 = vmul.f32 %v2168, %v2996
      %v3061 = vmul.f32 %v2170, %v2997
      %v3062 = vmul.f32 %v2172, %v2998
      %v3063 = vmul.f32 %v2174, %v2999
      %v3064 = vmul.f32 %v2176, %v3000
      %v3065 = vmul.f32 %v2178, %v3001
      %v3066 = vmul.f32 %v2180, %v3002
      %v3067 = vmul.f32 %v2182, %v3003
      %v3068 = vmul.f32 %v2184, %v3004
      %v3069 = vmul.f32 %v2186, %v3005
      %v3070 = vmul.f32 %v2188, %v3006
      %v3071 = vmul.f32 %v2190, %v3007
      %v3072 = vmul.f32 %v2192, %v3008
      %v3073 = vmul.f32 %v2194, %v3009
      %v3074 = vmul.f32 %v2196, %v3010
      %v3075 = vmul.f32 %v2198, %v3011
      %v3076 = vmul.f32 %v2200, %v3012
      %v3077 = vmul.f32 %v2202, %v3013
      %v3078 = vmul.f32 %v2204, %v3014
      %v3079 = vmul.f32 %v2206, %v3015
      %v3080 = vmul.f32 %v2208, %v3016
      %v3081 = vmul.f32 %v2210, %v3017
      %v3082 = vmul.f32 %v2212, %v3018
      %v3083 = vmul.f32 %v2214, %v3019
      %v3084 = vmul.f32 %v2216, %v3020
      %v3085 = vmul.f32 %v2218, %v3021
      %v3086 = vmul.f32 %v2220, %v3022
      %v3087 = vmul.f32 %v2222, %v3023
      %v3088 = vmul.f32 %v2224, %v3024
      %v3089 = vmul.f32 %v2226, %v3025
      %v3090 = vmul.f32 %v2228, %v3026
      %v3091 = vmul.f32 %v2230, %v3027
      %v3092 = vmul.f32 %v2232, %v3028
      %v3093 = vmul.f32 %v2234, %v3029
      %v3094 = vmul.f32 %v2236, %v3030
      %v3095 = vmul.f32 %v2238, %v3031
      %v3096 = vmul.f32 %v2240, %v3032
      %v3097 = vmul.f32 %v2242, %v3033
      %v3098 = vmul.f32 %v2244, %v3034
      %v3099 = vmul.f32 %v2246, %v3035
      %v3100 = vmul.f32 %v2248, %v3036
      %v3101 = vmul.f32 %v2250, %v3037
      %v3102 = vmul.f32 %v2252, %v3038
      %v3103 = vmul.f32 %v2254, %v3039
      %v3104 = vmul.f32 %v2256, %v3040
      %v3105 = vmul.f32 %v2258, %v3041
      %v3106 = vmul.f32 %v2260, %v3042
      %v3107 = vmul.f32 %v2262, %v3043
      %v3108 = vmul.f32 %v2264, %v3044
      %v3109 = vmul.f32 %v2266, %v3045
      %v3110 = vmul.f32 %v2268, %v3046
      %v3111 = vmul.f32 %v2270, %v3047
      %v3112 = vmul.f32 %v2272, %v3048
      %v3113 = vmul.f32 %v2274, %v3049
      %v3114 = vmul.f32 %v2276, %v3050
      %v3115 = vmul.f32 %v2278, %v3051
      %v3116 = vmul.f32 %v2280, %v3052
      %v3117 = vmul.f32 %v2282, %v3053
      %v3118 = vmul.f32 %v2284, %v3054
      %v3119 = vmul.f32 %v2286, %v3055
      %v3120 = vmul.f32 %v2288, %v3056
      %v3121 = vadd.f32 %v2738, %v2740
      %3122 = vadd.xlane.f32.xlu0 %v3121
      %v3123 = vpop.xlane.xlu0 %3122
      %v3124 = vadd.f32 %v2742, %v2744
      %3125 = vadd.xlane.f32.xlu0 %v3124
      %v3126 = vpop.xlane.xlu0 %3125
      %v3127 = vadd.f32 %v2746, %v2748
      %3128 = vadd.xlane.f32.xlu0 %v3127
      %v3129 = vpop.xlane.xlu0 %3128
      %v3130 = vadd.f32 %v2750, %v2752
      %3131 = vadd.xlane.f32.xlu0 %v3130
      %v3132 = vpop.xlane.xlu0 %3131
      %v3133 = vadd.f32 %v2754, %v2756
      %3134 = vadd.xlane.f32.xlu0 %v3133
      %v3135 = vpop.xlane.xlu0 %3134
      %v3136 = vadd.f32 %v2758, %v2760
      %3137 = vadd.xlane.f32.xlu0 %v3136
      %v3138 = vpop.xlane.xlu0 %3137
      %v3139 = vadd.f32 %v2762, %v2764
      %3140 = vadd.xlane.f32.xlu0 %v3139
      %v3141 = vpop.xlane.xlu0 %3140
      %v3142 = vadd.f32 %v2766, %v2768
      %3143 = vadd.xlane.f32.xlu0 %v3142
      %v3144 = vpop.xlane.xlu0 %3143
      %v3145 = vadd.f32 %v2770, %v2772
      %3146 = vadd.xlane.f32.xlu0 %v3145
      %v3147 = vpop.xlane.xlu0 %3146
      %v3148 = vadd.f32 %v2774, %v2776
      %3149 = vadd.xlane.f32.xlu0 %v3148
      %v3150 = vpop.xlane.xlu0 %3149
      %v3151 = vadd.f32 %v2778, %v2780
      %3152 = vadd.xlane.f32.xlu0 %v3151
      %v3153 = vpop.xlane.xlu0 %3152
      %v3154 = vadd.f32 %v2782, %v2784
      %3155 = vadd.xlane.f32.xlu0 %v3154
      %v3156 = vpop.xlane.xlu0 %3155
      %v3157 = vadd.f32 %v2786, %v2788
      %3158 = vadd.xlane.f32.xlu0 %v3157
      %v3159 = vpop.xlane.xlu0 %3158
      %v3160 = vadd.f32 %v2790, %v2792
      %3161 = vadd.xlane.f32.xlu0 %v3160
      %v3162 = vpop.xlane.xlu0 %3161
      %v3163 = vadd.f32 %v2794, %v2796
      %3164 = vadd.xlane.f32.xlu0 %v3163
      %v3165 = vpop.xlane.xlu0 %3164
      %v3166 = vadd.f32 %v2798, %v2800
      %3167 = vadd.xlane.f32.xlu0 %v3166
      %v3168 = vpop.xlane.xlu0 %3167
      %v3169 = vadd.f32 %v2802, %v2804
      %3170 = vadd.xlane.f32.xlu0 %v3169
      %v3171 = vpop.xlane.xlu0 %3170
      %v3172 = vadd.f32 %v2806, %v2808
      %3173 = vadd.xlane.f32.xlu0 %v3172
      %v3174 = vpop.xlane.xlu0 %3173
      %v3175 = vadd.f32 %v2810, %v2812
      %3176 = vadd.xlane.f32.xlu0 %v3175
      %v3177 = vpop.xlane.xlu0 %3176
      %v3178 = vadd.f32 %v2814, %v2816
      %3179 = vadd.xlane.f32.xlu0 %v3178
      %v3180 = vpop.xlane.xlu0 %3179
      %v3181 = vadd.f32 %v2818, %v2820
      %3182 = vadd.xlane.f32.xlu0 %v3181
      %v3183 = vpop.xlane.xlu0 %3182
      %v3184 = vadd.f32 %v2822, %v2824
      %3185 = vadd.xlane.f32.xlu0 %v3184
      %v3186 = vpop.xlane.xlu0 %3185
      %v3187 = vadd.f32 %v2826, %v2828
      %3188 = vadd.xlane.f32.xlu0 %v3187
      %v3189 = vpop.xlane.xlu0 %3188
      %v3190 = vadd.f32 %v2830, %v2832
      %3191 = vadd.xlane.f32.xlu0 %v3190
      %v3192 = vpop.xlane.xlu0 %3191
      %v3193 = vadd.f32 %v2834, %v2836
      %3194 = vadd.xlane.f32.xlu0 %v3193
      %v3195 = vpop.xlane.xlu0 %3194
      %v3196 = vadd.f32 %v2838, %v2840
      %3197 = vadd.xlane.f32.xlu0 %v3196
      %v3198 = vpop.xlane.xlu0 %3197
      %v3199 = vadd.f32 %v2842, %v2844
      %3200 = vadd.xlane.f32.xlu0 %v3199
      %v3201 = vpop.xlane.xlu0 %3200
      %v3202 = vadd.f32 %v2846, %v2848
      %3203 = vadd.xlane.f32.xlu0 %v3202
      %v3204 = vpop.xlane.xlu0 %3203
      %v3205 = vadd.f32 %v2850, %v2852
      %3206 = vadd.xlane.f32.xlu0 %v3205
      %v3207 = vpop.xlane.xlu0 %3206
      %v3208 = vadd.f32 %v2854, %v2856
      %3209 = vadd.xlane.f32.xlu0 %v3208
      %v3210 = vpop.xlane.xlu0 %3209
      %v3211 = vadd.f32 %v2858, %v2860
      %3212 = vadd.xlane.f32.xlu0 %v3211
      %v3213 = vpop.xlane.xlu0 %3212
      %v3214 = vadd.f32 %v2862, %v2864
      %3215 = vadd.xlane.f32.xlu0 %v3214
      %v3216 = vpop.xlane.xlu0 %3215
      %v3217 = vadd.f32 %v2866, %v2868
      %3218 = vadd.xlane.f32.xlu0 %v3217
      %v3219 = vpop.xlane.xlu0 %3218
      %v3220 = vadd.f32 %v2870, %v2872
      %3221 = vadd.xlane.f32.xlu0 %v3220
      %v3222 = vpop.xlane.xlu0 %3221
      %v3223 = vadd.f32 %v2874, %v2876
      %3224 = vadd.xlane.f32.xlu0 %v3223
      %v3225 = vpop.xlane.xlu0 %3224
      %v3226 = vadd.f32 %v2878, %v2880
      %3227 = vadd.xlane.f32.xlu0 %v3226
      %v3228 = vpop.xlane.xlu0 %3227
      %v3229 = vadd.f32 %v2882, %v2884
      %3230 = vadd.xlane.f32.xlu0 %v3229
      %v3231 = vpop.xlane.xlu0 %3230
      %v3232 = vadd.f32 %v2886, %v2888
      %3233 = vadd.xlane.f32.xlu0 %v3232
      %v3234 = vpop.xlane.xlu0 %3233
      %v3235 = vadd.f32 %v2890, %v2892
      %3236 = vadd.xlane.f32.xlu0 %v3235
      %v3237 = vpop.xlane.xlu0 %3236
      %v3238 = vadd.f32 %v2894, %v2896
      %3239 = vadd.xlane.f32.xlu0 %v3238
      %v3240 = vpop.xlane.xlu0 %3239
      %v3241 = vadd.f32 %v2898, %v2900
      %3242 = vadd.xlane.f32.xlu0 %v3241
      %v3243 = vpop.xlane.xlu0 %3242
      %v3244 = vadd.f32 %v2902, %v2904
      %3245 = vadd.xlane.f32.xlu0 %v3244
      %v3246 = vpop.xlane.xlu0 %3245
      %v3247 = vadd.f32 %v2906, %v2908
      %3248 = vadd.xlane.f32.xlu0 %v3247
      %v3249 = vpop.xlane.xlu0 %3248
      %v3250 = vadd.f32 %v2910, %v2912
      %3251 = vadd.xlane.f32.xlu0 %v3250
      %v3252 = vpop.xlane.xlu0 %3251
      %v3253 = vadd.f32 %v2914, %v2916
      %3254 = vadd.xlane.f32.xlu0 %v3253
      %v3255 = vpop.xlane.xlu0 %3254
      %v3256 = vadd.f32 %v2918, %v2920
      %3257 = vadd.xlane.f32.xlu0 %v3256
      %v3258 = vpop.xlane.xlu0 %3257
      %v3259 = vadd.f32 %v2922, %v2924
      %3260 = vadd.xlane.f32.xlu0 %v3259
      %v3261 = vpop.xlane.xlu0 %3260
      %v3262 = vadd.f32 %v2926, %v2928
      %3263 = vadd.xlane.f32.xlu0 %v3262
      %v3264 = vpop.xlane.xlu0 %3263
      %v3265 = vadd.f32 %v2930, %v2932
      %3266 = vadd.xlane.f32.xlu0 %v3265
      %v3267 = vpop.xlane.xlu0 %3266
      %v3268 = vadd.f32 %v2934, %v2936
      %3269 = vadd.xlane.f32.xlu0 %v3268
      %v3270 = vpop.xlane.xlu0 %3269
      %v3271 = vadd.f32 %v2938, %v2940
      %3272 = vadd.xlane.f32.xlu0 %v3271
      %v3273 = vpop.xlane.xlu0 %3272
      %v3274 = vadd.f32 %v2942, %v2944
      %3275 = vadd.xlane.f32.xlu0 %v3274
      %v3276 = vpop.xlane.xlu0 %3275
      %v3277 = vadd.f32 %v2946, %v2948
      %3278 = vadd.xlane.f32.xlu0 %v3277
      %v3279 = vpop.xlane.xlu0 %3278
      %v3280 = vadd.f32 %v2950, %v2952
      %3281 = vadd.xlane.f32.xlu0 %v3280
      %v3282 = vpop.xlane.xlu0 %3281
      %v3283 = vadd.f32 %v2954, %v2956
      %3284 = vadd.xlane.f32.xlu0 %v3283
      %v3285 = vpop.xlane.xlu0 %3284
      %v3286 = vadd.f32 %v2958, %v2960
      %3287 = vadd.xlane.f32.xlu0 %v3286
      %v3288 = vpop.xlane.xlu0 %3287
      %v3289 = vadd.f32 %v2962, %v2964
      %3290 = vadd.xlane.f32.xlu0 %v3289
      %v3291 = vpop.xlane.xlu0 %3290
      %v3292 = vadd.f32 %v2966, %v2968
      %3293 = vadd.xlane.f32.xlu0 %v3292
      %v3294 = vpop.xlane.xlu0 %3293
      %v3295 = vadd.f32 %v2970, %v2972
      %3296 = vadd.xlane.f32.xlu0 %v3295
      %v3297 = vpop.xlane.xlu0 %3296
      %v3298 = vadd.f32 %v2974, %v2976
      %3299 = vadd.xlane.f32.xlu0 %v3298
      %v3300 = vpop.xlane.xlu0 %3299
      %v3301 = vadd.f32 %v2978, %v2980
      %3302 = vadd.xlane.f32.xlu0 %v3301
      %v3303 = vpop.xlane.xlu0 %3302
      %v3304 = vadd.f32 %v2982, %v2984
      %3305 = vadd.xlane.f32.xlu0 %v3304
      %v3306 = vpop.xlane.xlu0 %3305
      %v3307 = vadd.f32 %v2986, %v2988
      %3308 = vadd.xlane.f32.xlu0 %v3307
      %v3309 = vpop.xlane.xlu0 %3308
      %v3310 = vadd.f32 %v2990, %v2992
      %3311 = vadd.xlane.f32.xlu0 %v3310
      %v3312 = vpop.xlane.xlu0 %3311
      %v3313 = vadd.f32 %v3057, %v3123
      %v3314 = vadd.f32 %v3058, %v3126
      %v3315 = vadd.f32 %v3059, %v3129
      %v3316 = vadd.f32 %v3060, %v3132
      %v3317 = vadd.f32 %v3061, %v3135
      %v3318 = vadd.f32 %v3062, %v3138
      %v3319 = vadd.f32 %v3063, %v3141
      %v3320 = vadd.f32 %v3064, %v3144
      %v3321 = vadd.f32 %v3065, %v3147
      %v3322 = vadd.f32 %v3066, %v3150
      %v3323 = vadd.f32 %v3067, %v3153
      %v3324 = vadd.f32 %v3068, %v3156
      %v3325 = vadd.f32 %v3069, %v3159
      %v3326 = vadd.f32 %v3070, %v3162
      %v3327 = vadd.f32 %v3071, %v3165
      %v3328 = vadd.f32 %v3072, %v3168
      %v3329 = vadd.f32 %v3073, %v3171
      %v3330 = vadd.f32 %v3074, %v3174
      %v3331 = vadd.f32 %v3075, %v3177
      %v3332 = vadd.f32 %v3076, %v3180
      %v3333 = vadd.f32 %v3077, %v3183
      %v3334 = vadd.f32 %v3078, %v3186
      %v3335 = vadd.f32 %v3079, %v3189
      %v3336 = vadd.f32 %v3080, %v3192
      %v3337 = vadd.f32 %v3081, %v3195
      %v3338 = vadd.f32 %v3082, %v3198
      %v3339 = vadd.f32 %v3083, %v3201
      %v3340 = vadd.f32 %v3084, %v3204
      %v3341 = vadd.f32 %v3085, %v3207
      %v3342 = vadd.f32 %v3086, %v3210
      %v3343 = vadd.f32 %v3087, %v3213
      %v3344 = vadd.f32 %v3088, %v3216
      %v3345 = vadd.f32 %v3089, %v3219
      %v3346 = vadd.f32 %v3090, %v3222
      %v3347 = vadd.f32 %v3091, %v3225
      %v3348 = vadd.f32 %v3092, %v3228
      %v3349 = vadd.f32 %v3093, %v3231
      %v3350 = vadd.f32 %v3094, %v3234
      %v3351 = vadd.f32 %v3095, %v3237
      %v3352 = vadd.f32 %v3096, %v3240
      %v3353 = vadd.f32 %v3097, %v3243
      %v3354 = vadd.f32 %v3098, %v3246
      %v3355 = vadd.f32 %v3099, %v3249
      %v3356 = vadd.f32 %v3100, %v3252
      %v3357 = vadd.f32 %v3101, %v3255
      %v3358 = vadd.f32 %v3102, %v3258
      %v3359 = vadd.f32 %v3103, %v3261
      %v3360 = vadd.f32 %v3104, %v3264
      %v3361 = vadd.f32 %v3105, %v3267
      %v3362 = vadd.f32 %v3106, %v3270
      %v3363 = vadd.f32 %v3107, %v3273
      %v3364 = vadd.f32 %v3108, %v3276
      %v3365 = vadd.f32 %v3109, %v3279
      %v3366 = vadd.f32 %v3110, %v3282
      %v3367 = vadd.f32 %v3111, %v3285
      %v3368 = vadd.f32 %v3112, %v3288
      %v3369 = vadd.f32 %v3113, %v3291
      %v3370 = vadd.f32 %v3114, %v3294
      %v3371 = vadd.f32 %v3115, %v3297
      %v3372 = vadd.f32 %v3116, %v3300
      %v3373 = vadd.f32 %v3117, %v3303
      %v3374 = vadd.f32 %v3118, %v3306
      %v3375 = vadd.f32 %v3119, %v3309
      %v3376 = vadd.f32 %v3120, %v3312
      %vm3377 = vcmask 7168
      %3378 = vst.msk [vmem:[#allocation4] sm:$0xff] %vm3377, %v3313
      %3379 = vst.msk [vmem:[#allocation4 + $0x8] sm:$0xff] %vm3377, %v3314
      %3380 = vst.msk [vmem:[#allocation4 + $0x10] sm:$0xff] %vm3377, %v3315
      %3381 = vst.msk [vmem:[#allocation4 + $0x18] sm:$0xff] %vm3377, %v3316
      %3382 = vst.msk [vmem:[#allocation4 + $0x20] sm:$0xff] %vm3377, %v3317
      %3383 = vst.msk [vmem:[#allocation4 + $0x28] sm:$0xff] %vm3377, %v3318
      %3384 = vst.msk [vmem:[#allocation4 + $0x30] sm:$0xff] %vm3377, %v3319
      %3385 = vst.msk [vmem:[#allocation4 + $0x38] sm:$0xff] %vm3377, %v3320
      %3386 = vst.msk [vmem:[#allocation4 + $0x40] sm:$0xff] %vm3377, %v3321
      %3387 = vst.msk [vmem:[#allocation4 + $0x48] sm:$0xff] %vm3377, %v3322
      %3388 = vst.msk [vmem:[#allocation4 + $0x50] sm:$0xff] %vm3377, %v3323
      %3389 = vst.msk [vmem:[#allocation4 + $0x58] sm:$0xff] %vm3377, %v3324
      %3390 = vst.msk [vmem:[#allocation4 + $0x60] sm:$0xff] %vm3377, %v3325
      %3391 = vst.msk [vmem:[#allocation4 + $0x68] sm:$0xff] %vm3377, %v3326
      %3392 = vst.msk [vmem:[#allocation4 + $0x70] sm:$0xff] %vm3377, %v3327
      %3393 = vst.msk [vmem:[#allocation4 + $0x78] sm:$0xff] %vm3377, %v3328
      %3394 = vst.msk [vmem:[#allocation4 + $0x80] sm:$0xff] %vm3377, %v3329
      %3395 = vst.msk [vmem:[#allocation4 + $0x88] sm:$0xff] %vm3377, %v3330
      %3396 = vst.msk [vmem:[#allocation4 + $0x90] sm:$0xff] %vm3377, %v3331
      %3397 = vst.msk [vmem:[#allocation4 + $0x98] sm:$0xff] %vm3377, %v3332
      %3398 = vst.msk [vmem:[#allocation4 + $0xa0] sm:$0xff] %vm3377, %v3333
      %3399 = vst.msk [vmem:[#allocation4 + $0xa8] sm:$0xff] %vm3377, %v3334
      %3400 = vst.msk [vmem:[#allocation4 + $0xb0] sm:$0xff] %vm3377, %v3335
      %3401 = vst.msk [vmem:[#allocation4 + $0xb8] sm:$0xff] %vm3377, %v3336
      %3402 = vst.msk [vmem:[#allocation4 + $0xc0] sm:$0xff] %vm3377, %v3337
      %3403 = vst.msk [vmem:[#allocation4 + $0xc8] sm:$0xff] %vm3377, %v3338
      %3404 = vst.msk [vmem:[#allocation4 + $0xd0] sm:$0xff] %vm3377, %v3339
      %3405 = vst.msk [vmem:[#allocation4 + $0xd8] sm:$0xff] %vm3377, %v3340
      %3406 = vst.msk [vmem:[#allocation4 + $0xe0] sm:$0xff] %vm3377, %v3341
      %3407 = vst.msk [vmem:[#allocation4 + $0xe8] sm:$0xff] %vm3377, %v3342
      %3408 = vst.msk [vmem:[#allocation4 + $0xf0] sm:$0xff] %vm3377, %v3343
      %3409 = vst.msk [vmem:[#allocation4 + $0xf8] sm:$0xff] %vm3377, %v3344
      %3410 = vst.msk [vmem:[#allocation4 + $0x100] sm:$0xff] %vm3377, %v3345
      %3411 = vst.msk [vmem:[#allocation4 + $0x108] sm:$0xff] %vm3377, %v3346
      %3412 = vst.msk [vmem:[#allocation4 + $0x110] sm:$0xff] %vm3377, %v3347
      %3413 = vst.msk [vmem:[#allocation4 + $0x118] sm:$0xff] %vm3377, %v3348
      %3414 = vst.msk [vmem:[#allocation4 + $0x120] sm:$0xff] %vm3377, %v3349
      %3415 = vst.msk [vmem:[#allocation4 + $0x128] sm:$0xff] %vm3377, %v3350
      %3416 = vst.msk [vmem:[#allocation4 + $0x130] sm:$0xff] %vm3377, %v3351
      %3417 = vst.msk [vmem:[#allocation4 + $0x138] sm:$0xff] %vm3377, %v3352
      %3418 = vst.msk [vmem:[#allocation4 + $0x140] sm:$0xff] %vm3377, %v3353
      %3419 = vst.msk [vmem:[#allocation4 + $0x148] sm:$0xff] %vm3377, %v3354
      %3420 = vst.msk [vmem:[#allocation4 + $0x150] sm:$0xff] %vm3377, %v3355
      %3421 = vst.msk [vmem:[#allocation4 + $0x158] sm:$0xff] %vm3377, %v3356
      %3422 = vst.msk [vmem:[#allocation4 + $0x160] sm:$0xff] %vm3377, %v3357
      %3423 = vst.msk [vmem:[#allocation4 + $0x168] sm:$0xff] %vm3377, %v3358
      %3424 = vst.msk [vmem:[#allocation4 + $0x170] sm:$0xff] %vm3377, %v3359
      %3425 = vst.msk [vmem:[#allocation4 + $0x178] sm:$0xff] %vm3377, %v3360
      %3426 = vst.msk [vmem:[#allocation4 + $0x180] sm:$0xff] %vm3377, %v3361
      %3427 = vst.msk [vmem:[#allocation4 + $0x188] sm:$0xff] %vm3377, %v3362
      %3428 = vst.msk [vmem:[#allocation4 + $0x190] sm:$0xff] %vm3377, %v3363
      %3429 = vst.msk [vmem:[#allocation4 + $0x198] sm:$0xff] %vm3377, %v3364
      %3430 = vst.msk [vmem:[#allocation4 + $0x1a0] sm:$0xff] %vm3377, %v3365
      %3431 = vst.msk [vmem:[#allocation4 + $0x1a8] sm:$0xff] %vm3377, %v3366
      %3432 = vst.msk [vmem:[#allocation4 + $0x1b0] sm:$0xff] %vm3377, %v3367
      %3433 = vst.msk [vmem:[#allocation4 + $0x1b8] sm:$0xff] %vm3377, %v3368
      %3434 = vst.msk [vmem:[#allocation4 + $0x1c0] sm:$0xff] %vm3377, %v3369
      %3435 = vst.msk [vmem:[#allocation4 + $0x1c8] sm:$0xff] %vm3377, %v3370
      %3436 = vst.msk [vmem:[#allocation4 + $0x1d0] sm:$0xff] %vm3377, %v3371
      %3437 = vst.msk [vmem:[#allocation4 + $0x1d8] sm:$0xff] %vm3377, %v3372
      %3438 = vst.msk [vmem:[#allocation4 + $0x1e0] sm:$0xff] %vm3377, %v3373
      %3439 = vst.msk [vmem:[#allocation4 + $0x1e8] sm:$0xff] %vm3377, %v3374
      %3440 = vst.msk [vmem:[#allocation4 + $0x1f0] sm:$0xff] %vm3377, %v3375
      %3441 = vst.msk [vmem:[#allocation4 + $0x1f8] sm:$0xff] %vm3377, %v3376
      %v3442 = vld [vmem:[#allocation5] sm:$0xff]
      %v3443 = vld [vmem:[#allocation5 + $0x8] sm:$0xff]
      %v3444 = vld [vmem:[#allocation5 + $0x10] sm:$0xff]
      %v3445 = vld [vmem:[#allocation5 + $0x18] sm:$0xff]
      %v3446 = vld [vmem:[#allocation5 + $0x20] sm:$0xff]
      %v3447 = vld [vmem:[#allocation5 + $0x28] sm:$0xff]
      %v3448 = vld [vmem:[#allocation5 + $0x30] sm:$0xff]
      %v3449 = vld [vmem:[#allocation5 + $0x38] sm:$0xff]
      %v3450 = vld [vmem:[#allocation5 + $0x40] sm:$0xff]
      %v3451 = vld [vmem:[#allocation5 + $0x48] sm:$0xff]
      %v3452 = vld [vmem:[#allocation5 + $0x50] sm:$0xff]
      %v3453 = vld [vmem:[#allocation5 + $0x58] sm:$0xff]
      %v3454 = vld [vmem:[#allocation5 + $0x60] sm:$0xff]
      %v3455 = vld [vmem:[#allocation5 + $0x68] sm:$0xff]
      %v3456 = vld [vmem:[#allocation5 + $0x70] sm:$0xff]
      %v3457 = vld [vmem:[#allocation5 + $0x78] sm:$0xff]
      %v3458 = vld [vmem:[#allocation5 + $0x80] sm:$0xff]
      %v3459 = vld [vmem:[#allocation5 + $0x88] sm:$0xff]
      %v3460 = vld [vmem:[#allocation5 + $0x90] sm:$0xff]
      %v3461 = vld [vmem:[#allocation5 + $0x98] sm:$0xff]
      %v3462 = vld [vmem:[#allocation5 + $0xa0] sm:$0xff]
      %v3463 = vld [vmem:[#allocation5 + $0xa8] sm:$0xff]
      %v3464 = vld [vmem:[#allocation5 + $0xb0] sm:$0xff]
      %v3465 = vld [vmem:[#allocation5 + $0xb8] sm:$0xff]
      %v3466 = vld [vmem:[#allocation5 + $0xc0] sm:$0xff]
      %v3467 = vld [vmem:[#allocation5 + $0xc8] sm:$0xff]
      %v3468 = vld [vmem:[#allocation5 + $0xd0] sm:$0xff]
      %v3469 = vld [vmem:[#allocation5 + $0xd8] sm:$0xff]
      %v3470 = vld [vmem:[#allocation5 + $0xe0] sm:$0xff]
      %v3471 = vld [vmem:[#allocation5 + $0xe8] sm:$0xff]
      %v3472 = vld [vmem:[#allocation5 + $0xf0] sm:$0xff]
      %v3473 = vld [vmem:[#allocation5 + $0xf8] sm:$0xff]
      %v3474 = vld [vmem:[#allocation5 + $0x100] sm:$0xff]
      %v3475 = vld [vmem:[#allocation5 + $0x108] sm:$0xff]
      %v3476 = vld [vmem:[#allocation5 + $0x110] sm:$0xff]
      %v3477 = vld [vmem:[#allocation5 + $0x118] sm:$0xff]
      %v3478 = vld [vmem:[#allocation5 + $0x120] sm:$0xff]
      %v3479 = vld [vmem:[#allocation5 + $0x128] sm:$0xff]
      %v3480 = vld [vmem:[#allocation5 + $0x130] sm:$0xff]
      %v3481 = vld [vmem:[#allocation5 + $0x138] sm:$0xff]
      %v3482 = vld [vmem:[#allocation5 + $0x140] sm:$0xff]
      %v3483 = vld [vmem:[#allocation5 + $0x148] sm:$0xff]
      %v3484 = vld [vmem:[#allocation5 + $0x150] sm:$0xff]
      %v3485 = vld [vmem:[#allocation5 + $0x158] sm:$0xff]
      %v3486 = vld [vmem:[#allocation5 + $0x160] sm:$0xff]
      %v3487 = vld [vmem:[#allocation5 + $0x168] sm:$0xff]
      %v3488 = vld [vmem:[#allocation5 + $0x170] sm:$0xff]
      %v3489 = vld [vmem:[#allocation5 + $0x178] sm:$0xff]
      %v3490 = vld [vmem:[#allocation5 + $0x180] sm:$0xff]
      %v3491 = vld [vmem:[#allocation5 + $0x188] sm:$0xff]
      %v3492 = vld [vmem:[#allocation5 + $0x190] sm:$0xff]
      %v3493 = vld [vmem:[#allocation5 + $0x198] sm:$0xff]
      %v3494 = vld [vmem:[#allocation5 + $0x1a0] sm:$0xff]
      %v3495 = vld [vmem:[#allocation5 + $0x1a8] sm:$0xff]
      %v3496 = vld [vmem:[#allocation5 + $0x1b0] sm:$0xff]
      %v3497 = vld [vmem:[#allocation5 + $0x1b8] sm:$0xff]
      %v3498 = vld [vmem:[#allocation5 + $0x1c0] sm:$0xff]
      %v3499 = vld [vmem:[#allocation5 + $0x1c8] sm:$0xff]
      %v3500 = vld [vmem:[#allocation5 + $0x1d0] sm:$0xff]
      %v3501 = vld [vmem:[#allocation5 + $0x1d8] sm:$0xff]
      %v3502 = vld [vmem:[#allocation5 + $0x1e0] sm:$0xff]
      %v3503 = vld [vmem:[#allocation5 + $0x1e8] sm:$0xff]
      %v3504 = vld [vmem:[#allocation5 + $0x1f0] sm:$0xff]
      %v3505 = vld [vmem:[#allocation5 + $0x1f8] sm:$0xff]
      %3507 = vset.pattern.permute.xlu0 0
      %3508 = vperm.xlu0 %3507, %v2162
      %v3509 = vpop.permute.xlu0 %3508
      %3512 = vset.pattern.permute.xlu0 0
      %3513 = vperm.xlu0 %3512, %v2164
      %v3514 = vpop.permute.xlu0 %3513
      %3517 = vset.pattern.permute.xlu0 0
      %3518 = vperm.xlu0 %3517, %v2166
      %v3519 = vpop.permute.xlu0 %3518
      %3522 = vset.pattern.permute.xlu0 0
      %3523 = vperm.xlu0 %3522, %v2168
      %v3524 = vpop.permute.xlu0 %3523
      %3527 = vset.pattern.permute.xlu0 0
      %3528 = vperm.xlu0 %3527, %v2170
      %v3529 = vpop.permute.xlu0 %3528
      %3532 = vset.pattern.permute.xlu0 0
      %3533 = vperm.xlu0 %3532, %v2172
      %v3534 = vpop.permute.xlu0 %3533
      %3537 = vset.pattern.permute.xlu0 0
      %3538 = vperm.xlu0 %3537, %v2174
      %v3539 = vpop.permute.xlu0 %3538
      %3542 = vset.pattern.permute.xlu0 0
      %3543 = vperm.xlu0 %3542, %v2176
      %v3544 = vpop.permute.xlu0 %3543
      %3547 = vset.pattern.permute.xlu0 0
      %3548 = vperm.xlu0 %3547, %v2178
      %v3549 = vpop.permute.xlu0 %3548
      %3552 = vset.pattern.permute.xlu0 0
      %3553 = vperm.xlu0 %3552, %v2180
      %v3554 = vpop.permute.xlu0 %3553
      %3557 = vset.pattern.permute.xlu0 0
      %3558 = vperm.xlu0 %3557, %v2182
      %v3559 = vpop.permute.xlu0 %3558
      %3562 = vset.pattern.permute.xlu0 0
      %3563 = vperm.xlu0 %3562, %v2184
      %v3564 = vpop.permute.xlu0 %3563
      %3567 = vset.pattern.permute.xlu0 0
      %3568 = vperm.xlu0 %3567, %v2186
      %v3569 = vpop.permute.xlu0 %3568
      %3572 = vset.pattern.permute.xlu0 0
      %3573 = vperm.xlu0 %3572, %v2188
      %v3574 = vpop.permute.xlu0 %3573
      %3577 = vset.pattern.permute.xlu0 0
      %3578 = vperm.xlu0 %3577, %v2190
      %v3579 = vpop.permute.xlu0 %3578
      %3582 = vset.pattern.permute.xlu0 0
      %3583 = vperm.xlu0 %3582, %v2192
      %v3584 = vpop.permute.xlu0 %3583
      %3587 = vset.pattern.permute.xlu0 0
      %3588 = vperm.xlu0 %3587, %v2194
      %v3589 = vpop.permute.xlu0 %3588
      %3592 = vset.pattern.permute.xlu0 0
      %3593 = vperm.xlu0 %3592, %v2196
      %v3594 = vpop.permute.xlu0 %3593
      %3597 = vset.pattern.permute.xlu0 0
      %3598 = vperm.xlu0 %3597, %v2198
      %v3599 = vpop.permute.xlu0 %3598
      %3602 = vset.pattern.permute.xlu0 0
      %3603 = vperm.xlu0 %3602, %v2200
      %v3604 = vpop.permute.xlu0 %3603
      %3607 = vset.pattern.permute.xlu0 0
      %3608 = vperm.xlu0 %3607, %v2202
      %v3609 = vpop.permute.xlu0 %3608
      %3612 = vset.pattern.permute.xlu0 0
      %3613 = vperm.xlu0 %3612, %v2204
      %v3614 = vpop.permute.xlu0 %3613
      %3617 = vset.pattern.permute.xlu0 0
      %3618 = vperm.xlu0 %3617, %v2206
      %v3619 = vpop.permute.xlu0 %3618
      %3622 = vset.pattern.permute.xlu0 0
      %3623 = vperm.xlu0 %3622, %v2208
      %v3624 = vpop.permute.xlu0 %3623
      %3627 = vset.pattern.permute.xlu0 0
      %3628 = vperm.xlu0 %3627, %v2210
      %v3629 = vpop.permute.xlu0 %3628
      %3632 = vset.pattern.permute.xlu0 0
      %3633 = vperm.xlu0 %3632, %v2212
      %v3634 = vpop.permute.xlu0 %3633
      %3637 = vset.pattern.permute.xlu0 0
      %3638 = vperm.xlu0 %3637, %v2214
      %v3639 = vpop.permute.xlu0 %3638
      %3642 = vset.pattern.permute.xlu0 0
      %3643 = vperm.xlu0 %3642, %v2216
      %v3644 = vpop.permute.xlu0 %3643
      %3647 = vset.pattern.permute.xlu0 0
      %3648 = vperm.xlu0 %3647, %v2218
      %v3649 = vpop.permute.xlu0 %3648
      %3652 = vset.pattern.permute.xlu0 0
      %3653 = vperm.xlu0 %3652, %v2220
      %v3654 = vpop.permute.xlu0 %3653
      %3657 = vset.pattern.permute.xlu0 0
      %3658 = vperm.xlu0 %3657, %v2222
      %v3659 = vpop.permute.xlu0 %3658
      %3662 = vset.pattern.permute.xlu0 0
      %3663 = vperm.xlu0 %3662, %v2224
      %v3664 = vpop.permute.xlu0 %3663
      %3667 = vset.pattern.permute.xlu0 0
      %3668 = vperm.xlu0 %3667, %v2226
      %v3669 = vpop.permute.xlu0 %3668
      %3672 = vset.pattern.permute.xlu0 0
      %3673 = vperm.xlu0 %3672, %v2228
      %v3674 = vpop.permute.xlu0 %3673
      %3677 = vset.pattern.permute.xlu0 0
      %3678 = vperm.xlu0 %3677, %v2230
      %v3679 = vpop.permute.xlu0 %3678
      %3682 = vset.pattern.permute.xlu0 0
      %3683 = vperm.xlu0 %3682, %v2232
      %v3684 = vpop.permute.xlu0 %3683
      %3687 = vset.pattern.permute.xlu0 0
      %3688 = vperm.xlu0 %3687, %v2234
      %v3689 = vpop.permute.xlu0 %3688
      %3692 = vset.pattern.permute.xlu0 0
      %3693 = vperm.xlu0 %3692, %v2236
      %v3694 = vpop.permute.xlu0 %3693
      %3697 = vset.pattern.permute.xlu0 0
      %3698 = vperm.xlu0 %3697, %v2238
      %v3699 = vpop.permute.xlu0 %3698
      %3702 = vset.pattern.permute.xlu0 0
      %3703 = vperm.xlu0 %3702, %v2240
      %v3704 = vpop.permute.xlu0 %3703
      %3707 = vset.pattern.permute.xlu0 0
      %3708 = vperm.xlu0 %3707, %v2242
      %v3709 = vpop.permute.xlu0 %3708
      %3712 = vset.pattern.permute.xlu0 0
      %3713 = vperm.xlu0 %3712, %v2244
      %v3714 = vpop.permute.xlu0 %3713
      %3717 = vset.pattern.permute.xlu0 0
      %3718 = vperm.xlu0 %3717, %v2246
      %v3719 = vpop.permute.xlu0 %3718
      %3722 = vset.pattern.permute.xlu0 0
      %3723 = vperm.xlu0 %3722, %v2248
      %v3724 = vpop.permute.xlu0 %3723
      %3727 = vset.pattern.permute.xlu0 0
      %3728 = vperm.xlu0 %3727, %v2250
      %v3729 = vpop.permute.xlu0 %3728
      %3732 = vset.pattern.permute.xlu0 0
      %3733 = vperm.xlu0 %3732, %v2252
      %v3734 = vpop.permute.xlu0 %3733
      %3737 = vset.pattern.permute.xlu0 0
      %3738 = vperm.xlu0 %3737, %v2254
      %v3739 = vpop.permute.xlu0 %3738
      %3742 = vset.pattern.permute.xlu0 0
      %3743 = vperm.xlu0 %3742, %v2256
      %v3744 = vpop.permute.xlu0 %3743
      %3747 = vset.pattern.permute.xlu0 0
      %3748 = vperm.xlu0 %3747, %v2258
      %v3749 = vpop.permute.xlu0 %3748
      %3752 = vset.pattern.permute.xlu0 0
      %3753 = vperm.xlu0 %3752, %v2260
      %v3754 = vpop.permute.xlu0 %3753
      %3757 = vset.pattern.permute.xlu0 0
      %3758 = vperm.xlu0 %3757, %v2262
      %v3759 = vpop.permute.xlu0 %3758
      %3762 = vset.pattern.permute.xlu0 0
      %3763 = vperm.xlu0 %3762, %v2264
      %v3764 = vpop.permute.xlu0 %3763
      %3767 = vset.pattern.permute.xlu0 0
      %3768 = vperm.xlu0 %3767, %v2266
      %v3769 = vpop.permute.xlu0 %3768
      %3772 = vset.pattern.permute.xlu0 0
      %3773 = vperm.xlu0 %3772, %v2268
      %v3774 = vpop.permute.xlu0 %3773
      %3777 = vset.pattern.permute.xlu0 0
      %3778 = vperm.xlu0 %3777, %v2270
      %v3779 = vpop.permute.xlu0 %3778
      %3782 = vset.pattern.permute.xlu0 0
      %3783 = vperm.xlu0 %3782, %v2272
      %v3784 = vpop.permute.xlu0 %3783
      %3787 = vset.pattern.permute.xlu0 0
      %3788 = vperm.xlu0 %3787, %v2274
      %v3789 = vpop.permute.xlu0 %3788
      %3792 = vset.pattern.permute.xlu0 0
      %3793 = vperm.xlu0 %3792, %v2276
      %v3794 = vpop.permute.xlu0 %3793
      %3797 = vset.pattern.permute.xlu0 0
      %3798 = vperm.xlu0 %3797, %v2278
      %v3799 = vpop.permute.xlu0 %3798
      %3802 = vset.pattern.permute.xlu0 0
      %3803 = vperm.xlu0 %3802, %v2280
      %v3804 = vpop.permute.xlu0 %3803
      %3807 = vset.pattern.permute.xlu0 0
      %3808 = vperm.xlu0 %3807, %v2282
      %v3809 = vpop.permute.xlu0 %3808
      %3812 = vset.pattern.permute.xlu0 0
      %3813 = vperm.xlu0 %3812, %v2284
      %v3814 = vpop.permute.xlu0 %3813
      %3817 = vset.pattern.permute.xlu0 0
      %3818 = vperm.xlu0 %3817, %v2286
      %v3819 = vpop.permute.xlu0 %3818
      %3822 = vset.pattern.permute.xlu0 0
      %3823 = vperm.xlu0 %3822, %v2288
      %v3824 = vpop.permute.xlu0 %3823
      %v3826 = vmul.f32 %v3509, %v3442
      %v3827 = vmul.f32 %v3514, %v3443
      %v3828 = vmul.f32 %v3519, %v3444
      %v3829 = vmul.f32 %v3524, %v3445
      %v3830 = vmul.f32 %v3529, %v3446
      %v3831 = vmul.f32 %v3534, %v3447
      %v3832 = vmul.f32 %v3539, %v3448
      %v3833 = vmul.f32 %v3544, %v3449
      %v3834 = vmul.f32 %v3549, %v3450
      %v3835 = vmul.f32 %v3554, %v3451
      %v3836 = vmul.f32 %v3559, %v3452
      %v3837 = vmul.f32 %v3564, %v3453
      %v3838 = vmul.f32 %v3569, %v3454
      %v3839 = vmul.f32 %v3574, %v3455
      %v3840 = vmul.f32 %v3579, %v3456
      %v3841 = vmul.f32 %v3584, %v3457
      %v3842 = vmul.f32 %v3589, %v3458
      %v3843 = vmul.f32 %v3594, %v3459
      %v3844 = vmul.f32 %v3599, %v3460
      %v3845 = vmul.f32 %v3604, %v3461
      %v3846 = vmul.f32 %v3609, %v3462
      %v3847 = vmul.f32 %v3614, %v3463
      %v3848 = vmul.f32 %v3619, %v3464
      %v3849 = vmul.f32 %v3624, %v3465
      %v3850 = vmul.f32 %v3629, %v3466
      %v3851 = vmul.f32 %v3634, %v3467
      %v3852 = vmul.f32 %v3639, %v3468
      %v3853 = vmul.f32 %v3644, %v3469
      %v3854 = vmul.f32 %v3649, %v3470
      %v3855 = vmul.f32 %v3654, %v3471
      %v3856 = vmul.f32 %v3659, %v3472
      %v3857 = vmul.f32 %v3664, %v3473
      %v3858 = vmul.f32 %v3669, %v3474
      %v3859 = vmul.f32 %v3674, %v3475
      %v3860 = vmul.f32 %v3679, %v3476
      %v3861 = vmul.f32 %v3684, %v3477
      %v3862 = vmul.f32 %v3689, %v3478
      %v3863 = vmul.f32 %v3694, %v3479
      %v3864 = vmul.f32 %v3699, %v3480
      %v3865 = vmul.f32 %v3704, %v3481
      %v3866 = vmul.f32 %v3709, %v3482
      %v3867 = vmul.f32 %v3714, %v3483
      %v3868 = vmul.f32 %v3719, %v3484
      %v3869 = vmul.f32 %v3724, %v3485
      %v3870 = vmul.f32 %v3729, %v3486
      %v3871 = vmul.f32 %v3734, %v3487
      %v3872 = vmul.f32 %v3739, %v3488
      %v3873 = vmul.f32 %v3744, %v3489
      %v3874 = vmul.f32 %v3749, %v3490
      %v3875 = vmul.f32 %v3754, %v3491
      %v3876 = vmul.f32 %v3759, %v3492
      %v3877 = vmul.f32 %v3764, %v3493
      %v3878 = vmul.f32 %v3769, %v3494
      %v3879 = vmul.f32 %v3774, %v3495
      %v3880 = vmul.f32 %v3779, %v3496
      %v3881 = vmul.f32 %v3784, %v3497
      %v3882 = vmul.f32 %v3789, %v3498
      %v3883 = vmul.f32 %v3794, %v3499
      %v3884 = vmul.f32 %v3799, %v3500
      %v3885 = vmul.f32 %v3804, %v3501
      %v3886 = vmul.f32 %v3809, %v3502
      %v3887 = vmul.f32 %v3814, %v3503
      %v3888 = vmul.f32 %v3819, %v3504
      %v3889 = vmul.f32 %v3824, %v3505
      %v3890 = vpack.c.bf16 %v2742, %v2738
      %v3891 = vpack.c.bf16 %v2744, %v2740
      %v3892 = vpack.c.bf16 %v2750, %v2746
      %v3893 = vpack.c.bf16 %v2752, %v2748
      %v3894 = vpack.c.bf16 %v2758, %v2754
      %v3895 = vpack.c.bf16 %v2760, %v2756
      %v3896 = vpack.c.bf16 %v2766, %v2762
      %v3897 = vpack.c.bf16 %v2768, %v2764
      %v3898 = vpack.c.bf16 %v2774, %v2770
      %v3899 = vpack.c.bf16 %v2776, %v2772
      %v3900 = vpack.c.bf16 %v2782, %v2778
      %v3901 = vpack.c.bf16 %v2784, %v2780
      %v3902 = vpack.c.bf16 %v2790, %v2786
      %v3903 = vpack.c.bf16 %v2792, %v2788
      %v3904 = vpack.c.bf16 %v2798, %v2794
      %v3905 = vpack.c.bf16 %v2800, %v2796
      %v3906 = vpack.c.bf16 %v2806, %v2802
      %v3907 = vpack.c.bf16 %v2808, %v2804
      %v3908 = vpack.c.bf16 %v2814, %v2810
      %v3909 = vpack.c.bf16 %v2816, %v2812
      %v3910 = vpack.c.bf16 %v2822, %v2818
      %v3911 = vpack.c.bf16 %v2824, %v2820
      %v3912 = vpack.c.bf16 %v2830, %v2826
      %v3913 = vpack.c.bf16 %v2832, %v2828
      %v3914 = vpack.c.bf16 %v2838, %v2834
      %v3915 = vpack.c.bf16 %v2840, %v2836
      %v3916 = vpack.c.bf16 %v2846, %v2842
      %v3917 = vpack.c.bf16 %v2848, %v2844
      %v3918 = vpack.c.bf16 %v2854, %v2850
      %v3919 = vpack.c.bf16 %v2856, %v2852
      %v3920 = vpack.c.bf16 %v2862, %v2858
      %v3921 = vpack.c.bf16 %v2864, %v2860
      %v3922 = vpack.c.bf16 %v2870, %v2866
      %v3923 = vpack.c.bf16 %v2872, %v2868
      %v3924 = vpack.c.bf16 %v2878, %v2874
      %v3925 = vpack.c.bf16 %v2880, %v2876
      %v3926 = vpack.c.bf16 %v2886, %v2882
      %v3927 = vpack.c.bf16 %v2888, %v2884
      %v3928 = vpack.c.bf16 %v2894, %v2890
      %v3929 = vpack.c.bf16 %v2896, %v2892
      %v3930 = vpack.c.bf16 %v2902, %v2898
      %v3931 = vpack.c.bf16 %v2904, %v2900
      %v3932 = vpack.c.bf16 %v2910, %v2906
      %v3933 = vpack.c.bf16 %v2912, %v2908
      %v3934 = vpack.c.bf16 %v2918, %v2914
      %v3935 = vpack.c.bf16 %v2920, %v2916
      %v3936 = vpack.c.bf16 %v2926, %v2922
      %v3937 = vpack.c.bf16 %v2928, %v2924
      %v3938 = vpack.c.bf16 %v2934, %v2930
      %v3939 = vpack.c.bf16 %v2936, %v2932
      %v3940 = vpack.c.bf16 %v2942, %v2938
      %v3941 = vpack.c.bf16 %v2944, %v2940
      %v3942 = vpack.c.bf16 %v2950, %v2946
      %v3943 = vpack.c.bf16 %v2952, %v2948
      %v3944 = vpack.c.bf16 %v2958, %v2954
      %v3945 = vpack.c.bf16 %v2960, %v2956
      %v3946 = vpack.c.bf16 %v2966, %v2962
      %v3947 = vpack.c.bf16 %v2968, %v2964
      %v3948 = vpack.c.bf16 %v2974, %v2970
      %v3949 = vpack.c.bf16 %v2976, %v2972
      %v3950 = vpack.c.bf16 %v2982, %v2978
      %v3951 = vpack.c.bf16 %v2984, %v2980
      %v3952 = vpack.c.bf16 %v2990, %v2986
      %v3953 = vpack.c.bf16 %v2992, %v2988
      %v3954 = vld [vmem:[%s385] sm:$0xf]
      %v3955 = vld [vmem:[%s385 + $0x4] sm:$0xf]
      %v3956 = vld [vmem:[%s385 + $0x8] sm:$0xf]
      %v3957 = vld [vmem:[%s385 + $0xc] sm:$0xf]
      %v3958 = vld [vmem:[%s385 + $0x10] sm:$0xf]
      %v3959 = vld [vmem:[%s385 + $0x14] sm:$0xf]
      %v3960 = vld [vmem:[%s385 + $0x18] sm:$0xf]
      %v3961 = vld [vmem:[%s385 + $0x1c] sm:$0xf]
      %v3962 = vld [vmem:[%s385 + $0x20] sm:$0xf]
      %v3963 = vld [vmem:[%s385 + $0x24] sm:$0xf]
      %v3964 = vld [vmem:[%s385 + $0x28] sm:$0xf]
      %v3965 = vld [vmem:[%s385 + $0x2c] sm:$0xf]
      %v3966 = vld [vmem:[%s385 + $0x30] sm:$0xf]
      %v3967 = vld [vmem:[%s385 + $0x34] sm:$0xf]
      %v3968 = vld [vmem:[%s385 + $0x38] sm:$0xf]
      %v3969 = vld [vmem:[%s385 + $0x3c] sm:$0xf]
      %v3970 = vld [vmem:[%s385 + $0x40] sm:$0xf]
      %v3971 = vld [vmem:[%s385 + $0x44] sm:$0xf]
      %v3972 = vld [vmem:[%s385 + $0x48] sm:$0xf]
      %v3973 = vld [vmem:[%s385 + $0x4c] sm:$0xf]
      %v3974 = vld [vmem:[%s385 + $0x50] sm:$0xf]
      %v3975 = vld [vmem:[%s385 + $0x54] sm:$0xf]
      %v3976 = vld [vmem:[%s385 + $0x58] sm:$0xf]
      %v3977 = vld [vmem:[%s385 + $0x5c] sm:$0xf]
      %v3978 = vld [vmem:[%s385 + $0x60] sm:$0xf]
      %v3979 = vld [vmem:[%s385 + $0x64] sm:$0xf]
      %v3980 = vld [vmem:[%s385 + $0x68] sm:$0xf]
      %v3981 = vld [vmem:[%s385 + $0x6c] sm:$0xf]
      %v3982 = vld [vmem:[%s385 + $0x70] sm:$0xf]
      %v3983 = vld [vmem:[%s385 + $0x74] sm:$0xf]
      %v3984 = vld [vmem:[%s385 + $0x78] sm:$0xf]
      %v3985 = vld [vmem:[%s385 + $0x7c] sm:$0xf]
      %v4018 = vunpack.c.l.b16 %v3954
      %v4019 = vunpack.c.l.b16 %v3955
      %v4020 = vunpack.c.l.b16 %v3956
      %v4021 = vunpack.c.l.b16 %v3957
      %v4022 = vunpack.c.l.b16 %v3958
      %v4023 = vunpack.c.l.b16 %v3959
      %v4024 = vunpack.c.l.b16 %v3960
      %v4025 = vunpack.c.l.b16 %v3961
      %v4026 = vunpack.c.l.b16 %v3962
      %v4027 = vunpack.c.l.b16 %v3963
      %v4028 = vunpack.c.l.b16 %v3964
      %v4029 = vunpack.c.l.b16 %v3965
      %v4030 = vunpack.c.l.b16 %v3966
      %v4031 = vunpack.c.l.b16 %v3967
      %v4032 = vunpack.c.l.b16 %v3968
      %v4033 = vunpack.c.l.b16 %v3969
      %v4034 = vunpack.c.l.b16 %v3970
      %v4035 = vunpack.c.l.b16 %v3971
      %v4036 = vunpack.c.l.b16 %v3972
      %v4037 = vunpack.c.l.b16 %v3973
      %v4038 = vunpack.c.l.b16 %v3974
      %v4039 = vunpack.c.l.b16 %v3975
      %v4040 = vunpack.c.l.b16 %v3976
      %v4041 = vunpack.c.l.b16 %v3977
      %v4042 = vunpack.c.l.b16 %v3978
      %v4043 = vunpack.c.l.b16 %v3979
      %v4044 = vunpack.c.l.b16 %v3980
      %v4045 = vunpack.c.l.b16 %v3981
      %v4046 = vunpack.c.l.b16 %v3982
      %v4047 = vunpack.c.l.b16 %v3983
      %v4048 = vunpack.c.l.b16 %v3984
      %v4049 = vunpack.c.l.b16 %v3985
      %v4050 = vpack.c.b16 %v4019, %v4018
      %v4051 = vpack.c.b16 %v4021, %v4020
      %v4052 = vpack.c.b16 %v4023, %v4022
      %v4053 = vpack.c.b16 %v4025, %v4024
      %v4054 = vpack.c.b16 %v4027, %v4026
      %v4055 = vpack.c.b16 %v4029, %v4028
      %v4056 = vpack.c.b16 %v4031, %v4030
      %v4057 = vpack.c.b16 %v4033, %v4032
      %v4058 = vpack.c.b16 %v4035, %v4034
      %v4059 = vpack.c.b16 %v4037, %v4036
      %v4060 = vpack.c.b16 %v4039, %v4038
      %v4061 = vpack.c.b16 %v4041, %v4040
      %v4062 = vpack.c.b16 %v4043, %v4042
      %v4063 = vpack.c.b16 %v4045, %v4044
      %v4064 = vpack.c.b16 %v4047, %v4046
      %v4065 = vpack.c.b16 %v4049, %v4048
      %4082 = vmatpush.bf16.msra.mxu0 %v4057
      %4083 = vmatpush.bf16.msra.mxu0 %v4056
      %4084 = vmatpush.bf16.msra.mxu0 %v4055
      %4085 = vmatpush.bf16.msra.mxu0 %v4054
      %4086 = vmatpush.bf16.msra.mxu0 %v4053
      %4087 = vmatpush.bf16.msra.mxu0 %v4052
      %4088 = vmatpush.bf16.msra.mxu0 %v4051
      %4089 = vmatpush.bf16.msra.mxu0 %v4050
      %4090 = vmatmul.bf16.gmra.mxu0 %v3890
      %v4091 = vpop.f32.mrf.mxu0
      %v4092 = vadd.f32 0.0, %v4091
      %v4093 = vpop.f32.mrf.mxu0
      %v4094 = vadd.f32 0.0, %v4093
      %4095 = vmatmul.bf16.gmra.mxu0 %v3892
      %v4096 = vpop.f32.mrf.mxu0
      %v4097 = vadd.f32 0.0, %v4096
      %v4098 = vpop.f32.mrf.mxu0
      %v4099 = vadd.f32 0.0, %v4098
      %4100 = vmatmul.bf16.gmra.mxu0 %v3894
      %v4101 = vpop.f32.mrf.mxu0
      %v4102 = vadd.f32 0.0, %v4101
      %v4103 = vpop.f32.mrf.mxu0
      %v4104 = vadd.f32 0.0, %v4103
      %4105 = vmatmul.bf16.gmra.mxu0 %v3896
      %v4106 = vpop.f32.mrf.mxu0
      %v4107 = vadd.f32 0.0, %v4106
      %v4108 = vpop.f32.mrf.mxu0
      %v4109 = vadd.f32 0.0, %v4108
      %4110 = vmatmul.bf16.gmra.mxu0 %v3898
      %v4111 = vpop.f32.mrf.mxu0
      %v4112 = vadd.f32 0.0, %v4111
      %v4113 = vpop.f32.mrf.mxu0
      %v4114 = vadd.f32 0.0, %v4113
      %4115 = vmatmul.bf16.gmra.mxu0 %v3900
      %v4116 = vpop.f32.mrf.mxu0
      %v4117 = vadd.f32 0.0, %v4116
      %v4118 = vpop.f32.mrf.mxu0
      %v4119 = vadd.f32 0.0, %v4118
      %4120 = vmatmul.bf16.gmra.mxu0 %v3902
      %v4121 = vpop.f32.mrf.mxu0
      %v4122 = vadd.f32 0.0, %v4121
      %v4123 = vpop.f32.mrf.mxu0
      %v4124 = vadd.f32 0.0, %v4123
      %4125 = vmatmul.bf16.gmra.mxu0 %v3904
      %v4126 = vpop.f32.mrf.mxu0
      %v4127 = vadd.f32 0.0, %v4126
      %v4128 = vpop.f32.mrf.mxu0
      %v4129 = vadd.f32 0.0, %v4128
      %4130 = vmatmul.bf16.gmra.mxu0 %v3906
      %v4131 = vpop.f32.mrf.mxu0
      %v4132 = vadd.f32 0.0, %v4131
      %v4133 = vpop.f32.mrf.mxu0
      %v4134 = vadd.f32 0.0, %v4133
      %4135 = vmatmul.bf16.gmra.mxu0 %v3908
      %v4136 = vpop.f32.mrf.mxu0
      %v4137 = vadd.f32 0.0, %v4136
      %v4138 = vpop.f32.mrf.mxu0
      %v4139 = vadd.f32 0.0, %v4138
      %4140 = vmatmul.bf16.gmra.mxu0 %v3910
      %v4141 = vpop.f32.mrf.mxu0
      %v4142 = vadd.f32 0.0, %v4141
      %v4143 = vpop.f32.mrf.mxu0
      %v4144 = vadd.f32 0.0, %v4143
      %4145 = vmatmul.bf16.gmra.mxu0 %v3912
      %v4146 = vpop.f32.mrf.mxu0
      %v4147 = vadd.f32 0.0, %v4146
      %v4148 = vpop.f32.mrf.mxu0
      %v4149 = vadd.f32 0.0, %v4148
      %4150 = vmatmul.bf16.gmra.mxu0 %v3914
      %v4151 = vpop.f32.mrf.mxu0
      %v4152 = vadd.f32 0.0, %v4151
      %v4153 = vpop.f32.mrf.mxu0
      %v4154 = vadd.f32 0.0, %v4153
      %4155 = vmatmul.bf16.gmra.mxu0 %v3916
      %v4156 = vpop.f32.mrf.mxu0
      %v4157 = vadd.f32 0.0, %v4156
      %v4158 = vpop.f32.mrf.mxu0
      %v4159 = vadd.f32 0.0, %v4158
      %4160 = vmatmul.bf16.gmra.mxu0 %v3918
      %v4161 = vpop.f32.mrf.mxu0
      %v4162 = vadd.f32 0.0, %v4161
      %v4163 = vpop.f32.mrf.mxu0
      %v4164 = vadd.f32 0.0, %v4163
      %4165 = vmatmul.bf16.gmra.mxu0 %v3920
      %v4166 = vpop.f32.mrf.mxu0
      %v4167 = vadd.f32 0.0, %v4166
      %v4168 = vpop.f32.mrf.mxu0
      %v4169 = vadd.f32 0.0, %v4168
      %4170 = vmatmul.bf16.gmra.mxu0 %v3922
      %v4171 = vpop.f32.mrf.mxu0
      %v4172 = vadd.f32 0.0, %v4171
      %v4173 = vpop.f32.mrf.mxu0
      %v4174 = vadd.f32 0.0, %v4173
      %4175 = vmatmul.bf16.gmra.mxu0 %v3924
      %v4176 = vpop.f32.mrf.mxu0
      %v4177 = vadd.f32 0.0, %v4176
      %v4178 = vpop.f32.mrf.mxu0
      %v4179 = vadd.f32 0.0, %v4178
      %4180 = vmatmul.bf16.gmra.mxu0 %v3926
      %v4181 = vpop.f32.mrf.mxu0
      %v4182 = vadd.f32 0.0, %v4181
      %v4183 = vpop.f32.mrf.mxu0
      %v4184 = vadd.f32 0.0, %v4183
      %4185 = vmatmul.bf16.gmra.mxu0 %v3928
      %v4186 = vpop.f32.mrf.mxu0
      %v4187 = vadd.f32 0.0, %v4186
      %v4188 = vpop.f32.mrf.mxu0
      %v4189 = vadd.f32 0.0, %v4188
      %4190 = vmatmul.bf16.gmra.mxu0 %v3930
      %v4191 = vpop.f32.mrf.mxu0
      %v4192 = vadd.f32 0.0, %v4191
      %v4193 = vpop.f32.mrf.mxu0
      %v4194 = vadd.f32 0.0, %v4193
      %4195 = vmatmul.bf16.gmra.mxu0 %v3932
      %v4196 = vpop.f32.mrf.mxu0
      %v4197 = vadd.f32 0.0, %v4196
      %v4198 = vpop.f32.mrf.mxu0
      %v4199 = vadd.f32 0.0, %v4198
      %4200 = vmatmul.bf16.gmra.mxu0 %v3934
      %v4201 = vpop.f32.mrf.mxu0
      %v4202 = vadd.f32 0.0, %v4201
      %v4203 = vpop.f32.mrf.mxu0
      %v4204 = vadd.f32 0.0, %v4203
      %4205 = vmatmul.bf16.gmra.mxu0 %v3936
      %v4206 = vpop.f32.mrf.mxu0
      %v4207 = vadd.f32 0.0, %v4206
      %v4208 = vpop.f32.mrf.mxu0
      %v4209 = vadd.f32 0.0, %v4208
      %4210 = vmatmul.bf16.gmra.mxu0 %v3938
      %v4211 = vpop.f32.mrf.mxu0
      %v4212 = vadd.f32 0.0, %v4211
      %v4213 = vpop.f32.mrf.mxu0
      %v4214 = vadd.f32 0.0, %v4213
      %4215 = vmatmul.bf16.gmra.mxu0 %v3940
      %v4216 = vpop.f32.mrf.mxu0
      %v4217 = vadd.f32 0.0, %v4216
      %v4218 = vpop.f32.mrf.mxu0
      %v4219 = vadd.f32 0.0, %v4218
      %4220 = vmatmul.bf16.gmra.mxu0 %v3942
      %v4221 = vpop.f32.mrf.mxu0
      %v4222 = vadd.f32 0.0, %v4221
      %v4223 = vpop.f32.mrf.mxu0
      %v4224 = vadd.f32 0.0, %v4223
      %4225 = vmatmul.bf16.gmra.mxu0 %v3944
      %v4226 = vpop.f32.mrf.mxu0
      %v4227 = vadd.f32 0.0, %v4226
      %v4228 = vpop.f32.mrf.mxu0
      %v4229 = vadd.f32 0.0, %v4228
      %4230 = vmatmul.bf16.gmra.mxu0 %v3946
      %v4231 = vpop.f32.mrf.mxu0
      %v4232 = vadd.f32 0.0, %v4231
      %v4233 = vpop.f32.mrf.mxu0
      %v4234 = vadd.f32 0.0, %v4233
      %4235 = vmatmul.bf16.gmra.mxu0 %v3948
      %v4236 = vpop.f32.mrf.mxu0
      %v4237 = vadd.f32 0.0, %v4236
      %v4238 = vpop.f32.mrf.mxu0
      %v4239 = vadd.f32 0.0, %v4238
      %4240 = vmatmul.bf16.gmra.mxu0 %v3950
      %v4241 = vpop.f32.mrf.mxu0
      %v4242 = vadd.f32 0.0, %v4241
      %v4243 = vpop.f32.mrf.mxu0
      %v4244 = vadd.f32 0.0, %v4243
      %4245 = vmatmul.bf16.gmra.mxu0 %v3952
      %v4246 = vpop.f32.mrf.mxu0
      %v4247 = vadd.f32 0.0, %v4246
      %v4248 = vpop.f32.mrf.mxu0
      %v4249 = vadd.f32 0.0, %v4248
      %4250 = vdwg.mxu0
      %4251 = vmatpush.bf16.msra.mxu0 %v4065
      %4252 = vmatpush.bf16.msra.mxu0 %v4064
      %4253 = vmatpush.bf16.msra.mxu0 %v4063
      %4254 = vmatpush.bf16.msra.mxu0 %v4062
      %4255 = vmatpush.bf16.msra.mxu0 %v4061
      %4256 = vmatpush.bf16.msra.mxu0 %v4060
      %4257 = vmatpush.bf16.msra.mxu0 %v4059
      %4258 = vmatpush.bf16.msra.mxu0 %v4058
      %4259 = vmatmul.bf16.gmra.mxu0 %v3891
      %v4260 = vpop.f32.mrf.mxu0
      %v4261 = vadd.f32 %v4092, %v4260
      %v4262 = vpop.f32.mrf.mxu0
      %v4263 = vadd.f32 %v4094, %v4262
      %4264 = vmatmul.bf16.gmra.mxu0 %v3893
      %v4265 = vpop.f32.mrf.mxu0
      %v4266 = vadd.f32 %v4097, %v4265
      %v4267 = vpop.f32.mrf.mxu0
      %v4268 = vadd.f32 %v4099, %v4267
      %4269 = vmatmul.bf16.gmra.mxu0 %v3895
      %v4270 = vpop.f32.mrf.mxu0
      %v4271 = vadd.f32 %v4102, %v4270
      %v4272 = vpop.f32.mrf.mxu0
      %v4273 = vadd.f32 %v4104, %v4272
      %4274 = vmatmul.bf16.gmra.mxu0 %v3897
      %v4275 = vpop.f32.mrf.mxu0
      %v4276 = vadd.f32 %v4107, %v4275
      %v4277 = vpop.f32.mrf.mxu0
      %v4278 = vadd.f32 %v4109, %v4277
      %4279 = vmatmul.bf16.gmra.mxu0 %v3899
      %v4280 = vpop.f32.mrf.mxu0
      %v4281 = vadd.f32 %v4112, %v4280
      %v4282 = vpop.f32.mrf.mxu0
      %v4283 = vadd.f32 %v4114, %v4282
      %4284 = vmatmul.bf16.gmra.mxu0 %v3901
      %v4285 = vpop.f32.mrf.mxu0
      %v4286 = vadd.f32 %v4117, %v4285
      %v4287 = vpop.f32.mrf.mxu0
      %v4288 = vadd.f32 %v4119, %v4287
      %4289 = vmatmul.bf16.gmra.mxu0 %v3903
      %v4290 = vpop.f32.mrf.mxu0
      %v4291 = vadd.f32 %v4122, %v4290
      %v4292 = vpop.f32.mrf.mxu0
      %v4293 = vadd.f32 %v4124, %v4292
      %4294 = vmatmul.bf16.gmra.mxu0 %v3905
      %v4295 = vpop.f32.mrf.mxu0
      %v4296 = vadd.f32 %v4127, %v4295
      %v4297 = vpop.f32.mrf.mxu0
      %v4298 = vadd.f32 %v4129, %v4297
      %4299 = vmatmul.bf16.gmra.mxu0 %v3907
      %v4300 = vpop.f32.mrf.mxu0
      %v4301 = vadd.f32 %v4132, %v4300
      %v4302 = vpop.f32.mrf.mxu0
      %v4303 = vadd.f32 %v4134, %v4302
      %4304 = vmatmul.bf16.gmra.mxu0 %v3909
      %v4305 = vpop.f32.mrf.mxu0
      %v4306 = vadd.f32 %v4137, %v4305
      %v4307 = vpop.f32.mrf.mxu0
      %v4308 = vadd.f32 %v4139, %v4307
      %4309 = vmatmul.bf16.gmra.mxu0 %v3911
      %v4310 = vpop.f32.mrf.mxu0
      %v4311 = vadd.f32 %v4142, %v4310
      %v4312 = vpop.f32.mrf.mxu0
      %v4313 = vadd.f32 %v4144, %v4312
      %4314 = vmatmul.bf16.gmra.mxu0 %v3913
      %v4315 = vpop.f32.mrf.mxu0
      %v4316 = vadd.f32 %v4147, %v4315
      %v4317 = vpop.f32.mrf.mxu0
      %v4318 = vadd.f32 %v4149, %v4317
      %4319 = vmatmul.bf16.gmra.mxu0 %v3915
      %v4320 = vpop.f32.mrf.mxu0
      %v4321 = vadd.f32 %v4152, %v4320
      %v4322 = vpop.f32.mrf.mxu0
      %v4323 = vadd.f32 %v4154, %v4322
      %4324 = vmatmul.bf16.gmra.mxu0 %v3917
      %v4325 = vpop.f32.mrf.mxu0
      %v4326 = vadd.f32 %v4157, %v4325
      %v4327 = vpop.f32.mrf.mxu0
      %v4328 = vadd.f32 %v4159, %v4327
      %4329 = vmatmul.bf16.gmra.mxu0 %v3919
      %v4330 = vpop.f32.mrf.mxu0
      %v4331 = vadd.f32 %v4162, %v4330
      %v4332 = vpop.f32.mrf.mxu0
      %v4333 = vadd.f32 %v4164, %v4332
      %4334 = vmatmul.bf16.gmra.mxu0 %v3921
      %v4335 = vpop.f32.mrf.mxu0
      %v4336 = vadd.f32 %v4167, %v4335
      %v4337 = vpop.f32.mrf.mxu0
      %v4338 = vadd.f32 %v4169, %v4337
      %4339 = vmatmul.bf16.gmra.mxu0 %v3923
      %v4340 = vpop.f32.mrf.mxu0
      %v4341 = vadd.f32 %v4172, %v4340
      %v4342 = vpop.f32.mrf.mxu0
      %v4343 = vadd.f32 %v4174, %v4342
      %4344 = vmatmul.bf16.gmra.mxu0 %v3925
      %v4345 = vpop.f32.mrf.mxu0
      %v4346 = vadd.f32 %v4177, %v4345
      %v4347 = vpop.f32.mrf.mxu0
      %v4348 = vadd.f32 %v4179, %v4347
      %4349 = vmatmul.bf16.gmra.mxu0 %v3927
      %v4350 = vpop.f32.mrf.mxu0
      %v4351 = vadd.f32 %v4182, %v4350
      %v4352 = vpop.f32.mrf.mxu0
      %v4353 = vadd.f32 %v4184, %v4352
      %4354 = vmatmul.bf16.gmra.mxu0 %v3929
      %v4355 = vpop.f32.mrf.mxu0
      %v4356 = vadd.f32 %v4187, %v4355
      %v4357 = vpop.f32.mrf.mxu0
      %v4358 = vadd.f32 %v4189, %v4357
      %4359 = vmatmul.bf16.gmra.mxu0 %v3931
      %v4360 = vpop.f32.mrf.mxu0
      %v4361 = vadd.f32 %v4192, %v4360
      %v4362 = vpop.f32.mrf.mxu0
      %v4363 = vadd.f32 %v4194, %v4362
      %4364 = vmatmul.bf16.gmra.mxu0 %v3933
      %v4365 = vpop.f32.mrf.mxu0
      %v4366 = vadd.f32 %v4197, %v4365
      %v4367 = vpop.f32.mrf.mxu0
      %v4368 = vadd.f32 %v4199, %v4367
      %4369 = vmatmul.bf16.gmra.mxu0 %v3935
      %v4370 = vpop.f32.mrf.mxu0
      %v4371 = vadd.f32 %v4202, %v4370
      %v4372 = vpop.f32.mrf.mxu0
      %v4373 = vadd.f32 %v4204, %v4372
      %4374 = vmatmul.bf16.gmra.mxu0 %v3937
      %v4375 = vpop.f32.mrf.mxu0
      %v4376 = vadd.f32 %v4207, %v4375
      %v4377 = vpop.f32.mrf.mxu0
      %v4378 = vadd.f32 %v4209, %v4377
      %4379 = vmatmul.bf16.gmra.mxu0 %v3939
      %v4380 = vpop.f32.mrf.mxu0
      %v4381 = vadd.f32 %v4212, %v4380
      %v4382 = vpop.f32.mrf.mxu0
      %v4383 = vadd.f32 %v4214, %v4382
      %4384 = vmatmul.bf16.gmra.mxu0 %v3941
      %v4385 = vpop.f32.mrf.mxu0
      %v4386 = vadd.f32 %v4217, %v4385
      %v4387 = vpop.f32.mrf.mxu0
      %v4388 = vadd.f32 %v4219, %v4387
      %4389 = vmatmul.bf16.gmra.mxu0 %v3943
      %v4390 = vpop.f32.mrf.mxu0
      %v4391 = vadd.f32 %v4222, %v4390
      %v4392 = vpop.f32.mrf.mxu0
      %v4393 = vadd.f32 %v4224, %v4392
      %4394 = vmatmul.bf16.gmra.mxu0 %v3945
      %v4395 = vpop.f32.mrf.mxu0
      %v4396 = vadd.f32 %v4227, %v4395
      %v4397 = vpop.f32.mrf.mxu0
      %v4398 = vadd.f32 %v4229, %v4397
      %4399 = vmatmul.bf16.gmra.mxu0 %v3947
      %v4400 = vpop.f32.mrf.mxu0
      %v4401 = vadd.f32 %v4232, %v4400
      %v4402 = vpop.f32.mrf.mxu0
      %v4403 = vadd.f32 %v4234, %v4402
      %4404 = vmatmul.bf16.gmra.mxu0 %v3949
      %v4405 = vpop.f32.mrf.mxu0
      %v4406 = vadd.f32 %v4237, %v4405
      %v4407 = vpop.f32.mrf.mxu0
      %v4408 = vadd.f32 %v4239, %v4407
      %4409 = vmatmul.bf16.gmra.mxu0 %v3951
      %v4410 = vpop.f32.mrf.mxu0
      %v4411 = vadd.f32 %v4242, %v4410
      %v4412 = vpop.f32.mrf.mxu0
      %v4413 = vadd.f32 %v4244, %v4412
      %4414 = vmatmul.bf16.gmra.mxu0 %v3953
      %v4415 = vpop.f32.mrf.mxu0
      %v4416 = vadd.f32 %v4247, %v4415
      %v4417 = vpop.f32.mrf.mxu0
      %v4418 = vadd.f32 %v4249, %v4417
      %4419 = vdwg.mxu0
      %v4420 = vadd.f32 %v3826, %v4261
      %v4421 = vadd.f32 %v3827, %v4263
      %v4422 = vadd.f32 %v3828, %v4266
      %v4423 = vadd.f32 %v3829, %v4268
      %v4424 = vadd.f32 %v3830, %v4271
      %v4425 = vadd.f32 %v3831, %v4273
      %v4426 = vadd.f32 %v3832, %v4276
      %v4427 = vadd.f32 %v3833, %v4278
      %v4428 = vadd.f32 %v3834, %v4281
      %v4429 = vadd.f32 %v3835, %v4283
      %v4430 = vadd.f32 %v3836, %v4286
      %v4431 = vadd.f32 %v3837, %v4288
      %v4432 = vadd.f32 %v3838, %v4291
      %v4433 = vadd.f32 %v3839, %v4293
      %v4434 = vadd.f32 %v3840, %v4296
      %v4435 = vadd.f32 %v3841, %v4298
      %v4436 = vadd.f32 %v3842, %v4301
      %v4437 = vadd.f32 %v3843, %v4303
      %v4438 = vadd.f32 %v3844, %v4306
      %v4439 = vadd.f32 %v3845, %v4308
      %v4440 = vadd.f32 %v3846, %v4311
      %v4441 = vadd.f32 %v3847, %v4313
      %v4442 = vadd.f32 %v3848, %v4316
      %v4443 = vadd.f32 %v3849, %v4318
      %v4444 = vadd.f32 %v3850, %v4321
      %v4445 = vadd.f32 %v3851, %v4323
      %v4446 = vadd.f32 %v3852, %v4326
      %v4447 = vadd.f32 %v3853, %v4328
      %v4448 = vadd.f32 %v3854, %v4331
      %v4449 = vadd.f32 %v3855, %v4333
      %v4450 = vadd.f32 %v3856, %v4336
      %v4451 = vadd.f32 %v3857, %v4338
      %v4452 = vadd.f32 %v3858, %v4341
      %v4453 = vadd.f32 %v3859, %v4343
      %v4454 = vadd.f32 %v3860, %v4346
      %v4455 = vadd.f32 %v3861, %v4348
      %v4456 = vadd.f32 %v3862, %v4351
      %v4457 = vadd.f32 %v3863, %v4353
      %v4458 = vadd.f32 %v3864, %v4356
      %v4459 = vadd.f32 %v3865, %v4358
      %v4460 = vadd.f32 %v3866, %v4361
      %v4461 = vadd.f32 %v3867, %v4363
      %v4462 = vadd.f32 %v3868, %v4366
      %v4463 = vadd.f32 %v3869, %v4368
      %v4464 = vadd.f32 %v3870, %v4371
      %v4465 = vadd.f32 %v3871, %v4373
      %v4466 = vadd.f32 %v3872, %v4376
      %v4467 = vadd.f32 %v3873, %v4378
      %v4468 = vadd.f32 %v3874, %v4381
      %v4469 = vadd.f32 %v3875, %v4383
      %v4470 = vadd.f32 %v3876, %v4386
      %v4471 = vadd.f32 %v3877, %v4388
      %v4472 = vadd.f32 %v3878, %v4391
      %v4473 = vadd.f32 %v3879, %v4393
      %v4474 = vadd.f32 %v3880, %v4396
      %v4475 = vadd.f32 %v3881, %v4398
      %v4476 = vadd.f32 %v3882, %v4401
      %v4477 = vadd.f32 %v3883, %v4403
      %v4478 = vadd.f32 %v3884, %v4406
      %v4479 = vadd.f32 %v3885, %v4408
      %v4480 = vadd.f32 %v3886, %v4411
      %v4481 = vadd.f32 %v3887, %v4413
      %v4482 = vadd.f32 %v3888, %v4416
      %v4483 = vadd.f32 %v3889, %v4418
      %4484 = vst [vmem:[#allocation5] sm:$0xff] %v4420
      %4485 = vst [vmem:[#allocation5 + $0x8] sm:$0xff] %v4421
      %4486 = vst [vmem:[#allocation5 + $0x10] sm:$0xff] %v4422
      %4487 = vst [vmem:[#allocation5 + $0x18] sm:$0xff] %v4423
      %4488 = vst [vmem:[#allocation5 + $0x20] sm:$0xff] %v4424
      %4489 = vst [vmem:[#allocation5 + $0x28] sm:$0xff] %v4425
      %4490 = vst [vmem:[#allocation5 + $0x30] sm:$0xff] %v4426
      %4491 = vst [vmem:[#allocation5 + $0x38] sm:$0xff] %v4427
      %4492 = vst [vmem:[#allocation5 + $0x40] sm:$0xff] %v4428
      %4493 = vst [vmem:[#allocation5 + $0x48] sm:$0xff] %v4429
      %4494 = vst [vmem:[#allocation5 + $0x50] sm:$0xff] %v4430
      %4495 = vst [vmem:[#allocation5 + $0x58] sm:$0xff] %v4431
      %4496 = vst [vmem:[#allocation5 + $0x60] sm:$0xff] %v4432
      %4497 = vst [vmem:[#allocation5 + $0x68] sm:$0xff] %v4433
      %4498 = vst [vmem:[#allocation5 + $0x70] sm:$0xff] %v4434
      %4499 = vst [vmem:[#allocation5 + $0x78] sm:$0xff] %v4435
      %4500 = vst [vmem:[#allocation5 + $0x80] sm:$0xff] %v4436
      %4501 = vst [vmem:[#allocation5 + $0x88] sm:$0xff] %v4437
      %4502 = vst [vmem:[#allocation5 + $0x90] sm:$0xff] %v4438
      %4503 = vst [vmem:[#allocation5 + $0x98] sm:$0xff] %v4439
      %4504 = vst [vmem:[#allocation5 + $0xa0] sm:$0xff] %v4440
      %4505 = vst [vmem:[#allocation5 + $0xa8] sm:$0xff] %v4441
      %4506 = vst [vmem:[#allocation5 + $0xb0] sm:$0xff] %v4442
      %4507 = vst [vmem:[#allocation5 + $0xb8] sm:$0xff] %v4443
      %4508 = vst [vmem:[#allocation5 + $0xc0] sm:$0xff] %v4444
      %4509 = vst [vmem:[#allocation5 + $0xc8] sm:$0xff] %v4445
      %4510 = vst [vmem:[#allocation5 + $0xd0] sm:$0xff] %v4446
      %4511 = vst [vmem:[#allocation5 + $0xd8] sm:$0xff] %v4447
      %4512 = vst [vmem:[#allocation5 + $0xe0] sm:$0xff] %v4448
      %4513 = vst [vmem:[#allocation5 + $0xe8] sm:$0xff] %v4449
      %4514 = vst [vmem:[#allocation5 + $0xf0] sm:$0xff] %v4450
      %4515 = vst [vmem:[#allocation5 + $0xf8] sm:$0xff] %v4451
      %4516 = vst [vmem:[#allocation5 + $0x100] sm:$0xff] %v4452
      %4517 = vst [vmem:[#allocation5 + $0x108] sm:$0xff] %v4453
      %4518 = vst [vmem:[#allocation5 + $0x110] sm:$0xff] %v4454
      %4519 = vst [vmem:[#allocation5 + $0x118] sm:$0xff] %v4455
      %4520 = vst [vmem:[#allocation5 + $0x120] sm:$0xff] %v4456
      %4521 = vst [vmem:[#allocation5 + $0x128] sm:$0xff] %v4457
      %4522 = vst [vmem:[#allocation5 + $0x130] sm:$0xff] %v4458
      %4523 = vst [vmem:[#allocation5 + $0x138] sm:$0xff] %v4459
      %4524 = vst [vmem:[#allocation5 + $0x140] sm:$0xff] %v4460
      %4525 = vst [vmem:[#allocation5 + $0x148] sm:$0xff] %v4461
      %4526 = vst [vmem:[#allocation5 + $0x150] sm:$0xff] %v4462
      %4527 = vst [vmem:[#allocation5 + $0x158] sm:$0xff] %v4463
      %4528 = vst [vmem:[#allocation5 + $0x160] sm:$0xff] %v4464
      %4529 = vst [vmem:[#allocation5 + $0x168] sm:$0xff] %v4465
      %4530 = vst [vmem:[#allocation5 + $0x170] sm:$0xff] %v4466
      %4531 = vst [vmem:[#allocation5 + $0x178] sm:$0xff] %v4467
      %4532 = vst [vmem:[#allocation5 + $0x180] sm:$0xff] %v4468
      %4533 = vst [vmem:[#allocation5 + $0x188] sm:$0xff] %v4469
      %4534 = vst [vmem:[#allocation5 + $0x190] sm:$0xff] %v4470
      %4535 = vst [vmem:[#allocation5 + $0x198] sm:$0xff] %v4471
      %4536 = vst [vmem:[#allocation5 + $0x1a0] sm:$0xff] %v4472
      %4537 = vst [vmem:[#allocation5 + $0x1a8] sm:$0xff] %v4473
      %4538 = vst [vmem:[#allocation5 + $0x1b0] sm:$0xff] %v4474
      %4539 = vst [vmem:[#allocation5 + $0x1b8] sm:$0xff] %v4475
      %4540 = vst [vmem:[#allocation5 + $0x1c0] sm:$0xff] %v4476
      %4541 = vst [vmem:[#allocation5 + $0x1c8] sm:$0xff] %v4477
      %4542 = vst [vmem:[#allocation5 + $0x1d0] sm:$0xff] %v4478
      %4543 = vst [vmem:[#allocation5 + $0x1d8] sm:$0xff] %v4479
      %4544 = vst [vmem:[#allocation5 + $0x1e0] sm:$0xff] %v4480
      %4545 = vst [vmem:[#allocation5 + $0x1e8] sm:$0xff] %v4481
      %4546 = vst [vmem:[#allocation5 + $0x1f0] sm:$0xff] %v4482
      %4547 = vst [vmem:[#allocation5 + $0x1f8] sm:$0xff] %v4483
      %4548 = vst.msk [vmem:[#allocation3] sm:$0xff] %vm3377, %v2033
      %4549 = vst.msk [vmem:[#allocation3 + $0x8] sm:$0xff] %vm3377, %v2034
      %4550 = vst.msk [vmem:[#allocation3 + $0x10] sm:$0xff] %vm3377, %v2035
      %4551 = vst.msk [vmem:[#allocation3 + $0x18] sm:$0xff] %vm3377, %v2036
      %4552 = vst.msk [vmem:[#allocation3 + $0x20] sm:$0xff] %vm3377, %v2037
      %4553 = vst.msk [vmem:[#allocation3 + $0x28] sm:$0xff] %vm3377, %v2038
      %4554 = vst.msk [vmem:[#allocation3 + $0x30] sm:$0xff] %vm3377, %v2039
      %4555 = vst.msk [vmem:[#allocation3 + $0x38] sm:$0xff] %vm3377, %v2040
      %4556 = vst.msk [vmem:[#allocation3 + $0x40] sm:$0xff] %vm3377, %v2041
      %4557 = vst.msk [vmem:[#allocation3 + $0x48] sm:$0xff] %vm3377, %v2042
      %4558 = vst.msk [vmem:[#allocation3 + $0x50] sm:$0xff] %vm3377, %v2043
      %4559 = vst.msk [vmem:[#allocation3 + $0x58] sm:$0xff] %vm3377, %v2044
      %4560 = vst.msk [vmem:[#allocation3 + $0x60] sm:$0xff] %vm3377, %v2045
      %4561 = vst.msk [vmem:[#allocation3 + $0x68] sm:$0xff] %vm3377, %v2046
      %4562 = vst.msk [vmem:[#allocation3 + $0x70] sm:$0xff] %vm3377, %v2047
      %4563 = vst.msk [vmem:[#allocation3 + $0x78] sm:$0xff] %vm3377, %v2048
      %4564 = vst.msk [vmem:[#allocation3 + $0x80] sm:$0xff] %vm3377, %v2049
      %4565 = vst.msk [vmem:[#allocation3 + $0x88] sm:$0xff] %vm3377, %v2050
      %4566 = vst.msk [vmem:[#allocation3 + $0x90] sm:$0xff] %vm3377, %v2051
      %4567 = vst.msk [vmem:[#allocation3 + $0x98] sm:$0xff] %vm3377, %v2052
      %4568 = vst.msk [vmem:[#allocation3 + $0xa0] sm:$0xff] %vm3377, %v2053
      %4569 = vst.msk [vmem:[#allocation3 + $0xa8] sm:$0xff] %vm3377, %v2054
      %4570 = vst.msk [vmem:[#allocation3 + $0xb0] sm:$0xff] %vm3377, %v2055
      %4571 = vst.msk [vmem:[#allocation3 + $0xb8] sm:$0xff] %vm3377, %v2056
      %4572 = vst.msk [vmem:[#allocation3 + $0xc0] sm:$0xff] %vm3377, %v2057
      %4573 = vst.msk [vmem:[#allocation3 + $0xc8] sm:$0xff] %vm3377, %v2058
      %4574 = vst.msk [vmem:[#allocation3 + $0xd0] sm:$0xff] %vm3377, %v2059
      %4575 = vst.msk [vmem:[#allocation3 + $0xd8] sm:$0xff] %vm3377, %v2060
      %4576 = vst.msk [vmem:[#allocation3 + $0xe0] sm:$0xff] %vm3377, %v2061
      %4577 = vst.msk [vmem:[#allocation3 + $0xe8] sm:$0xff] %vm3377, %v2062
      %4578 = vst.msk [vmem:[#allocation3 + $0xf0] sm:$0xff] %vm3377, %v2063
      %4579 = vst.msk [vmem:[#allocation3 + $0xf8] sm:$0xff] %vm3377, %v2064
      %4580 = vst.msk [vmem:[#allocation3 + $0x100] sm:$0xff] %vm3377, %v2065
      %4581 = vst.msk [vmem:[#allocation3 + $0x108] sm:$0xff] %vm3377, %v2066
      %4582 = vst.msk [vmem:[#allocation3 + $0x110] sm:$0xff] %vm3377, %v2067
      %4583 = vst.msk [vmem:[#allocation3 + $0x118] sm:$0xff] %vm3377, %v2068
      %4584 = vst.msk [vmem:[#allocation3 + $0x120] sm:$0xff] %vm3377, %v2069
      %4585 = vst.msk [vmem:[#allocation3 + $0x128] sm:$0xff] %vm3377, %v2070
      %4586 = vst.msk [vmem:[#allocation3 + $0x130] sm:$0xff] %vm3377, %v2071
      %4587 = vst.msk [vmem:[#allocation3 + $0x138] sm:$0xff] %vm3377, %v2072
      %4588 = vst.msk [vmem:[#allocation3 + $0x140] sm:$0xff] %vm3377, %v2073
      %4589 = vst.msk [vmem:[#allocation3 + $0x148] sm:$0xff] %vm3377, %v2074
      %4590 = vst.msk [vmem:[#allocation3 + $0x150] sm:$0xff] %vm3377, %v2075
      %4591 = vst.msk [vmem:[#allocation3 + $0x158] sm:$0xff] %vm3377, %v2076
      %4592 = vst.msk [vmem:[#allocation3 + $0x160] sm:$0xff] %vm3377, %v2077
      %4593 = vst.msk [vmem:[#allocation3 + $0x168] sm:$0xff] %vm3377, %v2078
      %4594 = vst.msk [vmem:[#allocation3 + $0x170] sm:$0xff] %vm3377, %v2079
      %4595 = vst.msk [vmem:[#allocation3 + $0x178] sm:$0xff] %vm3377, %v2080
      %4596 = vst.msk [vmem:[#allocation3 + $0x180] sm:$0xff] %vm3377, %v2081
      %4597 = vst.msk [vmem:[#allocation3 + $0x188] sm:$0xff] %vm3377, %v2082
      %4598 = vst.msk [vmem:[#allocation3 + $0x190] sm:$0xff] %vm3377, %v2083
      %4599 = vst.msk [vmem:[#allocation3 + $0x198] sm:$0xff] %vm3377, %v2084
      %4600 = vst.msk [vmem:[#allocation3 + $0x1a0] sm:$0xff] %vm3377, %v2085
      %4601 = vst.msk [vmem:[#allocation3 + $0x1a8] sm:$0xff] %vm3377, %v2086
      %4602 = vst.msk [vmem:[#allocation3 + $0x1b0] sm:$0xff] %vm3377, %v2087
      %4603 = vst.msk [vmem:[#allocation3 + $0x1b8] sm:$0xff] %vm3377, %v2088
      %4604 = vst.msk [vmem:[#allocation3 + $0x1c0] sm:$0xff] %vm3377, %v2089
      %4605 = vst.msk [vmem:[#allocation3 + $0x1c8] sm:$0xff] %vm3377, %v2090
      %4606 = vst.msk [vmem:[#allocation3 + $0x1d0] sm:$0xff] %vm3377, %v2091
      %4607 = vst.msk [vmem:[#allocation3 + $0x1d8] sm:$0xff] %vm3377, %v2092
      %4608 = vst.msk [vmem:[#allocation3 + $0x1e0] sm:$0xff] %vm3377, %v2093
      %4609 = vst.msk [vmem:[#allocation3 + $0x1e8] sm:$0xff] %vm3377, %v2094
      %4610 = vst.msk [vmem:[#allocation3 + $0x1f0] sm:$0xff] %vm3377, %v2095
      %4611 = vst.msk [vmem:[#allocation3 + $0x1f8] sm:$0xff] %vm3377, %v2096
      // Predicated region
      $region53: #{nonlocal_block_3d.3} parent=47 // pred_check
        %p4612 = pneg %p397
      $region54: #{nonlocal_block_3d.3} parent=47 // pred_check_branch
        %4614 = sbr.rel (%p4612) target = $region56
      $region55: #{nonlocal_block_3d.3} parent=47 // pred_region
        %v4615 = vld [vmem:[#allocation5] sm:$0xff]
        %v4616 = vld [vmem:[#allocation5 + $0x8] sm:$0xff]
        %v4617 = vld [vmem:[#allocation5 + $0x10] sm:$0xff]
        %v4618 = vld [vmem:[#allocation5 + $0x18] sm:$0xff]
        %v4619 = vld [vmem:[#allocation5 + $0x20] sm:$0xff]
        %v4620 = vld [vmem:[#allocation5 + $0x28] sm:$0xff]
        %v4621 = vld [vmem:[#allocation5 + $0x30] sm:$0xff]
        %v4622 = vld [vmem:[#allocation5 + $0x38] sm:$0xff]
        %v4623 = vld [vmem:[#allocation5 + $0x40] sm:$0xff]
        %v4624 = vld [vmem:[#allocation5 + $0x48] sm:$0xff]
        %v4625 = vld [vmem:[#allocation5 + $0x50] sm:$0xff]
        %v4626 = vld [vmem:[#allocation5 + $0x58] sm:$0xff]
        %v4627 = vld [vmem:[#allocation5 + $0x60] sm:$0xff]
        %v4628 = vld [vmem:[#allocation5 + $0x68] sm:$0xff]
        %v4629 = vld [vmem:[#allocation5 + $0x70] sm:$0xff]
        %v4630 = vld [vmem:[#allocation5 + $0x78] sm:$0xff]
        %v4631 = vld [vmem:[#allocation5 + $0x80] sm:$0xff]
        %v4632 = vld [vmem:[#allocation5 + $0x88] sm:$0xff]
        %v4633 = vld [vmem:[#allocation5 + $0x90] sm:$0xff]
        %v4634 = vld [vmem:[#allocation5 + $0x98] sm:$0xff]
        %v4635 = vld [vmem:[#allocation5 + $0xa0] sm:$0xff]
        %v4636 = vld [vmem:[#allocation5 + $0xa8] sm:$0xff]
        %v4637 = vld [vmem:[#allocation5 + $0xb0] sm:$0xff]
        %v4638 = vld [vmem:[#allocation5 + $0xb8] sm:$0xff]
        %v4639 = vld [vmem:[#allocation5 + $0xc0] sm:$0xff]
        %v4640 = vld [vmem:[#allocation5 + $0xc8] sm:$0xff]
        %v4641 = vld [vmem:[#allocation5 + $0xd0] sm:$0xff]
        %v4642 = vld [vmem:[#allocation5 + $0xd8] sm:$0xff]
        %v4643 = vld [vmem:[#allocation5 + $0xe0] sm:$0xff]
        %v4644 = vld [vmem:[#allocation5 + $0xe8] sm:$0xff]
        %v4645 = vld [vmem:[#allocation5 + $0xf0] sm:$0xff]
        %v4646 = vld [vmem:[#allocation5 + $0xf8] sm:$0xff]
        %v4647 = vld [vmem:[#allocation5 + $0x100] sm:$0xff]
        %v4648 = vld [vmem:[#allocation5 + $0x108] sm:$0xff]
        %v4649 = vld [vmem:[#allocation5 + $0x110] sm:$0xff]
        %v4650 = vld [vmem:[#allocation5 + $0x118] sm:$0xff]
        %v4651 = vld [vmem:[#allocation5 + $0x120] sm:$0xff]
        %v4652 = vld [vmem:[#allocation5 + $0x128] sm:$0xff]
        %v4653 = vld [vmem:[#allocation5 + $0x130] sm:$0xff]
        %v4654 = vld [vmem:[#allocation5 + $0x138] sm:$0xff]
        %v4655 = vld [vmem:[#allocation5 + $0x140] sm:$0xff]
        %v4656 = vld [vmem:[#allocation5 + $0x148] sm:$0xff]
        %v4657 = vld [vmem:[#allocation5 + $0x150] sm:$0xff]
        %v4658 = vld [vmem:[#allocation5 + $0x158] sm:$0xff]
        %v4659 = vld [vmem:[#allocation5 + $0x160] sm:$0xff]
        %v4660 = vld [vmem:[#allocation5 + $0x168] sm:$0xff]
        %v4661 = vld [vmem:[#allocation5 + $0x170] sm:$0xff]
        %v4662 = vld [vmem:[#allocation5 + $0x178] sm:$0xff]
        %v4663 = vld [vmem:[#allocation5 + $0x180] sm:$0xff]
        %v4664 = vld [vmem:[#allocation5 + $0x188] sm:$0xff]
        %v4665 = vld [vmem:[#allocation5 + $0x190] sm:$0xff]
        %v4666 = vld [vmem:[#allocation5 + $0x198] sm:$0xff]
        %v4667 = vld [vmem:[#allocation5 + $0x1a0] sm:$0xff]
        %v4668 = vld [vmem:[#allocation5 + $0x1a8] sm:$0xff]
        %v4669 = vld [vmem:[#allocation5 + $0x1b0] sm:$0xff]
        %v4670 = vld [vmem:[#allocation5 + $0x1b8] sm:$0xff]
        %v4671 = vld [vmem:[#allocation5 + $0x1c0] sm:$0xff]
        %v4672 = vld [vmem:[#allocation5 + $0x1c8] sm:$0xff]
        %v4673 = vld [vmem:[#allocation5 + $0x1d0] sm:$0xff]
        %v4674 = vld [vmem:[#allocation5 + $0x1d8] sm:$0xff]
        %v4675 = vld [vmem:[#allocation5 + $0x1e0] sm:$0xff]
        %v4676 = vld [vmem:[#allocation5 + $0x1e8] sm:$0xff]
        %v4677 = vld [vmem:[#allocation5 + $0x1f0] sm:$0xff]
        %v4678 = vld [vmem:[#allocation5 + $0x1f8] sm:$0xff]
        %v4679 = vld [vmem:[#allocation4] sm:$0xff]
        %v4680 = vld [vmem:[#allocation4 + $0x8] sm:$0xff]
        %v4681 = vld [vmem:[#allocation4 + $0x10] sm:$0xff]
        %v4682 = vld [vmem:[#allocation4 + $0x18] sm:$0xff]
        %v4683 = vld [vmem:[#allocation4 + $0x20] sm:$0xff]
        %v4684 = vld [vmem:[#allocation4 + $0x28] sm:$0xff]
        %v4685 = vld [vmem:[#allocation4 + $0x30] sm:$0xff]
        %v4686 = vld [vmem:[#allocation4 + $0x38] sm:$0xff]
        %v4687 = vld [vmem:[#allocation4 + $0x40] sm:$0xff]
        %v4688 = vld [vmem:[#allocation4 + $0x48] sm:$0xff]
        %v4689 = vld [vmem:[#allocation4 + $0x50] sm:$0xff]
        %v4690 = vld [vmem:[#allocation4 + $0x58] sm:$0xff]
        %v4691 = vld [vmem:[#allocation4 + $0x60] sm:$0xff]
        %v4692 = vld [vmem:[#allocation4 + $0x68] sm:$0xff]
        %v4693 = vld [vmem:[#allocation4 + $0x70] sm:$0xff]
        %v4694 = vld [vmem:[#allocation4 + $0x78] sm:$0xff]
        %v4695 = vld [vmem:[#allocation4 + $0x80] sm:$0xff]
        %v4696 = vld [vmem:[#allocation4 + $0x88] sm:$0xff]
        %v4697 = vld [vmem:[#allocation4 + $0x90] sm:$0xff]
        %v4698 = vld [vmem:[#allocation4 + $0x98] sm:$0xff]
        %v4699 = vld [vmem:[#allocation4 + $0xa0] sm:$0xff]
        %v4700 = vld [vmem:[#allocation4 + $0xa8] sm:$0xff]
        %v4701 = vld [vmem:[#allocation4 + $0xb0] sm:$0xff]
        %v4702 = vld [vmem:[#allocation4 + $0xb8] sm:$0xff]
        %v4703 = vld [vmem:[#allocation4 + $0xc0] sm:$0xff]
        %v4704 = vld [vmem:[#allocation4 + $0xc8] sm:$0xff]
        %v4705 = vld [vmem:[#allocation4 + $0xd0] sm:$0xff]
        %v4706 = vld [vmem:[#allocation4 + $0xd8] sm:$0xff]
        %v4707 = vld [vmem:[#allocation4 + $0xe0] sm:$0xff]
        %v4708 = vld [vmem:[#allocation4 + $0xe8] sm:$0xff]
        %v4709 = vld [vmem:[#allocation4 + $0xf0] sm:$0xff]
        %v4710 = vld [vmem:[#allocation4 + $0xf8] sm:$0xff]
        %v4711 = vld [vmem:[#allocation4 + $0x100] sm:$0xff]
        %v4712 = vld [vmem:[#allocation4 + $0x108] sm:$0xff]
        %v4713 = vld [vmem:[#allocation4 + $0x110] sm:$0xff]
        %v4714 = vld [vmem:[#allocation4 + $0x118] sm:$0xff]
        %v4715 = vld [vmem:[#allocation4 + $0x120] sm:$0xff]
        %v4716 = vld [vmem:[#allocation4 + $0x128] sm:$0xff]
        %v4717 = vld [vmem:[#allocation4 + $0x130] sm:$0xff]
        %v4718 = vld [vmem:[#allocation4 + $0x138] sm:$0xff]
        %v4719 = vld [vmem:[#allocation4 + $0x140] sm:$0xff]
        %v4720 = vld [vmem:[#allocation4 + $0x148] sm:$0xff]
        %v4721 = vld [vmem:[#allocation4 + $0x150] sm:$0xff]
        %v4722 = vld [vmem:[#allocation4 + $0x158] sm:$0xff]
        %v4723 = vld [vmem:[#allocation4 + $0x160] sm:$0xff]
        %v4724 = vld [vmem:[#allocation4 + $0x168] sm:$0xff]
        %v4725 = vld [vmem:[#allocation4 + $0x170] sm:$0xff]
        %v4726 = vld [vmem:[#allocation4 + $0x178] sm:$0xff]
        %v4727 = vld [vmem:[#allocation4 + $0x180] sm:$0xff]
        %v4728 = vld [vmem:[#allocation4 + $0x188] sm:$0xff]
        %v4729 = vld [vmem:[#allocation4 + $0x190] sm:$0xff]
        %v4730 = vld [vmem:[#allocation4 + $0x198] sm:$0xff]
        %v4731 = vld [vmem:[#allocation4 + $0x1a0] sm:$0xff]
        %v4732 = vld [vmem:[#allocation4 + $0x1a8] sm:$0xff]
        %v4733 = vld [vmem:[#allocation4 + $0x1b0] sm:$0xff]
        %v4734 = vld [vmem:[#allocation4 + $0x1b8] sm:$0xff]
        %v4735 = vld [vmem:[#allocation4 + $0x1c0] sm:$0xff]
        %v4736 = vld [vmem:[#allocation4 + $0x1c8] sm:$0xff]
        %v4737 = vld [vmem:[#allocation4 + $0x1d0] sm:$0xff]
        %v4738 = vld [vmem:[#allocation4 + $0x1d8] sm:$0xff]
        %v4739 = vld [vmem:[#allocation4 + $0x1e0] sm:$0xff]
        %v4740 = vld [vmem:[#allocation4 + $0x1e8] sm:$0xff]
        %v4741 = vld [vmem:[#allocation4 + $0x1f0] sm:$0xff]
        %v4742 = vld [vmem:[#allocation4 + $0x1f8] sm:$0xff]
        %v4743 = vrcp.pop %v4679
        %v4744 = vmul.f32 %v4679, %v4743
        %v4745 = vsub.f32 1.0, %v4744
        %v4746 = vmul.f32 %v4743, %v4745
        %v4747 = vadd.f32 %v4743, %v4746
        %vm4748 = vweird.f32 %v4679
        %vm4749 = vweird.f32 %v4743
        %vm4750 = vmor %vm4748, %vm4749
        %v4751 = vsel %vm4750, %v4743, %v4747
        %v4752 = vand.u32 2147483647, %v4679
        %vm4753 = vcmp.eq.f32.partialorder %v4752, 8.507059e+37
        %v4754 = vand.u32 %v4679, 2147483648
        %v4755 = vor.u32 1.1754944e-38, %v4754
        %v4756 = vsel %vm4753, %v4755, %v4751
        %v4757 = vrcp.pop %v4680
        %v4758 = vmul.f32 %v4680, %v4757
        %v4759 = vsub.f32 1.0, %v4758
        %v4760 = vmul.f32 %v4757, %v4759
        %v4761 = vadd.f32 %v4757, %v4760
        %vm4762 = vweird.f32 %v4680
        %vm4763 = vweird.f32 %v4757
        %vm4764 = vmor %vm4762, %vm4763
        %v4765 = vsel %vm4764, %v4757, %v4761
        %v4766 = vand.u32 2147483647, %v4680
        %vm4767 = vcmp.eq.f32.partialorder %v4766, 8.507059e+37
        %v4768 = vand.u32 %v4680, 2147483648
        %v4769 = vor.u32 1.1754944e-38, %v4768
        %v4770 = vsel %vm4767, %v4769, %v4765
        %v4771 = vrcp.pop %v4681
        %v4772 = vmul.f32 %v4681, %v4771
        %v4773 = vsub.f32 1.0, %v4772
        %v4774 = vmul.f32 %v4771, %v4773
        %v4775 = vadd.f32 %v4771, %v4774
        %vm4776 = vweird.f32 %v4681
        %vm4777 = vweird.f32 %v4771
        %vm4778 = vmor %vm4776, %vm4777
        %v4779 = vsel %vm4778, %v4771, %v4775
        %v4780 = vand.u32 2147483647, %v4681
        %vm4781 = vcmp.eq.f32.partialorder %v4780, 8.507059e+37
        %v4782 = vand.u32 %v4681, 2147483648
        %v4783 = vor.u32 1.1754944e-38, %v4782
        %v4784 = vsel %vm4781, %v4783, %v4779
        %v4785 = vrcp.pop %v4682
        %v4786 = vmul.f32 %v4682, %v4785
        %v4787 = vsub.f32 1.0, %v4786
        %v4788 = vmul.f32 %v4785, %v4787
        %v4789 = vadd.f32 %v4785, %v4788
        %vm4790 = vweird.f32 %v4682
        %vm4791 = vweird.f32 %v4785
        %vm4792 = vmor %vm4790, %vm4791
        %v4793 = vsel %vm4792, %v4785, %v4789
        %v4794 = vand.u32 2147483647, %v4682
        %vm4795 = vcmp.eq.f32.partialorder %v4794, 8.507059e+37
        %v4796 = vand.u32 %v4682, 2147483648
        %v4797 = vor.u32 1.1754944e-38, %v4796
        %v4798 = vsel %vm4795, %v4797, %v4793
        %v4799 = vrcp.pop %v4683
        %v4800 = vmul.f32 %v4683, %v4799
        %v4801 = vsub.f32 1.0, %v4800
        %v4802 = vmul.f32 %v4799, %v4801
        %v4803 = vadd.f32 %v4799, %v4802
        %vm4804 = vweird.f32 %v4683
        %vm4805 = vweird.f32 %v4799
        %vm4806 = vmor %vm4804, %vm4805
        %v4807 = vsel %vm4806, %v4799, %v4803
        %v4808 = vand.u32 2147483647, %v4683
        %vm4809 = vcmp.eq.f32.partialorder %v4808, 8.507059e+37
        %v4810 = vand.u32 %v4683, 2147483648
        %v4811 = vor.u32 1.1754944e-38, %v4810
        %v4812 = vsel %vm4809, %v4811, %v4807
        %v4813 = vrcp.pop %v4684
        %v4814 = vmul.f32 %v4684, %v4813
        %v4815 = vsub.f32 1.0, %v4814
        %v4816 = vmul.f32 %v4813, %v4815
        %v4817 = vadd.f32 %v4813, %v4816
        %vm4818 = vweird.f32 %v4684
        %vm4819 = vweird.f32 %v4813
        %vm4820 = vmor %vm4818, %vm4819
        %v4821 = vsel %vm4820, %v4813, %v4817
        %v4822 = vand.u32 2147483647, %v4684
        %vm4823 = vcmp.eq.f32.partialorder %v4822, 8.507059e+37
        %v4824 = vand.u32 %v4684, 2147483648
        %v4825 = vor.u32 1.1754944e-38, %v4824
        %v4826 = vsel %vm4823, %v4825, %v4821
        %v4827 = vrcp.pop %v4685
        %v4828 = vmul.f32 %v4685, %v4827
        %v4829 = vsub.f32 1.0, %v4828
        %v4830 = vmul.f32 %v4827, %v4829
        %v4831 = vadd.f32 %v4827, %v4830
        %vm4832 = vweird.f32 %v4685
        %vm4833 = vweird.f32 %v4827
        %vm4834 = vmor %vm4832, %vm4833
        %v4835 = vsel %vm4834, %v4827, %v4831
        %v4836 = vand.u32 2147483647, %v4685
        %vm4837 = vcmp.eq.f32.partialorder %v4836, 8.507059e+37
        %v4838 = vand.u32 %v4685, 2147483648
        %v4839 = vor.u32 1.1754944e-38, %v4838
        %v4840 = vsel %vm4837, %v4839, %v4835
        %v4841 = vrcp.pop %v4686
        %v4842 = vmul.f32 %v4686, %v4841
        %v4843 = vsub.f32 1.0, %v4842
        %v4844 = vmul.f32 %v4841, %v4843
        %v4845 = vadd.f32 %v4841, %v4844
        %vm4846 = vweird.f32 %v4686
        %vm4847 = vweird.f32 %v4841
        %vm4848 = vmor %vm4846, %vm4847
        %v4849 = vsel %vm4848, %v4841, %v4845
        %v4850 = vand.u32 2147483647, %v4686
        %vm4851 = vcmp.eq.f32.partialorder %v4850, 8.507059e+37
        %v4852 = vand.u32 %v4686, 2147483648
        %v4853 = vor.u32 1.1754944e-38, %v4852
        %v4854 = vsel %vm4851, %v4853, %v4849
        %v4855 = vrcp.pop %v4687
        %v4856 = vmul.f32 %v4687, %v4855
        %v4857 = vsub.f32 1.0, %v4856
        %v4858 = vmul.f32 %v4855, %v4857
        %v4859 = vadd.f32 %v4855, %v4858
        %vm4860 = vweird.f32 %v4687
        %vm4861 = vweird.f32 %v4855
        %vm4862 = vmor %vm4860, %vm4861
        %v4863 = vsel %vm4862, %v4855, %v4859
        %v4864 = vand.u32 2147483647, %v4687
        %vm4865 = vcmp.eq.f32.partialorder %v4864, 8.507059e+37
        %v4866 = vand.u32 %v4687, 2147483648
        %v4867 = vor.u32 1.1754944e-38, %v4866
        %v4868 = vsel %vm4865, %v4867, %v4863
        %v4869 = vrcp.pop %v4688
        %v4870 = vmul.f32 %v4688, %v4869
        %v4871 = vsub.f32 1.0, %v4870
        %v4872 = vmul.f32 %v4869, %v4871
        %v4873 = vadd.f32 %v4869, %v4872
        %vm4874 = vweird.f32 %v4688
        %vm4875 = vweird.f32 %v4869
        %vm4876 = vmor %vm4874, %vm4875
        %v4877 = vsel %vm4876, %v4869, %v4873
        %v4878 = vand.u32 2147483647, %v4688
        %vm4879 = vcmp.eq.f32.partialorder %v4878, 8.507059e+37
        %v4880 = vand.u32 %v4688, 2147483648
        %v4881 = vor.u32 1.1754944e-38, %v4880
        %v4882 = vsel %vm4879, %v4881, %v4877
        %v4883 = vrcp.pop %v4689
        %v4884 = vmul.f32 %v4689, %v4883
        %v4885 = vsub.f32 1.0, %v4884
        %v4886 = vmul.f32 %v4883, %v4885
        %v4887 = vadd.f32 %v4883, %v4886
        %vm4888 = vweird.f32 %v4689
        %vm4889 = vweird.f32 %v4883
        %vm4890 = vmor %vm4888, %vm4889
        %v4891 = vsel %vm4890, %v4883, %v4887
        %v4892 = vand.u32 2147483647, %v4689
        %vm4893 = vcmp.eq.f32.partialorder %v4892, 8.507059e+37
        %v4894 = vand.u32 %v4689, 2147483648
        %v4895 = vor.u32 1.1754944e-38, %v4894
        %v4896 = vsel %vm4893, %v4895, %v4891
        %v4897 = vrcp.pop %v4690
        %v4898 = vmul.f32 %v4690, %v4897
        %v4899 = vsub.f32 1.0, %v4898
        %v4900 = vmul.f32 %v4897, %v4899
        %v4901 = vadd.f32 %v4897, %v4900
        %vm4902 = vweird.f32 %v4690
        %vm4903 = vweird.f32 %v4897
        %vm4904 = vmor %vm4902, %vm4903
        %v4905 = vsel %vm4904, %v4897, %v4901
        %v4906 = vand.u32 2147483647, %v4690
        %vm4907 = vcmp.eq.f32.partialorder %v4906, 8.507059e+37
        %v4908 = vand.u32 %v4690, 2147483648
        %v4909 = vor.u32 1.1754944e-38, %v4908
        %v4910 = vsel %vm4907, %v4909, %v4905
        %v4911 = vrcp.pop %v4691
        %v4912 = vmul.f32 %v4691, %v4911
        %v4913 = vsub.f32 1.0, %v4912
        %v4914 = vmul.f32 %v4911, %v4913
        %v4915 = vadd.f32 %v4911, %v4914
        %vm4916 = vweird.f32 %v4691
        %vm4917 = vweird.f32 %v4911
        %vm4918 = vmor %vm4916, %vm4917
        %v4919 = vsel %vm4918, %v4911, %v4915
        %v4920 = vand.u32 2147483647, %v4691
        %vm4921 = vcmp.eq.f32.partialorder %v4920, 8.507059e+37
        %v4922 = vand.u32 %v4691, 2147483648
        %v4923 = vor.u32 1.1754944e-38, %v4922
        %v4924 = vsel %vm4921, %v4923, %v4919
        %v4925 = vrcp.pop %v4692
        %v4926 = vmul.f32 %v4692, %v4925
        %v4927 = vsub.f32 1.0, %v4926
        %v4928 = vmul.f32 %v4925, %v4927
        %v4929 = vadd.f32 %v4925, %v4928
        %vm4930 = vweird.f32 %v4692
        %vm4931 = vweird.f32 %v4925
        %vm4932 = vmor %vm4930, %vm4931
        %v4933 = vsel %vm4932, %v4925, %v4929
        %v4934 = vand.u32 2147483647, %v4692
        %vm4935 = vcmp.eq.f32.partialorder %v4934, 8.507059e+37
        %v4936 = vand.u32 %v4692, 2147483648
        %v4937 = vor.u32 1.1754944e-38, %v4936
        %v4938 = vsel %vm4935, %v4937, %v4933
        %v4939 = vrcp.pop %v4693
        %v4940 = vmul.f32 %v4693, %v4939
        %v4941 = vsub.f32 1.0, %v4940
        %v4942 = vmul.f32 %v4939, %v4941
        %v4943 = vadd.f32 %v4939, %v4942
        %vm4944 = vweird.f32 %v4693
        %vm4945 = vweird.f32 %v4939
        %vm4946 = vmor %vm4944, %vm4945
        %v4947 = vsel %vm4946, %v4939, %v4943
        %v4948 = vand.u32 2147483647, %v4693
        %vm4949 = vcmp.eq.f32.partialorder %v4948, 8.507059e+37
        %v4950 = vand.u32 %v4693, 2147483648
        %v4951 = vor.u32 1.1754944e-38, %v4950
        %v4952 = vsel %vm4949, %v4951, %v4947
        %v4953 = vrcp.pop %v4694
        %v4954 = vmul.f32 %v4694, %v4953
        %v4955 = vsub.f32 1.0, %v4954
        %v4956 = vmul.f32 %v4953, %v4955
        %v4957 = vadd.f32 %v4953, %v4956
        %vm4958 = vweird.f32 %v4694
        %vm4959 = vweird.f32 %v4953
        %vm4960 = vmor %vm4958, %vm4959
        %v4961 = vsel %vm4960, %v4953, %v4957
        %v4962 = vand.u32 2147483647, %v4694
        %vm4963 = vcmp.eq.f32.partialorder %v4962, 8.507059e+37
        %v4964 = vand.u32 %v4694, 2147483648
        %v4965 = vor.u32 1.1754944e-38, %v4964
        %v4966 = vsel %vm4963, %v4965, %v4961
        %v4967 = vrcp.pop %v4695
        %v4968 = vmul.f32 %v4695, %v4967
        %v4969 = vsub.f32 1.0, %v4968
        %v4970 = vmul.f32 %v4967, %v4969
        %v4971 = vadd.f32 %v4967, %v4970
        %vm4972 = vweird.f32 %v4695
        %vm4973 = vweird.f32 %v4967
        %vm4974 = vmor %vm4972, %vm4973
        %v4975 = vsel %vm4974, %v4967, %v4971
        %v4976 = vand.u32 2147483647, %v4695
        %vm4977 = vcmp.eq.f32.partialorder %v4976, 8.507059e+37
        %v4978 = vand.u32 %v4695, 2147483648
        %v4979 = vor.u32 1.1754944e-38, %v4978
        %v4980 = vsel %vm4977, %v4979, %v4975
        %v4981 = vrcp.pop %v4696
        %v4982 = vmul.f32 %v4696, %v4981
        %v4983 = vsub.f32 1.0, %v4982
        %v4984 = vmul.f32 %v4981, %v4983
        %v4985 = vadd.f32 %v4981, %v4984
        %vm4986 = vweird.f32 %v4696
        %vm4987 = vweird.f32 %v4981
        %vm4988 = vmor %vm4986, %vm4987
        %v4989 = vsel %vm4988, %v4981, %v4985
        %v4990 = vand.u32 2147483647, %v4696
        %vm4991 = vcmp.eq.f32.partialorder %v4990, 8.507059e+37
        %v4992 = vand.u32 %v4696, 2147483648
        %v4993 = vor.u32 1.1754944e-38, %v4992
        %v4994 = vsel %vm4991, %v4993, %v4989
        %v4995 = vrcp.pop %v4697
        %v4996 = vmul.f32 %v4697, %v4995
        %v4997 = vsub.f32 1.0, %v4996
        %v4998 = vmul.f32 %v4995, %v4997
        %v4999 = vadd.f32 %v4995, %v4998
        %vm5000 = vweird.f32 %v4697
        %vm5001 = vweird.f32 %v4995
        %vm5002 = vmor %vm5000, %vm5001
        %v5003 = vsel %vm5002, %v4995, %v4999
        %v5004 = vand.u32 2147483647, %v4697
        %vm5005 = vcmp.eq.f32.partialorder %v5004, 8.507059e+37
        %v5006 = vand.u32 %v4697, 2147483648
        %v5007 = vor.u32 1.1754944e-38, %v5006
        %v5008 = vsel %vm5005, %v5007, %v5003
        %v5009 = vrcp.pop %v4698
        %v5010 = vmul.f32 %v4698, %v5009
        %v5011 = vsub.f32 1.0, %v5010
        %v5012 = vmul.f32 %v5009, %v5011
        %v5013 = vadd.f32 %v5009, %v5012
        %vm5014 = vweird.f32 %v4698
        %vm5015 = vweird.f32 %v5009
        %vm5016 = vmor %vm5014, %vm5015
        %v5017 = vsel %vm5016, %v5009, %v5013
        %v5018 = vand.u32 2147483647, %v4698
        %vm5019 = vcmp.eq.f32.partialorder %v5018, 8.507059e+37
        %v5020 = vand.u32 %v4698, 2147483648
        %v5021 = vor.u32 1.1754944e-38, %v5020
        %v5022 = vsel %vm5019, %v5021, %v5017
        %v5023 = vrcp.pop %v4699
        %v5024 = vmul.f32 %v4699, %v5023
        %v5025 = vsub.f32 1.0, %v5024
        %v5026 = vmul.f32 %v5023, %v5025
        %v5027 = vadd.f32 %v5023, %v5026
        %vm5028 = vweird.f32 %v4699
        %vm5029 = vweird.f32 %v5023
        %vm5030 = vmor %vm5028, %vm5029
        %v5031 = vsel %vm5030, %v5023, %v5027
        %v5032 = vand.u32 2147483647, %v4699
        %vm5033 = vcmp.eq.f32.partialorder %v5032, 8.507059e+37
        %v5034 = vand.u32 %v4699, 2147483648
        %v5035 = vor.u32 1.1754944e-38, %v5034
        %v5036 = vsel %vm5033, %v5035, %v5031
        %v5037 = vrcp.pop %v4700
        %v5038 = vmul.f32 %v4700, %v5037
        %v5039 = vsub.f32 1.0, %v5038
        %v5040 = vmul.f32 %v5037, %v5039
        %v5041 = vadd.f32 %v5037, %v5040
        %vm5042 = vweird.f32 %v4700
        %vm5043 = vweird.f32 %v5037
        %vm5044 = vmor %vm5042, %vm5043
        %v5045 = vsel %vm5044, %v5037, %v5041
        %v5046 = vand.u32 2147483647, %v4700
        %vm5047 = vcmp.eq.f32.partialorder %v5046, 8.507059e+37
        %v5048 = vand.u32 %v4700, 2147483648
        %v5049 = vor.u32 1.1754944e-38, %v5048
        %v5050 = vsel %vm5047, %v5049, %v5045
        %v5051 = vrcp.pop %v4701
        %v5052 = vmul.f32 %v4701, %v5051
        %v5053 = vsub.f32 1.0, %v5052
        %v5054 = vmul.f32 %v5051, %v5053
        %v5055 = vadd.f32 %v5051, %v5054
        %vm5056 = vweird.f32 %v4701
        %vm5057 = vweird.f32 %v5051
        %vm5058 = vmor %vm5056, %vm5057
        %v5059 = vsel %vm5058, %v5051, %v5055
        %v5060 = vand.u32 2147483647, %v4701
        %vm5061 = vcmp.eq.f32.partialorder %v5060, 8.507059e+37
        %v5062 = vand.u32 %v4701, 2147483648
        %v5063 = vor.u32 1.1754944e-38, %v5062
        %v5064 = vsel %vm5061, %v5063, %v5059
        %v5065 = vrcp.pop %v4702
        %v5066 = vmul.f32 %v4702, %v5065
        %v5067 = vsub.f32 1.0, %v5066
        %v5068 = vmul.f32 %v5065, %v5067
        %v5069 = vadd.f32 %v5065, %v5068
        %vm5070 = vweird.f32 %v4702
        %vm5071 = vweird.f32 %v5065
        %vm5072 = vmor %vm5070, %vm5071
        %v5073 = vsel %vm5072, %v5065, %v5069
        %v5074 = vand.u32 2147483647, %v4702
        %vm5075 = vcmp.eq.f32.partialorder %v5074, 8.507059e+37
        %v5076 = vand.u32 %v4702, 2147483648
        %v5077 = vor.u32 1.1754944e-38, %v5076
        %v5078 = vsel %vm5075, %v5077, %v5073
        %v5079 = vrcp.pop %v4703
        %v5080 = vmul.f32 %v4703, %v5079
        %v5081 = vsub.f32 1.0, %v5080
        %v5082 = vmul.f32 %v5079, %v5081
        %v5083 = vadd.f32 %v5079, %v5082
        %vm5084 = vweird.f32 %v4703
        %vm5085 = vweird.f32 %v5079
        %vm5086 = vmor %vm5084, %vm5085
        %v5087 = vsel %vm5086, %v5079, %v5083
        %v5088 = vand.u32 2147483647, %v4703
        %vm5089 = vcmp.eq.f32.partialorder %v5088, 8.507059e+37
        %v5090 = vand.u32 %v4703, 2147483648
        %v5091 = vor.u32 1.1754944e-38, %v5090
        %v5092 = vsel %vm5089, %v5091, %v5087
        %v5093 = vrcp.pop %v4704
        %v5094 = vmul.f32 %v4704, %v5093
        %v5095 = vsub.f32 1.0, %v5094
        %v5096 = vmul.f32 %v5093, %v5095
        %v5097 = vadd.f32 %v5093, %v5096
        %vm5098 = vweird.f32 %v4704
        %vm5099 = vweird.f32 %v5093
        %vm5100 = vmor %vm5098, %vm5099
        %v5101 = vsel %vm5100, %v5093, %v5097
        %v5102 = vand.u32 2147483647, %v4704
        %vm5103 = vcmp.eq.f32.partialorder %v5102, 8.507059e+37
        %v5104 = vand.u32 %v4704, 2147483648
        %v5105 = vor.u32 1.1754944e-38, %v5104
        %v5106 = vsel %vm5103, %v5105, %v5101
        %v5107 = vrcp.pop %v4705
        %v5108 = vmul.f32 %v4705, %v5107
        %v5109 = vsub.f32 1.0, %v5108
        %v5110 = vmul.f32 %v5107, %v5109
        %v5111 = vadd.f32 %v5107, %v5110
        %vm5112 = vweird.f32 %v4705
        %vm5113 = vweird.f32 %v5107
        %vm5114 = vmor %vm5112, %vm5113
        %v5115 = vsel %vm5114, %v5107, %v5111
        %v5116 = vand.u32 2147483647, %v4705
        %vm5117 = vcmp.eq.f32.partialorder %v5116, 8.507059e+37
        %v5118 = vand.u32 %v4705, 2147483648
        %v5119 = vor.u32 1.1754944e-38, %v5118
        %v5120 = vsel %vm5117, %v5119, %v5115
        %v5121 = vrcp.pop %v4706
        %v5122 = vmul.f32 %v4706, %v5121
        %v5123 = vsub.f32 1.0, %v5122
        %v5124 = vmul.f32 %v5121, %v5123
        %v5125 = vadd.f32 %v5121, %v5124
        %vm5126 = vweird.f32 %v4706
        %vm5127 = vweird.f32 %v5121
        %vm5128 = vmor %vm5126, %vm5127
        %v5129 = vsel %vm5128, %v5121, %v5125
        %v5130 = vand.u32 2147483647, %v4706
        %vm5131 = vcmp.eq.f32.partialorder %v5130, 8.507059e+37
        %v5132 = vand.u32 %v4706, 2147483648
        %v5133 = vor.u32 1.1754944e-38, %v5132
        %v5134 = vsel %vm5131, %v5133, %v5129
        %v5135 = vrcp.pop %v4707
        %v5136 = vmul.f32 %v4707, %v5135
        %v5137 = vsub.f32 1.0, %v5136
        %v5138 = vmul.f32 %v5135, %v5137
        %v5139 = vadd.f32 %v5135, %v5138
        %vm5140 = vweird.f32 %v4707
        %vm5141 = vweird.f32 %v5135
        %vm5142 = vmor %vm5140, %vm5141
        %v5143 = vsel %vm5142, %v5135, %v5139
        %v5144 = vand.u32 2147483647, %v4707
        %vm5145 = vcmp.eq.f32.partialorder %v5144, 8.507059e+37
        %v5146 = vand.u32 %v4707, 2147483648
        %v5147 = vor.u32 1.1754944e-38, %v5146
        %v5148 = vsel %vm5145, %v5147, %v5143
        %v5149 = vrcp.pop %v4708
        %v5150 = vmul.f32 %v4708, %v5149
        %v5151 = vsub.f32 1.0, %v5150
        %v5152 = vmul.f32 %v5149, %v5151
        %v5153 = vadd.f32 %v5149, %v5152
        %vm5154 = vweird.f32 %v4708
        %vm5155 = vweird.f32 %v5149
        %vm5156 = vmor %vm5154, %vm5155
        %v5157 = vsel %vm5156, %v5149, %v5153
        %v5158 = vand.u32 2147483647, %v4708
        %vm5159 = vcmp.eq.f32.partialorder %v5158, 8.507059e+37
        %v5160 = vand.u32 %v4708, 2147483648
        %v5161 = vor.u32 1.1754944e-38, %v5160
        %v5162 = vsel %vm5159, %v5161, %v5157
        %v5163 = vrcp.pop %v4709
        %v5164 = vmul.f32 %v4709, %v5163
        %v5165 = vsub.f32 1.0, %v5164
        %v5166 = vmul.f32 %v5163, %v5165
        %v5167 = vadd.f32 %v5163, %v5166
        %vm5168 = vweird.f32 %v4709
        %vm5169 = vweird.f32 %v5163
        %vm5170 = vmor %vm5168, %vm5169
        %v5171 = vsel %vm5170, %v5163, %v5167
        %v5172 = vand.u32 2147483647, %v4709
        %vm5173 = vcmp.eq.f32.partialorder %v5172, 8.507059e+37
        %v5174 = vand.u32 %v4709, 2147483648
        %v5175 = vor.u32 1.1754944e-38, %v5174
        %v5176 = vsel %vm5173, %v5175, %v5171
        %v5177 = vrcp.pop %v4710
        %v5178 = vmul.f32 %v4710, %v5177
        %v5179 = vsub.f32 1.0, %v5178
        %v5180 = vmul.f32 %v5177, %v5179
        %v5181 = vadd.f32 %v5177, %v5180
        %vm5182 = vweird.f32 %v4710
        %vm5183 = vweird.f32 %v5177
        %vm5184 = vmor %vm5182, %vm5183
        %v5185 = vsel %vm5184, %v5177, %v5181
        %v5186 = vand.u32 2147483647, %v4710
        %vm5187 = vcmp.eq.f32.partialorder %v5186, 8.507059e+37
        %v5188 = vand.u32 %v4710, 2147483648
        %v5189 = vor.u32 1.1754944e-38, %v5188
        %v5190 = vsel %vm5187, %v5189, %v5185
        %v5191 = vrcp.pop %v4711
        %v5192 = vmul.f32 %v4711, %v5191
        %v5193 = vsub.f32 1.0, %v5192
        %v5194 = vmul.f32 %v5191, %v5193
        %v5195 = vadd.f32 %v5191, %v5194
        %vm5196 = vweird.f32 %v4711
        %vm5197 = vweird.f32 %v5191
        %vm5198 = vmor %vm5196, %vm5197
        %v5199 = vsel %vm5198, %v5191, %v5195
        %v5200 = vand.u32 2147483647, %v4711
        %vm5201 = vcmp.eq.f32.partialorder %v5200, 8.507059e+37
        %v5202 = vand.u32 %v4711, 2147483648
        %v5203 = vor.u32 1.1754944e-38, %v5202
        %v5204 = vsel %vm5201, %v5203, %v5199
        %v5205 = vrcp.pop %v4712
        %v5206 = vmul.f32 %v4712, %v5205
        %v5207 = vsub.f32 1.0, %v5206
        %v5208 = vmul.f32 %v5205, %v5207
        %v5209 = vadd.f32 %v5205, %v5208
        %vm5210 = vweird.f32 %v4712
        %vm5211 = vweird.f32 %v5205
        %vm5212 = vmor %vm5210, %vm5211
        %v5213 = vsel %vm5212, %v5205, %v5209
        %v5214 = vand.u32 2147483647, %v4712
        %vm5215 = vcmp.eq.f32.partialorder %v5214, 8.507059e+37
        %v5216 = vand.u32 %v4712, 2147483648
        %v5217 = vor.u32 1.1754944e-38, %v5216
        %v5218 = vsel %vm5215, %v5217, %v5213
        %v5219 = vrcp.pop %v4713
        %v5220 = vmul.f32 %v4713, %v5219
        %v5221 = vsub.f32 1.0, %v5220
        %v5222 = vmul.f32 %v5219, %v5221
        %v5223 = vadd.f32 %v5219, %v5222
        %vm5224 = vweird.f32 %v4713
        %vm5225 = vweird.f32 %v5219
        %vm5226 = vmor %vm5224, %vm5225
        %v5227 = vsel %vm5226, %v5219, %v5223
        %v5228 = vand.u32 2147483647, %v4713
        %vm5229 = vcmp.eq.f32.partialorder %v5228, 8.507059e+37
        %v5230 = vand.u32 %v4713, 2147483648
        %v5231 = vor.u32 1.1754944e-38, %v5230
        %v5232 = vsel %vm5229, %v5231, %v5227
        %v5233 = vrcp.pop %v4714
        %v5234 = vmul.f32 %v4714, %v5233
        %v5235 = vsub.f32 1.0, %v5234
        %v5236 = vmul.f32 %v5233, %v5235
        %v5237 = vadd.f32 %v5233, %v5236
        %vm5238 = vweird.f32 %v4714
        %vm5239 = vweird.f32 %v5233
        %vm5240 = vmor %vm5238, %vm5239
        %v5241 = vsel %vm5240, %v5233, %v5237
        %v5242 = vand.u32 2147483647, %v4714
        %vm5243 = vcmp.eq.f32.partialorder %v5242, 8.507059e+37
        %v5244 = vand.u32 %v4714, 2147483648
        %v5245 = vor.u32 1.1754944e-38, %v5244
        %v5246 = vsel %vm5243, %v5245, %v5241
        %v5247 = vrcp.pop %v4715
        %v5248 = vmul.f32 %v4715, %v5247
        %v5249 = vsub.f32 1.0, %v5248
        %v5250 = vmul.f32 %v5247, %v5249
        %v5251 = vadd.f32 %v5247, %v5250
        %vm5252 = vweird.f32 %v4715
        %vm5253 = vweird.f32 %v5247
        %vm5254 = vmor %vm5252, %vm5253
        %v5255 = vsel %vm5254, %v5247, %v5251
        %v5256 = vand.u32 2147483647, %v4715
        %vm5257 = vcmp.eq.f32.partialorder %v5256, 8.507059e+37
        %v5258 = vand.u32 %v4715, 2147483648
        %v5259 = vor.u32 1.1754944e-38, %v5258
        %v5260 = vsel %vm5257, %v5259, %v5255
        %v5261 = vrcp.pop %v4716
        %v5262 = vmul.f32 %v4716, %v5261
        %v5263 = vsub.f32 1.0, %v5262
        %v5264 = vmul.f32 %v5261, %v5263
        %v5265 = vadd.f32 %v5261, %v5264
        %vm5266 = vweird.f32 %v4716
        %vm5267 = vweird.f32 %v5261
        %vm5268 = vmor %vm5266, %vm5267
        %v5269 = vsel %vm5268, %v5261, %v5265
        %v5270 = vand.u32 2147483647, %v4716
        %vm5271 = vcmp.eq.f32.partialorder %v5270, 8.507059e+37
        %v5272 = vand.u32 %v4716, 2147483648
        %v5273 = vor.u32 1.1754944e-38, %v5272
        %v5274 = vsel %vm5271, %v5273, %v5269
        %v5275 = vrcp.pop %v4717
        %v5276 = vmul.f32 %v4717, %v5275
        %v5277 = vsub.f32 1.0, %v5276
        %v5278 = vmul.f32 %v5275, %v5277
        %v5279 = vadd.f32 %v5275, %v5278
        %vm5280 = vweird.f32 %v4717
        %vm5281 = vweird.f32 %v5275
        %vm5282 = vmor %vm5280, %vm5281
        %v5283 = vsel %vm5282, %v5275, %v5279
        %v5284 = vand.u32 2147483647, %v4717
        %vm5285 = vcmp.eq.f32.partialorder %v5284, 8.507059e+37
        %v5286 = vand.u32 %v4717, 2147483648
        %v5287 = vor.u32 1.1754944e-38, %v5286
        %v5288 = vsel %vm5285, %v5287, %v5283
        %v5289 = vrcp.pop %v4718
        %v5290 = vmul.f32 %v4718, %v5289
        %v5291 = vsub.f32 1.0, %v5290
        %v5292 = vmul.f32 %v5289, %v5291
        %v5293 = vadd.f32 %v5289, %v5292
        %vm5294 = vweird.f32 %v4718
        %vm5295 = vweird.f32 %v5289
        %vm5296 = vmor %vm5294, %vm5295
        %v5297 = vsel %vm5296, %v5289, %v5293
        %v5298 = vand.u32 2147483647, %v4718
        %vm5299 = vcmp.eq.f32.partialorder %v5298, 8.507059e+37
        %v5300 = vand.u32 %v4718, 2147483648
        %v5301 = vor.u32 1.1754944e-38, %v5300
        %v5302 = vsel %vm5299, %v5301, %v5297
        %v5303 = vrcp.pop %v4719
        %v5304 = vmul.f32 %v4719, %v5303
        %v5305 = vsub.f32 1.0, %v5304
        %v5306 = vmul.f32 %v5303, %v5305
        %v5307 = vadd.f32 %v5303, %v5306
        %vm5308 = vweird.f32 %v4719
        %vm5309 = vweird.f32 %v5303
        %vm5310 = vmor %vm5308, %vm5309
        %v5311 = vsel %vm5310, %v5303, %v5307
        %v5312 = vand.u32 2147483647, %v4719
        %vm5313 = vcmp.eq.f32.partialorder %v5312, 8.507059e+37
        %v5314 = vand.u32 %v4719, 2147483648
        %v5315 = vor.u32 1.1754944e-38, %v5314
        %v5316 = vsel %vm5313, %v5315, %v5311
        %v5317 = vrcp.pop %v4720
        %v5318 = vmul.f32 %v4720, %v5317
        %v5319 = vsub.f32 1.0, %v5318
        %v5320 = vmul.f32 %v5317, %v5319
        %v5321 = vadd.f32 %v5317, %v5320
        %vm5322 = vweird.f32 %v4720
        %vm5323 = vweird.f32 %v5317
        %vm5324 = vmor %vm5322, %vm5323
        %v5325 = vsel %vm5324, %v5317, %v5321
        %v5326 = vand.u32 2147483647, %v4720
        %vm5327 = vcmp.eq.f32.partialorder %v5326, 8.507059e+37
        %v5328 = vand.u32 %v4720, 2147483648
        %v5329 = vor.u32 1.1754944e-38, %v5328
        %v5330 = vsel %vm5327, %v5329, %v5325
        %v5331 = vrcp.pop %v4721
        %v5332 = vmul.f32 %v4721, %v5331
        %v5333 = vsub.f32 1.0, %v5332
        %v5334 = vmul.f32 %v5331, %v5333
        %v5335 = vadd.f32 %v5331, %v5334
        %vm5336 = vweird.f32 %v4721
        %vm5337 = vweird.f32 %v5331
        %vm5338 = vmor %vm5336, %vm5337
        %v5339 = vsel %vm5338, %v5331, %v5335
        %v5340 = vand.u32 2147483647, %v4721
        %vm5341 = vcmp.eq.f32.partialorder %v5340, 8.507059e+37
        %v5342 = vand.u32 %v4721, 2147483648
        %v5343 = vor.u32 1.1754944e-38, %v5342
        %v5344 = vsel %vm5341, %v5343, %v5339
        %v5345 = vrcp.pop %v4722
        %v5346 = vmul.f32 %v4722, %v5345
        %v5347 = vsub.f32 1.0, %v5346
        %v5348 = vmul.f32 %v5345, %v5347
        %v5349 = vadd.f32 %v5345, %v5348
        %vm5350 = vweird.f32 %v4722
        %vm5351 = vweird.f32 %v5345
        %vm5352 = vmor %vm5350, %vm5351
        %v5353 = vsel %vm5352, %v5345, %v5349
        %v5354 = vand.u32 2147483647, %v4722
        %vm5355 = vcmp.eq.f32.partialorder %v5354, 8.507059e+37
        %v5356 = vand.u32 %v4722, 2147483648
        %v5357 = vor.u32 1.1754944e-38, %v5356
        %v5358 = vsel %vm5355, %v5357, %v5353
        %v5359 = vrcp.pop %v4723
        %v5360 = vmul.f32 %v4723, %v5359
        %v5361 = vsub.f32 1.0, %v5360
        %v5362 = vmul.f32 %v5359, %v5361
        %v5363 = vadd.f32 %v5359, %v5362
        %vm5364 = vweird.f32 %v4723
        %vm5365 = vweird.f32 %v5359
        %vm5366 = vmor %vm5364, %vm5365
        %v5367 = vsel %vm5366, %v5359, %v5363
        %v5368 = vand.u32 2147483647, %v4723
        %vm5369 = vcmp.eq.f32.partialorder %v5368, 8.507059e+37
        %v5370 = vand.u32 %v4723, 2147483648
        %v5371 = vor.u32 1.1754944e-38, %v5370
        %v5372 = vsel %vm5369, %v5371, %v5367
        %v5373 = vrcp.pop %v4724
        %v5374 = vmul.f32 %v4724, %v5373
        %v5375 = vsub.f32 1.0, %v5374
        %v5376 = vmul.f32 %v5373, %v5375
        %v5377 = vadd.f32 %v5373, %v5376
        %vm5378 = vweird.f32 %v4724
        %vm5379 = vweird.f32 %v5373
        %vm5380 = vmor %vm5378, %vm5379
        %v5381 = vsel %vm5380, %v5373, %v5377
        %v5382 = vand.u32 2147483647, %v4724
        %vm5383 = vcmp.eq.f32.partialorder %v5382, 8.507059e+37
        %v5384 = vand.u32 %v4724, 2147483648
        %v5385 = vor.u32 1.1754944e-38, %v5384
        %v5386 = vsel %vm5383, %v5385, %v5381
        %v5387 = vrcp.pop %v4725
        %v5388 = vmul.f32 %v4725, %v5387
        %v5389 = vsub.f32 1.0, %v5388
        %v5390 = vmul.f32 %v5387, %v5389
        %v5391 = vadd.f32 %v5387, %v5390
        %vm5392 = vweird.f32 %v4725
        %vm5393 = vweird.f32 %v5387
        %vm5394 = vmor %vm5392, %vm5393
        %v5395 = vsel %vm5394, %v5387, %v5391
        %v5396 = vand.u32 2147483647, %v4725
        %vm5397 = vcmp.eq.f32.partialorder %v5396, 8.507059e+37
        %v5398 = vand.u32 %v4725, 2147483648
        %v5399 = vor.u32 1.1754944e-38, %v5398
        %v5400 = vsel %vm5397, %v5399, %v5395
        %v5401 = vrcp.pop %v4726
        %v5402 = vmul.f32 %v4726, %v5401
        %v5403 = vsub.f32 1.0, %v5402
        %v5404 = vmul.f32 %v5401, %v5403
        %v5405 = vadd.f32 %v5401, %v5404
        %vm5406 = vweird.f32 %v4726
        %vm5407 = vweird.f32 %v5401
        %vm5408 = vmor %vm5406, %vm5407
        %v5409 = vsel %vm5408, %v5401, %v5405
        %v5410 = vand.u32 2147483647, %v4726
        %vm5411 = vcmp.eq.f32.partialorder %v5410, 8.507059e+37
        %v5412 = vand.u32 %v4726, 2147483648
        %v5413 = vor.u32 1.1754944e-38, %v5412
        %v5414 = vsel %vm5411, %v5413, %v5409
        %v5415 = vrcp.pop %v4727
        %v5416 = vmul.f32 %v4727, %v5415
        %v5417 = vsub.f32 1.0, %v5416
        %v5418 = vmul.f32 %v5415, %v5417
        %v5419 = vadd.f32 %v5415, %v5418
        %vm5420 = vweird.f32 %v4727
        %vm5421 = vweird.f32 %v5415
        %vm5422 = vmor %vm5420, %vm5421
        %v5423 = vsel %vm5422, %v5415, %v5419
        %v5424 = vand.u32 2147483647, %v4727
        %vm5425 = vcmp.eq.f32.partialorder %v5424, 8.507059e+37
        %v5426 = vand.u32 %v4727, 2147483648
        %v5427 = vor.u32 1.1754944e-38, %v5426
        %v5428 = vsel %vm5425, %v5427, %v5423
        %v5429 = vrcp.pop %v4728
        %v5430 = vmul.f32 %v4728, %v5429
        %v5431 = vsub.f32 1.0, %v5430
        %v5432 = vmul.f32 %v5429, %v5431
        %v5433 = vadd.f32 %v5429, %v5432
        %vm5434 = vweird.f32 %v4728
        %vm5435 = vweird.f32 %v5429
        %vm5436 = vmor %vm5434, %vm5435
        %v5437 = vsel %vm5436, %v5429, %v5433
        %v5438 = vand.u32 2147483647, %v4728
        %vm5439 = vcmp.eq.f32.partialorder %v5438, 8.507059e+37
        %v5440 = vand.u32 %v4728, 2147483648
        %v5441 = vor.u32 1.1754944e-38, %v5440
        %v5442 = vsel %vm5439, %v5441, %v5437
        %v5443 = vrcp.pop %v4729
        %v5444 = vmul.f32 %v4729, %v5443
        %v5445 = vsub.f32 1.0, %v5444
        %v5446 = vmul.f32 %v5443, %v5445
        %v5447 = vadd.f32 %v5443, %v5446
        %vm5448 = vweird.f32 %v4729
        %vm5449 = vweird.f32 %v5443
        %vm5450 = vmor %vm5448, %vm5449
        %v5451 = vsel %vm5450, %v5443, %v5447
        %v5452 = vand.u32 2147483647, %v4729
        %vm5453 = vcmp.eq.f32.partialorder %v5452, 8.507059e+37
        %v5454 = vand.u32 %v4729, 2147483648
        %v5455 = vor.u32 1.1754944e-38, %v5454
        %v5456 = vsel %vm5453, %v5455, %v5451
        %v5457 = vrcp.pop %v4730
        %v5458 = vmul.f32 %v4730, %v5457
        %v5459 = vsub.f32 1.0, %v5458
        %v5460 = vmul.f32 %v5457, %v5459
        %v5461 = vadd.f32 %v5457, %v5460
        %vm5462 = vweird.f32 %v4730
        %vm5463 = vweird.f32 %v5457
        %vm5464 = vmor %vm5462, %vm5463
        %v5465 = vsel %vm5464, %v5457, %v5461
        %v5466 = vand.u32 2147483647, %v4730
        %vm5467 = vcmp.eq.f32.partialorder %v5466, 8.507059e+37
        %v5468 = vand.u32 %v4730, 2147483648
        %v5469 = vor.u32 1.1754944e-38, %v5468
        %v5470 = vsel %vm5467, %v5469, %v5465
        %v5471 = vrcp.pop %v4731
        %v5472 = vmul.f32 %v4731, %v5471
        %v5473 = vsub.f32 1.0, %v5472
        %v5474 = vmul.f32 %v5471, %v5473
        %v5475 = vadd.f32 %v5471, %v5474
        %vm5476 = vweird.f32 %v4731
        %vm5477 = vweird.f32 %v5471
        %vm5478 = vmor %vm5476, %vm5477
        %v5479 = vsel %vm5478, %v5471, %v5475
        %v5480 = vand.u32 2147483647, %v4731
        %vm5481 = vcmp.eq.f32.partialorder %v5480, 8.507059e+37
        %v5482 = vand.u32 %v4731, 2147483648
        %v5483 = vor.u32 1.1754944e-38, %v5482
        %v5484 = vsel %vm5481, %v5483, %v5479
        %v5485 = vrcp.pop %v4732
        %v5486 = vmul.f32 %v4732, %v5485
        %v5487 = vsub.f32 1.0, %v5486
        %v5488 = vmul.f32 %v5485, %v5487
        %v5489 = vadd.f32 %v5485, %v5488
        %vm5490 = vweird.f32 %v4732
        %vm5491 = vweird.f32 %v5485
        %vm5492 = vmor %vm5490, %vm5491
        %v5493 = vsel %vm5492, %v5485, %v5489
        %v5494 = vand.u32 2147483647, %v4732
        %vm5495 = vcmp.eq.f32.partialorder %v5494, 8.507059e+37
        %v5496 = vand.u32 %v4732, 2147483648
        %v5497 = vor.u32 1.1754944e-38, %v5496
        %v5498 = vsel %vm5495, %v5497, %v5493
        %v5499 = vrcp.pop %v4733
        %v5500 = vmul.f32 %v4733, %v5499
        %v5501 = vsub.f32 1.0, %v5500
        %v5502 = vmul.f32 %v5499, %v5501
        %v5503 = vadd.f32 %v5499, %v5502
        %vm5504 = vweird.f32 %v4733
        %vm5505 = vweird.f32 %v5499
        %vm5506 = vmor %vm5504, %vm5505
        %v5507 = vsel %vm5506, %v5499, %v5503
        %v5508 = vand.u32 2147483647, %v4733
        %vm5509 = vcmp.eq.f32.partialorder %v5508, 8.507059e+37
        %v5510 = vand.u32 %v4733, 2147483648
        %v5511 = vor.u32 1.1754944e-38, %v5510
        %v5512 = vsel %vm5509, %v5511, %v5507
        %v5513 = vrcp.pop %v4734
        %v5514 = vmul.f32 %v4734, %v5513
        %v5515 = vsub.f32 1.0, %v5514
        %v5516 = vmul.f32 %v5513, %v5515
        %v5517 = vadd.f32 %v5513, %v5516
        %vm5518 = vweird.f32 %v4734
        %vm5519 = vweird.f32 %v5513
        %vm5520 = vmor %vm5518, %vm5519
        %v5521 = vsel %vm5520, %v5513, %v5517
        %v5522 = vand.u32 2147483647, %v4734
        %vm5523 = vcmp.eq.f32.partialorder %v5522, 8.507059e+37
        %v5524 = vand.u32 %v4734, 2147483648
        %v5525 = vor.u32 1.1754944e-38, %v5524
        %v5526 = vsel %vm5523, %v5525, %v5521
        %v5527 = vrcp.pop %v4735
        %v5528 = vmul.f32 %v4735, %v5527
        %v5529 = vsub.f32 1.0, %v5528
        %v5530 = vmul.f32 %v5527, %v5529
        %v5531 = vadd.f32 %v5527, %v5530
        %vm5532 = vweird.f32 %v4735
        %vm5533 = vweird.f32 %v5527
        %vm5534 = vmor %vm5532, %vm5533
        %v5535 = vsel %vm5534, %v5527, %v5531
        %v5536 = vand.u32 2147483647, %v4735
        %vm5537 = vcmp.eq.f32.partialorder %v5536, 8.507059e+37
        %v5538 = vand.u32 %v4735, 2147483648
        %v5539 = vor.u32 1.1754944e-38, %v5538
        %v5540 = vsel %vm5537, %v5539, %v5535
        %v5541 = vrcp.pop %v4736
        %v5542 = vmul.f32 %v4736, %v5541
        %v5543 = vsub.f32 1.0, %v5542
        %v5544 = vmul.f32 %v5541, %v5543
        %v5545 = vadd.f32 %v5541, %v5544
        %vm5546 = vweird.f32 %v4736
        %vm5547 = vweird.f32 %v5541
        %vm5548 = vmor %vm5546, %vm5547
        %v5549 = vsel %vm5548, %v5541, %v5545
        %v5550 = vand.u32 2147483647, %v4736
        %vm5551 = vcmp.eq.f32.partialorder %v5550, 8.507059e+37
        %v5552 = vand.u32 %v4736, 2147483648
        %v5553 = vor.u32 1.1754944e-38, %v5552
        %v5554 = vsel %vm5551, %v5553, %v5549
        %v5555 = vrcp.pop %v4737
        %v5556 = vmul.f32 %v4737, %v5555
        %v5557 = vsub.f32 1.0, %v5556
        %v5558 = vmul.f32 %v5555, %v5557
        %v5559 = vadd.f32 %v5555, %v5558
        %vm5560 = vweird.f32 %v4737
        %vm5561 = vweird.f32 %v5555
        %vm5562 = vmor %vm5560, %vm5561
        %v5563 = vsel %vm5562, %v5555, %v5559
        %v5564 = vand.u32 2147483647, %v4737
        %vm5565 = vcmp.eq.f32.partialorder %v5564, 8.507059e+37
        %v5566 = vand.u32 %v4737, 2147483648
        %v5567 = vor.u32 1.1754944e-38, %v5566
        %v5568 = vsel %vm5565, %v5567, %v5563
        %v5569 = vrcp.pop %v4738
        %v5570 = vmul.f32 %v4738, %v5569
        %v5571 = vsub.f32 1.0, %v5570
        %v5572 = vmul.f32 %v5569, %v5571
        %v5573 = vadd.f32 %v5569, %v5572
        %vm5574 = vweird.f32 %v4738
        %vm5575 = vweird.f32 %v5569
        %vm5576 = vmor %vm5574, %vm5575
        %v5577 = vsel %vm5576, %v5569, %v5573
        %v5578 = vand.u32 2147483647, %v4738
        %vm5579 = vcmp.eq.f32.partialorder %v5578, 8.507059e+37
        %v5580 = vand.u32 %v4738, 2147483648
        %v5581 = vor.u32 1.1754944e-38, %v5580
        %v5582 = vsel %vm5579, %v5581, %v5577
        %v5583 = vrcp.pop %v4739
        %v5584 = vmul.f32 %v4739, %v5583
        %v5585 = vsub.f32 1.0, %v5584
        %v5586 = vmul.f32 %v5583, %v5585
        %v5587 = vadd.f32 %v5583, %v5586
        %vm5588 = vweird.f32 %v4739
        %vm5589 = vweird.f32 %v5583
        %vm5590 = vmor %vm5588, %vm5589
        %v5591 = vsel %vm5590, %v5583, %v5587
        %v5592 = vand.u32 2147483647, %v4739
        %vm5593 = vcmp.eq.f32.partialorder %v5592, 8.507059e+37
        %v5594 = vand.u32 %v4739, 2147483648
        %v5595 = vor.u32 1.1754944e-38, %v5594
        %v5596 = vsel %vm5593, %v5595, %v5591
        %v5597 = vrcp.pop %v4740
        %v5598 = vmul.f32 %v4740, %v5597
        %v5599 = vsub.f32 1.0, %v5598
        %v5600 = vmul.f32 %v5597, %v5599
        %v5601 = vadd.f32 %v5597, %v5600
        %vm5602 = vweird.f32 %v4740
        %vm5603 = vweird.f32 %v5597
        %vm5604 = vmor %vm5602, %vm5603
        %v5605 = vsel %vm5604, %v5597, %v5601
        %v5606 = vand.u32 2147483647, %v4740
        %vm5607 = vcmp.eq.f32.partialorder %v5606, 8.507059e+37
        %v5608 = vand.u32 %v4740, 2147483648
        %v5609 = vor.u32 1.1754944e-38, %v5608
        %v5610 = vsel %vm5607, %v5609, %v5605
        %v5611 = vrcp.pop %v4741
        %v5612 = vmul.f32 %v4741, %v5611
        %v5613 = vsub.f32 1.0, %v5612
        %v5614 = vmul.f32 %v5611, %v5613
        %v5615 = vadd.f32 %v5611, %v5614
        %vm5616 = vweird.f32 %v4741
        %vm5617 = vweird.f32 %v5611
        %vm5618 = vmor %vm5616, %vm5617
        %v5619 = vsel %vm5618, %v5611, %v5615
        %v5620 = vand.u32 2147483647, %v4741
        %vm5621 = vcmp.eq.f32.partialorder %v5620, 8.507059e+37
        %v5622 = vand.u32 %v4741, 2147483648
        %v5623 = vor.u32 1.1754944e-38, %v5622
        %v5624 = vsel %vm5621, %v5623, %v5619
        %v5625 = vrcp.pop %v4742
        %v5626 = vmul.f32 %v4742, %v5625
        %v5627 = vsub.f32 1.0, %v5626
        %v5628 = vmul.f32 %v5625, %v5627
        %v5629 = vadd.f32 %v5625, %v5628
        %vm5630 = vweird.f32 %v4742
        %vm5631 = vweird.f32 %v5625
        %vm5632 = vmor %vm5630, %vm5631
        %v5633 = vsel %vm5632, %v5625, %v5629
        %v5634 = vand.u32 2147483647, %v4742
        %vm5635 = vcmp.eq.f32.partialorder %v5634, 8.507059e+37
        %v5636 = vand.u32 %v4742, 2147483648
        %v5637 = vor.u32 1.1754944e-38, %v5636
        %v5638 = vsel %vm5635, %v5637, %v5633
        %5640 = vset.pattern.permute.xlu0 0
        %5641 = vperm.xlu0 %5640, %v4756
        %v5642 = vpop.permute.xlu0 %5641
        %5645 = vset.pattern.permute.xlu0 0
        %5646 = vperm.xlu0 %5645, %v4770
        %v5647 = vpop.permute.xlu0 %5646
        %5650 = vset.pattern.permute.xlu0 0
        %5651 = vperm.xlu0 %5650, %v4784
        %v5652 = vpop.permute.xlu0 %5651
        %5655 = vset.pattern.permute.xlu0 0
        %5656 = vperm.xlu0 %5655, %v4798
        %v5657 = vpop.permute.xlu0 %5656
        %5660 = vset.pattern.permute.xlu0 0
        %5661 = vperm.xlu0 %5660, %v4812
        %v5662 = vpop.permute.xlu0 %5661
        %5665 = vset.pattern.permute.xlu0 0
        %5666 = vperm.xlu0 %5665, %v4826
        %v5667 = vpop.permute.xlu0 %5666
        %5670 = vset.pattern.permute.xlu0 0
        %5671 = vperm.xlu0 %5670, %v4840
        %v5672 = vpop.permute.xlu0 %5671
        %5675 = vset.pattern.permute.xlu0 0
        %5676 = vperm.xlu0 %5675, %v4854
        %v5677 = vpop.permute.xlu0 %5676
        %5680 = vset.pattern.permute.xlu0 0
        %5681 = vperm.xlu0 %5680, %v4868
        %v5682 = vpop.permute.xlu0 %5681
        %5685 = vset.pattern.permute.xlu0 0
        %5686 = vperm.xlu0 %5685, %v4882
        %v5687 = vpop.permute.xlu0 %5686
        %5690 = vset.pattern.permute.xlu0 0
        %5691 = vperm.xlu0 %5690, %v4896
        %v5692 = vpop.permute.xlu0 %5691
        %5695 = vset.pattern.permute.xlu0 0
        %5696 = vperm.xlu0 %5695, %v4910
        %v5697 = vpop.permute.xlu0 %5696
        %5700 = vset.pattern.permute.xlu0 0
        %5701 = vperm.xlu0 %5700, %v4924
        %v5702 = vpop.permute.xlu0 %5701
        %5705 = vset.pattern.permute.xlu0 0
        %5706 = vperm.xlu0 %5705, %v4938
        %v5707 = vpop.permute.xlu0 %5706
        %5710 = vset.pattern.permute.xlu0 0
        %5711 = vperm.xlu0 %5710, %v4952
        %v5712 = vpop.permute.xlu0 %5711
        %5715 = vset.pattern.permute.xlu0 0
        %5716 = vperm.xlu0 %5715, %v4966
        %v5717 = vpop.permute.xlu0 %5716
        %5720 = vset.pattern.permute.xlu0 0
        %5721 = vperm.xlu0 %5720, %v4980
        %v5722 = vpop.permute.xlu0 %5721
        %5725 = vset.pattern.permute.xlu0 0
        %5726 = vperm.xlu0 %5725, %v4994
        %v5727 = vpop.permute.xlu0 %5726
        %5730 = vset.pattern.permute.xlu0 0
        %5731 = vperm.xlu0 %5730, %v5008
        %v5732 = vpop.permute.xlu0 %5731
        %5735 = vset.pattern.permute.xlu0 0
        %5736 = vperm.xlu0 %5735, %v5022
        %v5737 = vpop.permute.xlu0 %5736
        %5740 = vset.pattern.permute.xlu0 0
        %5741 = vperm.xlu0 %5740, %v5036
        %v5742 = vpop.permute.xlu0 %5741
        %5745 = vset.pattern.permute.xlu0 0
        %5746 = vperm.xlu0 %5745, %v5050
        %v5747 = vpop.permute.xlu0 %5746
        %5750 = vset.pattern.permute.xlu0 0
        %5751 = vperm.xlu0 %5750, %v5064
        %v5752 = vpop.permute.xlu0 %5751
        %5755 = vset.pattern.permute.xlu0 0
        %5756 = vperm.xlu0 %5755, %v5078
        %v5757 = vpop.permute.xlu0 %5756
        %5760 = vset.pattern.permute.xlu0 0
        %5761 = vperm.xlu0 %5760, %v5092
        %v5762 = vpop.permute.xlu0 %5761
        %5765 = vset.pattern.permute.xlu0 0
        %5766 = vperm.xlu0 %5765, %v5106
        %v5767 = vpop.permute.xlu0 %5766
        %5770 = vset.pattern.permute.xlu0 0
        %5771 = vperm.xlu0 %5770, %v5120
        %v5772 = vpop.permute.xlu0 %5771
        %5775 = vset.pattern.permute.xlu0 0
        %5776 = vperm.xlu0 %5775, %v5134
        %v5777 = vpop.permute.xlu0 %5776
        %5780 = vset.pattern.permute.xlu0 0
        %5781 = vperm.xlu0 %5780, %v5148
        %v5782 = vpop.permute.xlu0 %5781
        %5785 = vset.pattern.permute.xlu0 0
        %5786 = vperm.xlu0 %5785, %v5162
        %v5787 = vpop.permute.xlu0 %5786
        %5790 = vset.pattern.permute.xlu0 0
        %5791 = vperm.xlu0 %5790, %v5176
        %v5792 = vpop.permute.xlu0 %5791
        %5795 = vset.pattern.permute.xlu0 0
        %5796 = vperm.xlu0 %5795, %v5190
        %v5797 = vpop.permute.xlu0 %5796
        %5800 = vset.pattern.permute.xlu0 0
        %5801 = vperm.xlu0 %5800, %v5204
        %v5802 = vpop.permute.xlu0 %5801
        %5805 = vset.pattern.permute.xlu0 0
        %5806 = vperm.xlu0 %5805, %v5218
        %v5807 = vpop.permute.xlu0 %5806
        %5810 = vset.pattern.permute.xlu0 0
        %5811 = vperm.xlu0 %5810, %v5232
        %v5812 = vpop.permute.xlu0 %5811
        %5815 = vset.pattern.permute.xlu0 0
        %5816 = vperm.xlu0 %5815, %v5246
        %v5817 = vpop.permute.xlu0 %5816
        %5820 = vset.pattern.permute.xlu0 0
        %5821 = vperm.xlu0 %5820, %v5260
        %v5822 = vpop.permute.xlu0 %5821
        %5825 = vset.pattern.permute.xlu0 0
        %5826 = vperm.xlu0 %5825, %v5274
        %v5827 = vpop.permute.xlu0 %5826
        %5830 = vset.pattern.permute.xlu0 0
        %5831 = vperm.xlu0 %5830, %v5288
        %v5832 = vpop.permute.xlu0 %5831
        %5835 = vset.pattern.permute.xlu0 0
        %5836 = vperm.xlu0 %5835, %v5302
        %v5837 = vpop.permute.xlu0 %5836
        %5840 = vset.pattern.permute.xlu0 0
        %5841 = vperm.xlu0 %5840, %v5316
        %v5842 = vpop.permute.xlu0 %5841
        %5845 = vset.pattern.permute.xlu0 0
        %5846 = vperm.xlu0 %5845, %v5330
        %v5847 = vpop.permute.xlu0 %5846
        %5850 = vset.pattern.permute.xlu0 0
        %5851 = vperm.xlu0 %5850, %v5344
        %v5852 = vpop.permute.xlu0 %5851
        %5855 = vset.pattern.permute.xlu0 0
        %5856 = vperm.xlu0 %5855, %v5358
        %v5857 = vpop.permute.xlu0 %5856
        %5860 = vset.pattern.permute.xlu0 0
        %5861 = vperm.xlu0 %5860, %v5372
        %v5862 = vpop.permute.xlu0 %5861
        %5865 = vset.pattern.permute.xlu0 0
        %5866 = vperm.xlu0 %5865, %v5386
        %v5867 = vpop.permute.xlu0 %5866
        %5870 = vset.pattern.permute.xlu0 0
        %5871 = vperm.xlu0 %5870, %v5400
        %v5872 = vpop.permute.xlu0 %5871
        %5875 = vset.pattern.permute.xlu0 0
        %5876 = vperm.xlu0 %5875, %v5414
        %v5877 = vpop.permute.xlu0 %5876
        %5880 = vset.pattern.permute.xlu0 0
        %5881 = vperm.xlu0 %5880, %v5428
        %v5882 = vpop.permute.xlu0 %5881
        %5885 = vset.pattern.permute.xlu0 0
        %5886 = vperm.xlu0 %5885, %v5442
        %v5887 = vpop.permute.xlu0 %5886
        %5890 = vset.pattern.permute.xlu0 0
        %5891 = vperm.xlu0 %5890, %v5456
        %v5892 = vpop.permute.xlu0 %5891
        %5895 = vset.pattern.permute.xlu0 0
        %5896 = vperm.xlu0 %5895, %v5470
        %v5897 = vpop.permute.xlu0 %5896
        %5900 = vset.pattern.permute.xlu0 0
        %5901 = vperm.xlu0 %5900, %v5484
        %v5902 = vpop.permute.xlu0 %5901
        %5905 = vset.pattern.permute.xlu0 0
        %5906 = vperm.xlu0 %5905, %v5498
        %v5907 = vpop.permute.xlu0 %5906
        %5910 = vset.pattern.permute.xlu0 0
        %5911 = vperm.xlu0 %5910, %v5512
        %v5912 = vpop.permute.xlu0 %5911
        %5915 = vset.pattern.permute.xlu0 0
        %5916 = vperm.xlu0 %5915, %v5526
        %v5917 = vpop.permute.xlu0 %5916
        %5920 = vset.pattern.permute.xlu0 0
        %5921 = vperm.xlu0 %5920, %v5540
        %v5922 = vpop.permute.xlu0 %5921
        %5925 = vset.pattern.permute.xlu0 0
        %5926 = vperm.xlu0 %5925, %v5554
        %v5927 = vpop.permute.xlu0 %5926
        %5930 = vset.pattern.permute.xlu0 0
        %5931 = vperm.xlu0 %5930, %v5568
        %v5932 = vpop.permute.xlu0 %5931
        %5935 = vset.pattern.permute.xlu0 0
        %5936 = vperm.xlu0 %5935, %v5582
        %v5937 = vpop.permute.xlu0 %5936
        %5940 = vset.pattern.permute.xlu0 0
        %5941 = vperm.xlu0 %5940, %v5596
        %v5942 = vpop.permute.xlu0 %5941
        %5945 = vset.pattern.permute.xlu0 0
        %5946 = vperm.xlu0 %5945, %v5610
        %v5947 = vpop.permute.xlu0 %5946
        %5950 = vset.pattern.permute.xlu0 0
        %5951 = vperm.xlu0 %5950, %v5624
        %v5952 = vpop.permute.xlu0 %5951
        %5955 = vset.pattern.permute.xlu0 0
        %5956 = vperm.xlu0 %5955, %v5638
        %v5957 = vpop.permute.xlu0 %5956
        %v5959 = vmul.f32 %v4615, %v5642
        %v5960 = vmul.f32 %v4616, %v5647
        %v5961 = vmul.f32 %v4617, %v5652
        %v5962 = vmul.f32 %v4618, %v5657
        %v5963 = vmul.f32 %v4619, %v5662
        %v5964 = vmul.f32 %v4620, %v5667
        %v5965 = vmul.f32 %v4621, %v5672
        %v5966 = vmul.f32 %v4622, %v5677
        %v5967 = vmul.f32 %v4623, %v5682
        %v5968 = vmul.f32 %v4624, %v5687
        %v5969 = vmul.f32 %v4625, %v5692
        %v5970 = vmul.f32 %v4626, %v5697
        %v5971 = vmul.f32 %v4627, %v5702
        %v5972 = vmul.f32 %v4628, %v5707
        %v5973 = vmul.f32 %v4629, %v5712
        %v5974 = vmul.f32 %v4630, %v5717
        %v5975 = vmul.f32 %v4631, %v5722
        %v5976 = vmul.f32 %v4632, %v5727
        %v5977 = vmul.f32 %v4633, %v5732
        %v5978 = vmul.f32 %v4634, %v5737
        %v5979 = vmul.f32 %v4635, %v5742
        %v5980 = vmul.f32 %v4636, %v5747
        %v5981 = vmul.f32 %v4637, %v5752
        %v5982 = vmul.f32 %v4638, %v5757
        %v5983 = vmul.f32 %v4639, %v5762
        %v5984 = vmul.f32 %v4640, %v5767
        %v5985 = vmul.f32 %v4641, %v5772
        %v5986 = vmul.f32 %v4642, %v5777
        %v5987 = vmul.f32 %v4643, %v5782
        %v5988 = vmul.f32 %v4644, %v5787
        %v5989 = vmul.f32 %v4645, %v5792
        %v5990 = vmul.f32 %v4646, %v5797
        %v5991 = vmul.f32 %v4647, %v5802
        %v5992 = vmul.f32 %v4648, %v5807
        %v5993 = vmul.f32 %v4649, %v5812
        %v5994 = vmul.f32 %v4650, %v5817
        %v5995 = vmul.f32 %v4651, %v5822
        %v5996 = vmul.f32 %v4652, %v5827
        %v5997 = vmul.f32 %v4653, %v5832
        %v5998 = vmul.f32 %v4654, %v5837
        %v5999 = vmul.f32 %v4655, %v5842
        %v6000 = vmul.f32 %v4656, %v5847
        %v6001 = vmul.f32 %v4657, %v5852
        %v6002 = vmul.f32 %v4658, %v5857
        %v6003 = vmul.f32 %v4659, %v5862
        %v6004 = vmul.f32 %v4660, %v5867
        %v6005 = vmul.f32 %v4661, %v5872
        %v6006 = vmul.f32 %v4662, %v5877
        %v6007 = vmul.f32 %v4663, %v5882
        %v6008 = vmul.f32 %v4664, %v5887
        %v6009 = vmul.f32 %v4665, %v5892
        %v6010 = vmul.f32 %v4666, %v5897
        %v6011 = vmul.f32 %v4667, %v5902
        %v6012 = vmul.f32 %v4668, %v5907
        %v6013 = vmul.f32 %v4669, %v5912
        %v6014 = vmul.f32 %v4670, %v5917
        %v6015 = vmul.f32 %v4671, %v5922
        %v6016 = vmul.f32 %v4672, %v5927
        %v6017 = vmul.f32 %v4673, %v5932
        %v6018 = vmul.f32 %v4674, %v5937
        %v6019 = vmul.f32 %v4675, %v5942
        %v6020 = vmul.f32 %v4676, %v5947
        %v6021 = vmul.f32 %v4677, %v5952
        %v6022 = vmul.f32 %v4678, %v5957
        %v6023 = vpack.c.bf16 %v5960, %v5959
        %v6024 = vpack.c.bf16 %v5962, %v5961
        %v6025 = vpack.c.bf16 %v5964, %v5963
        %v6026 = vpack.c.bf16 %v5966, %v5965
        %v6027 = vpack.c.bf16 %v5968, %v5967
        %v6028 = vpack.c.bf16 %v5970, %v5969
        %v6029 = vpack.c.bf16 %v5972, %v5971
        %v6030 = vpack.c.bf16 %v5974, %v5973
        %v6031 = vpack.c.bf16 %v5976, %v5975
        %v6032 = vpack.c.bf16 %v5978, %v5977
        %v6033 = vpack.c.bf16 %v5980, %v5979
        %v6034 = vpack.c.bf16 %v5982, %v5981
        %v6035 = vpack.c.bf16 %v5984, %v5983
        %v6036 = vpack.c.bf16 %v5986, %v5985
        %v6037 = vpack.c.bf16 %v5988, %v5987
        %v6038 = vpack.c.bf16 %v5990, %v5989
        %v6039 = vpack.c.bf16 %v5992, %v5991
        %v6040 = vpack.c.bf16 %v5994, %v5993
        %v6041 = vpack.c.bf16 %v5996, %v5995
        %v6042 = vpack.c.bf16 %v5998, %v5997
        %v6043 = vpack.c.bf16 %v6000, %v5999
        %v6044 = vpack.c.bf16 %v6002, %v6001
        %v6045 = vpack.c.bf16 %v6004, %v6003
        %v6046 = vpack.c.bf16 %v6006, %v6005
        %v6047 = vpack.c.bf16 %v6008, %v6007
        %v6048 = vpack.c.bf16 %v6010, %v6009
        %v6049 = vpack.c.bf16 %v6012, %v6011
        %v6050 = vpack.c.bf16 %v6014, %v6013
        %v6051 = vpack.c.bf16 %v6016, %v6015
        %v6052 = vpack.c.bf16 %v6018, %v6017
        %v6053 = vpack.c.bf16 %v6020, %v6019
        %v6054 = vpack.c.bf16 %v6022, %v6021
        %v6055 = vld [vmem:[%s5] sm:$0xf]
        %v6056 = vld [vmem:[%s5 + $0x4] sm:$0xf]
        %v6057 = vld [vmem:[%s5 + $0x8] sm:$0xf]
        %v6058 = vld [vmem:[%s5 + $0xc] sm:$0xf]
        %v6059 = vld [vmem:[%s5 + $0x10] sm:$0xf]
        %v6060 = vld [vmem:[%s5 + $0x14] sm:$0xf]
        %v6061 = vld [vmem:[%s5 + $0x18] sm:$0xf]
        %v6062 = vld [vmem:[%s5 + $0x1c] sm:$0xf]
        %v6063 = vld [vmem:[%s5 + $0x20] sm:$0xf]
        %v6064 = vld [vmem:[%s5 + $0x24] sm:$0xf]
        %v6065 = vld [vmem:[%s5 + $0x28] sm:$0xf]
        %v6066 = vld [vmem:[%s5 + $0x2c] sm:$0xf]
        %v6067 = vld [vmem:[%s5 + $0x30] sm:$0xf]
        %v6068 = vld [vmem:[%s5 + $0x34] sm:$0xf]
        %v6069 = vld [vmem:[%s5 + $0x38] sm:$0xf]
        %v6070 = vld [vmem:[%s5 + $0x3c] sm:$0xf]
        %v6071 = vld [vmem:[%s6] sm:$0x1]
        %v6073 = vperm.slane %v6071, 0
        %v6091 = vunpack.c.l.b16 %v6055
        %v6092 = vunpack.c.l.b16 %v6056
        %v6093 = vunpack.c.l.b16 %v6057
        %v6094 = vunpack.c.l.b16 %v6058
        %v6095 = vunpack.c.l.b16 %v6059
        %v6096 = vunpack.c.l.b16 %v6060
        %v6097 = vunpack.c.l.b16 %v6061
        %v6098 = vunpack.c.l.b16 %v6062
        %v6099 = vunpack.c.l.b16 %v6063
        %v6100 = vunpack.c.l.b16 %v6064
        %v6101 = vunpack.c.l.b16 %v6065
        %v6102 = vunpack.c.l.b16 %v6066
        %v6103 = vunpack.c.l.b16 %v6067
        %v6104 = vunpack.c.l.b16 %v6068
        %v6105 = vunpack.c.l.b16 %v6069
        %v6106 = vunpack.c.l.b16 %v6070
        %v6107 = vpack.c.b16 %v6092, %v6091
        %v6108 = vpack.c.b16 %v6094, %v6093
        %v6109 = vpack.c.b16 %v6096, %v6095
        %v6110 = vpack.c.b16 %v6098, %v6097
        %v6111 = vpack.c.b16 %v6100, %v6099
        %v6112 = vpack.c.b16 %v6102, %v6101
        %v6113 = vpack.c.b16 %v6104, %v6103
        %v6114 = vpack.c.b16 %v6106, %v6105
        %6123 = vmatpush.bf16.msra.mxu0 %v6114
        %6124 = vmatpush.bf16.msra.mxu0 %v6113
        %6125 = vmatpush.bf16.msra.mxu0 %v6112
        %6126 = vmatpush.bf16.msra.mxu0 %v6111
        %6127 = vmatpush.bf16.msra.mxu0 %v6110
        %6128 = vmatpush.bf16.msra.mxu0 %v6109
        %6129 = vmatpush.bf16.msra.mxu0 %v6108
        %6130 = vmatpush.bf16.msra.mxu0 %v6107
        %6131 = vmatmul.bf16.gmra.mxu0 %v6023
        %v6132 = vpop.f32.mrf.mxu0
        %v6133 = vadd.f32 %v6073, %v6132
        %v6134 = vpop.f32.mrf.mxu0
        %v6135 = vadd.f32 %v6073, %v6134
        %6136 = vmatmul.bf16.gmra.mxu0 %v6024
        %v6137 = vpop.f32.mrf.mxu0
        %v6138 = vadd.f32 %v6073, %v6137
        %v6139 = vpop.f32.mrf.mxu0
        %v6140 = vadd.f32 %v6073, %v6139
        %6141 = vmatmul.bf16.gmra.mxu0 %v6025
        %v6142 = vpop.f32.mrf.mxu0
        %v6143 = vadd.f32 %v6073, %v6142
        %v6144 = vpop.f32.mrf.mxu0
        %v6145 = vadd.f32 %v6073, %v6144
        %6146 = vmatmul.bf16.gmra.mxu0 %v6026
        %v6147 = vpop.f32.mrf.mxu0
        %v6148 = vadd.f32 %v6073, %v6147
        %v6149 = vpop.f32.mrf.mxu0
        %v6150 = vadd.f32 %v6073, %v6149
        %6151 = vmatmul.bf16.gmra.mxu0 %v6027
        %v6152 = vpop.f32.mrf.mxu0
        %v6153 = vadd.f32 %v6073, %v6152
        %v6154 = vpop.f32.mrf.mxu0
        %v6155 = vadd.f32 %v6073, %v6154
        %6156 = vmatmul.bf16.gmra.mxu0 %v6028
        %v6157 = vpop.f32.mrf.mxu0
        %v6158 = vadd.f32 %v6073, %v6157
        %v6159 = vpop.f32.mrf.mxu0
        %v6160 = vadd.f32 %v6073, %v6159
        %6161 = vmatmul.bf16.gmra.mxu0 %v6029
        %v6162 = vpop.f32.mrf.mxu0
        %v6163 = vadd.f32 %v6073, %v6162
        %v6164 = vpop.f32.mrf.mxu0
        %v6165 = vadd.f32 %v6073, %v6164
        %6166 = vmatmul.bf16.gmra.mxu0 %v6030
        %v6167 = vpop.f32.mrf.mxu0
        %v6168 = vadd.f32 %v6073, %v6167
        %v6169 = vpop.f32.mrf.mxu0
        %v6170 = vadd.f32 %v6073, %v6169
        %6171 = vmatmul.bf16.gmra.mxu0 %v6031
        %v6172 = vpop.f32.mrf.mxu0
        %v6173 = vadd.f32 %v6073, %v6172
        %v6174 = vpop.f32.mrf.mxu0
        %v6175 = vadd.f32 %v6073, %v6174
        %6176 = vmatmul.bf16.gmra.mxu0 %v6032
        %v6177 = vpop.f32.mrf.mxu0
        %v6178 = vadd.f32 %v6073, %v6177
        %v6179 = vpop.f32.mrf.mxu0
        %v6180 = vadd.f32 %v6073, %v6179
        %6181 = vmatmul.bf16.gmra.mxu0 %v6033
        %v6182 = vpop.f32.mrf.mxu0
        %v6183 = vadd.f32 %v6073, %v6182
        %v6184 = vpop.f32.mrf.mxu0
        %v6185 = vadd.f32 %v6073, %v6184
        %6186 = vmatmul.bf16.gmra.mxu0 %v6034
        %v6187 = vpop.f32.mrf.mxu0
        %v6188 = vadd.f32 %v6073, %v6187
        %v6189 = vpop.f32.mrf.mxu0
        %v6190 = vadd.f32 %v6073, %v6189
        %6191 = vmatmul.bf16.gmra.mxu0 %v6035
        %v6192 = vpop.f32.mrf.mxu0
        %v6193 = vadd.f32 %v6073, %v6192
        %v6194 = vpop.f32.mrf.mxu0
        %v6195 = vadd.f32 %v6073, %v6194
        %6196 = vmatmul.bf16.gmra.mxu0 %v6036
        %v6197 = vpop.f32.mrf.mxu0
        %v6198 = vadd.f32 %v6073, %v6197
        %v6199 = vpop.f32.mrf.mxu0
        %v6200 = vadd.f32 %v6073, %v6199
        %6201 = vmatmul.bf16.gmra.mxu0 %v6037
        %v6202 = vpop.f32.mrf.mxu0
        %v6203 = vadd.f32 %v6073, %v6202
        %v6204 = vpop.f32.mrf.mxu0
        %v6205 = vadd.f32 %v6073, %v6204
        %6206 = vmatmul.bf16.gmra.mxu0 %v6038
        %v6207 = vpop.f32.mrf.mxu0
        %v6208 = vadd.f32 %v6073, %v6207
        %v6209 = vpop.f32.mrf.mxu0
        %v6210 = vadd.f32 %v6073, %v6209
        %6211 = vmatmul.bf16.gmra.mxu0 %v6039
        %v6212 = vpop.f32.mrf.mxu0
        %v6213 = vadd.f32 %v6073, %v6212
        %v6214 = vpop.f32.mrf.mxu0
        %v6215 = vadd.f32 %v6073, %v6214
        %6216 = vmatmul.bf16.gmra.mxu0 %v6040
        %v6217 = vpop.f32.mrf.mxu0
        %v6218 = vadd.f32 %v6073, %v6217
        %v6219 = vpop.f32.mrf.mxu0
        %v6220 = vadd.f32 %v6073, %v6219
        %6221 = vmatmul.bf16.gmra.mxu0 %v6041
        %v6222 = vpop.f32.mrf.mxu0
        %v6223 = vadd.f32 %v6073, %v6222
        %v6224 = vpop.f32.mrf.mxu0
        %v6225 = vadd.f32 %v6073, %v6224
        %6226 = vmatmul.bf16.gmra.mxu0 %v6042
        %v6227 = vpop.f32.mrf.mxu0
        %v6228 = vadd.f32 %v6073, %v6227
        %v6229 = vpop.f32.mrf.mxu0
        %v6230 = vadd.f32 %v6073, %v6229
        %6231 = vmatmul.bf16.gmra.mxu0 %v6043
        %v6232 = vpop.f32.mrf.mxu0
        %v6233 = vadd.f32 %v6073, %v6232
        %v6234 = vpop.f32.mrf.mxu0
        %v6235 = vadd.f32 %v6073, %v6234
        %6236 = vmatmul.bf16.gmra.mxu0 %v6044
        %v6237 = vpop.f32.mrf.mxu0
        %v6238 = vadd.f32 %v6073, %v6237
        %v6239 = vpop.f32.mrf.mxu0
        %v6240 = vadd.f32 %v6073, %v6239
        %6241 = vmatmul.bf16.gmra.mxu0 %v6045
        %v6242 = vpop.f32.mrf.mxu0
        %v6243 = vadd.f32 %v6073, %v6242
        %v6244 = vpop.f32.mrf.mxu0
        %v6245 = vadd.f32 %v6073, %v6244
        %6246 = vmatmul.bf16.gmra.mxu0 %v6046
        %v6247 = vpop.f32.mrf.mxu0
        %v6248 = vadd.f32 %v6073, %v6247
        %v6249 = vpop.f32.mrf.mxu0
        %v6250 = vadd.f32 %v6073, %v6249
        %6251 = vmatmul.bf16.gmra.mxu0 %v6047
        %v6252 = vpop.f32.mrf.mxu0
        %v6253 = vadd.f32 %v6073, %v6252
        %v6254 = vpop.f32.mrf.mxu0
        %v6255 = vadd.f32 %v6073, %v6254
        %6256 = vmatmul.bf16.gmra.mxu0 %v6048
        %v6257 = vpop.f32.mrf.mxu0
        %v6258 = vadd.f32 %v6073, %v6257
        %v6259 = vpop.f32.mrf.mxu0
        %v6260 = vadd.f32 %v6073, %v6259
        %6261 = vmatmul.bf16.gmra.mxu0 %v6049
        %v6262 = vpop.f32.mrf.mxu0
        %v6263 = vadd.f32 %v6073, %v6262
        %v6264 = vpop.f32.mrf.mxu0
        %v6265 = vadd.f32 %v6073, %v6264
        %6266 = vmatmul.bf16.gmra.mxu0 %v6050
        %v6267 = vpop.f32.mrf.mxu0
        %v6268 = vadd.f32 %v6073, %v6267
        %v6269 = vpop.f32.mrf.mxu0
        %v6270 = vadd.f32 %v6073, %v6269
        %6271 = vmatmul.bf16.gmra.mxu0 %v6051
        %v6272 = vpop.f32.mrf.mxu0
        %v6273 = vadd.f32 %v6073, %v6272
        %v6274 = vpop.f32.mrf.mxu0
        %v6275 = vadd.f32 %v6073, %v6274
        %6276 = vmatmul.bf16.gmra.mxu0 %v6052
        %v6277 = vpop.f32.mrf.mxu0
        %v6278 = vadd.f32 %v6073, %v6277
        %v6279 = vpop.f32.mrf.mxu0
        %v6280 = vadd.f32 %v6073, %v6279
        %6281 = vmatmul.bf16.gmra.mxu0 %v6053
        %v6282 = vpop.f32.mrf.mxu0
        %v6283 = vadd.f32 %v6073, %v6282
        %v6284 = vpop.f32.mrf.mxu0
        %v6285 = vadd.f32 %v6073, %v6284
        %6286 = vmatmul.bf16.gmra.mxu0 %v6054
        %v6287 = vpop.f32.mrf.mxu0
        %v6288 = vadd.f32 %v6073, %v6287
        %v6289 = vpop.f32.mrf.mxu0
        %v6290 = vadd.f32 %v6073, %v6289
        %6291 = vdwg.mxu0
        %v6292 = vld [vmem:[%s365] sm:$0xff]
        %v6293 = vld [vmem:[%s365 + $0x8] sm:$0xff]
        %v6294 = vld [vmem:[%s365 + $0x10] sm:$0xff]
        %v6295 = vld [vmem:[%s365 + $0x18] sm:$0xff]
        %v6296 = vld [vmem:[%s365 + $0x20] sm:$0xff]
        %v6297 = vld [vmem:[%s365 + $0x28] sm:$0xff]
        %v6298 = vld [vmem:[%s365 + $0x30] sm:$0xff]
        %v6299 = vld [vmem:[%s365 + $0x38] sm:$0xff]
        %v6300 = vld [vmem:[%s365 + $0x40] sm:$0xff]
        %v6301 = vld [vmem:[%s365 + $0x48] sm:$0xff]
        %v6302 = vld [vmem:[%s365 + $0x50] sm:$0xff]
        %v6303 = vld [vmem:[%s365 + $0x58] sm:$0xff]
        %v6304 = vld [vmem:[%s365 + $0x60] sm:$0xff]
        %v6305 = vld [vmem:[%s365 + $0x68] sm:$0xff]
        %v6306 = vld [vmem:[%s365 + $0x70] sm:$0xff]
        %v6307 = vld [vmem:[%s365 + $0x78] sm:$0xff]
        %v6308 = vld [vmem:[%s365 + $0x80] sm:$0xff]
        %v6309 = vld [vmem:[%s365 + $0x88] sm:$0xff]
        %v6310 = vld [vmem:[%s365 + $0x90] sm:$0xff]
        %v6311 = vld [vmem:[%s365 + $0x98] sm:$0xff]
        %v6312 = vld [vmem:[%s365 + $0xa0] sm:$0xff]
        %v6313 = vld [vmem:[%s365 + $0xa8] sm:$0xff]
        %v6314 = vld [vmem:[%s365 + $0xb0] sm:$0xff]
        %v6315 = vld [vmem:[%s365 + $0xb8] sm:$0xff]
        %v6316 = vld [vmem:[%s365 + $0xc0] sm:$0xff]
        %v6317 = vld [vmem:[%s365 + $0xc8] sm:$0xff]
        %v6318 = vld [vmem:[%s365 + $0xd0] sm:$0xff]
        %v6319 = vld [vmem:[%s365 + $0xd8] sm:$0xff]
        %v6320 = vld [vmem:[%s365 + $0xe0] sm:$0xff]
        %v6321 = vld [vmem:[%s365 + $0xe8] sm:$0xff]
        %v6322 = vld [vmem:[%s365 + $0xf0] sm:$0xff]
        %v6323 = vld [vmem:[%s365 + $0xf8] sm:$0xff]
        %v6324 = vld [vmem:[%s365 + $0x100] sm:$0xff]
        %v6325 = vld [vmem:[%s365 + $0x108] sm:$0xff]
        %v6326 = vld [vmem:[%s365 + $0x110] sm:$0xff]
        %v6327 = vld [vmem:[%s365 + $0x118] sm:$0xff]
        %v6328 = vld [vmem:[%s365 + $0x120] sm:$0xff]
        %v6329 = vld [vmem:[%s365 + $0x128] sm:$0xff]
        %v6330 = vld [vmem:[%s365 + $0x130] sm:$0xff]
        %v6331 = vld [vmem:[%s365 + $0x138] sm:$0xff]
        %v6332 = vld [vmem:[%s365 + $0x140] sm:$0xff]
        %v6333 = vld [vmem:[%s365 + $0x148] sm:$0xff]
        %v6334 = vld [vmem:[%s365 + $0x150] sm:$0xff]
        %v6335 = vld [vmem:[%s365 + $0x158] sm:$0xff]
        %v6336 = vld [vmem:[%s365 + $0x160] sm:$0xff]
        %v6337 = vld [vmem:[%s365 + $0x168] sm:$0xff]
        %v6338 = vld [vmem:[%s365 + $0x170] sm:$0xff]
        %v6339 = vld [vmem:[%s365 + $0x178] sm:$0xff]
        %v6340 = vld [vmem:[%s365 + $0x180] sm:$0xff]
        %v6341 = vld [vmem:[%s365 + $0x188] sm:$0xff]
        %v6342 = vld [vmem:[%s365 + $0x190] sm:$0xff]
        %v6343 = vld [vmem:[%s365 + $0x198] sm:$0xff]
        %v6344 = vld [vmem:[%s365 + $0x1a0] sm:$0xff]
        %v6345 = vld [vmem:[%s365 + $0x1a8] sm:$0xff]
        %v6346 = vld [vmem:[%s365 + $0x1b0] sm:$0xff]
        %v6347 = vld [vmem:[%s365 + $0x1b8] sm:$0xff]
        %v6348 = vld [vmem:[%s365 + $0x1c0] sm:$0xff]
        %v6349 = vld [vmem:[%s365 + $0x1c8] sm:$0xff]
        %v6350 = vld [vmem:[%s365 + $0x1d0] sm:$0xff]
        %v6351 = vld [vmem:[%s365 + $0x1d8] sm:$0xff]
        %v6352 = vld [vmem:[%s365 + $0x1e0] sm:$0xff]
        %v6353 = vld [vmem:[%s365 + $0x1e8] sm:$0xff]
        %v6354 = vld [vmem:[%s365 + $0x1f0] sm:$0xff]
        %v6355 = vld [vmem:[%s365 + $0x1f8] sm:$0xff]
        %v6356 = vadd.f32 %v6133, %v6292
        %v6357 = vadd.f32 %v6135, %v6293
        %v6358 = vadd.f32 %v6138, %v6294
        %v6359 = vadd.f32 %v6140, %v6295
        %v6360 = vadd.f32 %v6143, %v6296
        %v6361 = vadd.f32 %v6145, %v6297
        %v6362 = vadd.f32 %v6148, %v6298
        %v6363 = vadd.f32 %v6150, %v6299
        %v6364 = vadd.f32 %v6153, %v6300
        %v6365 = vadd.f32 %v6155, %v6301
        %v6366 = vadd.f32 %v6158, %v6302
        %v6367 = vadd.f32 %v6160, %v6303
        %v6368 = vadd.f32 %v6163, %v6304
        %v6369 = vadd.f32 %v6165, %v6305
        %v6370 = vadd.f32 %v6168, %v6306
        %v6371 = vadd.f32 %v6170, %v6307
        %v6372 = vadd.f32 %v6173, %v6308
        %v6373 = vadd.f32 %v6175, %v6309
        %v6374 = vadd.f32 %v6178, %v6310
        %v6375 = vadd.f32 %v6180, %v6311
        %v6376 = vadd.f32 %v6183, %v6312
        %v6377 = vadd.f32 %v6185, %v6313
        %v6378 = vadd.f32 %v6188, %v6314
        %v6379 = vadd.f32 %v6190, %v6315
        %v6380 = vadd.f32 %v6193, %v6316
        %v6381 = vadd.f32 %v6195, %v6317
        %v6382 = vadd.f32 %v6198, %v6318
        %v6383 = vadd.f32 %v6200, %v6319
        %v6384 = vadd.f32 %v6203, %v6320
        %v6385 = vadd.f32 %v6205, %v6321
        %v6386 = vadd.f32 %v6208, %v6322
        %v6387 = vadd.f32 %v6210, %v6323
        %v6388 = vadd.f32 %v6213, %v6324
        %v6389 = vadd.f32 %v6215, %v6325
        %v6390 = vadd.f32 %v6218, %v6326
        %v6391 = vadd.f32 %v6220, %v6327
        %v6392 = vadd.f32 %v6223, %v6328
        %v6393 = vadd.f32 %v6225, %v6329
        %v6394 = vadd.f32 %v6228, %v6330
        %v6395 = vadd.f32 %v6230, %v6331
        %v6396 = vadd.f32 %v6233, %v6332
        %v6397 = vadd.f32 %v6235, %v6333
        %v6398 = vadd.f32 %v6238, %v6334
        %v6399 = vadd.f32 %v6240, %v6335
        %v6400 = vadd.f32 %v6243, %v6336
        %v6401 = vadd.f32 %v6245, %v6337
        %v6402 = vadd.f32 %v6248, %v6338
        %v6403 = vadd.f32 %v6250, %v6339
        %v6404 = vadd.f32 %v6253, %v6340
        %v6405 = vadd.f32 %v6255, %v6341
        %v6406 = vadd.f32 %v6258, %v6342
        %v6407 = vadd.f32 %v6260, %v6343
        %v6408 = vadd.f32 %v6263, %v6344
        %v6409 = vadd.f32 %v6265, %v6345
        %v6410 = vadd.f32 %v6268, %v6346
        %v6411 = vadd.f32 %v6270, %v6347
        %v6412 = vadd.f32 %v6273, %v6348
        %v6413 = vadd.f32 %v6275, %v6349
        %v6414 = vadd.f32 %v6278, %v6350
        %v6415 = vadd.f32 %v6280, %v6351
        %v6416 = vadd.f32 %v6283, %v6352
        %v6417 = vadd.f32 %v6285, %v6353
        %v6418 = vadd.f32 %v6288, %v6354
        %v6419 = vadd.f32 %v6290, %v6355
        %6420 = vst [vmem:[%s395] sm:$0xff] %v6356
        %6421 = vst [vmem:[%s395 + $0x8] sm:$0xff] %v6357
        %6422 = vst [vmem:[%s395 + $0x10] sm:$0xff] %v6358
        %6423 = vst [vmem:[%s395 + $0x18] sm:$0xff] %v6359
        %6424 = vst [vmem:[%s395 + $0x20] sm:$0xff] %v6360
        %6425 = vst [vmem:[%s395 + $0x28] sm:$0xff] %v6361
        %6426 = vst [vmem:[%s395 + $0x30] sm:$0xff] %v6362
        %6427 = vst [vmem:[%s395 + $0x38] sm:$0xff] %v6363
        %6428 = vst [vmem:[%s395 + $0x40] sm:$0xff] %v6364
        %6429 = vst [vmem:[%s395 + $0x48] sm:$0xff] %v6365
        %6430 = vst [vmem:[%s395 + $0x50] sm:$0xff] %v6366
        %6431 = vst [vmem:[%s395 + $0x58] sm:$0xff] %v6367
        %6432 = vst [vmem:[%s395 + $0x60] sm:$0xff] %v6368
        %6433 = vst [vmem:[%s395 + $0x68] sm:$0xff] %v6369
        %6434 = vst [vmem:[%s395 + $0x70] sm:$0xff] %v6370
        %6435 = vst [vmem:[%s395 + $0x78] sm:$0xff] %v6371
        %6436 = vst [vmem:[%s395 + $0x80] sm:$0xff] %v6372
        %6437 = vst [vmem:[%s395 + $0x88] sm:$0xff] %v6373
        %6438 = vst [vmem:[%s395 + $0x90] sm:$0xff] %v6374
        %6439 = vst [vmem:[%s395 + $0x98] sm:$0xff] %v6375
        %6440 = vst [vmem:[%s395 + $0xa0] sm:$0xff] %v6376
        %6441 = vst [vmem:[%s395 + $0xa8] sm:$0xff] %v6377
        %6442 = vst [vmem:[%s395 + $0xb0] sm:$0xff] %v6378
        %6443 = vst [vmem:[%s395 + $0xb8] sm:$0xff] %v6379
        %6444 = vst [vmem:[%s395 + $0xc0] sm:$0xff] %v6380
        %6445 = vst [vmem:[%s395 + $0xc8] sm:$0xff] %v6381
        %6446 = vst [vmem:[%s395 + $0xd0] sm:$0xff] %v6382
        %6447 = vst [vmem:[%s395 + $0xd8] sm:$0xff] %v6383
        %6448 = vst [vmem:[%s395 + $0xe0] sm:$0xff] %v6384
        %6449 = vst [vmem:[%s395 + $0xe8] sm:$0xff] %v6385
        %6450 = vst [vmem:[%s395 + $0xf0] sm:$0xff] %v6386
        %6451 = vst [vmem:[%s395 + $0xf8] sm:$0xff] %v6387
        %6452 = vst [vmem:[%s395 + $0x100] sm:$0xff] %v6388
        %6453 = vst [vmem:[%s395 + $0x108] sm:$0xff] %v6389
        %6454 = vst [vmem:[%s395 + $0x110] sm:$0xff] %v6390
        %6455 = vst [vmem:[%s395 + $0x118] sm:$0xff] %v6391
        %6456 = vst [vmem:[%s395 + $0x120] sm:$0xff] %v6392
        %6457 = vst [vmem:[%s395 + $0x128] sm:$0xff] %v6393
        %6458 = vst [vmem:[%s395 + $0x130] sm:$0xff] %v6394
        %6459 = vst [vmem:[%s395 + $0x138] sm:$0xff] %v6395
        %6460 = vst [vmem:[%s395 + $0x140] sm:$0xff] %v6396
        %6461 = vst [vmem:[%s395 + $0x148] sm:$0xff] %v6397
        %6462 = vst [vmem:[%s395 + $0x150] sm:$0xff] %v6398
        %6463 = vst [vmem:[%s395 + $0x158] sm:$0xff] %v6399
        %6464 = vst [vmem:[%s395 + $0x160] sm:$0xff] %v6400
        %6465 = vst [vmem:[%s395 + $0x168] sm:$0xff] %v6401
        %6466 = vst [vmem:[%s395 + $0x170] sm:$0xff] %v6402
        %6467 = vst [vmem:[%s395 + $0x178] sm:$0xff] %v6403
        %6468 = vst [vmem:[%s395 + $0x180] sm:$0xff] %v6404
        %6469 = vst [vmem:[%s395 + $0x188] sm:$0xff] %v6405
        %6470 = vst [vmem:[%s395 + $0x190] sm:$0xff] %v6406
        %6471 = vst [vmem:[%s395 + $0x198] sm:$0xff] %v6407
        %6472 = vst [vmem:[%s395 + $0x1a0] sm:$0xff] %v6408
        %6473 = vst [vmem:[%s395 + $0x1a8] sm:$0xff] %v6409
        %6474 = vst [vmem:[%s395 + $0x1b0] sm:$0xff] %v6410
        %6475 = vst [vmem:[%s395 + $0x1b8] sm:$0xff] %v6411
        %6476 = vst [vmem:[%s395 + $0x1c0] sm:$0xff] %v6412
        %6477 = vst [vmem:[%s395 + $0x1c8] sm:$0xff] %v6413
        %6478 = vst [vmem:[%s395 + $0x1d0] sm:$0xff] %v6414
        %6479 = vst [vmem:[%s395 + $0x1d8] sm:$0xff] %v6415
        %6480 = vst [vmem:[%s395 + $0x1e0] sm:$0xff] %v6416
        %6481 = vst [vmem:[%s395 + $0x1e8] sm:$0xff] %v6417
        %6482 = vst [vmem:[%s395 + $0x1f0] sm:$0xff] %v6418
        %6483 = vst [vmem:[%s395 + $0x1f8] sm:$0xff] %v6419
      $region56: #{nonlocal_block_3d.3} parent=47 // pred_fallthru
        _
      %s6484 = smul.u32 64, %s24
      %p6485 = scmp.lt.s32.totalorder %s23, 1
      %s6486 = scalar_select %p6485, %s23, 1
      %p6487 = scmp.lt.s32.totalorder %s6484, 127
      %s6488 = scalar_select %p6487, %s6484, 127
      %s6489 = smul.addr %s6486, 128
      %s6490 = sadd.s32 %s6488, %s6489
      %s6491 = smul.addr %s6490, 8
      %s6492 = scalar_lea.vmem %s7, %s6491
      // Predicated region
      $region57: #{nonlocal_block_3d.3} parent=47 // pred_check
        %p6493 = pneg %p225
      $region58: #{nonlocal_block_3d.3} parent=47 // pred_check_branch
        %6495 = sbr.rel (%p6493) target = $region60
      $region59: #{nonlocal_block_3d.3} parent=47 // pred_region
        %s6496 = smul.u32 64, %s24
      $region60: #{nonlocal_block_3d.3} parent=47 // pred_fallthru
        _
    $region48: #{nonlocal_block_3d.3} parent=5 // pred_fallthru
      _
    %p6497 = scmp.le.s32.totalorder 2, %s13
    // Predicated region
    $region61: #{nonlocal_block_3d.3} parent=5 // pred_check
      %p6498 = pneg %p6497
    $region62: #{nonlocal_block_3d.3} parent=5 // pred_check_branch
      %6500 = sbr.rel (%p6498) target = $region64
    $region63: #{nonlocal_block_3d.3} parent=5 // pred_region
      %s6501 = ssub.s32 %s13, 2
      // Predicated region
      $region65: #{nonlocal_block_3d.3} parent=63 // pred_check
        %p6502 = pneg %p231
      $region66: #{nonlocal_block_3d.3} parent=63 // pred_check_branch
        %6504 = sbr.rel (%p6502) target = $region68
      $region67: #{nonlocal_block_3d.3} parent=63 // pred_region
        %s6505 = smul.u32 64, %s27
        %p6506 = scmp.lt.s32.totalorder %s26, 1
        %s6507 = scalar_select %p6506, %s26, 1
        %p6508 = scmp.lt.s32.totalorder %s6505, 127
        %s6509 = scalar_select %p6508, %s6505, 127
        %s6510 = smul.addr %s6507, 128
        %s6511 = sadd.s32 %s6509, %s6510
        %s6512 = smul.addr %s6511, 8
        %s6513 = scalar_lea.vmem %s7, %s6512
      $region68: #{nonlocal_block_3d.3} parent=63 // pred_fallthru
        _
    $region64: #{nonlocal_block_3d.3} parent=5 // pred_fallthru
      _
  $region6: #{nonlocal_block_3d.3} parent=0 // loop_footer
    %s17 = sadd.s32 1, %s13
  $region7: #{nonlocal_block_3d.3} parent=0 // loop_footer_branch
    %12 = sbr.rel target = $region3
  $region8: #{nonlocal_block_3d.3} parent=0 // loop_exit
    _

</llo_original>
